<compile_context>
chip_gen: v6e
topology: v6e:2x2x1
jax: 0.10.0
libtpu: 0.0.40
codegen_flags: <defaults>
</compile_context>

<pallas_src>
import functools

import jax
import jax.numpy as jnp
from jax.experimental import pallas as pl
from jax.experimental.pallas import tpu as pltpu

TILE_M = 512      # row tile for the plain linear kernels
TILE_G = 256      # group tile for the fused conv+maxpool kernels
BN_EPS = 1e-5


def _round_up(n, m):
    return ((n + m - 1) // m) * m


def _row_tile(m, cap=TILE_M):
    """Row-block size: big blocks for HBM roofline, >=2 grid steps when possible."""
    if m > cap:
        return cap                               # ragged tail handled by Pallas
    if m >= 256:
        return _round_up((m + 1) // 2, 8)        # >=2 steps (v7x has 2 TCs)
    return m                                     # full dim: always a legal block


def _group_tile(g, cap=TILE_G):
    if g > cap:
        return cap
    if g >= 256:
        return _round_up((g + 1) // 2, 8)
    return g


def _sigmoid(x):
    return 1.0 / (1.0 + jnp.exp(-x))


# --------------------------------------------------------------------------
# Pallas kernels
# --------------------------------------------------------------------------
def _linear_kernel(x_ref, w_ref, b_ref, o_ref, *, relu):
    y = jnp.dot(x_ref[...].astype(jnp.bfloat16), w_ref[...],
                preferred_element_type=jnp.float32) + b_ref[...]
    if relu:
        y = jnp.maximum(y, 0.0)
    o_ref[...] = y


def fused_linear(x, w_bf16, shift, relu=True):
    """(M,Cin)@(Cin,Cout)+shift (+relu). bf16 MXU inputs, f32 epilogue, no pad copies."""
    m, cin = x.shape
    cout = w_bf16.shape[1]
    tm = _row_tile(m)
    kernel = functools.partial(_linear_kernel, relu=relu)
    return pl.pallas_call(
        kernel,
        out_shape=jax.ShapeDtypeStruct((m, cout), jnp.float32),
        grid_spec=pltpu.PrefetchScalarGridSpec(
            num_scalar_prefetch=0,
            grid=(pl.cdiv(m, tm),),
            in_specs=[
                pl.BlockSpec((tm, cin), lambda i: (i, 0)),
                pl.BlockSpec((cin, cout), lambda i: (0, 0)),
                pl.BlockSpec((1, cout), lambda i: (0, 0)),
            ],
            out_specs=pl.BlockSpec((tm, cout), lambda i: (i, 0)),
        ),
        compiler_params=pltpu.CompilerParams(dimension_semantics=("parallel",)),
    )(x, w_bf16, shift)


def _mlp2_pool_kernel(x_ref, w1_ref, b1_ref, w2_ref, b2_ref, o_ref):
    # One neighbour slice (tg, Cin): two fused conv+BN+relu layers, max over the
    # neighbour grid axis accumulated into the VMEM-resident output block.
    k = pl.program_id(1)
    x = x_ref[...].astype(jnp.bfloat16)
    y = jnp.dot(x, w1_ref[...], preferred_element_type=jnp.float32) + b1_ref[...]
    y = jnp.maximum(y, 0.0)
    y = jnp.dot(y.astype(jnp.bfloat16), w2_ref[...],
                preferred_element_type=jnp.float32) + b2_ref[...]
    y = jnp.maximum(y, 0.0)

    @pl.when(k == 0)
    def _():
        o_ref[...] = y

    @pl.when(k > 0)
    def _():
        o_ref[...] = jnp.maximum(o_ref[...], y)


def mlp2_pool(x_km, layer1, layer2):
    """x_km: (K, G, Cin) neighbour-major -> (G, Cout) = max_K relu(relu(x@W1+b1)@W2+b2)."""
    K, G, cin = x_km.shape
    w1, b1 = layer1
    w2, b2 = layer2
    c1 = w1.shape[1]
    c2 = w2.shape[1]
    tg = _group_tile(G)
    return pl.pallas_call(
        _mlp2_pool_kernel,
        out_shape=jax.ShapeDtypeStruct((G, c2), jnp.float32),
        grid_spec=pltpu.PrefetchScalarGridSpec(
            num_scalar_prefetch=0,
            grid=(pl.cdiv(G, tg), K),
            in_specs=[
                pl.BlockSpec((None, tg, cin), lambda i, k: (k, i, 0)),
                pl.BlockSpec((cin, c1), lambda i, k: (0, 0)),
                pl.BlockSpec((1, c1), lambda i, k: (0, 0)),
                pl.BlockSpec((c1, c2), lambda i, k: (0, 0)),
                pl.BlockSpec((1, c2), lambda i, k: (0, 0)),
            ],
            out_specs=pl.BlockSpec((tg, c2), lambda i, k: (i, 0)),
        ),
        compiler_params=pltpu.CompilerParams(
            dimension_semantics=("parallel", "arbitrary")),
    )(x_km, w1, b1, w2, b2)


def _motion_pool_kernel(x_ref, wf_ref, bf_ref, wd1_ref, bd1_ref, wd2_ref, bd2_ref,
                        o_ref):
    # Full MotionBlock + neighbour max-pool.  The fea / dis channel split is
    # baked into zero-padded weight rows so the kernel is two plain matmul
    # branches over the same input block (no in-kernel lane slicing).
    k = pl.program_id(1)
    x = x_ref[...].astype(jnp.bfloat16)
    fea = jnp.dot(x, wf_ref[...], preferred_element_type=jnp.float32) + bf_ref[...]
    fea = jnp.maximum(fea, 0.0)
    dis = jnp.dot(x, wd1_ref[...], preferred_element_type=jnp.float32) + bd1_ref[...]
    dis = jnp.maximum(dis, 0.0)
    dis = jnp.dot(dis.astype(jnp.bfloat16), wd2_ref[...],
                  preferred_element_type=jnp.float32) + bd2_ref[...]
    dis = jnp.maximum(dis, 0.0)
    y = fea * dis

    @pl.when(k == 0)
    def _():
        o_ref[...] = y

    @pl.when(k > 0)
    def _():
        o_ref[...] = jnp.maximum(o_ref[...], y)


def motion_pool(x_km, block):
    K, G, cin = x_km.shape
    wf, bf_ = block['fea']
    wd1, bd1 = block['dis1']
    wd2, bd2 = block['dis2']
    cmid = wd1.shape[1]
    cout = wf.shape[1]
    tg = _group_tile(G)
    return pl.pallas_call(
        _motion_pool_kernel,
        out_shape=jax.ShapeDtypeStruct((G, cout), jnp.float32),
        grid_spec=pltpu.PrefetchScalarGridSpec(
            num_scalar_prefetch=0,
            grid=(pl.cdiv(G, tg), K),
            in_specs=[
                pl.BlockSpec((None, tg, cin), lambda i, k: (k, i, 0)),
                pl.BlockSpec((cin, cout), lambda i, k: (0, 0)),
                pl.BlockSpec((1, cout), lambda i, k: (0, 0)),
                pl.BlockSpec((cin, cmid), lambda i, k: (0, 0)),
                pl.BlockSpec((1, cmid), lambda i, k: (0, 0)),
                pl.BlockSpec((cmid, cout), lambda i, k: (0, 0)),
                pl.BlockSpec((1, cout), lambda i, k: (0, 0)),
            ],
            out_specs=pl.BlockSpec((tg, cout), lambda i, k: (i, 0)),
        ),
        compiler_params=pltpu.CompilerParams(
            dimension_semantics=("parallel", "arbitrary")),
    )(x_km, wf, bf_, wd1, bd1, wd2, bd2)


def _lstm_cell_kernel(xp_ref, h_ref, c_ref, wh_ref, ho_ref, co_ref, *, hidden):
    # gates = (precomputed x-projection) + h_agg @ Wh ; nonlinearities + state
    # update fused in the epilogue (EUP/VPU run under the MXU).
    g = xp_ref[...] + jnp.dot(h_ref[...].astype(jnp.bfloat16), wh_ref[...],
                              preferred_element_type=jnp.float32)
    i_g = _sigmoid(g[:, :hidden])
    f_g = _sigmoid(g[:, hidden:2 * hidden])
    g_g = jnp.tanh(g[:, 2 * hidden:3 * hidden])
    o_g = _sigmoid(g[:, 3 * hidden:])
    c_new = f_g * c_ref[...] + i_g * g_g
    co_ref[...] = c_new
    ho_ref[...] = o_g * jnp.tanh(c_new)


def lstm_cell(xp, h_agg, c_agg, wh_bf16, hidden):
    m = xp.shape[0]
    tm = _row_tile(m)
    kernel = functools.partial(_lstm_cell_kernel, hidden=hidden)
    return pl.pallas_call(
        kernel,
        out_shape=(jax.ShapeDtypeStruct((m, hidden), jnp.float32),
                   jax.ShapeDtypeStruct((m, hidden), jnp.float32)),
        grid_spec=pltpu.PrefetchScalarGridSpec(
            num_scalar_prefetch=0,
            grid=(pl.cdiv(m, tm),),
            in_specs=[
                pl.BlockSpec((tm, 4 * hidden), lambda i: (i, 0)),
                pl.BlockSpec((tm, hidden), lambda i: (i, 0)),
                pl.BlockSpec((tm, hidden), lambda i: (i, 0)),
                pl.BlockSpec((hidden, 4 * hidden), lambda i: (0, 0)),
            ],
            out_specs=(pl.BlockSpec((tm, hidden), lambda i: (i, 0)),
                       pl.BlockSpec((tm, hidden), lambda i: (i, 0))),
        ),
        compiler_params=pltpu.CompilerParams(dimension_semantics=("parallel",)),
    )(xp, h_agg, c_agg, wh_bf16)


# --------------------------------------------------------------------------
# Grouping / selection glue (data-dependent: top_k + gathers stay in plain JAX)
# --------------------------------------------------------------------------
def _sqdist(a, b):
    # a: (..., N, d), b: (..., M, d) -> (..., N, M)
    return (jnp.sum(a * a, -1)[..., :, None]
            - 2.0 * jnp.einsum('...nd,...md->...nm', a, b)
            + jnp.sum(b * b, -1)[..., None, :])


def _to_neighbor_major(g5):
    # (B,T,N,K,C) -> (K, B*T*N, C) so each pool-kernel DMA block is contiguous.
    B, T, N, K, C = g5.shape
    return jnp.moveaxis(g5, 3, 0).reshape(K, B * T * N, C)


def group_points_cl(a1, a2, knn):
    # a1, a2: (B,T,N,C) channel-last; knn by the first 3 (xyz) channels.
    d = _sqdist(a1[..., :3], a2[..., :3])
    _, idx = jax.lax.top_k(-d, knn)                                 # (B,T,N,K)
    g = jax.vmap(jax.vmap(lambda a, i: a[i]))(a2, idx)              # (B,T,N,K,C)
    return g - a1[:, :, :, None, :]


def st_group_points_cl(a, framenum, knn):
    # TODO(synk): GroupOperation.st_group_points reconstructed: temporal window
    # of `framenum` frames, knn by xyz, output = [rel coords(4), nbr feat, ctr feat].
    B, T, N, C = a.shape
    half = framenum // 2
    cand = jnp.concatenate(
        [a[:, jnp.clip(jnp.arange(T) + o, 0, T - 1)] for o in range(-half, half + 1)],
        axis=2)                                                     # (B,T,M,C)
    d = _sqdist(a[..., :3], cand[..., :3])
    _, idx = jax.lax.top_k(-d, knn)                                 # (B,T,N,K)
    g = jax.vmap(jax.vmap(lambda c, i: c[i]))(cand, idx)            # (B,T,N,K,C)
    center = a[:, :, :, None, :]
    rel = g[..., :4] - center[..., :4]
    nbr = g[..., 4:]
    ctr = jnp.broadcast_to(center[..., 4:], nbr.shape)
    return jnp.concatenate([rel, nbr, ctr], axis=-1)                # (B,T,N,K,2C-4)


def select_ind_cl(ga, inputs_cl, pts_num):
    # ga: (B,T,N,K,C) grouped features; inputs_cl: (B,T,N,4).
    B, T, N, K, C = ga.shape
    w = jnp.max(jnp.sum(ga[..., :3] ** 2, axis=-1), axis=-1)        # (B,T,N)
    _, ind = jax.lax.top_k(w, pts_num)                              # (B,T,pts)
    idx5 = jnp.broadcast_to(ind[:, :, :, None, None], (B, T, pts_num, K, C))
    ga_sel = jnp.take_along_axis(ga, idx5, axis=2)
    idx4 = jnp.broadcast_to(ind[..., None], (B, T, pts_num, inputs_cl.shape[-1]))
    inp_sel = jnp.take_along_axis(inputs_cl, idx4, axis=2)
    return ga_sel, inp_sel, ind


# --------------------------------------------------------------------------
# Simplified PointLSTM (projection hoisted; cell runs as a Pallas kernel)
# --------------------------------------------------------------------------
def point_lstm_cl(fea, lstm_p, topk, hidden=256):
    # fea: (B,T,N,C) with first 4 channels = point coordinates.
    # TODO(synk): PointLSTM definition not provided; simplified cell with max
    # aggregation of topk previous-frame neighbour states.
    B, T, N, C = fea.shape
    feats = jnp.transpose(fea, (1, 0, 2, 3))                        # (T,B,N,C)
    coords = feats[..., :4]
    # Hoist the input projection of every timestep into one big fused matmul.
    xp_all = fused_linear(feats.reshape(T * B * N, C), lstm_p['Wx'], lstm_p['b'],
                          relu=False).reshape(T, B, N, 4 * hidden)
    wh = lstm_p['Wh']

    def step(carry, xs):
        h_prev, c_prev, coord_prev = carry
        xp_t, coord_t = xs
        d = _sqdist(coord_t[..., :3], coord_prev[..., :3])          # (B,N,N)
        _, idx = jax.lax.top_k(-d, topk)                            # (B,N,topk)
        gather = jax.vmap(lambda a, i: a[i])
        h_agg = jnp.max(gather(h_prev, idx), axis=2)                # (B,N,H)
        c_agg = jnp.max(gather(c_prev, idx), axis=2)
        h_new, c_new = lstm_cell(xp_t.reshape(B * N, 4 * hidden),
                                 h_agg.reshape(B * N, hidden),
                                 c_agg.reshape(B * N, hidden), wh, hidden)
        h_new = h_new.reshape(B, N, hidden)
        c_new = c_new.reshape(B, N, hidden)
        out_t = jnp.concatenate([coord_t, h_new], axis=-1)          # (B,N,4+H)
        return (h_new, c_new, coord_t), out_t

    carry0 = (jnp.zeros((B, N, hidden), jnp.float32),
              jnp.zeros((B, N, hidden), jnp.float32),
              coords[0])
    _, outs = jax.lax.scan(step, carry0, (xp_all, coords))
    return jnp.transpose(outs, (1, 0, 2, 3))                        # (B,T,N,4+H)


# --------------------------------------------------------------------------
# Parameter init: conv bias + eval-BN folded into (bf16 weight, f32 shift)
# --------------------------------------------------------------------------
def _init_conv_bn(key, cin, cout):
    k1, k2, k3, k4, k5 = jax.random.split(key, 5)
    w = jax.random.normal(k1, (cin, cout), jnp.float32) * (1.0 / float(cin) ** 0.5)
    b = 0.01 * jax.random.normal(k2, (cout,), jnp.float32)
    gamma = 1.0 + 0.1 * jax.random.normal(k3, (cout,), jnp.float32)
    beta = 0.1 * jax.random.normal(k4, (cout,), jnp.float32)
    mean = 0.1 * jax.random.normal(k5, (cout,), jnp.float32)
    var = jnp.ones((cout,), jnp.float32)
    scale = gamma / jnp.sqrt(var + BN_EPS)
    return w * scale[None, :], b * scale + beta - mean * scale


def _layer(w_folded, shift, pad_to=None, row_offset=0):
    if pad_to is not None:
        wp = jnp.zeros((pad_to, w_folded.shape[1]), jnp.float32)
        w_folded = wp.at[row_offset:row_offset + w_folded.shape[0]].set(w_folded)
    return (w_folded.astype(jnp.bfloat16),
            shift.reshape(1, -1).astype(jnp.float32))


def init_params(key, hidden_dim=256):
    keys = jax.random.split(key, 12)
    p = {}
    p['stage1'] = (_layer(*_init_conv_bn(keys[0], 4, 32)),
                   _layer(*_init_conv_bn(keys[1], 32, 64)))
    # MotionBlock weights: fea branch sees channels [4:], dis branch channels [:4];
    # the split is baked in as zero rows so the kernels consume the full block.
    p['stage2'] = {
        'fea': _layer(*_init_conv_bn(keys[2], 128, 128), pad_to=132, row_offset=4),
        'dis1': _layer(*_init_conv_bn(keys[3], 4, 64), pad_to=132, row_offset=0),
        'dis2': _layer(*_init_conv_bn(keys[4], 64, 128)),
    }
    # stage3 / pool3 / stage6 exist in __init__ but are never used in forward.
    p['stage4'] = {
        'fea': _layer(*_init_conv_bn(keys[5], 512, 512), pad_to=516, row_offset=4),
        'dis1': _layer(*_init_conv_bn(keys[6], 4, 256), pad_to=516, row_offset=0),
        'dis2': _layer(*_init_conv_bn(keys[7], 256, 512)),
    }
    p['stage5'] = _layer(*_init_conv_bn(keys[8], 512, 1024))
    p['lstm'] = {
        'Wx': (0.05 * jax.random.normal(keys[9], (132, 4 * hidden_dim),
                                        jnp.float32)).astype(jnp.bfloat16),
        'Wh': (0.05 * jax.random.normal(keys[10], (hidden_dim, 4 * hidden_dim),
                                        jnp.float32)).astype(jnp.bfloat16),
        'b': jnp.zeros((1, 4 * hidden_dim), jnp.float32),
    }
    k1, k2, k3 = jax.random.split(keys[11], 3)
    gamma = 1.0 + 0.1 * jax.random.normal(k1, (1024,), jnp.float32)
    beta = 0.1 * jax.random.normal(k2, (1024,), jnp.float32)
    mean = 0.1 * jax.random.normal(k3, (1024,), jnp.float32)
    p['global_bn'] = {'scale': gamma / jnp.sqrt(1.0 + BN_EPS),
                      'beta': beta, 'mean': mean}
    return p


# --------------------------------------------------------------------------
# Full forward (eval mode, mirrors Motion.forward)
# --------------------------------------------------------------------------
def motion_forward(x, params, pts_size, knn, downsample, topk):
    # x: (B, T, N_raw, D>=4); eval-mode strided point sub-sampling.
    B, T, n_raw, _ = x.shape
    stride = n_raw // pts_size
    inputs = x[:, :, ::stride, :4]                                  # (B,T,N,4)
    pts_num = inputs.shape[2]

    # ---- stage 1: MLP(4->32->64) over knn groups, max-pool fused over K ----
    g1 = group_points_cl(inputs, inputs, knn[0])                    # (B,T,N,K,4)
    fea1 = mlp2_pool(_to_neighbor_major(g1), *params['stage1'])
    fea1 = fea1.reshape(B, T, pts_num, -1)
    fea1 = jnp.concatenate([inputs, fea1], axis=-1)                 # (B,T,N,68)

    # ---- stage 2: st-grouping, point subsample, MotionBlock + pool ----
    pts_num //= downsample[0]
    ga2 = st_group_points_cl(fea1, 3, knn[1])                       # (B,T,N,K,132)
    ga2, inputs, _ = select_ind_cl(ga2, inputs, pts_num)
    fea2 = motion_pool(_to_neighbor_major(ga2), params['stage2'])
    fea2 = fea2.reshape(B, T, pts_num, -1)
    fea2 = jnp.concatenate([inputs, fea2], axis=-1)                 # (B,T,N/2,132)

    # ---- PointLSTM + stage-3 point selection ----
    pts_num //= downsample[1]
    lstm_out = point_lstm_cl(fea2, params['lstm'], topk)            # (B,T,N/2,260)
    ga3 = st_group_points_cl(fea2, 3, knn[2])                       # (B,T,N/2,K,260)
    _, inputs, ind = select_ind_cl(ga3, inputs, pts_num)
    idx = jnp.broadcast_to(ind[..., None], (B, T, pts_num, lstm_out.shape[-1]))
    fea3 = jnp.take_along_axis(lstm_out, idx, axis=2)               # (B,T,N/4,260)

    # ---- stage 4 / 5 ----
    pts_num //= downsample[2]
    ga4 = st_group_points_cl(fea3, 3, knn[3])                       # (B,T,N/4,K,516)
    ga4, inputs, _ = select_ind_cl(ga4, inputs, pts_num)
    fea4 = motion_pool(_to_neighbor_major(ga4), params['stage4'])   # (B*T*N/8,512)
    out = fused_linear(fea4, *params['stage5'], relu=True)          # (B*T*N/8,1024)
    out = jnp.max(out.reshape(B, T * pts_num, 1024), axis=1)        # global max-pool
    gb = params['global_bn']
    out = (out - gb['mean']) * gb['scale'] + gb['beta']             # BatchNorm2d eval
    return out.reshape(B, 1024)


# --------------------------------------------------------------------------
if __name__ == "__main__":
    # Small synthetic config: num_classes unused in forward (stage6 not called).
    B, T, N_RAW, D = 2, 8, 64, 4
    PTS_SIZE = 32
    KNN = (8, 12, 12, 8)
    DOWNSAMPLE = (2, 2, 2)
    TOPK = 8

    key = jax.random.PRNGKey(0)
    kx, kp = jax.random.split(key)
    x = jax.random.normal(kx, (B, T, N_RAW, D), jnp.float32)
    params = init_params(kp)

    fwd = jax.jit(lambda inp: motion_forward(
        inp, params, PTS_SIZE, KNN, DOWNSAMPLE, TOPK))
    out = jax.block_until_ready(fwd(x))
    assert out.shape == (B, 1024), out.shape
    assert bool(jnp.all(jnp.isfinite(out)))
    print("KERNEL_OK")
</pallas_src>

<mosaic_0001>
module attributes {stable_mosaic.version = 11 : i64} {
  func.func @_mlp2_pool_kernel(%arg0: i32, %arg1: i32, %arg2: memref<1x256x4xf32, #tpu.memory_space<vmem>>, %arg3: memref<4x32xbf16, #tpu.memory_space<vmem>>, %arg4: memref<1x32xf32, #tpu.memory_space<vmem>>, %arg5: memref<32x64xbf16, #tpu.memory_space<vmem>>, %arg6: memref<1x64xf32, #tpu.memory_space<vmem>>, %arg7: memref<256x64xf32, #tpu.memory_space<vmem>>) attributes {dimension_semantics = [#tpu.dimension_semantics<parallel>, #tpu.dimension_semantics<arbitrary>], iteration_bounds = array<i64: 2, 8>, scalar_prefetch = 0 : i64, scratch_operands = 0 : i64, tpu.core_type = #tpu.core_type<tc>, window_params = [{transform_indices = @transform_0, window_bounds = array<i64: 1, 256, 4>}, {pipeline_mode = #tpu.pipeline_mode<synchronous>, transform_indices = @transform_1, window_bounds = array<i64: 4, 32>}, {pipeline_mode = #tpu.pipeline_mode<synchronous>, transform_indices = @transform_2, window_bounds = array<i64: 1, 32>}, {pipeline_mode = #tpu.pipeline_mode<synchronous>, transform_indices = @transform_3, window_bounds = array<i64: 32, 64>}, {pipeline_mode = #tpu.pipeline_mode<synchronous>, transform_indices = @transform_4, window_bounds = array<i64: 1, 64>}, {transform_indices = @transform_5, window_bounds = array<i64: 256, 64>}]} {
    %c0 = arith.constant 0 : index
    %c0_0 = arith.constant 0 : index
    %c0_1 = arith.constant 0 : index
    %0 = vector.load %arg2[%c0, %c0_0, %c0_1] : memref<1x256x4xf32, #tpu.memory_space<vmem>>, vector<1x256x4xf32>
    %1 = vector.shape_cast %0 : vector<1x256x4xf32> to vector<256x4xf32>
    %2 = arith.truncf %1 : vector<256x4xf32> to vector<256x4xbf16>
    %c0_2 = arith.constant 0 : index
    %c0_3 = arith.constant 0 : index
    %3 = vector.load %arg3[%c0_2, %c0_3] : memref<4x32xbf16, #tpu.memory_space<vmem>>, vector<4x32xbf16>
    %cst = arith.constant dense<0.000000e+00> : vector<256x32xf32>
    %4 = tpu.matmul %2, %3, %cst {dimension_numbers = #tpu.dot_dimension_numbers<[1], [0], [0], [1], [0, 0, 1, 1], [], []>} : vector<256x4xbf16>, vector<4x32xbf16>, vector<256x32xf32> -> vector<256x32xf32>
    %c0_4 = arith.constant 0 : index
    %c0_5 = arith.constant 0 : index
    %5 = vector.load %arg4[%c0_4, %c0_5] : memref<1x32xf32, #tpu.memory_space<vmem>>, vector<1x32xf32>
    %6 = vector.broadcast %5 : vector<1x32xf32> to vector<256x32xf32>
    %7 = arith.addf %4, %6 : vector<256x32xf32>
    %cst_6 = arith.constant 0.000000e+00 : f32
    %8 = vector.broadcast %cst_6 : f32 to vector<256x32xf32>
    %9 = arith.maximumf %7, %8 : vector<256x32xf32>
    %10 = arith.truncf %9 : vector<256x32xf32> to vector<256x32xbf16>
    %c0_7 = arith.constant 0 : index
    %c0_8 = arith.constant 0 : index
    %11 = vector.load %arg5[%c0_7, %c0_8] : memref<32x64xbf16, #tpu.memory_space<vmem>>, vector<32x64xbf16>
    %cst_9 = arith.constant dense<0.000000e+00> : vector<256x64xf32>
    %12 = tpu.matmul %10, %11, %cst_9 {dimension_numbers = #tpu.dot_dimension_numbers<[1], [0], [0], [1], [0, 0, 1, 1], [], []>} : vector<256x32xbf16>, vector<32x64xbf16>, vector<256x64xf32> -> vector<256x64xf32>
    %c0_10 = arith.constant 0 : index
    %c0_11 = arith.constant 0 : index
    %13 = vector.load %arg6[%c0_10, %c0_11] : memref<1x64xf32, #tpu.memory_space<vmem>>, vector<1x64xf32>
    %14 = vector.broadcast %13 : vector<1x64xf32> to vector<256x64xf32>
    %15 = arith.addf %12, %14 : vector<256x64xf32>
    %cst_12 = arith.constant 0.000000e+00 : f32
    %16 = vector.broadcast %cst_12 : f32 to vector<256x64xf32>
    %17 = arith.maximumf %15, %16 : vector<256x64xf32>
    %c0_i32 = arith.constant 0 : i32
    %18 = arith.cmpi eq, %arg1, %c0_i32 : i32
    %19 = arith.extui %18 : i1 to i32
    %c0_i32_13 = arith.constant 0 : i32
    %20 = arith.cmpi ne, %19, %c0_i32_13 : i32
    scf.if %20 {
      %c0_16 = arith.constant 0 : index
      %c0_17 = arith.constant 0 : index
      %24 = vector.load %arg7[%c0_16, %c0_17] : memref<256x64xf32, #tpu.memory_space<vmem>>, vector<256x64xf32>
      tpu.vector_store %arg7[%c0_16, %c0_17], %17 {strides = array<i32>} : memref<256x64xf32, #tpu.memory_space<vmem>>, vector<256x64xf32>,
    } else {
    }
    %c0_i32_14 = arith.constant 0 : i32
    %21 = arith.cmpi sgt, %arg1, %c0_i32_14 : i32
    %22 = arith.extui %21 : i1 to i32
    %c0_i32_15 = arith.constant 0 : i32
    %23 = arith.cmpi ne, %22, %c0_i32_15 : i32
    scf.if %23 {
      %c0_16 = arith.constant 0 : index
      %c0_17 = arith.constant 0 : index
      %24 = vector.load %arg7[%c0_16, %c0_17] : memref<256x64xf32, #tpu.memory_space<vmem>>, vector<256x64xf32>
      %25 = arith.maximumf %24, %17 : vector<256x64xf32>
      %c0_18 = arith.constant 0 : index
      %c0_19 = arith.constant 0 : index
      %26 = vector.load %arg7[%c0_18, %c0_19] : memref<256x64xf32, #tpu.memory_space<vmem>>, vector<256x64xf32>
      tpu.vector_store %arg7[%c0_18, %c0_19], %25 {strides = array<i32>} : memref<256x64xf32, #tpu.memory_space<vmem>>, vector<256x64xf32>,
    } else {
    }
    return
  }
  func.func @transform_0(%arg0: i32, %arg1: i32) -> (i32, i32, i32) {
    %c0_i32 = arith.constant 0 : i32
    %c0_i32_0 = arith.constant 0 : i32
    return %arg1, %arg0, %c0_i32 : i32, i32, i32
  }
  func.func @transform_1(%arg0: i32, %arg1: i32) -> (i32, i32) {
    %c0_i32 = arith.constant 0 : i32
    %c0_i32_0 = arith.constant 0 : i32
    %c0_i32_1 = arith.constant 0 : i32
    return %c0_i32, %c0_i32_0 : i32, i32
  }
  func.func @transform_2(%arg0: i32, %arg1: i32) -> (i32, i32) {
    %c0_i32 = arith.constant 0 : i32
    %c0_i32_0 = arith.constant 0 : i32
    %c0_i32_1 = arith.constant 0 : i32
    return %c0_i32, %c0_i32_0 : i32, i32
  }
  func.func @transform_3(%arg0: i32, %arg1: i32) -> (i32, i32) {
    %c0_i32 = arith.constant 0 : i32
    %c0_i32_0 = arith.constant 0 : i32
    %c0_i32_1 = arith.constant 0 : i32
    return %c0_i32, %c0_i32_0 : i32, i32
  }
  func.func @transform_4(%arg0: i32, %arg1: i32) -> (i32, i32) {
    %c0_i32 = arith.constant 0 : i32
    %c0_i32_0 = arith.constant 0 : i32
    %c0_i32_1 = arith.constant 0 : i32
    return %c0_i32, %c0_i32_0 : i32, i32
  }
  func.func @transform_5(%arg0: i32, %arg1: i32) -> (i32, i32) {
    %c0_i32 = arith.constant 0 : i32
    %c0_i32_0 = arith.constant 0 : i32
    return %arg0, %c0_i32 : i32, i32
  }
}

module attributes {stable_mosaic.version = 11 : i64} {
  func.func @_motion_pool_kernel(%arg0: i32, %arg1: i32, %arg2: memref<1x128x132xf32, #tpu.memory_space<vmem>>, %arg3: memref<132x128xbf16, #tpu.memory_space<vmem>>, %arg4: memref<1x128xf32, #tpu.memory_space<vmem>>, %arg5: memref<132x64xbf16, #tpu.memory_space<vmem>>, %arg6: memref<1x64xf32, #tpu.memory_space<vmem>>, %arg7: memref<64x128xbf16, #tpu.memory_space<vmem>>, %arg8: memref<1x128xf32, #tpu.memory_space<vmem>>, %arg9: memref<128x128xf32, #tpu.memory_space<vmem>>) attributes {dimension_semantics = [#tpu.dimension_semantics<parallel>, #tpu.dimension_semantics<arbitrary>], iteration_bounds = array<i64: 2, 12>, scalar_prefetch = 0 : i64, scratch_operands = 0 : i64, tpu.core_type = #tpu.core_type<tc>, window_params = [{transform_indices = @transform_0, window_bounds = array<i64: 1, 128, 132>}, {pipeline_mode = #tpu.pipeline_mode<synchronous>, transform_indices = @transform_1, window_bounds = array<i64: 132, 128>}, {pipeline_mode = #tpu.pipeline_mode<synchronous>, transform_indices = @transform_2, window_bounds = array<i64: 1, 128>}, {pipeline_mode = #tpu.pipeline_mode<synchronous>, transform_indices = @transform_3, window_bounds = array<i64: 132, 64>}, {pipeline_mode = #tpu.pipeline_mode<synchronous>, transform_indices = @transform_4, window_bounds = array<i64: 1, 64>}, {pipeline_mode = #tpu.pipeline_mode<synchronous>, transform_indices = @transform_5, window_bounds = array<i64: 64, 128>}, {pipeline_mode = #tpu.pipeline_mode<synchronous>, transform_indices = @transform_6, window_bounds = array<i64: 1, 128>}, {transform_indices = @transform_7, window_bounds = array<i64: 128, 128>}]} {
    %c0 = arith.constant 0 : index
    %c0_0 = arith.constant 0 : index
    %c0_1 = arith.constant 0 : index
    %0 = vector.load %arg2[%c0, %c0_0, %c0_1] : memref<1x128x132xf32, #tpu.memory_space<vmem>>, vector<1x128x132xf32>
    %1 = vector.shape_cast %0 : vector<1x128x132xf32> to vector<128x132xf32>
    %2 = arith.truncf %1 : vector<128x132xf32> to vector<128x132xbf16>
    %c0_2 = arith.constant 0 : index
    %c0_3 = arith.constant 0 : index
    %3 = vector.load %arg3[%c0_2, %c0_3] : memref<132x128xbf16, #tpu.memory_space<vmem>>, vector<132x128xbf16>
    %cst = arith.constant dense<0.000000e+00> : vector<128x128xf32>
    %4 = tpu.matmul %2, %3, %cst {dimension_numbers = #tpu.dot_dimension_numbers<[1], [0], [0], [1], [0, 0, 1, 1], [], []>} : vector<128x132xbf16>, vector<132x128xbf16>, vector<128x128xf32> -> vector<128x128xf32>
    %c0_4 = arith.constant 0 : index
    %c0_5 = arith.constant 0 : index
    %5 = vector.load %arg4[%c0_4, %c0_5] : memref<1x128xf32, #tpu.memory_space<vmem>>, vector<1x128xf32>
    %6 = vector.broadcast %5 : vector<1x128xf32> to vector<128x128xf32>
    %7 = arith.addf %4, %6 : vector<128x128xf32>
    %cst_6 = arith.constant 0.000000e+00 : f32
    %8 = vector.broadcast %cst_6 : f32 to vector<128x128xf32>
    %9 = arith.maximumf %7, %8 : vector<128x128xf32>
    %c0_7 = arith.constant 0 : index
    %c0_8 = arith.constant 0 : index
    %10 = vector.load %arg5[%c0_7, %c0_8] : memref<132x64xbf16, #tpu.memory_space<vmem>>, vector<132x64xbf16>
    %cst_9 = arith.constant dense<0.000000e+00> : vector<128x64xf32>
    %11 = tpu.matmul %2, %10, %cst_9 {dimension_numbers = #tpu.dot_dimension_numbers<[1], [0], [0], [1], [0, 0, 1, 1], [], []>} : vector<128x132xbf16>, vector<132x64xbf16>, vector<128x64xf32> -> vector<128x64xf32>
    %c0_10 = arith.constant 0 : index
    %c0_11 = arith.constant 0 : index
    %12 = vector.load %arg6[%c0_10, %c0_11] : memref<1x64xf32, #tpu.memory_space<vmem>>, vector<1x64xf32>
    %13 = vector.broadcast %12 : vector<1x64xf32> to vector<128x64xf32>
    %14 = arith.addf %11, %13 : vector<128x64xf32>
    %cst_12 = arith.constant 0.000000e+00 : f32
    %15 = vector.broadcast %cst_12 : f32 to vector<128x64xf32>
    %16 = arith.maximumf %14, %15 : vector<128x64xf32>
    %17 = arith.truncf %16 : vector<128x64xf32> to vector<128x64xbf16>
    %c0_13 = arith.constant 0 : index
    %c0_14 = arith.constant 0 : index
    %18 = vector.load %arg7[%c0_13, %c0_14] : memref<64x128xbf16, #tpu.memory_space<vmem>>, vector<64x128xbf16>
    %cst_15 = arith.constant dense<0.000000e+00> : vector<128x128xf32>
    %19 = tpu.matmul %17, %18, %cst_15 {dimension_numbers = #tpu.dot_dimension_numbers<[1], [0], [0], [1], [0, 0, 1, 1], [], []>} : vector<128x64xbf16>, vector<64x128xbf16>, vector<128x128xf32> -> vector<128x128xf32>
    %c0_16 = arith.constant 0 : index
    %c0_17 = arith.constant 0 : index
    %20 = vector.load %arg8[%c0_16, %c0_17] : memref<1x128xf32, #tpu.memory_space<vmem>>, vector<1x128xf32>
    %21 = vector.broadcast %20 : vector<1x128xf32> to vector<128x128xf32>
    %22 = arith.addf %19, %21 : vector<128x128xf32>
    %cst_18 = arith.constant 0.000000e+00 : f32
    %23 = vector.broadcast %cst_18 : f32 to vector<128x128xf32>
    %24 = arith.maximumf %22, %23 : vector<128x128xf32>
    %25 = arith.mulf %9, %24 : vector<128x128xf32>
    %c0_i32 = arith.constant 0 : i32
    %26 = arith.cmpi eq, %arg1, %c0_i32 : i32
    %27 = arith.extui %26 : i1 to i32
    %c0_i32_19 = arith.constant 0 : i32
    %28 = arith.cmpi ne, %27, %c0_i32_19 : i32
    scf.if %28 {
      %c0_22 = arith.constant 0 : index
      %c0_23 = arith.constant 0 : index
      %32 = vector.load %arg9[%c0_22, %c0_23] : memref<128x128xf32, #tpu.memory_space<vmem>>, vector<128x128xf32>
      tpu.vector_store %arg9[%c0_22, %c0_23], %25 {strides = array<i32>} : memref<128x128xf32, #tpu.memory_space<vmem>>, vector<128x128xf32>,
    } else {
    }
    %c0_i32_20 = arith.constant 0 : i32
    %29 = arith.cmpi sgt, %arg1, %c0_i32_20 : i32
    %30 = arith.extui %29 : i1 to i32
    %c0_i32_21 = arith.constant 0 : i32
    %31 = arith.cmpi ne, %30, %c0_i32_21 : i32
    scf.if %31 {
      %c0_22 = arith.constant 0 : index
      %c0_23 = arith.constant 0 : index
      %32 = vector.load %arg9[%c0_22, %c0_23] : memref<128x128xf32, #tpu.memory_space<vmem>>, vector<128x128xf32>
      %33 = arith.maximumf %32, %25 : vector<128x128xf32>
      %c0_24 = arith.constant 0 : index
      %c0_25 = arith.constant 0 : index
      %34 = vector.load %arg9[%c0_24, %c0_25] : memref<128x128xf32, #tpu.memory_space<vmem>>, vector<128x128xf32>
      tpu.vector_store %arg9[%c0_24, %c0_25], %33 {strides = array<i32>} : memref<128x128xf32, #tpu.memory_space<vmem>>, vector<128x128xf32>,
    } else {
    }
    return
  }
  func.func @transform_0(%arg0: i32, %arg1: i32) -> (i32, i32, i32) {
    %c0_i32 = arith.constant 0 : i32
    %c0_i32_0 = arith.constant 0 : i32
    return %arg1, %arg0, %c0_i32 : i32, i32, i32
  }
  func.func @transform_1(%arg0: i32, %arg1: i32) -> (i32, i32) {
    %c0_i32 = arith.constant 0 : i32
    %c0_i32_0 = arith.constant 0 : i32
    %c0_i32_1 = arith.constant 0 : i32
    return %c0_i32, %c0_i32_0 : i32, i32
  }
  func.func @transform_2(%arg0: i32, %arg1: i32) -> (i32, i32) {
    %c0_i32 = arith.constant 0 : i32
    %c0_i32_0 = arith.constant 0 : i32
    %c0_i32_1 = arith.constant 0 : i32
    return %c0_i32, %c0_i32_0 : i32, i32
  }
  func.func @transform_3(%arg0: i32, %arg1: i32) -> (i32, i32) {
    %c0_i32 = arith.constant 0 : i32
    %c0_i32_0 = arith.constant 0 : i32
    %c0_i32_1 = arith.constant 0 : i32
    return %c0_i32, %c0_i32_0 : i32, i32
  }
  func.func @transform_4(%arg0: i32, %arg1: i32) -> (i32, i32) {
    %c0_i32 = arith.constant 0 : i32
    %c0_i32_0 = arith.constant 0 : i32
    %c0_i32_1 = arith.constant 0 : i32
    return %c0_i32, %c0_i32_0 : i32, i32
  }
  func.func @transform_5(%arg0: i32, %arg1: i32) -> (i32, i32) {
    %c0_i32 = arith.constant 0 : i32
    %c0_i32_0 = arith.constant 0 : i32
    %c0_i32_1 = arith.constant 0 : i32
    return %c0_i32, %c0_i32_0 : i32, i32
  }
  func.func @transform_6(%arg0: i32, %arg1: i32) -> (i32, i32) {
    %c0_i32 = arith.constant 0 : i32
    %c0_i32_0 = arith.constant 0 : i32
    %c0_i32_1 = arith.constant 0 : i32
    return %c0_i32, %c0_i32_0 : i32, i32
  }
  func.func @transform_7(%arg0: i32, %arg1: i32) -> (i32, i32) {
    %c0_i32 = arith.constant 0 : i32
    %c0_i32_0 = arith.constant 0 : i32
    return %arg0, %c0_i32 : i32, i32
  }
}

module attributes {stable_mosaic.version = 11 : i64} {
  func.func @_linear_kernel(%arg0: i32, %arg1: memref<128x132xf32, #tpu.memory_space<vmem>>, %arg2: memref<132x1024xbf16, #tpu.memory_space<vmem>>, %arg3: memref<1x1024xf32, #tpu.memory_space<vmem>>, %arg4: memref<128x1024xf32, #tpu.memory_space<vmem>>) attributes {dimension_semantics = [#tpu.dimension_semantics<parallel>], iteration_bounds = array<i64: 2>, scalar_prefetch = 0 : i64, scratch_operands = 0 : i64, tpu.core_type = #tpu.core_type<tc>, window_params = [{transform_indices = @transform_0, window_bounds = array<i64: 128, 132>}, {pipeline_mode = #tpu.pipeline_mode<synchronous>, transform_indices = @transform_1, window_bounds = array<i64: 132, 1024>}, {pipeline_mode = #tpu.pipeline_mode<synchronous>, transform_indices = @transform_2, window_bounds = array<i64: 1, 1024>}, {transform_indices = @transform_3, window_bounds = array<i64: 128, 1024>}]} {
    %c0 = arith.constant 0 : index
    %c0_0 = arith.constant 0 : index
    %0 = vector.load %arg1[%c0, %c0_0] : memref<128x132xf32, #tpu.memory_space<vmem>>, vector<128x132xf32>
    %1 = arith.truncf %0 : vector<128x132xf32> to vector<128x132xbf16>
    %c0_1 = arith.constant 0 : index
    %c0_2 = arith.constant 0 : index
    %2 = vector.load %arg2[%c0_1, %c0_2] : memref<132x1024xbf16, #tpu.memory_space<vmem>>, vector<132x1024xbf16>
    %cst = arith.constant dense<0.000000e+00> : vector<128x1024xf32>
    %3 = tpu.matmul %1, %2, %cst {dimension_numbers = #tpu.dot_dimension_numbers<[1], [0], [0], [1], [0, 0, 1, 1], [], []>} : vector<128x132xbf16>, vector<132x1024xbf16>, vector<128x1024xf32> -> vector<128x1024xf32>
    %c0_3 = arith.constant 0 : index
    %c0_4 = arith.constant 0 : index
    %4 = vector.load %arg3[%c0_3, %c0_4] : memref<1x1024xf32, #tpu.memory_space<vmem>>, vector<1x1024xf32>
    %5 = vector.broadcast %4 : vector<1x1024xf32> to vector<128x1024xf32>
    %6 = arith.addf %3, %5 : vector<128x1024xf32>
    %c0_5 = arith.constant 0 : index
    %c0_6 = arith.constant 0 : index
    %7 = vector.load %arg4[%c0_5, %c0_6] : memref<128x1024xf32, #tpu.memory_space<vmem>>, vector<128x1024xf32>
    tpu.vector_store %arg4[%c0_5, %c0_6], %6 {strides = array<i32>} : memref<128x1024xf32, #tpu.memory_space<vmem>>, vector<128x1024xf32>,
    return
  }
  func.func @transform_0(%arg0: i32) -> (i32, i32) {
    %c0_i32 = arith.constant 0 : i32
    %c0_i32_0 = arith.constant 0 : i32
    return %arg0, %c0_i32 : i32, i32
  }
  func.func @transform_1(%arg0: i32) -> (i32, i32) {
    %c0_i32 = arith.constant 0 : i32
    %c0_i32_0 = arith.constant 0 : i32
    %c0_i32_1 = arith.constant 0 : i32
    return %c0_i32, %c0_i32_0 : i32, i32
  }
  func.func @transform_2(%arg0: i32) -> (i32, i32) {
    %c0_i32 = arith.constant 0 : i32
    %c0_i32_0 = arith.constant 0 : i32
    %c0_i32_1 = arith.constant 0 : i32
    return %c0_i32, %c0_i32_0 : i32, i32
  }
  func.func @transform_3(%arg0: i32) -> (i32, i32) {
    %c0_i32 = arith.constant 0 : i32
    %c0_i32_0 = arith.constant 0 : i32
    return %arg0, %c0_i32 : i32, i32
  }
}

module attributes {stable_mosaic.version = 11 : i64} {
  func.func @_lstm_cell_kernel(%arg0: i32, %arg1: memref<32x1024xf32, #tpu.memory_space<vmem>>, %arg2: memref<32x256xf32, #tpu.memory_space<vmem>>, %arg3: memref<32x256xf32, #tpu.memory_space<vmem>>, %arg4: memref<256x1024xbf16, #tpu.memory_space<vmem>>, %arg5: memref<32x256xf32, #tpu.memory_space<vmem>>, %arg6: memref<32x256xf32, #tpu.memory_space<vmem>>) attributes {dimension_semantics = [#tpu.dimension_semantics<parallel>], iteration_bounds = array<i64: 1>, scalar_prefetch = 0 : i64, scratch_operands = 0 : i64, tpu.core_type = #tpu.core_type<tc>, window_params = [{transform_indices = @transform_0, window_bounds = array<i64: 32, 1024>}, {transform_indices = @transform_1, window_bounds = array<i64: 32, 256>}, {transform_indices = @transform_2, window_bounds = array<i64: 32, 256>}, {pipeline_mode = #tpu.pipeline_mode<synchronous>, transform_indices = @transform_3, window_bounds = array<i64: 256, 1024>}, {transform_indices = @transform_4, window_bounds = array<i64: 32, 256>}, {transform_indices = @transform_5, window_bounds = array<i64: 32, 256>}]} {
    %c0 = arith.constant 0 : index
    %c0_0 = arith.constant 0 : index
    %0 = vector.load %arg1[%c0, %c0_0] : memref<32x1024xf32, #tpu.memory_space<vmem>>, vector<32x1024xf32>
    %c0_1 = arith.constant 0 : index
    %c0_2 = arith.constant 0 : index
    %1 = vector.load %arg2[%c0_1, %c0_2] : memref<32x256xf32, #tpu.memory_space<vmem>>, vector<32x256xf32>
    %2 = arith.truncf %1 : vector<32x256xf32> to vector<32x256xbf16>
    %c0_3 = arith.constant 0 : index
    %c0_4 = arith.constant 0 : index
    %3 = vector.load %arg4[%c0_3, %c0_4] : memref<256x1024xbf16, #tpu.memory_space<vmem>>, vector<256x1024xbf16>
    %cst = arith.constant dense<0.000000e+00> : vector<32x1024xf32>
    %4 = tpu.matmul %2, %3, %cst {dimension_numbers = #tpu.dot_dimension_numbers<[1], [0], [0], [1], [0, 0, 1, 1], [], []>} : vector<32x256xbf16>, vector<256x1024xbf16>, vector<32x1024xf32> -> vector<32x1024xf32>
    %5 = arith.addf %0, %4 : vector<32x1024xf32>
    %6 = vector.extract_strided_slice %5 {offsets = [0, 0], sizes = [32, 256], strides = [1, 1]} : vector<32x1024xf32> to vector<32x256xf32>
    %cst_5 = arith.constant 0.000000e+00 : f32
    %7 = vector.broadcast %cst_5 : f32 to vector<32x256xf32>
    %8 = arith.subf %7, %6 : vector<32x256xf32>
    %9 = math.exp %8 : vector<32x256xf32>
    %cst_6 = arith.constant 1.000000e+00 : f32
    %10 = vector.broadcast %cst_6 : f32 to vector<32x256xf32>
    %11 = arith.addf %10, %9 : vector<32x256xf32>
    %cst_7 = arith.constant 1.000000e+00 : f32
    %12 = vector.broadcast %cst_7 : f32 to vector<32x256xf32>
    %13 = arith.divf %12, %11 : vector<32x256xf32>
    %14 = vector.extract_strided_slice %5 {offsets = [0, 256], sizes = [32, 256], strides = [1, 1]} : vector<32x1024xf32> to vector<32x256xf32>
    %cst_8 = arith.constant 0.000000e+00 : f32
    %15 = vector.broadcast %cst_8 : f32 to vector<32x256xf32>
    %16 = arith.subf %15, %14 : vector<32x256xf32>
    %17 = math.exp %16 : vector<32x256xf32>
    %cst_9 = arith.constant 1.000000e+00 : f32
    %18 = vector.broadcast %cst_9 : f32 to vector<32x256xf32>
    %19 = arith.addf %18, %17 : vector<32x256xf32>
    %cst_10 = arith.constant 1.000000e+00 : f32
    %20 = vector.broadcast %cst_10 : f32 to vector<32x256xf32>
    %21 = arith.divf %20, %19 : vector<32x256xf32>
    %22 = vector.extract_strided_slice %5 {offsets = [0, 512], sizes = [32, 256], strides = [1, 1]} : vector<32x1024xf32> to vector<32x256xf32>
    %23 = math.tanh %22 : vector<32x256xf32>
    %24 = vector.extract_strided_slice %5 {offsets = [0, 768], sizes = [32, 256], strides = [1, 1]} : vector<32x1024xf32> to vector<32x256xf32>
    %cst_11 = arith.constant 0.000000e+00 : f32
    %25 = vector.broadcast %cst_11 : f32 to vector<32x256xf32>
    %26 = arith.subf %25, %24 : vector<32x256xf32>
    %27 = math.exp %26 : vector<32x256xf32>
    %cst_12 = arith.constant 1.000000e+00 : f32
    %28 = vector.broadcast %cst_12 : f32 to vector<32x256xf32>
    %29 = arith.addf %28, %27 : vector<32x256xf32>
    %cst_13 = arith.constant 1.000000e+00 : f32
    %30 = vector.broadcast %cst_13 : f32 to vector<32x256xf32>
    %31 = arith.divf %30, %29 : vector<32x256xf32>
    %c0_14 = arith.constant 0 : index
    %c0_15 = arith.constant 0 : index
    %32 = vector.load %arg3[%c0_14, %c0_15] : memref<32x256xf32, #tpu.memory_space<vmem>>, vector<32x256xf32>
    %33 = arith.mulf %21, %32 : vector<32x256xf32>
    %34 = arith.mulf %13, %23 : vector<32x256xf32>
    %35 = arith.addf %33, %34 : vector<32x256xf32>
    %c0_16 = arith.constant 0 : index
    %c0_17 = arith.constant 0 : index
    %36 = vector.load %arg6[%c0_16, %c0_17] : memref<32x256xf32, #tpu.memory_space<vmem>>, vector<32x256xf32>
    tpu.vector_store %arg6[%c0_16, %c0_17], %35 {strides = array<i32>} : memref<32x256xf32, #tpu.memory_space<vmem>>, vector<32x256xf32>,
    %37 = math.tanh %35 : vector<32x256xf32>
    %38 = arith.mulf %31, %37 : vector<32x256xf32>
    %c0_18 = arith.constant 0 : index
    %c0_19 = arith.constant 0 : index
    %39 = vector.load %arg5[%c0_18, %c0_19] : memref<32x256xf32, #tpu.memory_space<vmem>>, vector<32x256xf32>
    tpu.vector_store %arg5[%c0_18, %c0_19], %38 {strides = array<i32>} : memref<32x256xf32, #tpu.memory_space<vmem>>, vector<32x256xf32>,
    return
  }
  func.func @transform_0(%arg0: i32) -> (i32, i32) {
    %c0_i32 = arith.constant 0 : i32
    %c0_i32_0 = arith.constant 0 : i32
    return %arg0, %c0_i32 : i32, i32
  }
  func.func @transform_1(%arg0: i32) -> (i32, i32) {
    %c0_i32 = arith.constant 0 : i32
    %c0_i32_0 = arith.constant 0 : i32
    return %arg0, %c0_i32 : i32, i32
  }
  func.func @transform_2(%arg0: i32) -> (i32, i32) {
    %c0_i32 = arith.constant 0 : i32
    %c0_i32_0 = arith.constant 0 : i32
    return %arg0, %c0_i32 : i32, i32
  }
  func.func @transform_3(%arg0: i32) -> (i32, i32) {
    %c0_i32 = arith.constant 0 : i32
    %c0_i32_0 = arith.constant 0 : i32
    %c0_i32_1 = arith.constant 0 : i32
    return %c0_i32, %c0_i32_0 : i32, i32
  }
  func.func @transform_4(%arg0: i32) -> (i32, i32) {
    %c0_i32 = arith.constant 0 : i32
    %c0_i32_0 = arith.constant 0 : i32
    return %arg0, %c0_i32 : i32, i32
  }
  func.func @transform_5(%arg0: i32) -> (i32, i32) {
    %c0_i32 = arith.constant 0 : i32
    %c0_i32_0 = arith.constant 0 : i32
    return %arg0, %c0_i32 : i32, i32
  }
}

module attributes {stable_mosaic.version = 11 : i64} {
  func.func @_motion_pool_kernel(%arg0: i32, %arg1: i32, %arg2: memref<1x64x516xf32, #tpu.memory_space<vmem>>, %arg3: memref<516x512xbf16, #tpu.memory_space<vmem>>, %arg4: memref<1x512xf32, #tpu.memory_space<vmem>>, %arg5: memref<516x256xbf16, #tpu.memory_space<vmem>>, %arg6: memref<1x256xf32, #tpu.memory_space<vmem>>, %arg7: memref<256x512xbf16, #tpu.memory_space<vmem>>, %arg8: memref<1x512xf32, #tpu.memory_space<vmem>>, %arg9: memref<64x512xf32, #tpu.memory_space<vmem>>) attributes {dimension_semantics = [#tpu.dimension_semantics<parallel>, #tpu.dimension_semantics<arbitrary>], iteration_bounds = array<i64: 1, 8>, scalar_prefetch = 0 : i64, scratch_operands = 0 : i64, tpu.core_type = #tpu.core_type<tc>, window_params = [{transform_indices = @transform_0, window_bounds = array<i64: 1, 64, 516>}, {pipeline_mode = #tpu.pipeline_mode<synchronous>, transform_indices = @transform_1, window_bounds = array<i64: 516, 512>}, {pipeline_mode = #tpu.pipeline_mode<synchronous>, transform_indices = @transform_2, window_bounds = array<i64: 1, 512>}, {pipeline_mode = #tpu.pipeline_mode<synchronous>, transform_indices = @transform_3, window_bounds = array<i64: 516, 256>}, {pipeline_mode = #tpu.pipeline_mode<synchronous>, transform_indices = @transform_4, window_bounds = array<i64: 1, 256>}, {pipeline_mode = #tpu.pipeline_mode<synchronous>, transform_indices = @transform_5, window_bounds = array<i64: 256, 512>}, {pipeline_mode = #tpu.pipeline_mode<synchronous>, transform_indices = @transform_6, window_bounds = array<i64: 1, 512>}, {transform_indices = @transform_7, window_bounds = array<i64: 64, 512>}]} {
    %c0 = arith.constant 0 : index
    %c0_0 = arith.constant 0 : index
    %c0_1 = arith.constant 0 : index
    %0 = vector.load %arg2[%c0, %c0_0, %c0_1] : memref<1x64x516xf32, #tpu.memory_space<vmem>>, vector<1x64x516xf32>
    %1 = vector.shape_cast %0 : vector<1x64x516xf32> to vector<64x516xf32>
    %2 = arith.truncf %1 : vector<64x516xf32> to vector<64x516xbf16>
    %c0_2 = arith.constant 0 : index
    %c0_3 = arith.constant 0 : index
    %3 = vector.load %arg3[%c0_2, %c0_3] : memref<516x512xbf16, #tpu.memory_space<vmem>>, vector<516x512xbf16>
    %cst = arith.constant dense<0.000000e+00> : vector<64x512xf32>
    %4 = tpu.matmul %2, %3, %cst {dimension_numbers = #tpu.dot_dimension_numbers<[1], [0], [0], [1], [0, 0, 1, 1], [], []>} : vector<64x516xbf16>, vector<516x512xbf16>, vector<64x512xf32> -> vector<64x512xf32>
    %c0_4 = arith.constant 0 : index
    %c0_5 = arith.constant 0 : index
    %5 = vector.load %arg4[%c0_4, %c0_5] : memref<1x512xf32, #tpu.memory_space<vmem>>, vector<1x512xf32>
    %6 = vector.broadcast %5 : vector<1x512xf32> to vector<64x512xf32>
    %7 = arith.addf %4, %6 : vector<64x512xf32>
    %cst_6 = arith.constant 0.000000e+00 : f32
    %8 = vector.broadcast %cst_6 : f32 to vector<64x512xf32>
    %9 = arith.maximumf %7, %8 : vector<64x512xf32>
    %c0_7 = arith.constant 0 : index
    %c0_8 = arith.constant 0 : index
    %10 = vector.load %arg5[%c0_7, %c0_8] : memref<516x256xbf16, #tpu.memory_space<vmem>>, vector<516x256xbf16>
    %cst_9 = arith.constant dense<0.000000e+00> : vector<64x256xf32>
    %11 = tpu.matmul %2, %10, %cst_9 {dimension_numbers = #tpu.dot_dimension_numbers<[1], [0], [0], [1], [0, 0, 1, 1], [], []>} : vector<64x516xbf16>, vector<516x256xbf16>, vector<64x256xf32> -> vector<64x256xf32>
    %c0_10 = arith.constant 0 : index
    %c0_11 = arith.constant 0 : index
    %12 = vector.load %arg6[%c0_10, %c0_11] : memref<1x256xf32, #tpu.memory_space<vmem>>, vector<1x256xf32>
    %13 = vector.broadcast %12 : vector<1x256xf32> to vector<64x256xf32>
    %14 = arith.addf %11, %13 : vector<64x256xf32>
    %cst_12 = arith.constant 0.000000e+00 : f32
    %15 = vector.broadcast %cst_12 : f32 to vector<64x256xf32>
    %16 = arith.maximumf %14, %15 : vector<64x256xf32>
    %17 = arith.truncf %16 : vector<64x256xf32> to vector<64x256xbf16>
    %c0_13 = arith.constant 0 : index
    %c0_14 = arith.constant 0 : index
    %18 = vector.load %arg7[%c0_13, %c0_14] : memref<256x512xbf16, #tpu.memory_space<vmem>>, vector<256x512xbf16>
    %cst_15 = arith.constant dense<0.000000e+00> : vector<64x512xf32>
    %19 = tpu.matmul %17, %18, %cst_15 {dimension_numbers = #tpu.dot_dimension_numbers<[1], [0], [0], [1], [0, 0, 1, 1], [], []>} : vector<64x256xbf16>, vector<256x512xbf16>, vector<64x512xf32> -> vector<64x512xf32>
    %c0_16 = arith.constant 0 : index
    %c0_17 = arith.constant 0 : index
    %20 = vector.load %arg8[%c0_16, %c0_17] : memref<1x512xf32, #tpu.memory_space<vmem>>, vector<1x512xf32>
    %21 = vector.broadcast %20 : vector<1x512xf32> to vector<64x512xf32>
    %22 = arith.addf %19, %21 : vector<64x512xf32>
    %cst_18 = arith.constant 0.000000e+00 : f32
    %23 = vector.broadcast %cst_18 : f32 to vector<64x512xf32>
    %24 = arith.maximumf %22, %23 : vector<64x512xf32>
    %25 = arith.mulf %9, %24 : vector<64x512xf32>
    %c0_i32 = arith.constant 0 : i32
    %26 = arith.cmpi eq, %arg1, %c0_i32 : i32
    %27 = arith.extui %26 : i1 to i32
    %c0_i32_19 = arith.constant 0 : i32
    %28 = arith.cmpi ne, %27, %c0_i32_19 : i32
    scf.if %28 {
      %c0_22 = arith.constant 0 : index
      %c0_23 = arith.constant 0 : index
      %32 = vector.load %arg9[%c0_22, %c0_23] : memref<64x512xf32, #tpu.memory_space<vmem>>, vector<64x512xf32>
      tpu.vector_store %arg9[%c0_22, %c0_23], %25 {strides = array<i32>} : memref<64x512xf32, #tpu.memory_space<vmem>>, vector<64x512xf32>,
    } else {
    }
    %c0_i32_20 = arith.constant 0 : i32
    %29 = arith.cmpi sgt, %arg1, %c0_i32_20 : i32
    %30 = arith.extui %29 : i1 to i32
    %c0_i32_21 = arith.constant 0 : i32
    %31 = arith.cmpi ne, %30, %c0_i32_21 : i32
    scf.if %31 {
      %c0_22 = arith.constant 0 : index
      %c0_23 = arith.constant 0 : index
      %32 = vector.load %arg9[%c0_22, %c0_23] : memref<64x512xf32, #tpu.memory_space<vmem>>, vector<64x512xf32>
      %33 = arith.maximumf %32, %25 : vector<64x512xf32>
      %c0_24 = arith.constant 0 : index
      %c0_25 = arith.constant 0 : index
      %34 = vector.load %arg9[%c0_24, %c0_25] : memref<64x512xf32, #tpu.memory_space<vmem>>, vector<64x512xf32>
      tpu.vector_store %arg9[%c0_24, %c0_25], %33 {strides = array<i32>} : memref<64x512xf32, #tpu.memory_space<vmem>>, vector<64x512xf32>,
    } else {
    }
    return
  }
  func.func @transform_0(%arg0: i32, %arg1: i32) -> (i32, i32, i32) {
    %c0_i32 = arith.constant 0 : i32
    %c0_i32_0 = arith.constant 0 : i32
    return %arg1, %arg0, %c0_i32 : i32, i32, i32
  }
  func.func @transform_1(%arg0: i32, %arg1: i32) -> (i32, i32) {
    %c0_i32 = arith.constant 0 : i32
    %c0_i32_0 = arith.constant 0 : i32
    %c0_i32_1 = arith.constant 0 : i32
    return %c0_i32, %c0_i32_0 : i32, i32
  }
  func.func @transform_2(%arg0: i32, %arg1: i32) -> (i32, i32) {
    %c0_i32 = arith.constant 0 : i32
    %c0_i32_0 = arith.constant 0 : i32
    %c0_i32_1 = arith.constant 0 : i32
    return %c0_i32, %c0_i32_0 : i32, i32
  }
  func.func @transform_3(%arg0: i32, %arg1: i32) -> (i32, i32) {
    %c0_i32 = arith.constant 0 : i32
    %c0_i32_0 = arith.constant 0 : i32
    %c0_i32_1 = arith.constant 0 : i32
    return %c0_i32, %c0_i32_0 : i32, i32
  }
  func.func @transform_4(%arg0: i32, %arg1: i32) -> (i32, i32) {
    %c0_i32 = arith.constant 0 : i32
    %c0_i32_0 = arith.constant 0 : i32
    %c0_i32_1 = arith.constant 0 : i32
    return %c0_i32, %c0_i32_0 : i32, i32
  }
  func.func @transform_5(%arg0: i32, %arg1: i32) -> (i32, i32) {
    %c0_i32 = arith.constant 0 : i32
    %c0_i32_0 = arith.constant 0 : i32
    %c0_i32_1 = arith.constant 0 : i32
    return %c0_i32, %c0_i32_0 : i32, i32
  }
  func.func @transform_6(%arg0: i32, %arg1: i32) -> (i32, i32) {
    %c0_i32 = arith.constant 0 : i32
    %c0_i32_0 = arith.constant 0 : i32
    %c0_i32_1 = arith.constant 0 : i32
    return %c0_i32, %c0_i32_0 : i32, i32
  }
  func.func @transform_7(%arg0: i32, %arg1: i32) -> (i32, i32) {
    %c0_i32 = arith.constant 0 : i32
    %c0_i32_0 = arith.constant 0 : i32
    return %arg0, %c0_i32 : i32, i32
  }
}

module attributes {stable_mosaic.version = 11 : i64} {
  func.func @_linear_kernel(%arg0: i32, %arg1: memref<64x512xf32, #tpu.memory_space<vmem>>, %arg2: memref<512x1024xbf16, #tpu.memory_space<vmem>>, %arg3: memref<1x1024xf32, #tpu.memory_space<vmem>>, %arg4: memref<64x1024xf32, #tpu.memory_space<vmem>>) attributes {dimension_semantics = [#tpu.dimension_semantics<parallel>], iteration_bounds = array<i64: 1>, scalar_prefetch = 0 : i64, scratch_operands = 0 : i64, tpu.core_type = #tpu.core_type<tc>, window_params = [{transform_indices = @transform_0, window_bounds = array<i64: 64, 512>}, {pipeline_mode = #tpu.pipeline_mode<synchronous>, transform_indices = @transform_1, window_bounds = array<i64: 512, 1024>}, {pipeline_mode = #tpu.pipeline_mode<synchronous>, transform_indices = @transform_2, window_bounds = array<i64: 1, 1024>}, {transform_indices = @transform_3, window_bounds = array<i64: 64, 1024>}]} {
    %c0 = arith.constant 0 : index
    %c0_0 = arith.constant 0 : index
    %0 = vector.load %arg1[%c0, %c0_0] : memref<64x512xf32, #tpu.memory_space<vmem>>, vector<64x512xf32>
    %1 = arith.truncf %0 : vector<64x512xf32> to vector<64x512xbf16>
    %c0_1 = arith.constant 0 : index
    %c0_2 = arith.constant 0 : index
    %2 = vector.load %arg2[%c0_1, %c0_2] : memref<512x1024xbf16, #tpu.memory_space<vmem>>, vector<512x1024xbf16>
    %cst = arith.constant dense<0.000000e+00> : vector<64x1024xf32>
    %3 = tpu.matmul %1, %2, %cst {dimension_numbers = #tpu.dot_dimension_numbers<[1], [0], [0], [1], [0, 0, 1, 1], [], []>} : vector<64x512xbf16>, vector<512x1024xbf16>, vector<64x1024xf32> -> vector<64x1024xf32>
    %c0_3 = arith.constant 0 : index
    %c0_4 = arith.constant 0 : index
    %4 = vector.load %arg3[%c0_3, %c0_4] : memref<1x1024xf32, #tpu.memory_space<vmem>>, vector<1x1024xf32>
    %5 = vector.broadcast %4 : vector<1x1024xf32> to vector<64x1024xf32>
    %6 = arith.addf %3, %5 : vector<64x1024xf32>
    %cst_5 = arith.constant 0.000000e+00 : f32
    %7 = vector.broadcast %cst_5 : f32 to vector<64x1024xf32>
    %8 = arith.maximumf %6, %7 : vector<64x1024xf32>
    %c0_6 = arith.constant 0 : index
    %c0_7 = arith.constant 0 : index
    %9 = vector.load %arg4[%c0_6, %c0_7] : memref<64x1024xf32, #tpu.memory_space<vmem>>, vector<64x1024xf32>
    tpu.vector_store %arg4[%c0_6, %c0_7], %8 {strides = array<i32>} : memref<64x1024xf32, #tpu.memory_space<vmem>>, vector<64x1024xf32>,
    return
  }
  func.func @transform_0(%arg0: i32) -> (i32, i32) {
    %c0_i32 = arith.constant 0 : i32
    %c0_i32_0 = arith.constant 0 : i32
    return %arg0, %c0_i32 : i32, i32
  }
  func.func @transform_1(%arg0: i32) -> (i32, i32) {
    %c0_i32 = arith.constant 0 : i32
    %c0_i32_0 = arith.constant 0 : i32
    %c0_i32_1 = arith.constant 0 : i32
    return %c0_i32, %c0_i32_0 : i32, i32
  }
  func.func @transform_2(%arg0: i32) -> (i32, i32) {
    %c0_i32 = arith.constant 0 : i32
    %c0_i32_0 = arith.constant 0 : i32
    %c0_i32_1 = arith.constant 0 : i32
    return %c0_i32, %c0_i32_0 : i32, i32
  }
  func.func @transform_3(%arg0: i32) -> (i32, i32) {
    %c0_i32 = arith.constant 0 : i32
    %c0_i32_0 = arith.constant 0 : i32
    return %arg0, %c0_i32 : i32, i32
  }
}

</mosaic_0001>

<llo_original>
// kernel: _lambda_.5
$region0: #{_lambda_.5}
  #allocation0 [shape = 'u32[]', space=smem, size = 0x4, offset = 0x4, fixed_abs, tag = 'smem constant byte address 0x4 - core index']
  #allocation1 [shape = 'u32[144,128]{1,0:T(1,128)}', space=vmem, size = 0x12000, scoped, tag = 'internal scratch']
  %s0 = inlined_call_operand.vmem [shape: f32[8,512,4], index: 0, kind: input, shape index: {}]
  %s1 = inlined_call_operand.vmem [shape: bf16[4,32], index: 1, kind: input, shape index: {}]
  %s2 = inlined_call_operand.vmem [shape: f32[1,32], index: 2, kind: input, shape index: {}]
  %s3 = inlined_call_operand.vmem [shape: bf16[32,64], index: 3, kind: input, shape index: {}]
  %s4 = inlined_call_operand.vmem [shape: f32[1,64], index: 4, kind: input, shape index: {}]
  %s5 = inlined_call_operand.vmem [shape: f32[512,64], index: 5, kind: output, shape index: {}]
  %s6 = sld [smem:[#allocation0]]
  $region61: #{_lambda_.5} parent=0
    _
  %s8 = ssub.s32 1, %s6
  %s9 = scalar_select 0, %s8, %s6
  loop: start=0, step=1, limit=18
  $region2: #{_lambda_.5} parent=0 // loop_pre_header
    _
  $region3: #{_lambda_.5} parent=0 // loop_header
    %s11 = sphi 0, %s15
    %p12 = scmp.ge.s32.totalorder %s11, 18
    %s18 = sphi 0, %s30
    %s19 = sphi 0, %s26
    %s20 = sphi 0, %s18
    %s21 = sphi 0, %s19
    %s22 = sphi 0, %s20
    %s23 = sphi 0, %s21
    %s35 = sphi 0, %s37
    %s38 = sphi 0, %s35
    %s39 = sphi 0, %s38
    %s55 = sphi 0, %s39
    %s59 = sphi 0, %s59
    %s61 = sphi 0, %s59
    %s62 = sphi 0, %s61
    %s76 = sphi 0, %s62
    %s80 = sphi 0, %s80
    %s82 = sphi 0, %s80
    %s83 = sphi 0, %s82
    %s97 = sphi 0, %s83
    %s101 = sphi 0, %s101
    %s103 = sphi 0, %s101
    %s104 = sphi 0, %s103
    %s118 = sphi 0, %s104
    %s122 = sphi 0, %s122
    %s124 = sphi 0, %s122
    %s125 = sphi 0, %s124
    %s139 = sphi 0, %s125
    %s145 = sphi 0, %s147
    %s148 = sphi 0, %s145
    %s149 = sphi 0, %s148
    %s165 = sphi 0, %s149
  $region4: #{_lambda_.5} parent=0 // loop_header_branch
    %14 = sbr.rel (%p12) target = $region8
  $region5: #{_lambda_.5} parent=0 // loop_body
    %s16 = ssub.s32 %s11, 1
    %s17 = ssub.s32 %s11, 2
    %s24 = sadd.s32 1, %s19
    %p25 = scmp.ge.s32.totalorder %s24, 8
    %s26 = scalar_select %p25, 0, %s24
    %s27 = sadd.s32 1, %s18
    %s28 = scalar_select %p25, %s27, %s18
    %p29 = scmp.ge.s32.totalorder %s28, 2
    %s30 = scalar_select %p29, 0, %s28
    %s31 = ssub.s32 %s19, %s26
    %s32 = ssub.s32 %s18, %s30
    %s33 = sor.u32 %s31, %s32
    %p34 = scmp.eq.s32.totalorder %s33, 0
    %s36 = sadd.s32 %s35, 1
    %s37 = scalar_select %p34, %s35, %s36
    %p40 = pneg %p34
    %p41 = scmp.eq.s32.totalorder %s11, 15
    %p42 = por %p40, %p41
    %p43 = scmp.ne.s32.totalorder %s35, %s38
    %p44 = scmp.eq.s32.totalorder %s11, 0
    %p45 = por %p43, %p44
    %p46 = scmp.ne.s32.totalorder %s35, %s38
    %p47 = scmp.eq.s32.totalorder %s16, 15
    %p48 = por %p46, %p47
    %p49 = scmp.ne.s32.totalorder %s38, %s39
    %p50 = scmp.eq.s32.totalorder %s16, 0
    %p51 = por %p49, %p50
    %p52 = scmp.ne.s32.totalorder %s38, %s39
    %p53 = scmp.eq.s32.totalorder %s17, 15
    %p54 = por %p52, %p53
    %p56 = scmp.ne.s32.totalorder %s39, %s55
    %p57 = scmp.eq.s32.totalorder %s17, 0
    %p58 = por %p56, %p57
    %s60 = sadd.s32 %s59, 1
    %p63 = scmp.eq.s32.totalorder %s11, 15
    %p64 = scmp.ne.s32.totalorder %s59, %s61
    %p65 = scmp.eq.s32.totalorder %s11, 0
    %p66 = por %p64, %p65
    %p67 = scmp.ne.s32.totalorder %s59, %s61
    %p68 = scmp.eq.s32.totalorder %s16, 15
    %p69 = por %p67, %p68
    %p70 = scmp.ne.s32.totalorder %s61, %s62
    %p71 = scmp.eq.s32.totalorder %s16, 0
    %p72 = por %p70, %p71
    %p73 = scmp.ne.s32.totalorder %s61, %s62
    %p74 = scmp.eq.s32.totalorder %s17, 15
    %p75 = por %p73, %p74
    %p77 = scmp.ne.s32.totalorder %s62, %s76
    %p78 = scmp.eq.s32.totalorder %s17, 0
    %p79 = por %p77, %p78
    %s81 = sadd.s32 %s80, 1
    %p84 = scmp.eq.s32.totalorder %s11, 15
    %p85 = scmp.ne.s32.totalorder %s80, %s82
    %p86 = scmp.eq.s32.totalorder %s11, 0
    %p87 = por %p85, %p86
    %p88 = scmp.ne.s32.totalorder %s80, %s82
    %p89 = scmp.eq.s32.totalorder %s16, 15
    %p90 = por %p88, %p89
    %p91 = scmp.ne.s32.totalorder %s82, %s83
    %p92 = scmp.eq.s32.totalorder %s16, 0
    %p93 = por %p91, %p92
    %p94 = scmp.ne.s32.totalorder %s82, %s83
    %p95 = scmp.eq.s32.totalorder %s17, 15
    %p96 = por %p94, %p95
    %p98 = scmp.ne.s32.totalorder %s83, %s97
    %p99 = scmp.eq.s32.totalorder %s17, 0
    %p100 = por %p98, %p99
    %s102 = sadd.s32 %s101, 1
    %p105 = scmp.eq.s32.totalorder %s11, 15
    %p106 = scmp.ne.s32.totalorder %s101, %s103
    %p107 = scmp.eq.s32.totalorder %s11, 0
    %p108 = por %p106, %p107
    %p109 = scmp.ne.s32.totalorder %s101, %s103
    %p110 = scmp.eq.s32.totalorder %s16, 15
    %p111 = por %p109, %p110
    %p112 = scmp.ne.s32.totalorder %s103, %s104
    %p113 = scmp.eq.s32.totalorder %s16, 0
    %p114 = por %p112, %p113
    %p115 = scmp.ne.s32.totalorder %s103, %s104
    %p116 = scmp.eq.s32.totalorder %s17, 15
    %p117 = por %p115, %p116
    %p119 = scmp.ne.s32.totalorder %s104, %s118
    %p120 = scmp.eq.s32.totalorder %s17, 0
    %p121 = por %p119, %p120
    %s123 = sadd.s32 %s122, 1
    %p126 = scmp.eq.s32.totalorder %s11, 15
    %p127 = scmp.ne.s32.totalorder %s122, %s124
    %p128 = scmp.eq.s32.totalorder %s11, 0
    %p129 = por %p127, %p128
    %p130 = scmp.ne.s32.totalorder %s122, %s124
    %p131 = scmp.eq.s32.totalorder %s16, 15
    %p132 = por %p130, %p131
    %p133 = scmp.ne.s32.totalorder %s124, %s125
    %p134 = scmp.eq.s32.totalorder %s16, 0
    %p135 = por %p133, %p134
    %p136 = scmp.ne.s32.totalorder %s124, %s125
    %p137 = scmp.eq.s32.totalorder %s17, 15
    %p138 = por %p136, %p137
    %p140 = scmp.ne.s32.totalorder %s125, %s139
    %p141 = scmp.eq.s32.totalorder %s17, 0
    %p142 = por %p140, %p141
    %s143 = ssub.s32 %s18, %s30
    %p144 = scmp.eq.s32.totalorder %s143, 0
    %s146 = sadd.s32 %s145, 1
    %s147 = scalar_select %p144, %s145, %s146
    %p150 = pneg %p144
    %p151 = scmp.eq.s32.totalorder %s11, 15
    %p152 = por %p150, %p151
    %p153 = scmp.ne.s32.totalorder %s145, %s148
    %p154 = scmp.eq.s32.totalorder %s11, 0
    %p155 = por %p153, %p154
    %p156 = scmp.ne.s32.totalorder %s145, %s148
    %p157 = scmp.eq.s32.totalorder %s16, 15
    %p158 = por %p156, %p157
    %p159 = scmp.ne.s32.totalorder %s148, %s149
    %p160 = scmp.eq.s32.totalorder %s16, 0
    %p161 = por %p159, %p160
    %p162 = scmp.ne.s32.totalorder %s148, %s149
    %p163 = scmp.eq.s32.totalorder %s17, 15
    %p164 = por %p162, %p163
    %p166 = scmp.ne.s32.totalorder %s149, %s165
    %p167 = scmp.eq.s32.totalorder %s17, 0
    %p168 = por %p166, %p167
    %p169 = scmp.le.s32.totalorder 1, %s11
    %p170 = scmp.lt.s32.totalorder %s11, 17
    %p171 = pnand %p169, %p170
    %p172 = pneg %p171
    // Predicated region
    $region9: #{_lambda_.5} parent=5 // pred_check
      _
    $region10: #{_lambda_.5} parent=5 // pred_check_branch
      %174 = sbr.rel (%p171) target = $region12
    $region11: #{_lambda_.5} parent=5 // pred_region
      %s175 = ssub.s32 %s11, 1
      // Predicated region
      $region13: #{_lambda_.5} parent=11 // pred_check
        %p176 = pneg %p72
      $region14: #{_lambda_.5} parent=11 // pred_check_branch
        %178 = sbr.rel (%p176) target = $region16
      $region15: #{_lambda_.5} parent=11 // pred_region
        _
      $region16: #{_lambda_.5} parent=11 // pred_fallthru
        _
      // Predicated region
      $region17: #{_lambda_.5} parent=11 // pred_check
        %p179 = pneg %p93
      $region18: #{_lambda_.5} parent=11 // pred_check_branch
        %181 = sbr.rel (%p179) target = $region20
      $region19: #{_lambda_.5} parent=11 // pred_region
        _
      $region20: #{_lambda_.5} parent=11 // pred_fallthru
        _
      // Predicated region
      $region21: #{_lambda_.5} parent=11 // pred_check
        %p182 = pneg %p114
      $region22: #{_lambda_.5} parent=11 // pred_check_branch
        %184 = sbr.rel (%p182) target = $region24
      $region23: #{_lambda_.5} parent=11 // pred_region
        _
      $region24: #{_lambda_.5} parent=11 // pred_fallthru
        _
      // Predicated region
      $region25: #{_lambda_.5} parent=11 // pred_check
        %p185 = pneg %p135
      $region26: #{_lambda_.5} parent=11 // pred_check_branch
        %187 = sbr.rel (%p185) target = $region28
      $region27: #{_lambda_.5} parent=11 // pred_region
        _
      $region28: #{_lambda_.5} parent=11 // pred_fallthru
        _
    $region12: #{_lambda_.5} parent=5 // pred_fallthru
      _
    %p188 = scmp.lt.s32.totalorder %s11, 16
    // Predicated region
    $region29: #{_lambda_.5} parent=5 // pred_check
      %p189 = pneg %p188
    $region30: #{_lambda_.5} parent=5 // pred_check_branch
      %191 = sbr.rel (%p189) target = $region32
    $region31: #{_lambda_.5} parent=5 // pred_region
      // Predicated region
      $region33: #{_lambda_.5} parent=31 // pred_check
        %p192 = pneg %p45
      $region34: #{_lambda_.5} parent=31 // pred_check_branch
        %194 = sbr.rel (%p192) target = $region36
      $region35: #{_lambda_.5} parent=31 // pred_region
        %s195 = smul.u32 32, %s18
        %p196 = scmp.lt.s32.totalorder %s19, 7
        %s197 = scalar_select %p196, %s19, 7
        %p198 = scmp.lt.s32.totalorder %s195, 63
        %s199 = scalar_select %p198, %s195, 63
        %s200 = smul.addr %s197, 64
        %s201 = sadd.s32 %s199, %s200
        %s202 = smul.addr %s201, 8
        %s203 = scalar_lea.vmem %s0, %s202
        %s204 = smul.u32 32, %s18
      $region36: #{_lambda_.5} parent=31 // pred_fallthru
        _
    $region32: #{_lambda_.5} parent=5 // pred_fallthru
      _
    %p205 = scmp.le.s32.totalorder 1, %s11
    %p206 = scmp.lt.s32.totalorder %s11, 17
    %p207 = pnand %p205, %p206
    %p208 = pneg %p207
    // Predicated region
    $region37: #{_lambda_.5} parent=5 // pred_check
      _
    $region38: #{_lambda_.5} parent=5 // pred_check_branch
      %210 = sbr.rel (%p207) target = $region40
    $region39: #{_lambda_.5} parent=5 // pred_region
      %s211 = ssub.s32 %s11, 1
      %s212 = smul.u32 32, %s20
      %p213 = scmp.lt.s32.totalorder %s21, 7
      %s214 = scalar_select %p213, %s21, 7
      %p215 = scmp.lt.s32.totalorder %s212, 63
      %s216 = scalar_select %p215, %s212, 63
      %s217 = smul.addr %s214, 64
      %s218 = sadd.s32 %s216, %s217
      %s219 = smul.addr %s218, 8
      %s220 = scalar_lea.vmem %s0, %s219
      %p221 = pneg %p51
      %p222 = pneg %p48
      %p223 = pneg %p72
      %p224 = pneg %p69
      %p225 = pneg %p93
      %p226 = pneg %p90
      %p227 = pneg %p114
      %p228 = pneg %p111
      %p229 = pneg %p135
      %p230 = pneg %p132
      %p231 = pneg %p161
      %p232 = pneg %p158
      %s233 = smul.u32 32, %s20
      %p234 = scmp.lt.s32.totalorder %s233, 63
      %s235 = scalar_select %p234, %s233, 63
      %s236 = smul.addr %s235, 8
      %s237 = scalar_lea.vmem %s5, %s236
      %s238 = smul.u32 32, %s20
      %p239 = scmp.lt.s32.totalorder %s21, 7
      %s240 = scalar_select %p239, %s21, 7
      %p241 = scmp.lt.s32.totalorder %s238, 63
      %s242 = scalar_select %p241, %s238, 63
      %s243 = smul.addr %s240, 64
      %s244 = sadd.s32 %s242, %s243
      %s245 = smul.addr %s244, 8
      %s246 = scalar_lea.vmem %s0, %s245
      %s247 = smul.u32 32, %s20
      %s248 = smul.u32 32, %s20
      %p249 = scmp.lt.s32.totalorder %s248, 63
      %s250 = scalar_select %p249, %s248, 63
      %s251 = smul.addr %s250, 8
      %s252 = scalar_lea.vmem %s5, %s251
      %s253 = smul.u32 32, %s20
      %v255 = vld [vmem:[%s246] sm:$0xff]
      %v256 = vld [vmem:[%s246 + $0x8] sm:$0xff]
      %v257 = vld [vmem:[%s246 + $0x10] sm:$0xff]
      %v258 = vld [vmem:[%s246 + $0x18] sm:$0xff]
      %v259 = vld [vmem:[%s246 + $0x20] sm:$0xff]
      %v260 = vld [vmem:[%s246 + $0x28] sm:$0xff]
      %v261 = vld [vmem:[%s246 + $0x30] sm:$0xff]
      %v262 = vld [vmem:[%s246 + $0x38] sm:$0xff]
      %v263 = vld [vmem:[%s246 + $0x40] sm:$0xff]
      %v264 = vld [vmem:[%s246 + $0x48] sm:$0xff]
      %v265 = vld [vmem:[%s246 + $0x50] sm:$0xff]
      %v266 = vld [vmem:[%s246 + $0x58] sm:$0xff]
      %v267 = vld [vmem:[%s246 + $0x60] sm:$0xff]
      %v268 = vld [vmem:[%s246 + $0x68] sm:$0xff]
      %v269 = vld [vmem:[%s246 + $0x70] sm:$0xff]
      %v270 = vld [vmem:[%s246 + $0x78] sm:$0xff]
      %v271 = vld [vmem:[%s246 + $0x80] sm:$0xff]
      %v272 = vld [vmem:[%s246 + $0x88] sm:$0xff]
      %v273 = vld [vmem:[%s246 + $0x90] sm:$0xff]
      %v274 = vld [vmem:[%s246 + $0x98] sm:$0xff]
      %v275 = vld [vmem:[%s246 + $0xa0] sm:$0xff]
      %v276 = vld [vmem:[%s246 + $0xa8] sm:$0xff]
      %v277 = vld [vmem:[%s246 + $0xb0] sm:$0xff]
      %v278 = vld [vmem:[%s246 + $0xb8] sm:$0xff]
      %v279 = vld [vmem:[%s246 + $0xc0] sm:$0xff]
      %v280 = vld [vmem:[%s246 + $0xc8] sm:$0xff]
      %v281 = vld [vmem:[%s246 + $0xd0] sm:$0xff]
      %v282 = vld [vmem:[%s246 + $0xd8] sm:$0xff]
      %v283 = vld [vmem:[%s246 + $0xe0] sm:$0xff]
      %v284 = vld [vmem:[%s246 + $0xe8] sm:$0xff]
      %v285 = vld [vmem:[%s246 + $0xf0] sm:$0xff]
      %v286 = vld [vmem:[%s246 + $0xf8] sm:$0xff]
      %v287 = vpack.c.bf16 %v256, %v255
      %v288 = vpack.c.bf16 %v258, %v257
      %v289 = vpack.c.bf16 %v260, %v259
      %v290 = vpack.c.bf16 %v262, %v261
      %v291 = vpack.c.bf16 %v264, %v263
      %v292 = vpack.c.bf16 %v266, %v265
      %v293 = vpack.c.bf16 %v268, %v267
      %v294 = vpack.c.bf16 %v270, %v269
      %v295 = vpack.c.bf16 %v272, %v271
      %v296 = vpack.c.bf16 %v274, %v273
      %v297 = vpack.c.bf16 %v276, %v275
      %v298 = vpack.c.bf16 %v278, %v277
      %v299 = vpack.c.bf16 %v280, %v279
      %v300 = vpack.c.bf16 %v282, %v281
      %v301 = vpack.c.bf16 %v284, %v283
      %v302 = vpack.c.bf16 %v286, %v285
      %v303 = vld [vmem:[%s1] sm:$0x3]
      %v304 = vld [vmem:[%s2] sm:$0x1]
      %v306 = vlaneseq
      %v307 = vshrl.u32 %v306, 7
      %v308 = vsub.s32 0, %v307
      %v309 = vrot.slane %v304, %v308
      %vm311 = vcmask 31744
      %v313 = vsel %vm311, %v287, 0
      %v316 = vsel %vm311, %v288, 0
      %v319 = vsel %vm311, %v289, 0
      %v322 = vsel %vm311, %v290, 0
      %v325 = vsel %vm311, %v291, 0
      %v328 = vsel %vm311, %v292, 0
      %v331 = vsel %vm311, %v293, 0
      %v334 = vsel %vm311, %v294, 0
      %v337 = vsel %vm311, %v295, 0
      %v340 = vsel %vm311, %v296, 0
      %v343 = vsel %vm311, %v297, 0
      %v346 = vsel %vm311, %v298, 0
      %v349 = vsel %vm311, %v299, 0
      %v352 = vsel %vm311, %v300, 0
      %v355 = vsel %vm311, %v301, 0
      %v358 = vsel %vm311, %v302, 0
      %vm360 = vcmask 1041408
      %v362 = vsel %vm360, %v303, 0
      %364 = vmatprep.subr.bf16.mxu0 0
      %365 = vmatpush1.bf16.msra.mxu0 0
      %366 = vmatprep.subr.bf16.mxu0 0
      %367 = vmatpush1.bf16.msra.mxu0 0
      %368 = vmatprep.subr.bf16.mxu0 0
      %369 = vmatpush1.bf16.msra.mxu0 0
      %370 = vmatprep.subr.bf16.mxu0 0
      %371 = vmatpush1.bf16.msra.mxu0 0
      %372 = vmatprep.subr.bf16.mxu0 0
      %373 = vmatpush1.bf16.msra.mxu0 0
      %374 = vmatprep.subr.bf16.mxu0 0
      %375 = vmatpush1.bf16.msra.mxu0 0
      %376 = vmatprep.subr.bf16.mxu0 0
      %377 = vmatpush1.bf16.msra.mxu0 0
      %378 = vmatprep.subr.bf16.mxu0 0
      %379 = vmatpush1.bf16.msra.mxu0 %v362
      %380 = vmatprep.subr.bf16.mxu0 0
      %381 = vmatpush2.bf16.msra.mxu0 0
      %382 = vmatprep.subr.bf16.mxu0 0
      %383 = vmatpush2.bf16.msra.mxu0 0
      %384 = vmatprep.subr.bf16.mxu0 0
      %385 = vmatpush2.bf16.msra.mxu0 0
      %386 = vmatprep.subr.bf16.mxu0 0
      %387 = vmatpush2.bf16.msra.mxu0 0
      %388 = vmatprep.subr.bf16.mxu0 0
      %389 = vmatpush2.bf16.msra.mxu0 0
      %390 = vmatprep.subr.bf16.mxu0 0
      %391 = vmatpush2.bf16.msra.mxu0 0
      %392 = vmatprep.subr.bf16.mxu0 0
      %393 = vmatpush2.bf16.msra.mxu0 0
      %394 = vmatprep.subr.bf16.mxu0 0
      %395 = vmatpush2.bf16.msra.mxu0 0
      %396 = vmatprep.mubr.bf16.mxu0 0
      %397 = vmatmul.mubr.bf16.gmra.mxu0 %v313
      %v398 = vpop.f32.mrf.mxu0
      %v399 = vadd.f32 %v309, %v398
      %v400 = vpop.f32.mrf.mxu0
      %v401 = vpop.f32.mrf.mxu0
      %v402 = vadd.f32 %v309, %v401
      %v403 = vpop.f32.mrf.mxu0
      %404 = vmatprep.mubr.bf16.mxu0 0
      %405 = vmatmul.mubr.bf16.gmra.mxu0 %v316
      %v406 = vpop.f32.mrf.mxu0
      %v407 = vadd.f32 %v309, %v406
      %v408 = vpop.f32.mrf.mxu0
      %v409 = vpop.f32.mrf.mxu0
      %v410 = vadd.f32 %v309, %v409
      %v411 = vpop.f32.mrf.mxu0
      %412 = vmatprep.mubr.bf16.mxu0 0
      %413 = vmatmul.mubr.bf16.gmra.mxu0 %v319
      %v414 = vpop.f32.mrf.mxu0
      %v415 = vadd.f32 %v309, %v414
      %v416 = vpop.f32.mrf.mxu0
      %v417 = vpop.f32.mrf.mxu0
      %v418 = vadd.f32 %v309, %v417
      %v419 = vpop.f32.mrf.mxu0
      %420 = vmatprep.mubr.bf16.mxu0 0
      %421 = vmatmul.mubr.bf16.gmra.mxu0 %v322
      %v422 = vpop.f32.mrf.mxu0
      %v423 = vadd.f32 %v309, %v422
      %v424 = vpop.f32.mrf.mxu0
      %v425 = vpop.f32.mrf.mxu0
      %v426 = vadd.f32 %v309, %v425
      %v427 = vpop.f32.mrf.mxu0
      %428 = vmatprep.mubr.bf16.mxu0 0
      %429 = vmatmul.mubr.bf16.gmra.mxu0 %v325
      %v430 = vpop.f32.mrf.mxu0
      %v431 = vadd.f32 %v309, %v430
      %v432 = vpop.f32.mrf.mxu0
      %v433 = vpop.f32.mrf.mxu0
      %v434 = vadd.f32 %v309, %v433
      %v435 = vpop.f32.mrf.mxu0
      %436 = vmatprep.mubr.bf16.mxu0 0
      %437 = vmatmul.mubr.bf16.gmra.mxu0 %v328
      %v438 = vpop.f32.mrf.mxu0
      %v439 = vadd.f32 %v309, %v438
      %v440 = vpop.f32.mrf.mxu0
      %v441 = vpop.f32.mrf.mxu0
      %v442 = vadd.f32 %v309, %v441
      %v443 = vpop.f32.mrf.mxu0
      %444 = vmatprep.mubr.bf16.mxu0 0
      %445 = vmatmul.mubr.bf16.gmra.mxu0 %v331
      %v446 = vpop.f32.mrf.mxu0
      %v447 = vadd.f32 %v309, %v446
      %v448 = vpop.f32.mrf.mxu0
      %v449 = vpop.f32.mrf.mxu0
      %v450 = vadd.f32 %v309, %v449
      %v451 = vpop.f32.mrf.mxu0
      %452 = vmatprep.mubr.bf16.mxu0 0
      %453 = vmatmul.mubr.bf16.gmra.mxu0 %v334
      %v454 = vpop.f32.mrf.mxu0
      %v455 = vadd.f32 %v309, %v454
      %v456 = vpop.f32.mrf.mxu0
      %v457 = vpop.f32.mrf.mxu0
      %v458 = vadd.f32 %v309, %v457
      %v459 = vpop.f32.mrf.mxu0
      %460 = vmatprep.mubr.bf16.mxu0 0
      %461 = vmatmul.mubr.bf16.gmra.mxu0 %v337
      %v462 = vpop.f32.mrf.mxu0
      %v463 = vadd.f32 %v309, %v462
      %v464 = vpop.f32.mrf.mxu0
      %v465 = vpop.f32.mrf.mxu0
      %v466 = vadd.f32 %v309, %v465
      %v467 = vpop.f32.mrf.mxu0
      %468 = vmatprep.mubr.bf16.mxu0 0
      %469 = vmatmul.mubr.bf16.gmra.mxu0 %v340
      %v470 = vpop.f32.mrf.mxu0
      %v471 = vadd.f32 %v309, %v470
      %v472 = vpop.f32.mrf.mxu0
      %v473 = vpop.f32.mrf.mxu0
      %v474 = vadd.f32 %v309, %v473
      %v475 = vpop.f32.mrf.mxu0
      %476 = vmatprep.mubr.bf16.mxu0 0
      %477 = vmatmul.mubr.bf16.gmra.mxu0 %v343
      %v478 = vpop.f32.mrf.mxu0
      %v479 = vadd.f32 %v309, %v478
      %v480 = vpop.f32.mrf.mxu0
      %v481 = vpop.f32.mrf.mxu0
      %v482 = vadd.f32 %v309, %v481
      %v483 = vpop.f32.mrf.mxu0
      %484 = vmatprep.mubr.bf16.mxu0 0
      %485 = vmatmul.mubr.bf16.gmra.mxu0 %v346
      %v486 = vpop.f32.mrf.mxu0
      %v487 = vadd.f32 %v309, %v486
      %v488 = vpop.f32.mrf.mxu0
      %v489 = vpop.f32.mrf.mxu0
      %v490 = vadd.f32 %v309, %v489
      %v491 = vpop.f32.mrf.mxu0
      %492 = vmatprep.mubr.bf16.mxu0 0
      %493 = vmatmul.mubr.bf16.gmra.mxu0 %v349
      %v494 = vpop.f32.mrf.mxu0
      %v495 = vadd.f32 %v309, %v494
      %v496 = vpop.f32.mrf.mxu0
      %v497 = vpop.f32.mrf.mxu0
      %v498 = vadd.f32 %v309, %v497
      %v499 = vpop.f32.mrf.mxu0
      %500 = vmatprep.mubr.bf16.mxu0 0
      %501 = vmatmul.mubr.bf16.gmra.mxu0 %v352
      %v502 = vpop.f32.mrf.mxu0
      %v503 = vadd.f32 %v309, %v502
      %v504 = vpop.f32.mrf.mxu0
      %v505 = vpop.f32.mrf.mxu0
      %v506 = vadd.f32 %v309, %v505
      %v507 = vpop.f32.mrf.mxu0
      %508 = vmatprep.mubr.bf16.mxu0 0
      %509 = vmatmul.mubr.bf16.gmra.mxu0 %v355
      %v510 = vpop.f32.mrf.mxu0
      %v511 = vadd.f32 %v309, %v510
      %v512 = vpop.f32.mrf.mxu0
      %v513 = vpop.f32.mrf.mxu0
      %v514 = vadd.f32 %v309, %v513
      %v515 = vpop.f32.mrf.mxu0
      %516 = vmatprep.mubr.bf16.mxu0 0
      %517 = vmatmul.mubr.bf16.gmra.mxu0 %v358
      %v518 = vpop.f32.mrf.mxu0
      %v519 = vadd.f32 %v309, %v518
      %v520 = vpop.f32.mrf.mxu0
      %v521 = vpop.f32.mrf.mxu0
      %v522 = vadd.f32 %v309, %v521
      %v523 = vpop.f32.mrf.mxu0
      %524 = vdwg.mxu0
      %v525 = vmax.f32 %v399, 0.0
      %v526 = vmax.f32 %v402, 0.0
      %v527 = vmax.f32 %v407, 0.0
      %v528 = vmax.f32 %v410, 0.0
      %v529 = vmax.f32 %v415, 0.0
      %v530 = vmax.f32 %v418, 0.0
      %v531 = vmax.f32 %v423, 0.0
      %v532 = vmax.f32 %v426, 0.0
      %v533 = vmax.f32 %v431, 0.0
      %v534 = vmax.f32 %v434, 0.0
      %v535 = vmax.f32 %v439, 0.0
      %v536 = vmax.f32 %v442, 0.0
      %v537 = vmax.f32 %v447, 0.0
      %v538 = vmax.f32 %v450, 0.0
      %v539 = vmax.f32 %v455, 0.0
      %v540 = vmax.f32 %v458, 0.0
      %v541 = vmax.f32 %v463, 0.0
      %v542 = vmax.f32 %v466, 0.0
      %v543 = vmax.f32 %v471, 0.0
      %v544 = vmax.f32 %v474, 0.0
      %v545 = vmax.f32 %v479, 0.0
      %v546 = vmax.f32 %v482, 0.0
      %v547 = vmax.f32 %v487, 0.0
      %v548 = vmax.f32 %v490, 0.0
      %v549 = vmax.f32 %v495, 0.0
      %v550 = vmax.f32 %v498, 0.0
      %v551 = vmax.f32 %v503, 0.0
      %v552 = vmax.f32 %v506, 0.0
      %v553 = vmax.f32 %v511, 0.0
      %v554 = vmax.f32 %v514, 0.0
      %v555 = vmax.f32 %v519, 0.0
      %v556 = vmax.f32 %v522, 0.0
      %v557 = vpack.c.bf16 %v526, %v525
      %v558 = vpack.c.bf16 %v528, %v527
      %v559 = vpack.c.bf16 %v530, %v529
      %v560 = vpack.c.bf16 %v532, %v531
      %v561 = vpack.c.bf16 %v534, %v533
      %v562 = vpack.c.bf16 %v536, %v535
      %v563 = vpack.c.bf16 %v538, %v537
      %v564 = vpack.c.bf16 %v540, %v539
      %v565 = vpack.c.bf16 %v542, %v541
      %v566 = vpack.c.bf16 %v544, %v543
      %v567 = vpack.c.bf16 %v546, %v545
      %v568 = vpack.c.bf16 %v548, %v547
      %v569 = vpack.c.bf16 %v550, %v549
      %v570 = vpack.c.bf16 %v552, %v551
      %v571 = vpack.c.bf16 %v554, %v553
      %v572 = vpack.c.bf16 %v556, %v555
      %v573 = vld [vmem:[%s3] sm:$0xf]
      %v574 = vld [vmem:[%s3 + $0x4] sm:$0xf]
      %v575 = vld [vmem:[%s3 + $0x8] sm:$0xf]
      %v576 = vld [vmem:[%s3 + $0xc] sm:$0xf]
      %v577 = vld [vmem:[%s4] sm:$0x1]
      %v579 = vlaneseq
      %v580 = vshrl.u32 %v579, 7
      %v581 = vsub.s32 0, %v580
      %v582 = vrot.slane %v577, %v581
      %v588 = vunpack.c.l.b16 %v573
      %v589 = vunpack.c.l.b16 %v574
      %v590 = vunpack.c.l.b16 %v575
      %v591 = vunpack.c.l.b16 %v576
      %v592 = vpack.c.b16 %v589, %v588
      %v593 = vpack.c.b16 %v591, %v590
      %vm596 = vcmask 261120
      %v598 = vsel %vm596, %v557, 0
      %v601 = vsel %vm596, %v558, 0
      %v604 = vsel %vm596, %v559, 0
      %v607 = vsel %vm596, %v560, 0
      %v610 = vsel %vm596, %v561, 0
      %v613 = vsel %vm596, %v562, 0
      %v616 = vsel %vm596, %v563, 0
      %v619 = vsel %vm596, %v564, 0
      %v622 = vsel %vm596, %v565, 0
      %v625 = vsel %vm596, %v566, 0
      %v628 = vsel %vm596, %v567, 0
      %v631 = vsel %vm596, %v568, 0
      %v634 = vsel %vm596, %v569, 0
      %v637 = vsel %vm596, %v570, 0
      %v640 = vsel %vm596, %v571, 0
      %v643 = vsel %vm596, %v572, 0
      %645 = vmatprep.subr.bf16.mxu0 0
      %646 = vmatpush1.bf16.msra.mxu0 0
      %647 = vmatprep.subr.bf16.mxu0 0
      %648 = vmatpush1.bf16.msra.mxu0 0
      %649 = vmatprep.subr.bf16.mxu0 0
      %650 = vmatpush1.bf16.msra.mxu0 0
      %651 = vmatprep.subr.bf16.mxu0 0
      %652 = vmatpush1.bf16.msra.mxu0 0
      %653 = vmatprep.subr.bf16.mxu0 0
      %654 = vmatpush1.bf16.msra.mxu0 0
      %655 = vmatprep.subr.bf16.mxu0 0
      %656 = vmatpush1.bf16.msra.mxu0 0
      %657 = vmatprep.subr.bf16.mxu0 0
      %658 = vmatpush1.bf16.msra.mxu0 %v593
      %659 = vmatprep.subr.bf16.mxu0 0
      %660 = vmatpush1.bf16.msra.mxu0 %v592
      %661 = vmatprep.subr.bf16.mxu0 0
      %662 = vmatpush2.bf16.msra.mxu0 0
      %663 = vmatprep.subr.bf16.mxu0 0
      %664 = vmatpush2.bf16.msra.mxu0 0
      %665 = vmatprep.subr.bf16.mxu0 0
      %666 = vmatpush2.bf16.msra.mxu0 0
      %667 = vmatprep.subr.bf16.mxu0 0
      %668 = vmatpush2.bf16.msra.mxu0 0
      %669 = vmatprep.subr.bf16.mxu0 0
      %670 = vmatpush2.bf16.msra.mxu0 0
      %671 = vmatprep.subr.bf16.mxu0 0
      %672 = vmatpush2.bf16.msra.mxu0 0
      %673 = vmatprep.subr.bf16.mxu0 0
      %674 = vmatpush2.bf16.msra.mxu0 0
      %675 = vmatprep.subr.bf16.mxu0 0
      %676 = vmatpush2.bf16.msra.mxu0 0
      %677 = vmatprep.mubr.bf16.mxu0 0
      %678 = vmatmul.mubr.bf16.gmra.mxu0 %v598
      %v679 = vpop.f32.mrf.mxu0
      %v680 = vadd.f32 %v582, %v679
      %v681 = vpop.f32.mrf.mxu0
      %v682 = vpop.f32.mrf.mxu0
      %v683 = vadd.f32 %v582, %v682
      %v684 = vpop.f32.mrf.mxu0
      %685 = vmatprep.mubr.bf16.mxu0 0
      %686 = vmatmul.mubr.bf16.gmra.mxu0 %v601
      %v687 = vpop.f32.mrf.mxu0
      %v688 = vadd.f32 %v582, %v687
      %v689 = vpop.f32.mrf.mxu0
      %v690 = vpop.f32.mrf.mxu0
      %v691 = vadd.f32 %v582, %v690
      %v692 = vpop.f32.mrf.mxu0
      %693 = vmatprep.mubr.bf16.mxu0 0
      %694 = vmatmul.mubr.bf16.gmra.mxu0 %v604
      %v695 = vpop.f32.mrf.mxu0
      %v696 = vadd.f32 %v582, %v695
      %v697 = vpop.f32.mrf.mxu0
      %v698 = vpop.f32.mrf.mxu0
      %v699 = vadd.f32 %v582, %v698
      %v700 = vpop.f32.mrf.mxu0
      %701 = vmatprep.mubr.bf16.mxu0 0
      %702 = vmatmul.mubr.bf16.gmra.mxu0 %v607
      %v703 = vpop.f32.mrf.mxu0
      %v704 = vadd.f32 %v582, %v703
      %v705 = vpop.f32.mrf.mxu0
      %v706 = vpop.f32.mrf.mxu0
      %v707 = vadd.f32 %v582, %v706
      %v708 = vpop.f32.mrf.mxu0
      %709 = vmatprep.mubr.bf16.mxu0 0
      %710 = vmatmul.mubr.bf16.gmra.mxu0 %v610
      %v711 = vpop.f32.mrf.mxu0
      %v712 = vadd.f32 %v582, %v711
      %v713 = vpop.f32.mrf.mxu0
      %v714 = vpop.f32.mrf.mxu0
      %v715 = vadd.f32 %v582, %v714
      %v716 = vpop.f32.mrf.mxu0
      %717 = vmatprep.mubr.bf16.mxu0 0
      %718 = vmatmul.mubr.bf16.gmra.mxu0 %v613
      %v719 = vpop.f32.mrf.mxu0
      %v720 = vadd.f32 %v582, %v719
      %v721 = vpop.f32.mrf.mxu0
      %v722 = vpop.f32.mrf.mxu0
      %v723 = vadd.f32 %v582, %v722
      %v724 = vpop.f32.mrf.mxu0
      %725 = vmatprep.mubr.bf16.mxu0 0
      %726 = vmatmul.mubr.bf16.gmra.mxu0 %v616
      %v727 = vpop.f32.mrf.mxu0
      %v728 = vadd.f32 %v582, %v727
      %v729 = vpop.f32.mrf.mxu0
      %v730 = vpop.f32.mrf.mxu0
      %v731 = vadd.f32 %v582, %v730
      %v732 = vpop.f32.mrf.mxu0
      %733 = vmatprep.mubr.bf16.mxu0 0
      %734 = vmatmul.mubr.bf16.gmra.mxu0 %v619
      %v735 = vpop.f32.mrf.mxu0
      %v736 = vadd.f32 %v582, %v735
      %v737 = vpop.f32.mrf.mxu0
      %v738 = vpop.f32.mrf.mxu0
      %v739 = vadd.f32 %v582, %v738
      %v740 = vpop.f32.mrf.mxu0
      %741 = vmatprep.mubr.bf16.mxu0 0
      %742 = vmatmul.mubr.bf16.gmra.mxu0 %v622
      %v743 = vpop.f32.mrf.mxu0
      %v744 = vadd.f32 %v582, %v743
      %v745 = vpop.f32.mrf.mxu0
      %v746 = vpop.f32.mrf.mxu0
      %v747 = vadd.f32 %v582, %v746
      %v748 = vpop.f32.mrf.mxu0
      %749 = vmatprep.mubr.bf16.mxu0 0
      %750 = vmatmul.mubr.bf16.gmra.mxu0 %v625
      %v751 = vpop.f32.mrf.mxu0
      %v752 = vadd.f32 %v582, %v751
      %v753 = vpop.f32.mrf.mxu0
      %v754 = vpop.f32.mrf.mxu0
      %v755 = vadd.f32 %v582, %v754
      %v756 = vpop.f32.mrf.mxu0
      %757 = vmatprep.mubr.bf16.mxu0 0
      %758 = vmatmul.mubr.bf16.gmra.mxu0 %v628
      %v759 = vpop.f32.mrf.mxu0
      %v760 = vadd.f32 %v582, %v759
      %v761 = vpop.f32.mrf.mxu0
      %v762 = vpop.f32.mrf.mxu0
      %v763 = vadd.f32 %v582, %v762
      %v764 = vpop.f32.mrf.mxu0
      %765 = vmatprep.mubr.bf16.mxu0 0
      %766 = vmatmul.mubr.bf16.gmra.mxu0 %v631
      %v767 = vpop.f32.mrf.mxu0
      %v768 = vadd.f32 %v582, %v767
      %v769 = vpop.f32.mrf.mxu0
      %v770 = vpop.f32.mrf.mxu0
      %v771 = vadd.f32 %v582, %v770
      %v772 = vpop.f32.mrf.mxu0
      %773 = vmatprep.mubr.bf16.mxu0 0
      %774 = vmatmul.mubr.bf16.gmra.mxu0 %v634
      %v775 = vpop.f32.mrf.mxu0
      %v776 = vadd.f32 %v582, %v775
      %v777 = vpop.f32.mrf.mxu0
      %v778 = vpop.f32.mrf.mxu0
      %v779 = vadd.f32 %v582, %v778
      %v780 = vpop.f32.mrf.mxu0
      %781 = vmatprep.mubr.bf16.mxu0 0
      %782 = vmatmul.mubr.bf16.gmra.mxu0 %v637
      %v783 = vpop.f32.mrf.mxu0
      %v784 = vadd.f32 %v582, %v783
      %v785 = vpop.f32.mrf.mxu0
      %v786 = vpop.f32.mrf.mxu0
      %v787 = vadd.f32 %v582, %v786
      %v788 = vpop.f32.mrf.mxu0
      %789 = vmatprep.mubr.bf16.mxu0 0
      %790 = vmatmul.mubr.bf16.gmra.mxu0 %v640
      %v791 = vpop.f32.mrf.mxu0
      %v792 = vadd.f32 %v582, %v791
      %v793 = vpop.f32.mrf.mxu0
      %v794 = vpop.f32.mrf.mxu0
      %v795 = vadd.f32 %v582, %v794
      %v796 = vpop.f32.mrf.mxu0
      %797 = vmatprep.mubr.bf16.mxu0 0
      %798 = vmatmul.mubr.bf16.gmra.mxu0 %v643
      %v799 = vpop.f32.mrf.mxu0
      %v800 = vadd.f32 %v582, %v799
      %v801 = vpop.f32.mrf.mxu0
      %v802 = vpop.f32.mrf.mxu0
      %v803 = vadd.f32 %v582, %v802
      %v804 = vpop.f32.mrf.mxu0
      %805 = vdwg.mxu0
      %v806 = vmax.f32 %v680, 0.0
      %v807 = vmax.f32 %v683, 0.0
      %v808 = vmax.f32 %v688, 0.0
      %v809 = vmax.f32 %v691, 0.0
      %v810 = vmax.f32 %v696, 0.0
      %v811 = vmax.f32 %v699, 0.0
      %v812 = vmax.f32 %v704, 0.0
      %v813 = vmax.f32 %v707, 0.0
      %v814 = vmax.f32 %v712, 0.0
      %v815 = vmax.f32 %v715, 0.0
      %v816 = vmax.f32 %v720, 0.0
      %v817 = vmax.f32 %v723, 0.0
      %v818 = vmax.f32 %v728, 0.0
      %v819 = vmax.f32 %v731, 0.0
      %v820 = vmax.f32 %v736, 0.0
      %v821 = vmax.f32 %v739, 0.0
      %v822 = vmax.f32 %v744, 0.0
      %v823 = vmax.f32 %v747, 0.0
      %v824 = vmax.f32 %v752, 0.0
      %v825 = vmax.f32 %v755, 0.0
      %v826 = vmax.f32 %v760, 0.0
      %v827 = vmax.f32 %v763, 0.0
      %v828 = vmax.f32 %v768, 0.0
      %v829 = vmax.f32 %v771, 0.0
      %v830 = vmax.f32 %v776, 0.0
      %v831 = vmax.f32 %v779, 0.0
      %v832 = vmax.f32 %v784, 0.0
      %v833 = vmax.f32 %v787, 0.0
      %v834 = vmax.f32 %v792, 0.0
      %v835 = vmax.f32 %v795, 0.0
      %v836 = vmax.f32 %v800, 0.0
      %v837 = vmax.f32 %v803, 0.0
      %p838 = scmp.eq.s32.totalorder %s21, 0
      // Predicated region
      $region41: #{_lambda_.5} parent=39 // pred_check
        %p839 = pneg %p838
      $region42: #{_lambda_.5} parent=39 // pred_check_branch
        %841 = sbr.rel (%p839) target = $region44
      $region43: #{_lambda_.5} parent=39 // pred_region
        %vm842 = vcmask 523264
        %843 = vst.msk [vmem:[%s252] sm:$0xff] %vm842, %v806
        %844 = vst.msk [vmem:[%s252 + $0x8] sm:$0xff] %vm842, %v807
        %845 = vst.msk [vmem:[%s252 + $0x10] sm:$0xff] %vm842, %v808
        %846 = vst.msk [vmem:[%s252 + $0x18] sm:$0xff] %vm842, %v809
        %847 = vst.msk [vmem:[%s252 + $0x20] sm:$0xff] %vm842, %v810
        %848 = vst.msk [vmem:[%s252 + $0x28] sm:$0xff] %vm842, %v811
        %849 = vst.msk [vmem:[%s252 + $0x30] sm:$0xff] %vm842, %v812
        %850 = vst.msk [vmem:[%s252 + $0x38] sm:$0xff] %vm842, %v813
        %851 = vst.msk [vmem:[%s252 + $0x40] sm:$0xff] %vm842, %v814
        %852 = vst.msk [vmem:[%s252 + $0x48] sm:$0xff] %vm842, %v815
        %853 = vst.msk [vmem:[%s252 + $0x50] sm:$0xff] %vm842, %v816
        %854 = vst.msk [vmem:[%s252 + $0x58] sm:$0xff] %vm842, %v817
        %855 = vst.msk [vmem:[%s252 + $0x60] sm:$0xff] %vm842, %v818
        %856 = vst.msk [vmem:[%s252 + $0x68] sm:$0xff] %vm842, %v819
        %857 = vst.msk [vmem:[%s252 + $0x70] sm:$0xff] %vm842, %v820
        %858 = vst.msk [vmem:[%s252 + $0x78] sm:$0xff] %vm842, %v821
        %859 = vst.msk [vmem:[%s252 + $0x80] sm:$0xff] %vm842, %v822
        %860 = vst.msk [vmem:[%s252 + $0x88] sm:$0xff] %vm842, %v823
        %861 = vst.msk [vmem:[%s252 + $0x90] sm:$0xff] %vm842, %v824
        %862 = vst.msk [vmem:[%s252 + $0x98] sm:$0xff] %vm842, %v825
        %863 = vst.msk [vmem:[%s252 + $0xa0] sm:$0xff] %vm842, %v826
        %864 = vst.msk [vmem:[%s252 + $0xa8] sm:$0xff] %vm842, %v827
        %865 = vst.msk [vmem:[%s252 + $0xb0] sm:$0xff] %vm842, %v828
        %866 = vst.msk [vmem:[%s252 + $0xb8] sm:$0xff] %vm842, %v829
        %867 = vst.msk [vmem:[%s252 + $0xc0] sm:$0xff] %vm842, %v830
        %868 = vst.msk [vmem:[%s252 + $0xc8] sm:$0xff] %vm842, %v831
        %869 = vst.msk [vmem:[%s252 + $0xd0] sm:$0xff] %vm842, %v832
        %870 = vst.msk [vmem:[%s252 + $0xd8] sm:$0xff] %vm842, %v833
        %871 = vst.msk [vmem:[%s252 + $0xe0] sm:$0xff] %vm842, %v834
        %872 = vst.msk [vmem:[%s252 + $0xe8] sm:$0xff] %vm842, %v835
        %873 = vst.msk [vmem:[%s252 + $0xf0] sm:$0xff] %vm842, %v836
        %874 = vst.msk [vmem:[%s252 + $0xf8] sm:$0xff] %vm842, %v837
      $region44: #{_lambda_.5} parent=39 // pred_fallthru
        _
      %p875 = scmp.gt.s32.totalorder %s21, 0
      // Predicated region
      $region45: #{_lambda_.5} parent=39 // pred_check
        %p876 = pneg %p875
      $region46: #{_lambda_.5} parent=39 // pred_check_branch
        %878 = sbr.rel (%p876) target = $region48
      $region47: #{_lambda_.5} parent=39 // pred_region
        %v879 = vld [vmem:[%s252] sm:$0xff]
        %v880 = vld [vmem:[%s252 + $0x8] sm:$0xff]
        %v881 = vld [vmem:[%s252 + $0x10] sm:$0xff]
        %v882 = vld [vmem:[%s252 + $0x18] sm:$0xff]
        %v883 = vld [vmem:[%s252 + $0x20] sm:$0xff]
        %v884 = vld [vmem:[%s252 + $0x28] sm:$0xff]
        %v885 = vld [vmem:[%s252 + $0x30] sm:$0xff]
        %v886 = vld [vmem:[%s252 + $0x38] sm:$0xff]
        %v887 = vld [vmem:[%s252 + $0x40] sm:$0xff]
        %v888 = vld [vmem:[%s252 + $0x48] sm:$0xff]
        %v889 = vld [vmem:[%s252 + $0x50] sm:$0xff]
        %v890 = vld [vmem:[%s252 + $0x58] sm:$0xff]
        %v891 = vld [vmem:[%s252 + $0x60] sm:$0xff]
        %v892 = vld [vmem:[%s252 + $0x68] sm:$0xff]
        %v893 = vld [vmem:[%s252 + $0x70] sm:$0xff]
        %v894 = vld [vmem:[%s252 + $0x78] sm:$0xff]
        %v895 = vld [vmem:[%s252 + $0x80] sm:$0xff]
        %v896 = vld [vmem:[%s252 + $0x88] sm:$0xff]
        %v897 = vld [vmem:[%s252 + $0x90] sm:$0xff]
        %v898 = vld [vmem:[%s252 + $0x98] sm:$0xff]
        %v899 = vld [vmem:[%s252 + $0xa0] sm:$0xff]
        %v900 = vld [vmem:[%s252 + $0xa8] sm:$0xff]
        %v901 = vld [vmem:[%s252 + $0xb0] sm:$0xff]
        %v902 = vld [vmem:[%s252 + $0xb8] sm:$0xff]
        %v903 = vld [vmem:[%s252 + $0xc0] sm:$0xff]
        %v904 = vld [vmem:[%s252 + $0xc8] sm:$0xff]
        %v905 = vld [vmem:[%s252 + $0xd0] sm:$0xff]
        %v906 = vld [vmem:[%s252 + $0xd8] sm:$0xff]
        %v907 = vld [vmem:[%s252 + $0xe0] sm:$0xff]
        %v908 = vld [vmem:[%s252 + $0xe8] sm:$0xff]
        %v909 = vld [vmem:[%s252 + $0xf0] sm:$0xff]
        %v910 = vld [vmem:[%s252 + $0xf8] sm:$0xff]
        %v911 = vmax.f32 %v879, %v806
        %v912 = vmax.f32 %v880, %v807
        %v913 = vmax.f32 %v881, %v808
        %v914 = vmax.f32 %v882, %v809
        %v915 = vmax.f32 %v883, %v810
        %v916 = vmax.f32 %v884, %v811
        %v917 = vmax.f32 %v885, %v812
        %v918 = vmax.f32 %v886, %v813
        %v919 = vmax.f32 %v887, %v814
        %v920 = vmax.f32 %v888, %v815
        %v921 = vmax.f32 %v889, %v816
        %v922 = vmax.f32 %v890, %v817
        %v923 = vmax.f32 %v891, %v818
        %v924 = vmax.f32 %v892, %v819
        %v925 = vmax.f32 %v893, %v820
        %v926 = vmax.f32 %v894, %v821
        %v927 = vmax.f32 %v895, %v822
        %v928 = vmax.f32 %v896, %v823
        %v929 = vmax.f32 %v897, %v824
        %v930 = vmax.f32 %v898, %v825
        %v931 = vmax.f32 %v899, %v826
        %v932 = vmax.f32 %v900, %v827
        %v933 = vmax.f32 %v901, %v828
        %v934 = vmax.f32 %v902, %v829
        %v935 = vmax.f32 %v903, %v830
        %v936 = vmax.f32 %v904, %v831
        %v937 = vmax.f32 %v905, %v832
        %v938 = vmax.f32 %v906, %v833
        %v939 = vmax.f32 %v907, %v834
        %v940 = vmax.f32 %v908, %v835
        %v941 = vmax.f32 %v909, %v836
        %v942 = vmax.f32 %v910, %v837
        %vm943 = vcmask 523264
        %944 = vst.msk [vmem:[%s252] sm:$0xff] %vm943, %v911
        %945 = vst.msk [vmem:[%s252 + $0x8] sm:$0xff] %vm943, %v912
        %946 = vst.msk [vmem:[%s252 + $0x10] sm:$0xff] %vm943, %v913
        %947 = vst.msk [vmem:[%s252 + $0x18] sm:$0xff] %vm943, %v914
        %948 = vst.msk [vmem:[%s252 + $0x20] sm:$0xff] %vm943, %v915
        %949 = vst.msk [vmem:[%s252 + $0x28] sm:$0xff] %vm943, %v916
        %950 = vst.msk [vmem:[%s252 + $0x30] sm:$0xff] %vm943, %v917
        %951 = vst.msk [vmem:[%s252 + $0x38] sm:$0xff] %vm943, %v918
        %952 = vst.msk [vmem:[%s252 + $0x40] sm:$0xff] %vm943, %v919
        %953 = vst.msk [vmem:[%s252 + $0x48] sm:$0xff] %vm943, %v920
        %954 = vst.msk [vmem:[%s252 + $0x50] sm:$0xff] %vm943, %v921
        %955 = vst.msk [vmem:[%s252 + $0x58] sm:$0xff] %vm943, %v922
        %956 = vst.msk [vmem:[%s252 + $0x60] sm:$0xff] %vm943, %v923
        %957 = vst.msk [vmem:[%s252 + $0x68] sm:$0xff] %vm943, %v924
        %958 = vst.msk [vmem:[%s252 + $0x70] sm:$0xff] %vm943, %v925
        %959 = vst.msk [vmem:[%s252 + $0x78] sm:$0xff] %vm943, %v926
        %960 = vst.msk [vmem:[%s252 + $0x80] sm:$0xff] %vm943, %v927
        %961 = vst.msk [vmem:[%s252 + $0x88] sm:$0xff] %vm943, %v928
        %962 = vst.msk [vmem:[%s252 + $0x90] sm:$0xff] %vm943, %v929
        %963 = vst.msk [vmem:[%s252 + $0x98] sm:$0xff] %vm943, %v930
        %964 = vst.msk [vmem:[%s252 + $0xa0] sm:$0xff] %vm943, %v931
        %965 = vst.msk [vmem:[%s252 + $0xa8] sm:$0xff] %vm943, %v932
        %966 = vst.msk [vmem:[%s252 + $0xb0] sm:$0xff] %vm943, %v933
        %967 = vst.msk [vmem:[%s252 + $0xb8] sm:$0xff] %vm943, %v934
        %968 = vst.msk [vmem:[%s252 + $0xc0] sm:$0xff] %vm943, %v935
        %969 = vst.msk [vmem:[%s252 + $0xc8] sm:$0xff] %vm943, %v936
        %970 = vst.msk [vmem:[%s252 + $0xd0] sm:$0xff] %vm943, %v937
        %971 = vst.msk [vmem:[%s252 + $0xd8] sm:$0xff] %vm943, %v938
        %972 = vst.msk [vmem:[%s252 + $0xe0] sm:$0xff] %vm943, %v939
        %973 = vst.msk [vmem:[%s252 + $0xe8] sm:$0xff] %vm943, %v940
        %974 = vst.msk [vmem:[%s252 + $0xf0] sm:$0xff] %vm943, %v941
        %975 = vst.msk [vmem:[%s252 + $0xf8] sm:$0xff] %vm943, %v942
      $region48: #{_lambda_.5} parent=39 // pred_fallthru
        _
      %s976 = smul.u32 32, %s20
      %p977 = scmp.lt.s32.totalorder %s976, 63
      %s978 = scalar_select %p977, %s976, 63
      %s979 = smul.addr %s978, 8
      %s980 = scalar_lea.vmem %s5, %s979
      // Predicated region
      $region49: #{_lambda_.5} parent=39 // pred_check
        %p981 = pneg %p158
      $region50: #{_lambda_.5} parent=39 // pred_check_branch
        %983 = sbr.rel (%p981) target = $region52
      $region51: #{_lambda_.5} parent=39 // pred_region
        %s984 = smul.u32 32, %s20
      $region52: #{_lambda_.5} parent=39 // pred_fallthru
        _
    $region40: #{_lambda_.5} parent=5 // pred_fallthru
      _
    %p985 = scmp.le.s32.totalorder 2, %s11
    // Predicated region
    $region53: #{_lambda_.5} parent=5 // pred_check
      %p986 = pneg %p985
    $region54: #{_lambda_.5} parent=5 // pred_check_branch
      %988 = sbr.rel (%p986) target = $region56
    $region55: #{_lambda_.5} parent=5 // pred_region
      %s989 = ssub.s32 %s11, 2
      // Predicated region
      $region57: #{_lambda_.5} parent=55 // pred_check
        %p990 = pneg %p164
      $region58: #{_lambda_.5} parent=55 // pred_check_branch
        %992 = sbr.rel (%p990) target = $region60
      $region59: #{_lambda_.5} parent=55 // pred_region
        %s993 = smul.u32 32, %s22
        %p994 = scmp.lt.s32.totalorder %s993, 63
        %s995 = scalar_select %p994, %s993, 63
        %s996 = smul.addr %s995, 8
        %s997 = scalar_lea.vmem %s5, %s996
      $region60: #{_lambda_.5} parent=55 // pred_fallthru
        _
    $region56: #{_lambda_.5} parent=5 // pred_fallthru
      _
  $region6: #{_lambda_.5} parent=0 // loop_footer
    %s15 = sadd.s32 1, %s11
  $region7: #{_lambda_.5} parent=0 // loop_footer_branch
    %10 = sbr.rel target = $region3
  $region8: #{_lambda_.5} parent=0 // loop_exit
    _

// kernel: _lambda_.6
$region0: #{_lambda_.6}
  #allocation0 [shape = 'u32[]', space=smem, size = 0x4, offset = 0x4, fixed_abs, tag = 'smem constant byte address 0x4 - core index']
  #allocation1 [shape = 'u32[144,128]{1,0:T(1,128)}', space=vmem, size = 0x12000, scoped, tag = 'internal scratch']
  %s0 = inlined_call_operand.vmem [shape: f32[12,256,132], index: 0, kind: input, shape index: {}]
  %s1 = inlined_call_operand.vmem [shape: bf16[132,128], index: 1, kind: input, shape index: {}]
  %s2 = inlined_call_operand.vmem [shape: f32[1,128], index: 2, kind: input, shape index: {}]
  %s3 = inlined_call_operand.vmem [shape: bf16[132,64], index: 3, kind: input, shape index: {}]
  %s4 = inlined_call_operand.vmem [shape: f32[1,64], index: 4, kind: input, shape index: {}]
  %s5 = inlined_call_operand.vmem [shape: bf16[64,128], index: 5, kind: input, shape index: {}]
  %s6 = inlined_call_operand.vmem [shape: f32[1,128], index: 6, kind: input, shape index: {}]
  %s7 = inlined_call_operand.vmem [shape: f32[256,128], index: 7, kind: output, shape index: {}]
  %s8 = sld [smem:[#allocation0]]
  $region69: #{_lambda_.6} parent=0
    _
  %s10 = ssub.s32 1, %s8
  %s11 = scalar_select 0, %s10, %s8
  loop: start=0, step=1, limit=26
  $region2: #{_lambda_.6} parent=0 // loop_pre_header
    _
  $region3: #{_lambda_.6} parent=0 // loop_header
    %s13 = sphi 0, %s17
    %p14 = scmp.ge.s32.totalorder %s13, 26
    %s20 = sphi 0, %s32
    %s21 = sphi 0, %s28
    %s22 = sphi 0, %s20
    %s23 = sphi 0, %s21
    %s24 = sphi 0, %s22
    %s25 = sphi 0, %s23
    %s37 = sphi 0, %s39
    %s40 = sphi 0, %s37
    %s41 = sphi 0, %s40
    %s57 = sphi 0, %s41
    %s61 = sphi 0, %s61
    %s63 = sphi 0, %s61
    %s64 = sphi 0, %s63
    %s78 = sphi 0, %s64
    %s82 = sphi 0, %s82
    %s84 = sphi 0, %s82
    %s85 = sphi 0, %s84
    %s99 = sphi 0, %s85
    %s103 = sphi 0, %s103
    %s105 = sphi 0, %s103
    %s106 = sphi 0, %s105
    %s120 = sphi 0, %s106
    %s124 = sphi 0, %s124
    %s126 = sphi 0, %s124
    %s127 = sphi 0, %s126
    %s141 = sphi 0, %s127
    %s145 = sphi 0, %s145
    %s147 = sphi 0, %s145
    %s148 = sphi 0, %s147
    %s162 = sphi 0, %s148
    %s166 = sphi 0, %s166
    %s168 = sphi 0, %s166
    %s169 = sphi 0, %s168
    %s183 = sphi 0, %s169
    %s189 = sphi 0, %s191
    %s192 = sphi 0, %s189
    %s193 = sphi 0, %s192
    %s209 = sphi 0, %s193
  $region4: #{_lambda_.6} parent=0 // loop_header_branch
    %16 = sbr.rel (%p14) target = $region8
  $region5: #{_lambda_.6} parent=0 // loop_body
    %s18 = ssub.s32 %s13, 1
    %s19 = ssub.s32 %s13, 2
    %s26 = sadd.s32 1, %s21
    %p27 = scmp.ge.s32.totalorder %s26, 12
    %s28 = scalar_select %p27, 0, %s26
    %s29 = sadd.s32 1, %s20
    %s30 = scalar_select %p27, %s29, %s20
    %p31 = scmp.ge.s32.totalorder %s30, 2
    %s32 = scalar_select %p31, 0, %s30
    %s33 = ssub.s32 %s21, %s28
    %s34 = ssub.s32 %s20, %s32
    %s35 = sor.u32 %s33, %s34
    %p36 = scmp.eq.s32.totalorder %s35, 0
    %s38 = sadd.s32 %s37, 1
    %s39 = scalar_select %p36, %s37, %s38
    %p42 = pneg %p36
    %p43 = scmp.eq.s32.totalorder %s13, 23
    %p44 = por %p42, %p43
    %p45 = scmp.ne.s32.totalorder %s37, %s40
    %p46 = scmp.eq.s32.totalorder %s13, 0
    %p47 = por %p45, %p46
    %p48 = scmp.ne.s32.totalorder %s37, %s40
    %p49 = scmp.eq.s32.totalorder %s18, 23
    %p50 = por %p48, %p49
    %p51 = scmp.ne.s32.totalorder %s40, %s41
    %p52 = scmp.eq.s32.totalorder %s18, 0
    %p53 = por %p51, %p52
    %p54 = scmp.ne.s32.totalorder %s40, %s41
    %p55 = scmp.eq.s32.totalorder %s19, 23
    %p56 = por %p54, %p55
    %p58 = scmp.ne.s32.totalorder %s41, %s57
    %p59 = scmp.eq.s32.totalorder %s19, 0
    %p60 = por %p58, %p59
    %s62 = sadd.s32 %s61, 1
    %p65 = scmp.eq.s32.totalorder %s13, 23
    %p66 = scmp.ne.s32.totalorder %s61, %s63
    %p67 = scmp.eq.s32.totalorder %s13, 0
    %p68 = por %p66, %p67
    %p69 = scmp.ne.s32.totalorder %s61, %s63
    %p70 = scmp.eq.s32.totalorder %s18, 23
    %p71 = por %p69, %p70
    %p72 = scmp.ne.s32.totalorder %s63, %s64
    %p73 = scmp.eq.s32.totalorder %s18, 0
    %p74 = por %p72, %p73
    %p75 = scmp.ne.s32.totalorder %s63, %s64
    %p76 = scmp.eq.s32.totalorder %s19, 23
    %p77 = por %p75, %p76
    %p79 = scmp.ne.s32.totalorder %s64, %s78
    %p80 = scmp.eq.s32.totalorder %s19, 0
    %p81 = por %p79, %p80
    %s83 = sadd.s32 %s82, 1
    %p86 = scmp.eq.s32.totalorder %s13, 23
    %p87 = scmp.ne.s32.totalorder %s82, %s84
    %p88 = scmp.eq.s32.totalorder %s13, 0
    %p89 = por %p87, %p88
    %p90 = scmp.ne.s32.totalorder %s82, %s84
    %p91 = scmp.eq.s32.totalorder %s18, 23
    %p92 = por %p90, %p91
    %p93 = scmp.ne.s32.totalorder %s84, %s85
    %p94 = scmp.eq.s32.totalorder %s18, 0
    %p95 = por %p93, %p94
    %p96 = scmp.ne.s32.totalorder %s84, %s85
    %p97 = scmp.eq.s32.totalorder %s19, 23
    %p98 = por %p96, %p97
    %p100 = scmp.ne.s32.totalorder %s85, %s99
    %p101 = scmp.eq.s32.totalorder %s19, 0
    %p102 = por %p100, %p101
    %s104 = sadd.s32 %s103, 1
    %p107 = scmp.eq.s32.totalorder %s13, 23
    %p108 = scmp.ne.s32.totalorder %s103, %s105
    %p109 = scmp.eq.s32.totalorder %s13, 0
    %p110 = por %p108, %p109
    %p111 = scmp.ne.s32.totalorder %s103, %s105
    %p112 = scmp.eq.s32.totalorder %s18, 23
    %p113 = por %p111, %p112
    %p114 = scmp.ne.s32.totalorder %s105, %s106
    %p115 = scmp.eq.s32.totalorder %s18, 0
    %p116 = por %p114, %p115
    %p117 = scmp.ne.s32.totalorder %s105, %s106
    %p118 = scmp.eq.s32.totalorder %s19, 23
    %p119 = por %p117, %p118
    %p121 = scmp.ne.s32.totalorder %s106, %s120
    %p122 = scmp.eq.s32.totalorder %s19, 0
    %p123 = por %p121, %p122
    %s125 = sadd.s32 %s124, 1
    %p128 = scmp.eq.s32.totalorder %s13, 23
    %p129 = scmp.ne.s32.totalorder %s124, %s126
    %p130 = scmp.eq.s32.totalorder %s13, 0
    %p131 = por %p129, %p130
    %p132 = scmp.ne.s32.totalorder %s124, %s126
    %p133 = scmp.eq.s32.totalorder %s18, 23
    %p134 = por %p132, %p133
    %p135 = scmp.ne.s32.totalorder %s126, %s127
    %p136 = scmp.eq.s32.totalorder %s18, 0
    %p137 = por %p135, %p136
    %p138 = scmp.ne.s32.totalorder %s126, %s127
    %p139 = scmp.eq.s32.totalorder %s19, 23
    %p140 = por %p138, %p139
    %p142 = scmp.ne.s32.totalorder %s127, %s141
    %p143 = scmp.eq.s32.totalorder %s19, 0
    %p144 = por %p142, %p143
    %s146 = sadd.s32 %s145, 1
    %p149 = scmp.eq.s32.totalorder %s13, 23
    %p150 = scmp.ne.s32.totalorder %s145, %s147
    %p151 = scmp.eq.s32.totalorder %s13, 0
    %p152 = por %p150, %p151
    %p153 = scmp.ne.s32.totalorder %s145, %s147
    %p154 = scmp.eq.s32.totalorder %s18, 23
    %p155 = por %p153, %p154
    %p156 = scmp.ne.s32.totalorder %s147, %s148
    %p157 = scmp.eq.s32.totalorder %s18, 0
    %p158 = por %p156, %p157
    %p159 = scmp.ne.s32.totalorder %s147, %s148
    %p160 = scmp.eq.s32.totalorder %s19, 23
    %p161 = por %p159, %p160
    %p163 = scmp.ne.s32.totalorder %s148, %s162
    %p164 = scmp.eq.s32.totalorder %s19, 0
    %p165 = por %p163, %p164
    %s167 = sadd.s32 %s166, 1
    %p170 = scmp.eq.s32.totalorder %s13, 23
    %p171 = scmp.ne.s32.totalorder %s166, %s168
    %p172 = scmp.eq.s32.totalorder %s13, 0
    %p173 = por %p171, %p172
    %p174 = scmp.ne.s32.totalorder %s166, %s168
    %p175 = scmp.eq.s32.totalorder %s18, 23
    %p176 = por %p174, %p175
    %p177 = scmp.ne.s32.totalorder %s168, %s169
    %p178 = scmp.eq.s32.totalorder %s18, 0
    %p179 = por %p177, %p178
    %p180 = scmp.ne.s32.totalorder %s168, %s169
    %p181 = scmp.eq.s32.totalorder %s19, 23
    %p182 = por %p180, %p181
    %p184 = scmp.ne.s32.totalorder %s169, %s183
    %p185 = scmp.eq.s32.totalorder %s19, 0
    %p186 = por %p184, %p185
    %s187 = ssub.s32 %s20, %s32
    %p188 = scmp.eq.s32.totalorder %s187, 0
    %s190 = sadd.s32 %s189, 1
    %s191 = scalar_select %p188, %s189, %s190
    %p194 = pneg %p188
    %p195 = scmp.eq.s32.totalorder %s13, 23
    %p196 = por %p194, %p195
    %p197 = scmp.ne.s32.totalorder %s189, %s192
    %p198 = scmp.eq.s32.totalorder %s13, 0
    %p199 = por %p197, %p198
    %p200 = scmp.ne.s32.totalorder %s189, %s192
    %p201 = scmp.eq.s32.totalorder %s18, 23
    %p202 = por %p200, %p201
    %p203 = scmp.ne.s32.totalorder %s192, %s193
    %p204 = scmp.eq.s32.totalorder %s18, 0
    %p205 = por %p203, %p204
    %p206 = scmp.ne.s32.totalorder %s192, %s193
    %p207 = scmp.eq.s32.totalorder %s19, 23
    %p208 = por %p206, %p207
    %p210 = scmp.ne.s32.totalorder %s193, %s209
    %p211 = scmp.eq.s32.totalorder %s19, 0
    %p212 = por %p210, %p211
    %p213 = scmp.le.s32.totalorder 1, %s13
    %p214 = scmp.lt.s32.totalorder %s13, 25
    %p215 = pnand %p213, %p214
    %p216 = pneg %p215
    // Predicated region
    $region9: #{_lambda_.6} parent=5 // pred_check
      _
    $region10: #{_lambda_.6} parent=5 // pred_check_branch
      %218 = sbr.rel (%p215) target = $region12
    $region11: #{_lambda_.6} parent=5 // pred_region
      %s219 = ssub.s32 %s13, 1
      // Predicated region
      $region13: #{_lambda_.6} parent=11 // pred_check
        %p220 = pneg %p74
      $region14: #{_lambda_.6} parent=11 // pred_check_branch
        %222 = sbr.rel (%p220) target = $region16
      $region15: #{_lambda_.6} parent=11 // pred_region
        _
      $region16: #{_lambda_.6} parent=11 // pred_fallthru
        _
      // Predicated region
      $region17: #{_lambda_.6} parent=11 // pred_check
        %p223 = pneg %p95
      $region18: #{_lambda_.6} parent=11 // pred_check_branch
        %225 = sbr.rel (%p223) target = $region20
      $region19: #{_lambda_.6} parent=11 // pred_region
        _
      $region20: #{_lambda_.6} parent=11 // pred_fallthru
        _
      // Predicated region
      $region21: #{_lambda_.6} parent=11 // pred_check
        %p226 = pneg %p116
      $region22: #{_lambda_.6} parent=11 // pred_check_branch
        %228 = sbr.rel (%p226) target = $region24
      $region23: #{_lambda_.6} parent=11 // pred_region
        _
      $region24: #{_lambda_.6} parent=11 // pred_fallthru
        _
      // Predicated region
      $region25: #{_lambda_.6} parent=11 // pred_check
        %p229 = pneg %p137
      $region26: #{_lambda_.6} parent=11 // pred_check_branch
        %231 = sbr.rel (%p229) target = $region28
      $region27: #{_lambda_.6} parent=11 // pred_region
        _
      $region28: #{_lambda_.6} parent=11 // pred_fallthru
        _
      // Predicated region
      $region29: #{_lambda_.6} parent=11 // pred_check
        %p232 = pneg %p158
      $region30: #{_lambda_.6} parent=11 // pred_check_branch
        %234 = sbr.rel (%p232) target = $region32
      $region31: #{_lambda_.6} parent=11 // pred_region
        _
      $region32: #{_lambda_.6} parent=11 // pred_fallthru
        _
      // Predicated region
      $region33: #{_lambda_.6} parent=11 // pred_check
        %p235 = pneg %p179
      $region34: #{_lambda_.6} parent=11 // pred_check_branch
        %237 = sbr.rel (%p235) target = $region36
      $region35: #{_lambda_.6} parent=11 // pred_region
        _
      $region36: #{_lambda_.6} parent=11 // pred_fallthru
        _
    $region12: #{_lambda_.6} parent=5 // pred_fallthru
      _
    %p238 = scmp.lt.s32.totalorder %s13, 24
    // Predicated region
    $region37: #{_lambda_.6} parent=5 // pred_check
      %p239 = pneg %p238
    $region38: #{_lambda_.6} parent=5 // pred_check_branch
      %241 = sbr.rel (%p239) target = $region40
    $region39: #{_lambda_.6} parent=5 // pred_region
      // Predicated region
      $region41: #{_lambda_.6} parent=39 // pred_check
        %p242 = pneg %p47
      $region42: #{_lambda_.6} parent=39 // pred_check_branch
        %244 = sbr.rel (%p242) target = $region44
      $region43: #{_lambda_.6} parent=39 // pred_region
        %s245 = smul.u32 16, %s20
        %p246 = scmp.lt.s32.totalorder %s21, 11
        %s247 = scalar_select %p246, %s21, 11
        %p248 = scmp.lt.s32.totalorder %s245, 31
        %s249 = scalar_select %p248, %s245, 31
        %s250 = smul.addr %s249, 2
        %s251 = smul.addr %s247, 64
        %s252 = sadd.s32 %s250, %s251
        %s253 = smul.addr %s252, 8
        %s254 = scalar_lea.vmem %s0, %s253
        %s255 = smul.u32 16, %s20
      $region44: #{_lambda_.6} parent=39 // pred_fallthru
        _
    $region40: #{_lambda_.6} parent=5 // pred_fallthru
      _
    %p256 = scmp.le.s32.totalorder 1, %s13
    %p257 = scmp.lt.s32.totalorder %s13, 25
    %p258 = pnand %p256, %p257
    %p259 = pneg %p258
    // Predicated region
    $region45: #{_lambda_.6} parent=5 // pred_check
      _
    $region46: #{_lambda_.6} parent=5 // pred_check_branch
      %261 = sbr.rel (%p258) target = $region48
    $region47: #{_lambda_.6} parent=5 // pred_region
      %s262 = ssub.s32 %s13, 1
      %s263 = smul.u32 16, %s22
      %p264 = scmp.lt.s32.totalorder %s23, 11
      %s265 = scalar_select %p264, %s23, 11
      %p266 = scmp.lt.s32.totalorder %s263, 31
      %s267 = scalar_select %p266, %s263, 31
      %s268 = smul.addr %s267, 2
      %s269 = smul.addr %s265, 64
      %s270 = sadd.s32 %s268, %s269
      %s271 = smul.addr %s270, 8
      %s272 = scalar_lea.vmem %s0, %s271
      %p273 = pneg %p53
      %p274 = pneg %p50
      %p275 = pneg %p74
      %p276 = pneg %p71
      %p277 = pneg %p95
      %p278 = pneg %p92
      %p279 = pneg %p116
      %p280 = pneg %p113
      %p281 = pneg %p137
      %p282 = pneg %p134
      %p283 = pneg %p158
      %p284 = pneg %p155
      %p285 = pneg %p179
      %p286 = pneg %p176
      %p287 = pneg %p205
      %p288 = pneg %p202
      %s289 = smul.u32 16, %s22
      %p290 = scmp.lt.s32.totalorder %s289, 31
      %s291 = scalar_select %p290, %s289, 31
      %s292 = smul.addr %s291, 8
      %s293 = scalar_lea.vmem %s7, %s292
      %s294 = smul.u32 16, %s22
      %p295 = scmp.lt.s32.totalorder %s23, 11
      %s296 = scalar_select %p295, %s23, 11
      %p297 = scmp.lt.s32.totalorder %s294, 31
      %s298 = scalar_select %p297, %s294, 31
      %s299 = smul.addr %s298, 2
      %s300 = smul.addr %s296, 64
      %s301 = sadd.s32 %s299, %s300
      %s302 = smul.addr %s301, 8
      %s303 = scalar_lea.vmem %s0, %s302
      %s304 = smul.u32 16, %s22
      %s305 = smul.u32 16, %s22
      %p306 = scmp.lt.s32.totalorder %s305, 31
      %s307 = scalar_select %p306, %s305, 31
      %s308 = smul.addr %s307, 8
      %s309 = scalar_lea.vmem %s7, %s308
      %s310 = smul.u32 16, %s22
      %v312 = vld [vmem:[%s303] sm:$0xff]
      %v313 = vld [vmem:[%s303 + $0x8] sm:$0xff]
      %v314 = vld [vmem:[%s303 + $0x10] sm:$0xff]
      %v315 = vld [vmem:[%s303 + $0x18] sm:$0xff]
      %v316 = vld [vmem:[%s303 + $0x20] sm:$0xff]
      %v317 = vld [vmem:[%s303 + $0x28] sm:$0xff]
      %v318 = vld [vmem:[%s303 + $0x30] sm:$0xff]
      %v319 = vld [vmem:[%s303 + $0x38] sm:$0xff]
      %v320 = vld [vmem:[%s303 + $0x40] sm:$0xff]
      %v321 = vld [vmem:[%s303 + $0x48] sm:$0xff]
      %v322 = vld [vmem:[%s303 + $0x50] sm:$0xff]
      %v323 = vld [vmem:[%s303 + $0x58] sm:$0xff]
      %v324 = vld [vmem:[%s303 + $0x60] sm:$0xff]
      %v325 = vld [vmem:[%s303 + $0x68] sm:$0xff]
      %v326 = vld [vmem:[%s303 + $0x70] sm:$0xff]
      %v327 = vld [vmem:[%s303 + $0x78] sm:$0xff]
      %v328 = vld [vmem:[%s303 + $0x80] sm:$0xff]
      %v329 = vld [vmem:[%s303 + $0x88] sm:$0xff]
      %v330 = vld [vmem:[%s303 + $0x90] sm:$0xff]
      %v331 = vld [vmem:[%s303 + $0x98] sm:$0xff]
      %v332 = vld [vmem:[%s303 + $0xa0] sm:$0xff]
      %v333 = vld [vmem:[%s303 + $0xa8] sm:$0xff]
      %v334 = vld [vmem:[%s303 + $0xb0] sm:$0xff]
      %v335 = vld [vmem:[%s303 + $0xb8] sm:$0xff]
      %v336 = vld [vmem:[%s303 + $0xc0] sm:$0xff]
      %v337 = vld [vmem:[%s303 + $0xc8] sm:$0xff]
      %v338 = vld [vmem:[%s303 + $0xd0] sm:$0xff]
      %v339 = vld [vmem:[%s303 + $0xd8] sm:$0xff]
      %v340 = vld [vmem:[%s303 + $0xe0] sm:$0xff]
      %v341 = vld [vmem:[%s303 + $0xe8] sm:$0xff]
      %v342 = vld [vmem:[%s303 + $0xf0] sm:$0xff]
      %v343 = vld [vmem:[%s303 + $0xf8] sm:$0xff]
      %v344 = vpack.c.bf16 %v314, %v312
      %v345 = vpack.c.bf16 %v315, %v313
      %v346 = vpack.c.bf16 %v318, %v316
      %v347 = vpack.c.bf16 %v319, %v317
      %v348 = vpack.c.bf16 %v322, %v320
      %v349 = vpack.c.bf16 %v323, %v321
      %v350 = vpack.c.bf16 %v326, %v324
      %v351 = vpack.c.bf16 %v327, %v325
      %v352 = vpack.c.bf16 %v330, %v328
      %v353 = vpack.c.bf16 %v331, %v329
      %v354 = vpack.c.bf16 %v334, %v332
      %v355 = vpack.c.bf16 %v335, %v333
      %v356 = vpack.c.bf16 %v338, %v336
      %v357 = vpack.c.bf16 %v339, %v337
      %v358 = vpack.c.bf16 %v342, %v340
      %v359 = vpack.c.bf16 %v343, %v341
      %v360 = vld [vmem:[%s1] sm:$0xf]
      %v361 = vld [vmem:[%s1 + $0x4] sm:$0xf]
      %v362 = vld [vmem:[%s1 + $0x8] sm:$0xf]
      %v363 = vld [vmem:[%s1 + $0xc] sm:$0xf]
      %v364 = vld [vmem:[%s1 + $0x10] sm:$0xf]
      %v365 = vld [vmem:[%s1 + $0x14] sm:$0xf]
      %v366 = vld [vmem:[%s1 + $0x18] sm:$0xf]
      %v367 = vld [vmem:[%s1 + $0x1c] sm:$0xf]
      %v368 = vld [vmem:[%s1 + $0x20] sm:$0xf]
      %v369 = vld [vmem:[%s1 + $0x24] sm:$0xf]
      %v370 = vld [vmem:[%s1 + $0x28] sm:$0xf]
      %v371 = vld [vmem:[%s1 + $0x2c] sm:$0xf]
      %v372 = vld [vmem:[%s1 + $0x30] sm:$0xf]
      %v373 = vld [vmem:[%s1 + $0x34] sm:$0xf]
      %v374 = vld [vmem:[%s1 + $0x38] sm:$0xf]
      %v375 = vld [vmem:[%s1 + $0x3c] sm:$0xf]
      %v376 = vld [vmem:[%s1 + $0x40] sm:$0x3]
      %v377 = vld [vmem:[%s2] sm:$0x1]
      %v379 = vlaneseq
      %v380 = vshrl.u32 %v379, 7
      %v381 = vsub.s32 0, %v380
      %v382 = vrot.slane %v377, %v381
      %v401 = vunpack.c.l.b16 %v360
      %v402 = vunpack.c.l.b16 %v361
      %v403 = vunpack.c.l.b16 %v362
      %v404 = vunpack.c.l.b16 %v363
      %v405 = vunpack.c.l.b16 %v364
      %v406 = vunpack.c.l.b16 %v365
      %v407 = vunpack.c.l.b16 %v366
      %v408 = vunpack.c.l.b16 %v367
      %v409 = vunpack.c.l.b16 %v368
      %v410 = vunpack.c.l.b16 %v369
      %v411 = vunpack.c.l.b16 %v370
      %v412 = vunpack.c.l.b16 %v371
      %v413 = vunpack.c.l.b16 %v372
      %v414 = vunpack.c.l.b16 %v373
      %v415 = vunpack.c.l.b16 %v374
      %v416 = vunpack.c.l.b16 %v375
      %v417 = vunpack.c.l.b16 %v376
      %v418 = vpack.c.b16 %v402, %v401
      %v419 = vpack.c.b16 %v404, %v403
      %v420 = vpack.c.b16 %v406, %v405
      %v421 = vpack.c.b16 %v408, %v407
      %v422 = vpack.c.b16 %v410, %v409
      %v423 = vpack.c.b16 %v412, %v411
      %v424 = vpack.c.b16 %v414, %v413
      %v425 = vpack.c.b16 %v416, %v415
      %v426 = vpack.c.b16 %v417, %v417
      %vm435 = vcmask 31744
      %v437 = vsel %vm435, %v345, 0
      %v440 = vsel %vm435, %v347, 0
      %v443 = vsel %vm435, %v349, 0
      %v446 = vsel %vm435, %v351, 0
      %v449 = vsel %vm435, %v353, 0
      %v452 = vsel %vm435, %v355, 0
      %v455 = vsel %vm435, %v357, 0
      %v458 = vsel %vm435, %v359, 0
      %vm460 = vcmask 1041408
      %v462 = vsel %vm460, %v426, 0
      %464 = vmatprep.subr.bf16.mxu0 0
      %465 = vmatpush1.bf16.msra.mxu0 %v425
      %466 = vmatprep.subr.bf16.mxu0 0
      %467 = vmatpush1.bf16.msra.mxu0 %v424
      %468 = vmatprep.subr.bf16.mxu0 0
      %469 = vmatpush1.bf16.msra.mxu0 %v423
      %470 = vmatprep.subr.bf16.mxu0 0
      %471 = vmatpush1.bf16.msra.mxu0 %v422
      %472 = vmatprep.subr.bf16.mxu0 0
      %473 = vmatpush1.bf16.msra.mxu0 %v421
      %474 = vmatprep.subr.bf16.mxu0 0
      %475 = vmatpush1.bf16.msra.mxu0 %v420
      %476 = vmatprep.subr.bf16.mxu0 0
      %477 = vmatpush1.bf16.msra.mxu0 %v419
      %478 = vmatprep.subr.bf16.mxu0 0
      %479 = vmatpush1.bf16.msra.mxu0 %v418
      %480 = vmatprep.subr.bf16.mxu0 0
      %481 = vmatpush2.bf16.msra.mxu0 0
      %482 = vmatprep.subr.bf16.mxu0 0
      %483 = vmatpush2.bf16.msra.mxu0 0
      %484 = vmatprep.subr.bf16.mxu0 0
      %485 = vmatpush2.bf16.msra.mxu0 0
      %486 = vmatprep.subr.bf16.mxu0 0
      %487 = vmatpush2.bf16.msra.mxu0 0
      %488 = vmatprep.subr.bf16.mxu0 0
      %489 = vmatpush2.bf16.msra.mxu0 0
      %490 = vmatprep.subr.bf16.mxu0 0
      %491 = vmatpush2.bf16.msra.mxu0 0
      %492 = vmatprep.subr.bf16.mxu0 0
      %493 = vmatpush2.bf16.msra.mxu0 0
      %494 = vmatprep.subr.bf16.mxu0 0
      %495 = vmatpush2.bf16.msra.mxu0 %v462
      %496 = vmatprep.mubr.bf16.mxu0 %v437
      %497 = vmatmul.mubr.bf16.gmra.mxu0 %v344
      %v498 = vpop.f32.mrf.mxu0
      %v499 = vadd.f32 %v382, %v498
      %v500 = vpop.f32.mrf.mxu0
      %v501 = vpop.f32.mrf.mxu0
      %v502 = vadd.f32 %v382, %v501
      %v503 = vpop.f32.mrf.mxu0
      %504 = vmatprep.mubr.bf16.mxu0 %v440
      %505 = vmatmul.mubr.bf16.gmra.mxu0 %v346
      %v506 = vpop.f32.mrf.mxu0
      %v507 = vadd.f32 %v382, %v506
      %v508 = vpop.f32.mrf.mxu0
      %v509 = vpop.f32.mrf.mxu0
      %v510 = vadd.f32 %v382, %v509
      %v511 = vpop.f32.mrf.mxu0
      %512 = vmatprep.mubr.bf16.mxu0 %v443
      %513 = vmatmul.mubr.bf16.gmra.mxu0 %v348
      %v514 = vpop.f32.mrf.mxu0
      %v515 = vadd.f32 %v382, %v514
      %v516 = vpop.f32.mrf.mxu0
      %v517 = vpop.f32.mrf.mxu0
      %v518 = vadd.f32 %v382, %v517
      %v519 = vpop.f32.mrf.mxu0
      %520 = vmatprep.mubr.bf16.mxu0 %v446
      %521 = vmatmul.mubr.bf16.gmra.mxu0 %v350
      %v522 = vpop.f32.mrf.mxu0
      %v523 = vadd.f32 %v382, %v522
      %v524 = vpop.f32.mrf.mxu0
      %v525 = vpop.f32.mrf.mxu0
      %v526 = vadd.f32 %v382, %v525
      %v527 = vpop.f32.mrf.mxu0
      %528 = vmatprep.mubr.bf16.mxu0 %v449
      %529 = vmatmul.mubr.bf16.gmra.mxu0 %v352
      %v530 = vpop.f32.mrf.mxu0
      %v531 = vadd.f32 %v382, %v530
      %v532 = vpop.f32.mrf.mxu0
      %v533 = vpop.f32.mrf.mxu0
      %v534 = vadd.f32 %v382, %v533
      %v535 = vpop.f32.mrf.mxu0
      %536 = vmatprep.mubr.bf16.mxu0 %v452
      %537 = vmatmul.mubr.bf16.gmra.mxu0 %v354
      %v538 = vpop.f32.mrf.mxu0
      %v539 = vadd.f32 %v382, %v538
      %v540 = vpop.f32.mrf.mxu0
      %v541 = vpop.f32.mrf.mxu0
      %v542 = vadd.f32 %v382, %v541
      %v543 = vpop.f32.mrf.mxu0
      %544 = vmatprep.mubr.bf16.mxu0 %v455
      %545 = vmatmul.mubr.bf16.gmra.mxu0 %v356
      %v546 = vpop.f32.mrf.mxu0
      %v547 = vadd.f32 %v382, %v546
      %v548 = vpop.f32.mrf.mxu0
      %v549 = vpop.f32.mrf.mxu0
      %v550 = vadd.f32 %v382, %v549
      %v551 = vpop.f32.mrf.mxu0
      %552 = vmatprep.mubr.bf16.mxu0 %v458
      %553 = vmatmul.mubr.bf16.gmra.mxu0 %v358
      %v554 = vpop.f32.mrf.mxu0
      %v555 = vadd.f32 %v382, %v554
      %v556 = vpop.f32.mrf.mxu0
      %v557 = vpop.f32.mrf.mxu0
      %v558 = vadd.f32 %v382, %v557
      %v559 = vpop.f32.mrf.mxu0
      %560 = vdwg.mxu0
      %v561 = vmax.f32 %v499, 0.0
      %v562 = vmax.f32 %v502, 0.0
      %v563 = vmax.f32 %v507, 0.0
      %v564 = vmax.f32 %v510, 0.0
      %v565 = vmax.f32 %v515, 0.0
      %v566 = vmax.f32 %v518, 0.0
      %v567 = vmax.f32 %v523, 0.0
      %v568 = vmax.f32 %v526, 0.0
      %v569 = vmax.f32 %v531, 0.0
      %v570 = vmax.f32 %v534, 0.0
      %v571 = vmax.f32 %v539, 0.0
      %v572 = vmax.f32 %v542, 0.0
      %v573 = vmax.f32 %v547, 0.0
      %v574 = vmax.f32 %v550, 0.0
      %v575 = vmax.f32 %v555, 0.0
      %v576 = vmax.f32 %v558, 0.0
      %v577 = vld [vmem:[%s3] sm:$0xf]
      %v578 = vld [vmem:[%s3 + $0x4] sm:$0xf]
      %v579 = vld [vmem:[%s3 + $0x8] sm:$0xf]
      %v580 = vld [vmem:[%s3 + $0xc] sm:$0xf]
      %v581 = vld [vmem:[%s3 + $0x10] sm:$0xf]
      %v582 = vld [vmem:[%s3 + $0x14] sm:$0xf]
      %v583 = vld [vmem:[%s3 + $0x18] sm:$0xf]
      %v584 = vld [vmem:[%s3 + $0x1c] sm:$0xf]
      %v585 = vld [vmem:[%s3 + $0x20] sm:$0xf]
      %v586 = vld [vmem:[%s3 + $0x24] sm:$0xf]
      %v587 = vld [vmem:[%s3 + $0x28] sm:$0xf]
      %v588 = vld [vmem:[%s3 + $0x2c] sm:$0xf]
      %v589 = vld [vmem:[%s3 + $0x30] sm:$0xf]
      %v590 = vld [vmem:[%s3 + $0x34] sm:$0xf]
      %v591 = vld [vmem:[%s3 + $0x38] sm:$0xf]
      %v592 = vld [vmem:[%s3 + $0x3c] sm:$0xf]
      %v593 = vld [vmem:[%s3 + $0x40] sm:$0x3]
      %v594 = vld [vmem:[%s4] sm:$0x1]
      %v596 = vlaneseq
      %v597 = vshrl.u32 %v596, 7
      %v598 = vsub.s32 0, %v597
      %v599 = vrot.slane %v594, %v598
      %v618 = vunpack.c.l.b16 %v577
      %v619 = vunpack.c.l.b16 %v578
      %v620 = vunpack.c.l.b16 %v579
      %v621 = vunpack.c.l.b16 %v580
      %v622 = vunpack.c.l.b16 %v581
      %v623 = vunpack.c.l.b16 %v582
      %v624 = vunpack.c.l.b16 %v583
      %v625 = vunpack.c.l.b16 %v584
      %v626 = vunpack.c.l.b16 %v585
      %v627 = vunpack.c.l.b16 %v586
      %v628 = vunpack.c.l.b16 %v587
      %v629 = vunpack.c.l.b16 %v588
      %v630 = vunpack.c.l.b16 %v589
      %v631 = vunpack.c.l.b16 %v590
      %v632 = vunpack.c.l.b16 %v591
      %v633 = vunpack.c.l.b16 %v592
      %v634 = vunpack.c.l.b16 %v593
      %v635 = vpack.c.b16 %v619, %v618
      %v636 = vpack.c.b16 %v621, %v620
      %v637 = vpack.c.b16 %v623, %v622
      %v638 = vpack.c.b16 %v625, %v624
      %v639 = vpack.c.b16 %v627, %v626
      %v640 = vpack.c.b16 %v629, %v628
      %v641 = vpack.c.b16 %v631, %v630
      %v642 = vpack.c.b16 %v633, %v632
      %v643 = vpack.c.b16 %v634, %v634
      %v653 = vsel %vm460, %v643, 0
      %655 = vmatprep.subr.bf16.mxu0 0
      %656 = vmatpush1.bf16.msra.mxu0 %v642
      %657 = vmatprep.subr.bf16.mxu0 0
      %658 = vmatpush1.bf16.msra.mxu0 %v641
      %659 = vmatprep.subr.bf16.mxu0 0
      %660 = vmatpush1.bf16.msra.mxu0 %v640
      %661 = vmatprep.subr.bf16.mxu0 0
      %662 = vmatpush1.bf16.msra.mxu0 %v639
      %663 = vmatprep.subr.bf16.mxu0 0
      %664 = vmatpush1.bf16.msra.mxu0 %v638
      %665 = vmatprep.subr.bf16.mxu0 0
      %666 = vmatpush1.bf16.msra.mxu0 %v637
      %667 = vmatprep.subr.bf16.mxu0 0
      %668 = vmatpush1.bf16.msra.mxu0 %v636
      %669 = vmatprep.subr.bf16.mxu0 0
      %670 = vmatpush1.bf16.msra.mxu0 %v635
      %671 = vmatprep.subr.bf16.mxu0 0
      %672 = vmatpush2.bf16.msra.mxu0 0
      %673 = vmatprep.subr.bf16.mxu0 0
      %674 = vmatpush2.bf16.msra.mxu0 0
      %675 = vmatprep.subr.bf16.mxu0 0
      %676 = vmatpush2.bf16.msra.mxu0 0
      %677 = vmatprep.subr.bf16.mxu0 0
      %678 = vmatpush2.bf16.msra.mxu0 0
      %679 = vmatprep.subr.bf16.mxu0 0
      %680 = vmatpush2.bf16.msra.mxu0 0
      %681 = vmatprep.subr.bf16.mxu0 0
      %682 = vmatpush2.bf16.msra.mxu0 0
      %683 = vmatprep.subr.bf16.mxu0 0
      %684 = vmatpush2.bf16.msra.mxu0 0
      %685 = vmatprep.subr.bf16.mxu0 0
      %686 = vmatpush2.bf16.msra.mxu0 %v653
      %687 = vmatprep.mubr.bf16.mxu0 %v437
      %688 = vmatmul.mubr.bf16.gmra.mxu0 %v344
      %v689 = vpop.f32.mrf.mxu0
      %v690 = vadd.f32 %v599, %v689
      %v691 = vpop.f32.mrf.mxu0
      %v692 = vpop.f32.mrf.mxu0
      %v693 = vadd.f32 %v599, %v692
      %v694 = vpop.f32.mrf.mxu0
      %695 = vmatprep.mubr.bf16.mxu0 %v440
      %696 = vmatmul.mubr.bf16.gmra.mxu0 %v346
      %v697 = vpop.f32.mrf.mxu0
      %v698 = vadd.f32 %v599, %v697
      %v699 = vpop.f32.mrf.mxu0
      %v700 = vpop.f32.mrf.mxu0
      %v701 = vadd.f32 %v599, %v700
      %v702 = vpop.f32.mrf.mxu0
      %703 = vmatprep.mubr.bf16.mxu0 %v443
      %704 = vmatmul.mubr.bf16.gmra.mxu0 %v348
      %v705 = vpop.f32.mrf.mxu0
      %v706 = vadd.f32 %v599, %v705
      %v707 = vpop.f32.mrf.mxu0
      %v708 = vpop.f32.mrf.mxu0
      %v709 = vadd.f32 %v599, %v708
      %v710 = vpop.f32.mrf.mxu0
      %711 = vmatprep.mubr.bf16.mxu0 %v446
      %712 = vmatmul.mubr.bf16.gmra.mxu0 %v350
      %v713 = vpop.f32.mrf.mxu0
      %v714 = vadd.f32 %v599, %v713
      %v715 = vpop.f32.mrf.mxu0
      %v716 = vpop.f32.mrf.mxu0
      %v717 = vadd.f32 %v599, %v716
      %v718 = vpop.f32.mrf.mxu0
      %719 = vmatprep.mubr.bf16.mxu0 %v449
      %720 = vmatmul.mubr.bf16.gmra.mxu0 %v352
      %v721 = vpop.f32.mrf.mxu0
      %v722 = vadd.f32 %v599, %v721
      %v723 = vpop.f32.mrf.mxu0
      %v724 = vpop.f32.mrf.mxu0
      %v725 = vadd.f32 %v599, %v724
      %v726 = vpop.f32.mrf.mxu0
      %727 = vmatprep.mubr.bf16.mxu0 %v452
      %728 = vmatmul.mubr.bf16.gmra.mxu0 %v354
      %v729 = vpop.f32.mrf.mxu0
      %v730 = vadd.f32 %v599, %v729
      %v731 = vpop.f32.mrf.mxu0
      %v732 = vpop.f32.mrf.mxu0
      %v733 = vadd.f32 %v599, %v732
      %v734 = vpop.f32.mrf.mxu0
      %735 = vmatprep.mubr.bf16.mxu0 %v455
      %736 = vmatmul.mubr.bf16.gmra.mxu0 %v356
      %v737 = vpop.f32.mrf.mxu0
      %v738 = vadd.f32 %v599, %v737
      %v739 = vpop.f32.mrf.mxu0
      %v740 = vpop.f32.mrf.mxu0
      %v741 = vadd.f32 %v599, %v740
      %v742 = vpop.f32.mrf.mxu0
      %743 = vmatprep.mubr.bf16.mxu0 %v458
      %744 = vmatmul.mubr.bf16.gmra.mxu0 %v358
      %v745 = vpop.f32.mrf.mxu0
      %v746 = vadd.f32 %v599, %v745
      %v747 = vpop.f32.mrf.mxu0
      %v748 = vpop.f32.mrf.mxu0
      %v749 = vadd.f32 %v599, %v748
      %v750 = vpop.f32.mrf.mxu0
      %751 = vdwg.mxu0
      %v752 = vmax.f32 %v690, 0.0
      %v753 = vmax.f32 %v693, 0.0
      %v754 = vmax.f32 %v698, 0.0
      %v755 = vmax.f32 %v701, 0.0
      %v756 = vmax.f32 %v706, 0.0
      %v757 = vmax.f32 %v709, 0.0
      %v758 = vmax.f32 %v714, 0.0
      %v759 = vmax.f32 %v717, 0.0
      %v760 = vmax.f32 %v722, 0.0
      %v761 = vmax.f32 %v725, 0.0
      %v762 = vmax.f32 %v730, 0.0
      %v763 = vmax.f32 %v733, 0.0
      %v764 = vmax.f32 %v738, 0.0
      %v765 = vmax.f32 %v741, 0.0
      %v766 = vmax.f32 %v746, 0.0
      %v767 = vmax.f32 %v749, 0.0
      %v768 = vpack.c.bf16 %v753, %v752
      %v769 = vpack.c.bf16 %v755, %v754
      %v770 = vpack.c.bf16 %v757, %v756
      %v771 = vpack.c.bf16 %v759, %v758
      %v772 = vpack.c.bf16 %v761, %v760
      %v773 = vpack.c.bf16 %v763, %v762
      %v774 = vpack.c.bf16 %v765, %v764
      %v775 = vpack.c.bf16 %v767, %v766
      %v776 = vld [vmem:[%s5] sm:$0xf]
      %v777 = vld [vmem:[%s5 + $0x4] sm:$0xf]
      %v778 = vld [vmem:[%s5 + $0x8] sm:$0xf]
      %v779 = vld [vmem:[%s5 + $0xc] sm:$0xf]
      %v780 = vld [vmem:[%s5 + $0x10] sm:$0xf]
      %v781 = vld [vmem:[%s5 + $0x14] sm:$0xf]
      %v782 = vld [vmem:[%s5 + $0x18] sm:$0xf]
      %v783 = vld [vmem:[%s5 + $0x1c] sm:$0xf]
      %v784 = vld [vmem:[%s6] sm:$0x1]
      %v786 = vlaneseq
      %v787 = vshrl.u32 %v786, 7
      %v788 = vsub.s32 0, %v787
      %v789 = vrot.slane %v784, %v788
      %v799 = vunpack.c.l.b16 %v776
      %v800 = vunpack.c.l.b16 %v777
      %v801 = vunpack.c.l.b16 %v778
      %v802 = vunpack.c.l.b16 %v779
      %v803 = vunpack.c.l.b16 %v780
      %v804 = vunpack.c.l.b16 %v781
      %v805 = vunpack.c.l.b16 %v782
      %v806 = vunpack.c.l.b16 %v783
      %v807 = vpack.c.b16 %v800, %v799
      %v808 = vpack.c.b16 %v802, %v801
      %v809 = vpack.c.b16 %v804, %v803
      %v810 = vpack.c.b16 %v806, %v805
      %vm815 = vcmask 523264
      %v817 = vsel %vm815, %v768, 0
      %v820 = vsel %vm815, %v769, 0
      %v823 = vsel %vm815, %v770, 0
      %v826 = vsel %vm815, %v771, 0
      %v829 = vsel %vm815, %v772, 0
      %v832 = vsel %vm815, %v773, 0
      %v835 = vsel %vm815, %v774, 0
      %v838 = vsel %vm815, %v775, 0
      %840 = vmatprep.subr.bf16.mxu0 0
      %841 = vmatpush1.bf16.msra.mxu0 0
      %842 = vmatprep.subr.bf16.mxu0 0
      %843 = vmatpush1.bf16.msra.mxu0 0
      %844 = vmatprep.subr.bf16.mxu0 0
      %845 = vmatpush1.bf16.msra.mxu0 0
      %846 = vmatprep.subr.bf16.mxu0 0
      %847 = vmatpush1.bf16.msra.mxu0 0
      %848 = vmatprep.subr.bf16.mxu0 0
      %849 = vmatpush1.bf16.msra.mxu0 %v810
      %850 = vmatprep.subr.bf16.mxu0 0
      %851 = vmatpush1.bf16.msra.mxu0 %v809
      %852 = vmatprep.subr.bf16.mxu0 0
      %853 = vmatpush1.bf16.msra.mxu0 %v808
      %854 = vmatprep.subr.bf16.mxu0 0
      %855 = vmatpush1.bf16.msra.mxu0 %v807
      %856 = vmatprep.subr.bf16.mxu0 0
      %857 = vmatpush2.bf16.msra.mxu0 0
      %858 = vmatprep.subr.bf16.mxu0 0
      %859 = vmatpush2.bf16.msra.mxu0 0
      %860 = vmatprep.subr.bf16.mxu0 0
      %861 = vmatpush2.bf16.msra.mxu0 0
      %862 = vmatprep.subr.bf16.mxu0 0
      %863 = vmatpush2.bf16.msra.mxu0 0
      %864 = vmatprep.subr.bf16.mxu0 0
      %865 = vmatpush2.bf16.msra.mxu0 0
      %866 = vmatprep.subr.bf16.mxu0 0
      %867 = vmatpush2.bf16.msra.mxu0 0
      %868 = vmatprep.subr.bf16.mxu0 0
      %869 = vmatpush2.bf16.msra.mxu0 0
      %870 = vmatprep.subr.bf16.mxu0 0
      %871 = vmatpush2.bf16.msra.mxu0 0
      %872 = vmatprep.mubr.bf16.mxu0 0
      %873 = vmatmul.mubr.bf16.gmra.mxu0 %v817
      %v874 = vpop.f32.mrf.mxu0
      %v875 = vadd.f32 %v789, %v874
      %v876 = vpop.f32.mrf.mxu0
      %v877 = vpop.f32.mrf.mxu0
      %v878 = vadd.f32 %v789, %v877
      %v879 = vpop.f32.mrf.mxu0
      %880 = vmatprep.mubr.bf16.mxu0 0
      %881 = vmatmul.mubr.bf16.gmra.mxu0 %v820
      %v882 = vpop.f32.mrf.mxu0
      %v883 = vadd.f32 %v789, %v882
      %v884 = vpop.f32.mrf.mxu0
      %v885 = vpop.f32.mrf.mxu0
      %v886 = vadd.f32 %v789, %v885
      %v887 = vpop.f32.mrf.mxu0
      %888 = vmatprep.mubr.bf16.mxu0 0
      %889 = vmatmul.mubr.bf16.gmra.mxu0 %v823
      %v890 = vpop.f32.mrf.mxu0
      %v891 = vadd.f32 %v789, %v890
      %v892 = vpop.f32.mrf.mxu0
      %v893 = vpop.f32.mrf.mxu0
      %v894 = vadd.f32 %v789, %v893
      %v895 = vpop.f32.mrf.mxu0
      %896 = vmatprep.mubr.bf16.mxu0 0
      %897 = vmatmul.mubr.bf16.gmra.mxu0 %v826
      %v898 = vpop.f32.mrf.mxu0
      %v899 = vadd.f32 %v789, %v898
      %v900 = vpop.f32.mrf.mxu0
      %v901 = vpop.f32.mrf.mxu0
      %v902 = vadd.f32 %v789, %v901
      %v903 = vpop.f32.mrf.mxu0
      %904 = vmatprep.mubr.bf16.mxu0 0
      %905 = vmatmul.mubr.bf16.gmra.mxu0 %v829
      %v906 = vpop.f32.mrf.mxu0
      %v907 = vadd.f32 %v789, %v906
      %v908 = vpop.f32.mrf.mxu0
      %v909 = vpop.f32.mrf.mxu0
      %v910 = vadd.f32 %v789, %v909
      %v911 = vpop.f32.mrf.mxu0
      %912 = vmatprep.mubr.bf16.mxu0 0
      %913 = vmatmul.mubr.bf16.gmra.mxu0 %v832
      %v914 = vpop.f32.mrf.mxu0
      %v915 = vadd.f32 %v789, %v914
      %v916 = vpop.f32.mrf.mxu0
      %v917 = vpop.f32.mrf.mxu0
      %v918 = vadd.f32 %v789, %v917
      %v919 = vpop.f32.mrf.mxu0
      %920 = vmatprep.mubr.bf16.mxu0 0
      %921 = vmatmul.mubr.bf16.gmra.mxu0 %v835
      %v922 = vpop.f32.mrf.mxu0
      %v923 = vadd.f32 %v789, %v922
      %v924 = vpop.f32.mrf.mxu0
      %v925 = vpop.f32.mrf.mxu0
      %v926 = vadd.f32 %v789, %v925
      %v927 = vpop.f32.mrf.mxu0
      %928 = vmatprep.mubr.bf16.mxu0 0
      %929 = vmatmul.mubr.bf16.gmra.mxu0 %v838
      %v930 = vpop.f32.mrf.mxu0
      %v931 = vadd.f32 %v789, %v930
      %v932 = vpop.f32.mrf.mxu0
      %v933 = vpop.f32.mrf.mxu0
      %v934 = vadd.f32 %v789, %v933
      %v935 = vpop.f32.mrf.mxu0
      %936 = vdwg.mxu0
      %v937 = vmax.f32 %v875, 0.0
      %v938 = vmax.f32 %v878, 0.0
      %v939 = vmax.f32 %v883, 0.0
      %v940 = vmax.f32 %v886, 0.0
      %v941 = vmax.f32 %v891, 0.0
      %v942 = vmax.f32 %v894, 0.0
      %v943 = vmax.f32 %v899, 0.0
      %v944 = vmax.f32 %v902, 0.0
      %v945 = vmax.f32 %v907, 0.0
      %v946 = vmax.f32 %v910, 0.0
      %v947 = vmax.f32 %v915, 0.0
      %v948 = vmax.f32 %v918, 0.0
      %v949 = vmax.f32 %v923, 0.0
      %v950 = vmax.f32 %v926, 0.0
      %v951 = vmax.f32 %v931, 0.0
      %v952 = vmax.f32 %v934, 0.0
      %v953 = vmul.f32 %v561, %v937
      %v954 = vmul.f32 %v562, %v938
      %v955 = vmul.f32 %v563, %v939
      %v956 = vmul.f32 %v564, %v940
      %v957 = vmul.f32 %v565, %v941
      %v958 = vmul.f32 %v566, %v942
      %v959 = vmul.f32 %v567, %v943
      %v960 = vmul.f32 %v568, %v944
      %v961 = vmul.f32 %v569, %v945
      %v962 = vmul.f32 %v570, %v946
      %v963 = vmul.f32 %v571, %v947
      %v964 = vmul.f32 %v572, %v948
      %v965 = vmul.f32 %v573, %v949
      %v966 = vmul.f32 %v574, %v950
      %v967 = vmul.f32 %v575, %v951
      %v968 = vmul.f32 %v576, %v952
      %p969 = scmp.eq.s32.totalorder %s23, 0
      // Predicated region
      $region49: #{_lambda_.6} parent=47 // pred_check
        %p970 = pneg %p969
      $region50: #{_lambda_.6} parent=47 // pred_check_branch
        %972 = sbr.rel (%p970) target = $region52
      $region51: #{_lambda_.6} parent=47 // pred_region
        %973 = vst [vmem:[%s309] sm:$0xff] %v953
        %974 = vst [vmem:[%s309 + $0x8] sm:$0xff] %v954
        %975 = vst [vmem:[%s309 + $0x10] sm:$0xff] %v955
        %976 = vst [vmem:[%s309 + $0x18] sm:$0xff] %v956
        %977 = vst [vmem:[%s309 + $0x20] sm:$0xff] %v957
        %978 = vst [vmem:[%s309 + $0x28] sm:$0xff] %v958
        %979 = vst [vmem:[%s309 + $0x30] sm:$0xff] %v959
        %980 = vst [vmem:[%s309 + $0x38] sm:$0xff] %v960
        %981 = vst [vmem:[%s309 + $0x40] sm:$0xff] %v961
        %982 = vst [vmem:[%s309 + $0x48] sm:$0xff] %v962
        %983 = vst [vmem:[%s309 + $0x50] sm:$0xff] %v963
        %984 = vst [vmem:[%s309 + $0x58] sm:$0xff] %v964
        %985 = vst [vmem:[%s309 + $0x60] sm:$0xff] %v965
        %986 = vst [vmem:[%s309 + $0x68] sm:$0xff] %v966
        %987 = vst [vmem:[%s309 + $0x70] sm:$0xff] %v967
        %988 = vst [vmem:[%s309 + $0x78] sm:$0xff] %v968
      $region52: #{_lambda_.6} parent=47 // pred_fallthru
        _
      %p989 = scmp.gt.s32.totalorder %s23, 0
      // Predicated region
      $region53: #{_lambda_.6} parent=47 // pred_check
        %p990 = pneg %p989
      $region54: #{_lambda_.6} parent=47 // pred_check_branch
        %992 = sbr.rel (%p990) target = $region56
      $region55: #{_lambda_.6} parent=47 // pred_region
        %v993 = vld [vmem:[%s309] sm:$0xff]
        %v994 = vld [vmem:[%s309 + $0x8] sm:$0xff]
        %v995 = vld [vmem:[%s309 + $0x10] sm:$0xff]
        %v996 = vld [vmem:[%s309 + $0x18] sm:$0xff]
        %v997 = vld [vmem:[%s309 + $0x20] sm:$0xff]
        %v998 = vld [vmem:[%s309 + $0x28] sm:$0xff]
        %v999 = vld [vmem:[%s309 + $0x30] sm:$0xff]
        %v1000 = vld [vmem:[%s309 + $0x38] sm:$0xff]
        %v1001 = vld [vmem:[%s309 + $0x40] sm:$0xff]
        %v1002 = vld [vmem:[%s309 + $0x48] sm:$0xff]
        %v1003 = vld [vmem:[%s309 + $0x50] sm:$0xff]
        %v1004 = vld [vmem:[%s309 + $0x58] sm:$0xff]
        %v1005 = vld [vmem:[%s309 + $0x60] sm:$0xff]
        %v1006 = vld [vmem:[%s309 + $0x68] sm:$0xff]
        %v1007 = vld [vmem:[%s309 + $0x70] sm:$0xff]
        %v1008 = vld [vmem:[%s309 + $0x78] sm:$0xff]
        %v1009 = vmax.f32 %v993, %v953
        %v1010 = vmax.f32 %v994, %v954
        %v1011 = vmax.f32 %v995, %v955
        %v1012 = vmax.f32 %v996, %v956
        %v1013 = vmax.f32 %v997, %v957
        %v1014 = vmax.f32 %v998, %v958
        %v1015 = vmax.f32 %v999, %v959
        %v1016 = vmax.f32 %v1000, %v960
        %v1017 = vmax.f32 %v1001, %v961
        %v1018 = vmax.f32 %v1002, %v962
        %v1019 = vmax.f32 %v1003, %v963
        %v1020 = vmax.f32 %v1004, %v964
        %v1021 = vmax.f32 %v1005, %v965
        %v1022 = vmax.f32 %v1006, %v966
        %v1023 = vmax.f32 %v1007, %v967
        %v1024 = vmax.f32 %v1008, %v968
        %1025 = vst [vmem:[%s309] sm:$0xff] %v1009
        %1026 = vst [vmem:[%s309 + $0x8] sm:$0xff] %v1010
        %1027 = vst [vmem:[%s309 + $0x10] sm:$0xff] %v1011
        %1028 = vst [vmem:[%s309 + $0x18] sm:$0xff] %v1012
        %1029 = vst [vmem:[%s309 + $0x20] sm:$0xff] %v1013
        %1030 = vst [vmem:[%s309 + $0x28] sm:$0xff] %v1014
        %1031 = vst [vmem:[%s309 + $0x30] sm:$0xff] %v1015
        %1032 = vst [vmem:[%s309 + $0x38] sm:$0xff] %v1016
        %1033 = vst [vmem:[%s309 + $0x40] sm:$0xff] %v1017
        %1034 = vst [vmem:[%s309 + $0x48] sm:$0xff] %v1018
        %1035 = vst [vmem:[%s309 + $0x50] sm:$0xff] %v1019
        %1036 = vst [vmem:[%s309 + $0x58] sm:$0xff] %v1020
        %1037 = vst [vmem:[%s309 + $0x60] sm:$0xff] %v1021
        %1038 = vst [vmem:[%s309 + $0x68] sm:$0xff] %v1022
        %1039 = vst [vmem:[%s309 + $0x70] sm:$0xff] %v1023
        %1040 = vst [vmem:[%s309 + $0x78] sm:$0xff] %v1024
      $region56: #{_lambda_.6} parent=47 // pred_fallthru
        _
      %s1041 = smul.u32 16, %s22
      %p1042 = scmp.lt.s32.totalorder %s1041, 31
      %s1043 = scalar_select %p1042, %s1041, 31
      %s1044 = smul.addr %s1043, 8
      %s1045 = scalar_lea.vmem %s7, %s1044
      // Predicated region
      $region57: #{_lambda_.6} parent=47 // pred_check
        %p1046 = pneg %p202
      $region58: #{_lambda_.6} parent=47 // pred_check_branch
        %1048 = sbr.rel (%p1046) target = $region60
      $region59: #{_lambda_.6} parent=47 // pred_region
        %s1049 = smul.u32 16, %s22
      $region60: #{_lambda_.6} parent=47 // pred_fallthru
        _
    $region48: #{_lambda_.6} parent=5 // pred_fallthru
      _
    %p1050 = scmp.le.s32.totalorder 2, %s13
    // Predicated region
    $region61: #{_lambda_.6} parent=5 // pred_check
      %p1051 = pneg %p1050
    $region62: #{_lambda_.6} parent=5 // pred_check_branch
      %1053 = sbr.rel (%p1051) target = $region64
    $region63: #{_lambda_.6} parent=5 // pred_region
      %s1054 = ssub.s32 %s13, 2
      // Predicated region
      $region65: #{_lambda_.6} parent=63 // pred_check
        %p1055 = pneg %p208
      $region66: #{_lambda_.6} parent=63 // pred_check_branch
        %1057 = sbr.rel (%p1055) target = $region68
      $region67: #{_lambda_.6} parent=63 // pred_region
        %s1058 = smul.u32 16, %s24
        %p1059 = scmp.lt.s32.totalorder %s1058, 31
        %s1060 = scalar_select %p1059, %s1058, 31
        %s1061 = smul.addr %s1060, 8
        %s1062 = scalar_lea.vmem %s7, %s1061
      $region68: #{_lambda_.6} parent=63 // pred_fallthru
        _
    $region64: #{_lambda_.6} parent=5 // pred_fallthru
      _
  $region6: #{_lambda_.6} parent=0 // loop_footer
    %s17 = sadd.s32 1, %s13
  $region7: #{_lambda_.6} parent=0 // loop_footer_branch
    %12 = sbr.rel target = $region3
  $region8: #{_lambda_.6} parent=0 // loop_exit
    _

// kernel: custom-call.38
$region0: #{custom-call.38}
  %s0 = inlined_call_operand.vmem [shape: f32[8,2,16,260], index: 0, kind: output, shape index: {}]

// kernel: _lambda_.7
$region0: #{_lambda_.7}
  #allocation0 [shape = 'u32[]', space=smem, size = 0x4, offset = 0x4, fixed_abs, tag = 'smem constant byte address 0x4 - core index']
  #allocation1 [shape = 'u32[144,128]{1,0:T(1,128)}', space=vmem, size = 0x12000, scoped, tag = 'internal scratch']
  %s0 = inlined_call_operand.vmem [shape: f32[256,132], index: 0, kind: input, shape index: {}]
  %s1 = inlined_call_operand.vmem [shape: bf16[132,1024], index: 1, kind: input, shape index: {}]
  %s2 = inlined_call_operand.vmem [shape: f32[1,1024], index: 2, kind: input, shape index: {}]
  %s3 = inlined_call_operand.vmem [shape: f32[256,1024], index: 3, kind: output, shape index: {}]
  %s4 = sld [smem:[#allocation0]]
  $region45: #{_lambda_.7} parent=0
    _
  %s6 = ssub.s32 1, %s4
  %s7 = scalar_select 0, %s6, %s4
  loop: start=0, step=1, limit=4
  $region2: #{_lambda_.7} parent=0 // loop_pre_header
    _
  $region3: #{_lambda_.7} parent=0 // loop_header
    %s9 = sphi 0, %s13
    %p10 = scmp.ge.s32.totalorder %s9, 4
    %s19 = sphi 0, %s21
    %s22 = sphi 0, %s19
    %s23 = sphi 0, %s22
    %s39 = sphi 0, %s23
    %s43 = sphi 0, %s43
    %s45 = sphi 0, %s43
    %s46 = sphi 0, %s45
    %s60 = sphi 0, %s46
    %s64 = sphi 0, %s64
    %s66 = sphi 0, %s64
    %s67 = sphi 0, %s66
    %s81 = sphi 0, %s67
    %s87 = sphi 0, %s89
    %s90 = sphi 0, %s87
    %s91 = sphi 0, %s90
    %s107 = sphi 0, %s91
  $region4: #{_lambda_.7} parent=0 // loop_header_branch
    %12 = sbr.rel (%p10) target = $region8
  $region5: #{_lambda_.7} parent=0 // loop_body
    %s14 = ssub.s32 %s9, 1
    %s15 = ssub.s32 %s9, 2
    %s16 = sadd.s32 %s9, 1
    %s17 = ssub.s32 %s9, %s16
    %p18 = scmp.eq.s32.totalorder %s17, 0
    %s20 = sadd.s32 %s19, 1
    %s21 = scalar_select %p18, %s19, %s20
    %p24 = pneg %p18
    %p25 = scmp.eq.s32.totalorder %s9, 1
    %p26 = por %p24, %p25
    %p27 = scmp.ne.s32.totalorder %s19, %s22
    %p28 = scmp.eq.s32.totalorder %s9, 0
    %p29 = por %p27, %p28
    %p30 = scmp.ne.s32.totalorder %s19, %s22
    %p31 = scmp.eq.s32.totalorder %s14, 1
    %p32 = por %p30, %p31
    %p33 = scmp.ne.s32.totalorder %s22, %s23
    %p34 = scmp.eq.s32.totalorder %s14, 0
    %p35 = por %p33, %p34
    %p36 = scmp.ne.s32.totalorder %s22, %s23
    %p37 = scmp.eq.s32.totalorder %s15, 1
    %p38 = por %p36, %p37
    %p40 = scmp.ne.s32.totalorder %s23, %s39
    %p41 = scmp.eq.s32.totalorder %s15, 0
    %p42 = por %p40, %p41
    %s44 = sadd.s32 %s43, 1
    %p47 = scmp.eq.s32.totalorder %s9, 1
    %p48 = scmp.ne.s32.totalorder %s43, %s45
    %p49 = scmp.eq.s32.totalorder %s9, 0
    %p50 = por %p48, %p49
    %p51 = scmp.ne.s32.totalorder %s43, %s45
    %p52 = scmp.eq.s32.totalorder %s14, 1
    %p53 = por %p51, %p52
    %p54 = scmp.ne.s32.totalorder %s45, %s46
    %p55 = scmp.eq.s32.totalorder %s14, 0
    %p56 = por %p54, %p55
    %p57 = scmp.ne.s32.totalorder %s45, %s46
    %p58 = scmp.eq.s32.totalorder %s15, 1
    %p59 = por %p57, %p58
    %p61 = scmp.ne.s32.totalorder %s46, %s60
    %p62 = scmp.eq.s32.totalorder %s15, 0
    %p63 = por %p61, %p62
    %s65 = sadd.s32 %s64, 1
    %p68 = scmp.eq.s32.totalorder %s9, 1
    %p69 = scmp.ne.s32.totalorder %s64, %s66
    %p70 = scmp.eq.s32.totalorder %s9, 0
    %p71 = por %p69, %p70
    %p72 = scmp.ne.s32.totalorder %s64, %s66
    %p73 = scmp.eq.s32.totalorder %s14, 1
    %p74 = por %p72, %p73
    %p75 = scmp.ne.s32.totalorder %s66, %s67
    %p76 = scmp.eq.s32.totalorder %s14, 0
    %p77 = por %p75, %p76
    %p78 = scmp.ne.s32.totalorder %s66, %s67
    %p79 = scmp.eq.s32.totalorder %s15, 1
    %p80 = por %p78, %p79
    %p82 = scmp.ne.s32.totalorder %s67, %s81
    %p83 = scmp.eq.s32.totalorder %s15, 0
    %p84 = por %p82, %p83
    %s85 = ssub.s32 %s9, %s16
    %p86 = scmp.eq.s32.totalorder %s85, 0
    %s88 = sadd.s32 %s87, 1
    %s89 = scalar_select %p86, %s87, %s88
    %p92 = pneg %p86
    %p93 = scmp.eq.s32.totalorder %s9, 1
    %p94 = por %p92, %p93
    %p95 = scmp.ne.s32.totalorder %s87, %s90
    %p96 = scmp.eq.s32.totalorder %s9, 0
    %p97 = por %p95, %p96
    %p98 = scmp.ne.s32.totalorder %s87, %s90
    %p99 = scmp.eq.s32.totalorder %s14, 1
    %p100 = por %p98, %p99
    %p101 = scmp.ne.s32.totalorder %s90, %s91
    %p102 = scmp.eq.s32.totalorder %s14, 0
    %p103 = por %p101, %p102
    %p104 = scmp.ne.s32.totalorder %s90, %s91
    %p105 = scmp.eq.s32.totalorder %s15, 1
    %p106 = por %p104, %p105
    %p108 = scmp.ne.s32.totalorder %s91, %s107
    %p109 = scmp.eq.s32.totalorder %s15, 0
    %p110 = por %p108, %p109
    %p111 = scmp.le.s32.totalorder 1, %s9
    %p112 = scmp.lt.s32.totalorder %s9, 3
    %p113 = pnand %p111, %p112
    %p114 = pneg %p113
    // Predicated region
    $region9: #{_lambda_.7} parent=5 // pred_check
      _
    $region10: #{_lambda_.7} parent=5 // pred_check_branch
      %116 = sbr.rel (%p113) target = $region12
    $region11: #{_lambda_.7} parent=5 // pred_region
      %s117 = ssub.s32 %s9, 1
      // Predicated region
      $region13: #{_lambda_.7} parent=11 // pred_check
        %p118 = pneg %p56
      $region14: #{_lambda_.7} parent=11 // pred_check_branch
        %120 = sbr.rel (%p118) target = $region16
      $region15: #{_lambda_.7} parent=11 // pred_region
        _
      $region16: #{_lambda_.7} parent=11 // pred_fallthru
        _
      // Predicated region
      $region17: #{_lambda_.7} parent=11 // pred_check
        %p121 = pneg %p77
      $region18: #{_lambda_.7} parent=11 // pred_check_branch
        %123 = sbr.rel (%p121) target = $region20
      $region19: #{_lambda_.7} parent=11 // pred_region
        _
      $region20: #{_lambda_.7} parent=11 // pred_fallthru
        _
    $region12: #{_lambda_.7} parent=5 // pred_fallthru
      _
    %p124 = scmp.lt.s32.totalorder %s9, 2
    // Predicated region
    $region21: #{_lambda_.7} parent=5 // pred_check
      %p125 = pneg %p124
    $region22: #{_lambda_.7} parent=5 // pred_check_branch
      %127 = sbr.rel (%p125) target = $region24
    $region23: #{_lambda_.7} parent=5 // pred_region
      // Predicated region
      $region25: #{_lambda_.7} parent=23 // pred_check
        %p128 = pneg %p29
      $region26: #{_lambda_.7} parent=23 // pred_check_branch
        %130 = sbr.rel (%p128) target = $region28
      $region27: #{_lambda_.7} parent=23 // pred_region
        %s131 = smul.u32 16, %s9
        %p132 = scmp.lt.s32.totalorder %s131, 31
        %s133 = scalar_select %p132, %s131, 31
        %s134 = smul.addr %s133, 2
        %s135 = smul.addr %s134, 8
        %s136 = scalar_lea.vmem %s0, %s135
        %s137 = smul.u32 16, %s9
      $region28: #{_lambda_.7} parent=23 // pred_fallthru
        _
    $region24: #{_lambda_.7} parent=5 // pred_fallthru
      _
    %p138 = scmp.le.s32.totalorder 1, %s9
    %p139 = scmp.lt.s32.totalorder %s9, 3
    %p140 = pnand %p138, %p139
    %p141 = pneg %p140
    // Predicated region
    $region29: #{_lambda_.7} parent=5 // pred_check
      _
    $region30: #{_lambda_.7} parent=5 // pred_check_branch
      %143 = sbr.rel (%p140) target = $region32
    $region31: #{_lambda_.7} parent=5 // pred_region
      %s144 = ssub.s32 %s9, 1
      %s145 = smul.u32 16, %s14
      %p146 = scmp.lt.s32.totalorder %s145, 31
      %s147 = scalar_select %p146, %s145, 31
      %s148 = smul.addr %s147, 2
      %s149 = smul.addr %s148, 8
      %s150 = scalar_lea.vmem %s0, %s149
      %p151 = pneg %p35
      %p152 = pneg %p32
      %p153 = pneg %p56
      %p154 = pneg %p53
      %p155 = pneg %p77
      %p156 = pneg %p74
      %p157 = pneg %p103
      %p158 = pneg %p100
      %s159 = smul.u32 16, %s14
      %p160 = scmp.lt.s32.totalorder %s159, 31
      %s161 = scalar_select %p160, %s159, 31
      %s162 = smul.addr %s161, 8
      %s163 = smul.addr %s162, 8
      %s164 = scalar_lea.vmem %s3, %s163
      %s165 = smul.u32 16, %s14
      %p166 = scmp.lt.s32.totalorder %s165, 31
      %s167 = scalar_select %p166, %s165, 31
      %s168 = smul.addr %s167, 2
      %s169 = smul.addr %s168, 8
      %s170 = scalar_lea.vmem %s0, %s169
      %s171 = smul.u32 16, %s14
      %s172 = smul.u32 16, %s14
      %p173 = scmp.lt.s32.totalorder %s172, 31
      %s174 = scalar_select %p173, %s172, 31
      %s175 = smul.addr %s174, 8
      %s176 = smul.addr %s175, 8
      %s177 = scalar_lea.vmem %s3, %s176
      %s178 = smul.u32 16, %s14
      %v180 = vld [vmem:[%s170] sm:$0xff]
      %v181 = vld [vmem:[%s170 + $0x8] sm:$0xff]
      %v182 = vld [vmem:[%s170 + $0x10] sm:$0xff]
      %v183 = vld [vmem:[%s170 + $0x18] sm:$0xff]
      %v184 = vld [vmem:[%s170 + $0x20] sm:$0xff]
      %v185 = vld [vmem:[%s170 + $0x28] sm:$0xff]
      %v186 = vld [vmem:[%s170 + $0x30] sm:$0xff]
      %v187 = vld [vmem:[%s170 + $0x38] sm:$0xff]
      %v188 = vld [vmem:[%s170 + $0x40] sm:$0xff]
      %v189 = vld [vmem:[%s170 + $0x48] sm:$0xff]
      %v190 = vld [vmem:[%s170 + $0x50] sm:$0xff]
      %v191 = vld [vmem:[%s170 + $0x58] sm:$0xff]
      %v192 = vld [vmem:[%s170 + $0x60] sm:$0xff]
      %v193 = vld [vmem:[%s170 + $0x68] sm:$0xff]
      %v194 = vld [vmem:[%s170 + $0x70] sm:$0xff]
      %v195 = vld [vmem:[%s170 + $0x78] sm:$0xff]
      %v196 = vld [vmem:[%s170 + $0x80] sm:$0xff]
      %v197 = vld [vmem:[%s170 + $0x88] sm:$0xff]
      %v198 = vld [vmem:[%s170 + $0x90] sm:$0xff]
      %v199 = vld [vmem:[%s170 + $0x98] sm:$0xff]
      %v200 = vld [vmem:[%s170 + $0xa0] sm:$0xff]
      %v201 = vld [vmem:[%s170 + $0xa8] sm:$0xff]
      %v202 = vld [vmem:[%s170 + $0xb0] sm:$0xff]
      %v203 = vld [vmem:[%s170 + $0xb8] sm:$0xff]
      %v204 = vld [vmem:[%s170 + $0xc0] sm:$0xff]
      %v205 = vld [vmem:[%s170 + $0xc8] sm:$0xff]
      %v206 = vld [vmem:[%s170 + $0xd0] sm:$0xff]
      %v207 = vld [vmem:[%s170 + $0xd8] sm:$0xff]
      %v208 = vld [vmem:[%s170 + $0xe0] sm:$0xff]
      %v209 = vld [vmem:[%s170 + $0xe8] sm:$0xff]
      %v210 = vld [vmem:[%s170 + $0xf0] sm:$0xff]
      %v211 = vld [vmem:[%s170 + $0xf8] sm:$0xff]
      %v212 = vpack.c.bf16 %v182, %v180
      %v213 = vpack.c.bf16 %v183, %v181
      %v214 = vpack.c.bf16 %v186, %v184
      %v215 = vpack.c.bf16 %v187, %v185
      %v216 = vpack.c.bf16 %v190, %v188
      %v217 = vpack.c.bf16 %v191, %v189
      %v218 = vpack.c.bf16 %v194, %v192
      %v219 = vpack.c.bf16 %v195, %v193
      %v220 = vpack.c.bf16 %v198, %v196
      %v221 = vpack.c.bf16 %v199, %v197
      %v222 = vpack.c.bf16 %v202, %v200
      %v223 = vpack.c.bf16 %v203, %v201
      %v224 = vpack.c.bf16 %v206, %v204
      %v225 = vpack.c.bf16 %v207, %v205
      %v226 = vpack.c.bf16 %v210, %v208
      %v227 = vpack.c.bf16 %v211, %v209
      %v228 = vld [vmem:[%s1] sm:$0xff]
      %v229 = vld [vmem:[%s1 + $0x8] sm:$0xff]
      %v230 = vld [vmem:[%s1 + $0x10] sm:$0xff]
      %v231 = vld [vmem:[%s1 + $0x18] sm:$0xff]
      %v232 = vld [vmem:[%s1 + $0x20] sm:$0xff]
      %v233 = vld [vmem:[%s1 + $0x28] sm:$0xff]
      %v234 = vld [vmem:[%s1 + $0x30] sm:$0xff]
      %v235 = vld [vmem:[%s1 + $0x38] sm:$0xff]
      %v236 = vld [vmem:[%s1 + $0x40] sm:$0xff]
      %v237 = vld [vmem:[%s1 + $0x48] sm:$0xff]
      %v238 = vld [vmem:[%s1 + $0x50] sm:$0xff]
      %v239 = vld [vmem:[%s1 + $0x58] sm:$0xff]
      %v240 = vld [vmem:[%s1 + $0x60] sm:$0xff]
      %v241 = vld [vmem:[%s1 + $0x68] sm:$0xff]
      %v242 = vld [vmem:[%s1 + $0x70] sm:$0xff]
      %v243 = vld [vmem:[%s1 + $0x78] sm:$0xff]
      %v244 = vld [vmem:[%s1 + $0x80] sm:$0xff]
      %v245 = vld [vmem:[%s1 + $0x88] sm:$0xff]
      %v246 = vld [vmem:[%s1 + $0x90] sm:$0xff]
      %v247 = vld [vmem:[%s1 + $0x98] sm:$0xff]
      %v248 = vld [vmem:[%s1 + $0xa0] sm:$0xff]
      %v249 = vld [vmem:[%s1 + $0xa8] sm:$0xff]
      %v250 = vld [vmem:[%s1 + $0xb0] sm:$0xff]
      %v251 = vld [vmem:[%s1 + $0xb8] sm:$0xff]
      %v252 = vld [vmem:[%s1 + $0xc0] sm:$0xff]
      %v253 = vld [vmem:[%s1 + $0xc8] sm:$0xff]
      %v254 = vld [vmem:[%s1 + $0xd0] sm:$0xff]
      %v255 = vld [vmem:[%s1 + $0xd8] sm:$0xff]
      %v256 = vld [vmem:[%s1 + $0xe0] sm:$0xff]
      %v257 = vld [vmem:[%s1 + $0xe8] sm:$0xff]
      %v258 = vld [vmem:[%s1 + $0xf0] sm:$0xff]
      %v259 = vld [vmem:[%s1 + $0xf8] sm:$0xff]
      %v260 = vld [vmem:[%s1 + $0x100] sm:$0xff]
      %v261 = vld [vmem:[%s1 + $0x108] sm:$0xff]
      %v262 = vld [vmem:[%s1 + $0x110] sm:$0xff]
      %v263 = vld [vmem:[%s1 + $0x118] sm:$0xff]
      %v264 = vld [vmem:[%s1 + $0x120] sm:$0xff]
      %v265 = vld [vmem:[%s1 + $0x128] sm:$0xff]
      %v266 = vld [vmem:[%s1 + $0x130] sm:$0xff]
      %v267 = vld [vmem:[%s1 + $0x138] sm:$0xff]
      %v268 = vld [vmem:[%s1 + $0x140] sm:$0xff]
      %v269 = vld [vmem:[%s1 + $0x148] sm:$0xff]
      %v270 = vld [vmem:[%s1 + $0x150] sm:$0xff]
      %v271 = vld [vmem:[%s1 + $0x158] sm:$0xff]
      %v272 = vld [vmem:[%s1 + $0x160] sm:$0xff]
      %v273 = vld [vmem:[%s1 + $0x168] sm:$0xff]
      %v274 = vld [vmem:[%s1 + $0x170] sm:$0xff]
      %v275 = vld [vmem:[%s1 + $0x178] sm:$0xff]
      %v276 = vld [vmem:[%s1 + $0x180] sm:$0xff]
      %v277 = vld [vmem:[%s1 + $0x188] sm:$0xff]
      %v278 = vld [vmem:[%s1 + $0x190] sm:$0xff]
      %v279 = vld [vmem:[%s1 + $0x198] sm:$0xff]
      %v280 = vld [vmem:[%s1 + $0x1a0] sm:$0xff]
      %v281 = vld [vmem:[%s1 + $0x1a8] sm:$0xff]
      %v282 = vld [vmem:[%s1 + $0x1b0] sm:$0xff]
      %v283 = vld [vmem:[%s1 + $0x1b8] sm:$0xff]
      %v284 = vld [vmem:[%s1 + $0x1c0] sm:$0xff]
      %v285 = vld [vmem:[%s1 + $0x1c8] sm:$0xff]
      %v286 = vld [vmem:[%s1 + $0x1d0] sm:$0xff]
      %v287 = vld [vmem:[%s1 + $0x1d8] sm:$0xff]
      %v288 = vld [vmem:[%s1 + $0x1e0] sm:$0xff]
      %v289 = vld [vmem:[%s1 + $0x1e8] sm:$0xff]
      %v290 = vld [vmem:[%s1 + $0x1f0] sm:$0xff]
      %v291 = vld [vmem:[%s1 + $0x1f8] sm:$0xff]
      %v292 = vld [vmem:[%s1 + $0x200] sm:$0x33]
      %v293 = vld [vmem:[%s1 + $0x208] sm:$0x33]
      %v294 = vld [vmem:[%s1 + $0x210] sm:$0x33]
      %v295 = vld [vmem:[%s1 + $0x218] sm:$0x33]
      %v296 = vld [vmem:[%s2] sm:$0xff]
      %v298 = vlaneseq
      %v299 = vshrl.u32 %v298, 7
      %v300 = vsub.s32 0, %v299
      %v301 = vrot.slane %v296, %v300
      %v302 = vlaneseq
      %v303 = vshrl.u32 %v302, 7
      %v304 = vsub.s32 1, %v303
      %v305 = vrot.slane %v296, %v304
      %v306 = vlaneseq
      %v307 = vshrl.u32 %v306, 7
      %v308 = vsub.s32 2, %v307
      %v309 = vrot.slane %v296, %v308
      %v310 = vlaneseq
      %v311 = vshrl.u32 %v310, 7
      %v312 = vsub.s32 3, %v311
      %v313 = vrot.slane %v296, %v312
      %v314 = vlaneseq
      %v315 = vshrl.u32 %v314, 7
      %v316 = vsub.s32 4, %v315
      %v317 = vrot.slane %v296, %v316
      %v318 = vlaneseq
      %v319 = vshrl.u32 %v318, 7
      %v320 = vsub.s32 5, %v319
      %v321 = vrot.slane %v296, %v320
      %v322 = vlaneseq
      %v323 = vshrl.u32 %v322, 7
      %v324 = vsub.s32 6, %v323
      %v325 = vrot.slane %v296, %v324
      %v326 = vlaneseq
      %v327 = vshrl.u32 %v326, 7
      %v328 = vsub.s32 7, %v327
      %v329 = vrot.slane %v296, %v328
      %v406 = vunpack.c.l.b16 %v228
      %v407 = vunpack.c.h.b16 %v228
      %v408 = vunpack.c.l.b16 %v229
      %v409 = vunpack.c.h.b16 %v229
      %v410 = vunpack.c.l.b16 %v230
      %v411 = vunpack.c.h.b16 %v230
      %v412 = vunpack.c.l.b16 %v231
      %v413 = vunpack.c.h.b16 %v231
      %v414 = vunpack.c.l.b16 %v232
      %v415 = vunpack.c.h.b16 %v232
      %v416 = vunpack.c.l.b16 %v233
      %v417 = vunpack.c.h.b16 %v233
      %v418 = vunpack.c.l.b16 %v234
      %v419 = vunpack.c.h.b16 %v234
      %v420 = vunpack.c.l.b16 %v235
      %v421 = vunpack.c.h.b16 %v235
      %v422 = vunpack.c.l.b16 %v236
      %v423 = vunpack.c.h.b16 %v236
      %v424 = vunpack.c.l.b16 %v237
      %v425 = vunpack.c.h.b16 %v237
      %v426 = vunpack.c.l.b16 %v238
      %v427 = vunpack.c.h.b16 %v238
      %v428 = vunpack.c.l.b16 %v239
      %v429 = vunpack.c.h.b16 %v239
      %v430 = vunpack.c.l.b16 %v240
      %v431 = vunpack.c.h.b16 %v240
      %v432 = vunpack.c.l.b16 %v241
      %v433 = vunpack.c.h.b16 %v241
      %v434 = vunpack.c.l.b16 %v242
      %v435 = vunpack.c.h.b16 %v242
      %v436 = vunpack.c.l.b16 %v243
      %v437 = vunpack.c.h.b16 %v243
      %v438 = vunpack.c.l.b16 %v244
      %v439 = vunpack.c.h.b16 %v244
      %v440 = vunpack.c.l.b16 %v245
      %v441 = vunpack.c.h.b16 %v245
      %v442 = vunpack.c.l.b16 %v246
      %v443 = vunpack.c.h.b16 %v246
      %v444 = vunpack.c.l.b16 %v247
      %v445 = vunpack.c.h.b16 %v247
      %v446 = vunpack.c.l.b16 %v248
      %v447 = vunpack.c.h.b16 %v248
      %v448 = vunpack.c.l.b16 %v249
      %v449 = vunpack.c.h.b16 %v249
      %v450 = vunpack.c.l.b16 %v250
      %v451 = vunpack.c.h.b16 %v250
      %v452 = vunpack.c.l.b16 %v251
      %v453 = vunpack.c.h.b16 %v251
      %v454 = vunpack.c.l.b16 %v252
      %v455 = vunpack.c.h.b16 %v252
      %v456 = vunpack.c.l.b16 %v253
      %v457 = vunpack.c.h.b16 %v253
      %v458 = vunpack.c.l.b16 %v254
      %v459 = vunpack.c.h.b16 %v254
      %v460 = vunpack.c.l.b16 %v255
      %v461 = vunpack.c.h.b16 %v255
      %v462 = vunpack.c.l.b16 %v256
      %v463 = vunpack.c.h.b16 %v256
      %v464 = vunpack.c.l.b16 %v257
      %v465 = vunpack.c.h.b16 %v257
      %v466 = vunpack.c.l.b16 %v258
      %v467 = vunpack.c.h.b16 %v258
      %v468 = vunpack.c.l.b16 %v259
      %v469 = vunpack.c.h.b16 %v259
      %v470 = vunpack.c.l.b16 %v260
      %v471 = vunpack.c.h.b16 %v260
      %v472 = vunpack.c.l.b16 %v261
      %v473 = vunpack.c.h.b16 %v261
      %v474 = vunpack.c.l.b16 %v262
      %v475 = vunpack.c.h.b16 %v262
      %v476 = vunpack.c.l.b16 %v263
      %v477 = vunpack.c.h.b16 %v263
      %v478 = vunpack.c.l.b16 %v264
      %v479 = vunpack.c.h.b16 %v264
      %v480 = vunpack.c.l.b16 %v265
      %v481 = vunpack.c.h.b16 %v265
      %v482 = vunpack.c.l.b16 %v266
      %v483 = vunpack.c.h.b16 %v266
      %v484 = vunpack.c.l.b16 %v267
      %v485 = vunpack.c.h.b16 %v267
      %v486 = vunpack.c.l.b16 %v268
      %v487 = vunpack.c.h.b16 %v268
      %v488 = vunpack.c.l.b16 %v269
      %v489 = vunpack.c.h.b16 %v269
      %v490 = vunpack.c.l.b16 %v270
      %v491 = vunpack.c.h.b16 %v270
      %v492 = vunpack.c.l.b16 %v271
      %v493 = vunpack.c.h.b16 %v271
      %v494 = vunpack.c.l.b16 %v272
      %v495 = vunpack.c.h.b16 %v272
      %v496 = vunpack.c.l.b16 %v273
      %v497 = vunpack.c.h.b16 %v273
      %v498 = vunpack.c.l.b16 %v274
      %v499 = vunpack.c.h.b16 %v274
      %v500 = vunpack.c.l.b16 %v275
      %v501 = vunpack.c.h.b16 %v275
      %v502 = vunpack.c.l.b16 %v276
      %v503 = vunpack.c.h.b16 %v276
      %v504 = vunpack.c.l.b16 %v277
      %v505 = vunpack.c.h.b16 %v277
      %v506 = vunpack.c.l.b16 %v278
      %v507 = vunpack.c.h.b16 %v278
      %v508 = vunpack.c.l.b16 %v279
      %v509 = vunpack.c.h.b16 %v279
      %v510 = vunpack.c.l.b16 %v280
      %v511 = vunpack.c.h.b16 %v280
      %v512 = vunpack.c.l.b16 %v281
      %v513 = vunpack.c.h.b16 %v281
      %v514 = vunpack.c.l.b16 %v282
      %v515 = vunpack.c.h.b16 %v282
      %v516 = vunpack.c.l.b16 %v283
      %v517 = vunpack.c.h.b16 %v283
      %v518 = vunpack.c.l.b16 %v284
      %v519 = vunpack.c.h.b16 %v284
      %v520 = vunpack.c.l.b16 %v285
      %v521 = vunpack.c.h.b16 %v285
      %v522 = vunpack.c.l.b16 %v286
      %v523 = vunpack.c.h.b16 %v286
      %v524 = vunpack.c.l.b16 %v287
      %v525 = vunpack.c.h.b16 %v287
      %v526 = vunpack.c.l.b16 %v288
      %v527 = vunpack.c.h.b16 %v288
      %v528 = vunpack.c.l.b16 %v289
      %v529 = vunpack.c.h.b16 %v289
      %v530 = vunpack.c.l.b16 %v290
      %v531 = vunpack.c.h.b16 %v290
      %v532 = vunpack.c.l.b16 %v291
      %v533 = vunpack.c.h.b16 %v291
      %v534 = vunpack.c.l.b16 %v292
      %v535 = vunpack.c.h.b16 %v292
      %v536 = vunpack.c.l.b16 %v293
      %v537 = vunpack.c.h.b16 %v293
      %v538 = vunpack.c.l.b16 %v294
      %v539 = vunpack.c.h.b16 %v294
      %v540 = vunpack.c.l.b16 %v295
      %v541 = vunpack.c.h.b16 %v295
      %v542 = vpack.c.b16 %v414, %v406
      %v543 = vpack.c.b16 %v415, %v407
      %v544 = vpack.c.b16 %v416, %v408
      %v545 = vpack.c.b16 %v417, %v409
      %v546 = vpack.c.b16 %v418, %v410
      %v547 = vpack.c.b16 %v419, %v411
      %v548 = vpack.c.b16 %v420, %v412
      %v549 = vpack.c.b16 %v421, %v413
      %v550 = vpack.c.b16 %v430, %v422
      %v551 = vpack.c.b16 %v431, %v423
      %v552 = vpack.c.b16 %v432, %v424
      %v553 = vpack.c.b16 %v433, %v425
      %v554 = vpack.c.b16 %v434, %v426
      %v555 = vpack.c.b16 %v435, %v427
      %v556 = vpack.c.b16 %v436, %v428
      %v557 = vpack.c.b16 %v437, %v429
      %v558 = vpack.c.b16 %v446, %v438
      %v559 = vpack.c.b16 %v447, %v439
      %v560 = vpack.c.b16 %v448, %v440
      %v561 = vpack.c.b16 %v449, %v441
      %v562 = vpack.c.b16 %v450, %v442
      %v563 = vpack.c.b16 %v451, %v443
      %v564 = vpack.c.b16 %v452, %v444
      %v565 = vpack.c.b16 %v453, %v445
      %v566 = vpack.c.b16 %v462, %v454
      %v567 = vpack.c.b16 %v463, %v455
      %v568 = vpack.c.b16 %v464, %v456
      %v569 = vpack.c.b16 %v465, %v457
      %v570 = vpack.c.b16 %v466, %v458
      %v571 = vpack.c.b16 %v467, %v459
      %v572 = vpack.c.b16 %v468, %v460
      %v573 = vpack.c.b16 %v469, %v461
      %v574 = vpack.c.b16 %v478, %v470
      %v575 = vpack.c.b16 %v479, %v471
      %v576 = vpack.c.b16 %v480, %v472
      %v577 = vpack.c.b16 %v481, %v473
      %v578 = vpack.c.b16 %v482, %v474
      %v579 = vpack.c.b16 %v483, %v475
      %v580 = vpack.c.b16 %v484, %v476
      %v581 = vpack.c.b16 %v485, %v477
      %v582 = vpack.c.b16 %v494, %v486
      %v583 = vpack.c.b16 %v495, %v487
      %v584 = vpack.c.b16 %v496, %v488
      %v585 = vpack.c.b16 %v497, %v489
      %v586 = vpack.c.b16 %v498, %v490
      %v587 = vpack.c.b16 %v499, %v491
      %v588 = vpack.c.b16 %v500, %v492
      %v589 = vpack.c.b16 %v501, %v493
      %v590 = vpack.c.b16 %v510, %v502
      %v591 = vpack.c.b16 %v511, %v503
      %v592 = vpack.c.b16 %v512, %v504
      %v593 = vpack.c.b16 %v513, %v505
      %v594 = vpack.c.b16 %v514, %v506
      %v595 = vpack.c.b16 %v515, %v507
      %v596 = vpack.c.b16 %v516, %v508
      %v597 = vpack.c.b16 %v517, %v509
      %v598 = vpack.c.b16 %v526, %v518
      %v599 = vpack.c.b16 %v527, %v519
      %v600 = vpack.c.b16 %v528, %v520
      %v601 = vpack.c.b16 %v529, %v521
      %v602 = vpack.c.b16 %v530, %v522
      %v603 = vpack.c.b16 %v531, %v523
      %v604 = vpack.c.b16 %v532, %v524
      %v605 = vpack.c.b16 %v533, %v525
      %v606 = vpack.c.b16 %v534, %v534
      %v607 = vpack.c.b16 %v535, %v535
      %v608 = vpack.c.b16 %v536, %v536
      %v609 = vpack.c.b16 %v537, %v537
      %v610 = vpack.c.b16 %v538, %v538
      %v611 = vpack.c.b16 %v539, %v539
      %v612 = vpack.c.b16 %v540, %v540
      %v613 = vpack.c.b16 %v541, %v541
      %vm678 = vcmask 31744
      %v680 = vsel %vm678, %v213, 0
      %v683 = vsel %vm678, %v215, 0
      %v686 = vsel %vm678, %v217, 0
      %v689 = vsel %vm678, %v219, 0
      %v692 = vsel %vm678, %v221, 0
      %v695 = vsel %vm678, %v223, 0
      %v698 = vsel %vm678, %v225, 0
      %v701 = vsel %vm678, %v227, 0
      %vm703 = vcmask 1041408
      %v705 = vsel %vm703, %v606, 0
      %v708 = vsel %vm703, %v607, 0
      %v711 = vsel %vm703, %v608, 0
      %v714 = vsel %vm703, %v609, 0
      %v717 = vsel %vm703, %v610, 0
      %v720 = vsel %vm703, %v611, 0
      %v723 = vsel %vm703, %v612, 0
      %v726 = vsel %vm703, %v613, 0
      %728 = vmatprep.subr.bf16.mxu0 %v599
      %729 = vmatpush1.bf16.msra.mxu0 %v598
      %730 = vmatprep.subr.bf16.mxu0 %v591
      %731 = vmatpush1.bf16.msra.mxu0 %v590
      %732 = vmatprep.subr.bf16.mxu0 %v583
      %733 = vmatpush1.bf16.msra.mxu0 %v582
      %734 = vmatprep.subr.bf16.mxu0 %v575
      %735 = vmatpush1.bf16.msra.mxu0 %v574
      %736 = vmatprep.subr.bf16.mxu0 %v567
      %737 = vmatpush1.bf16.msra.mxu0 %v566
      %738 = vmatprep.subr.bf16.mxu0 %v559
      %739 = vmatpush1.bf16.msra.mxu0 %v558
      %740 = vmatprep.subr.bf16.mxu0 %v551
      %741 = vmatpush1.bf16.msra.mxu0 %v550
      %742 = vmatprep.subr.bf16.mxu0 %v543
      %743 = vmatpush1.bf16.msra.mxu0 %v542
      %744 = vmatprep.subr.bf16.mxu0 0
      %745 = vmatpush2.bf16.msra.mxu0 0
      %746 = vmatprep.subr.bf16.mxu0 0
      %747 = vmatpush2.bf16.msra.mxu0 0
      %748 = vmatprep.subr.bf16.mxu0 0
      %749 = vmatpush2.bf16.msra.mxu0 0
      %750 = vmatprep.subr.bf16.mxu0 0
      %751 = vmatpush2.bf16.msra.mxu0 0
      %752 = vmatprep.subr.bf16.mxu0 0
      %753 = vmatpush2.bf16.msra.mxu0 0
      %754 = vmatprep.subr.bf16.mxu0 0
      %755 = vmatpush2.bf16.msra.mxu0 0
      %756 = vmatprep.subr.bf16.mxu0 0
      %757 = vmatpush2.bf16.msra.mxu0 0
      %758 = vmatprep.subr.bf16.mxu0 %v708
      %759 = vmatpush2.bf16.msra.mxu0 %v705
      %760 = vmatprep.mubr.bf16.mxu0 %v680
      %761 = vmatmul.mubr.bf16.gmra.mxu0 %v212
      %v762 = vpop.f32.mrf.mxu0
      %v763 = vadd.f32 %v301, %v762
      %v764 = vpop.f32.mrf.mxu0
      %v765 = vadd.f32 %v305, %v764
      %v766 = vpop.f32.mrf.mxu0
      %v767 = vadd.f32 %v301, %v766
      %v768 = vpop.f32.mrf.mxu0
      %v769 = vadd.f32 %v305, %v768
      %770 = vmatprep.mubr.bf16.mxu0 %v683
      %771 = vmatmul.mubr.bf16.gmra.mxu0 %v214
      %v772 = vpop.f32.mrf.mxu0
      %v773 = vadd.f32 %v301, %v772
      %v774 = vpop.f32.mrf.mxu0
      %v775 = vadd.f32 %v305, %v774
      %v776 = vpop.f32.mrf.mxu0
      %v777 = vadd.f32 %v301, %v776
      %v778 = vpop.f32.mrf.mxu0
      %v779 = vadd.f32 %v305, %v778
      %780 = vmatprep.mubr.bf16.mxu0 %v686
      %781 = vmatmul.mubr.bf16.gmra.mxu0 %v216
      %v782 = vpop.f32.mrf.mxu0
      %v783 = vadd.f32 %v301, %v782
      %v784 = vpop.f32.mrf.mxu0
      %v785 = vadd.f32 %v305, %v784
      %v786 = vpop.f32.mrf.mxu0
      %v787 = vadd.f32 %v301, %v786
      %v788 = vpop.f32.mrf.mxu0
      %v789 = vadd.f32 %v305, %v788
      %790 = vmatprep.mubr.bf16.mxu0 %v689
      %791 = vmatmul.mubr.bf16.gmra.mxu0 %v218
      %v792 = vpop.f32.mrf.mxu0
      %v793 = vadd.f32 %v301, %v792
      %v794 = vpop.f32.mrf.mxu0
      %v795 = vadd.f32 %v305, %v794
      %v796 = vpop.f32.mrf.mxu0
      %v797 = vadd.f32 %v301, %v796
      %v798 = vpop.f32.mrf.mxu0
      %v799 = vadd.f32 %v305, %v798
      %800 = vmatprep.mubr.bf16.mxu0 %v692
      %801 = vmatmul.mubr.bf16.gmra.mxu0 %v220
      %v802 = vpop.f32.mrf.mxu0
      %v803 = vadd.f32 %v301, %v802
      %v804 = vpop.f32.mrf.mxu0
      %v805 = vadd.f32 %v305, %v804
      %v806 = vpop.f32.mrf.mxu0
      %v807 = vadd.f32 %v301, %v806
      %v808 = vpop.f32.mrf.mxu0
      %v809 = vadd.f32 %v305, %v808
      %810 = vmatprep.mubr.bf16.mxu0 %v695
      %811 = vmatmul.mubr.bf16.gmra.mxu0 %v222
      %v812 = vpop.f32.mrf.mxu0
      %v813 = vadd.f32 %v301, %v812
      %v814 = vpop.f32.mrf.mxu0
      %v815 = vadd.f32 %v305, %v814
      %v816 = vpop.f32.mrf.mxu0
      %v817 = vadd.f32 %v301, %v816
      %v818 = vpop.f32.mrf.mxu0
      %v819 = vadd.f32 %v305, %v818
      %820 = vmatprep.mubr.bf16.mxu0 %v698
      %821 = vmatmul.mubr.bf16.gmra.mxu0 %v224
      %v822 = vpop.f32.mrf.mxu0
      %v823 = vadd.f32 %v301, %v822
      %v824 = vpop.f32.mrf.mxu0
      %v825 = vadd.f32 %v305, %v824
      %v826 = vpop.f32.mrf.mxu0
      %v827 = vadd.f32 %v301, %v826
      %v828 = vpop.f32.mrf.mxu0
      %v829 = vadd.f32 %v305, %v828
      %830 = vmatprep.mubr.bf16.mxu0 %v701
      %831 = vmatmul.mubr.bf16.gmra.mxu0 %v226
      %v832 = vpop.f32.mrf.mxu0
      %v833 = vadd.f32 %v301, %v832
      %v834 = vpop.f32.mrf.mxu0
      %v835 = vadd.f32 %v305, %v834
      %v836 = vpop.f32.mrf.mxu0
      %v837 = vadd.f32 %v301, %v836
      %v838 = vpop.f32.mrf.mxu0
      %v839 = vadd.f32 %v305, %v838
      %840 = vdwg.mxu0
      %841 = vmatprep.subr.bf16.mxu0 %v601
      %842 = vmatpush1.bf16.msra.mxu0 %v600
      %843 = vmatprep.subr.bf16.mxu0 %v593
      %844 = vmatpush1.bf16.msra.mxu0 %v592
      %845 = vmatprep.subr.bf16.mxu0 %v585
      %846 = vmatpush1.bf16.msra.mxu0 %v584
      %847 = vmatprep.subr.bf16.mxu0 %v577
      %848 = vmatpush1.bf16.msra.mxu0 %v576
      %849 = vmatprep.subr.bf16.mxu0 %v569
      %850 = vmatpush1.bf16.msra.mxu0 %v568
      %851 = vmatprep.subr.bf16.mxu0 %v561
      %852 = vmatpush1.bf16.msra.mxu0 %v560
      %853 = vmatprep.subr.bf16.mxu0 %v553
      %854 = vmatpush1.bf16.msra.mxu0 %v552
      %855 = vmatprep.subr.bf16.mxu0 %v545
      %856 = vmatpush1.bf16.msra.mxu0 %v544
      %857 = vmatprep.subr.bf16.mxu0 0
      %858 = vmatpush2.bf16.msra.mxu0 0
      %859 = vmatprep.subr.bf16.mxu0 0
      %860 = vmatpush2.bf16.msra.mxu0 0
      %861 = vmatprep.subr.bf16.mxu0 0
      %862 = vmatpush2.bf16.msra.mxu0 0
      %863 = vmatprep.subr.bf16.mxu0 0
      %864 = vmatpush2.bf16.msra.mxu0 0
      %865 = vmatprep.subr.bf16.mxu0 0
      %866 = vmatpush2.bf16.msra.mxu0 0
      %867 = vmatprep.subr.bf16.mxu0 0
      %868 = vmatpush2.bf16.msra.mxu0 0
      %869 = vmatprep.subr.bf16.mxu0 0
      %870 = vmatpush2.bf16.msra.mxu0 0
      %871 = vmatprep.subr.bf16.mxu0 %v714
      %872 = vmatpush2.bf16.msra.mxu0 %v711
      %873 = vmatprep.mubr.bf16.mxu0 %v680
      %874 = vmatmul.mubr.bf16.gmra.mxu0 %v212
      %v875 = vpop.f32.mrf.mxu0
      %v876 = vadd.f32 %v309, %v875
      %v877 = vpop.f32.mrf.mxu0
      %v878 = vadd.f32 %v313, %v877
      %v879 = vpop.f32.mrf.mxu0
      %v880 = vadd.f32 %v309, %v879
      %v881 = vpop.f32.mrf.mxu0
      %v882 = vadd.f32 %v313, %v881
      %883 = vmatprep.mubr.bf16.mxu0 %v683
      %884 = vmatmul.mubr.bf16.gmra.mxu0 %v214
      %v885 = vpop.f32.mrf.mxu0
      %v886 = vadd.f32 %v309, %v885
      %v887 = vpop.f32.mrf.mxu0
      %v888 = vadd.f32 %v313, %v887
      %v889 = vpop.f32.mrf.mxu0
      %v890 = vadd.f32 %v309, %v889
      %v891 = vpop.f32.mrf.mxu0
      %v892 = vadd.f32 %v313, %v891
      %893 = vmatprep.mubr.bf16.mxu0 %v686
      %894 = vmatmul.mubr.bf16.gmra.mxu0 %v216
      %v895 = vpop.f32.mrf.mxu0
      %v896 = vadd.f32 %v309, %v895
      %v897 = vpop.f32.mrf.mxu0
      %v898 = vadd.f32 %v313, %v897
      %v899 = vpop.f32.mrf.mxu0
      %v900 = vadd.f32 %v309, %v899
      %v901 = vpop.f32.mrf.mxu0
      %v902 = vadd.f32 %v313, %v901
      %903 = vmatprep.mubr.bf16.mxu0 %v689
      %904 = vmatmul.mubr.bf16.gmra.mxu0 %v218
      %v905 = vpop.f32.mrf.mxu0
      %v906 = vadd.f32 %v309, %v905
      %v907 = vpop.f32.mrf.mxu0
      %v908 = vadd.f32 %v313, %v907
      %v909 = vpop.f32.mrf.mxu0
      %v910 = vadd.f32 %v309, %v909
      %v911 = vpop.f32.mrf.mxu0
      %v912 = vadd.f32 %v313, %v911
      %913 = vmatprep.mubr.bf16.mxu0 %v692
      %914 = vmatmul.mubr.bf16.gmra.mxu0 %v220
      %v915 = vpop.f32.mrf.mxu0
      %v916 = vadd.f32 %v309, %v915
      %v917 = vpop.f32.mrf.mxu0
      %v918 = vadd.f32 %v313, %v917
      %v919 = vpop.f32.mrf.mxu0
      %v920 = vadd.f32 %v309, %v919
      %v921 = vpop.f32.mrf.mxu0
      %v922 = vadd.f32 %v313, %v921
      %923 = vmatprep.mubr.bf16.mxu0 %v695
      %924 = vmatmul.mubr.bf16.gmra.mxu0 %v222
      %v925 = vpop.f32.mrf.mxu0
      %v926 = vadd.f32 %v309, %v925
      %v927 = vpop.f32.mrf.mxu0
      %v928 = vadd.f32 %v313, %v927
      %v929 = vpop.f32.mrf.mxu0
      %v930 = vadd.f32 %v309, %v929
      %v931 = vpop.f32.mrf.mxu0
      %v932 = vadd.f32 %v313, %v931
      %933 = vmatprep.mubr.bf16.mxu0 %v698
      %934 = vmatmul.mubr.bf16.gmra.mxu0 %v224
      %v935 = vpop.f32.mrf.mxu0
      %v936 = vadd.f32 %v309, %v935
      %v937 = vpop.f32.mrf.mxu0
      %v938 = vadd.f32 %v313, %v937
      %v939 = vpop.f32.mrf.mxu0
      %v940 = vadd.f32 %v309, %v939
      %v941 = vpop.f32.mrf.mxu0
      %v942 = vadd.f32 %v313, %v941
      %943 = vmatprep.mubr.bf16.mxu0 %v701
      %944 = vmatmul.mubr.bf16.gmra.mxu0 %v226
      %v945 = vpop.f32.mrf.mxu0
      %v946 = vadd.f32 %v309, %v945
      %v947 = vpop.f32.mrf.mxu0
      %v948 = vadd.f32 %v313, %v947
      %v949 = vpop.f32.mrf.mxu0
      %v950 = vadd.f32 %v309, %v949
      %v951 = vpop.f32.mrf.mxu0
      %v952 = vadd.f32 %v313, %v951
      %953 = vdwg.mxu0
      %954 = vmatprep.subr.bf16.mxu0 %v603
      %955 = vmatpush1.bf16.msra.mxu0 %v602
      %956 = vmatprep.subr.bf16.mxu0 %v595
      %957 = vmatpush1.bf16.msra.mxu0 %v594
      %958 = vmatprep.subr.bf16.mxu0 %v587
      %959 = vmatpush1.bf16.msra.mxu0 %v586
      %960 = vmatprep.subr.bf16.mxu0 %v579
      %961 = vmatpush1.bf16.msra.mxu0 %v578
      %962 = vmatprep.subr.bf16.mxu0 %v571
      %963 = vmatpush1.bf16.msra.mxu0 %v570
      %964 = vmatprep.subr.bf16.mxu0 %v563
      %965 = vmatpush1.bf16.msra.mxu0 %v562
      %966 = vmatprep.subr.bf16.mxu0 %v555
      %967 = vmatpush1.bf16.msra.mxu0 %v554
      %968 = vmatprep.subr.bf16.mxu0 %v547
      %969 = vmatpush1.bf16.msra.mxu0 %v546
      %970 = vmatprep.subr.bf16.mxu0 0
      %971 = vmatpush2.bf16.msra.mxu0 0
      %972 = vmatprep.subr.bf16.mxu0 0
      %973 = vmatpush2.bf16.msra.mxu0 0
      %974 = vmatprep.subr.bf16.mxu0 0
      %975 = vmatpush2.bf16.msra.mxu0 0
      %976 = vmatprep.subr.bf16.mxu0 0
      %977 = vmatpush2.bf16.msra.mxu0 0
      %978 = vmatprep.subr.bf16.mxu0 0
      %979 = vmatpush2.bf16.msra.mxu0 0
      %980 = vmatprep.subr.bf16.mxu0 0
      %981 = vmatpush2.bf16.msra.mxu0 0
      %982 = vmatprep.subr.bf16.mxu0 0
      %983 = vmatpush2.bf16.msra.mxu0 0
      %984 = vmatprep.subr.bf16.mxu0 %v720
      %985 = vmatpush2.bf16.msra.mxu0 %v717
      %986 = vmatprep.mubr.bf16.mxu0 %v680
      %987 = vmatmul.mubr.bf16.gmra.mxu0 %v212
      %v988 = vpop.f32.mrf.mxu0
      %v989 = vadd.f32 %v317, %v988
      %v990 = vpop.f32.mrf.mxu0
      %v991 = vadd.f32 %v321, %v990
      %v992 = vpop.f32.mrf.mxu0
      %v993 = vadd.f32 %v317, %v992
      %v994 = vpop.f32.mrf.mxu0
      %v995 = vadd.f32 %v321, %v994
      %996 = vmatprep.mubr.bf16.mxu0 %v683
      %997 = vmatmul.mubr.bf16.gmra.mxu0 %v214
      %v998 = vpop.f32.mrf.mxu0
      %v999 = vadd.f32 %v317, %v998
      %v1000 = vpop.f32.mrf.mxu0
      %v1001 = vadd.f32 %v321, %v1000
      %v1002 = vpop.f32.mrf.mxu0
      %v1003 = vadd.f32 %v317, %v1002
      %v1004 = vpop.f32.mrf.mxu0
      %v1005 = vadd.f32 %v321, %v1004
      %1006 = vmatprep.mubr.bf16.mxu0 %v686
      %1007 = vmatmul.mubr.bf16.gmra.mxu0 %v216
      %v1008 = vpop.f32.mrf.mxu0
      %v1009 = vadd.f32 %v317, %v1008
      %v1010 = vpop.f32.mrf.mxu0
      %v1011 = vadd.f32 %v321, %v1010
      %v1012 = vpop.f32.mrf.mxu0
      %v1013 = vadd.f32 %v317, %v1012
      %v1014 = vpop.f32.mrf.mxu0
      %v1015 = vadd.f32 %v321, %v1014
      %1016 = vmatprep.mubr.bf16.mxu0 %v689
      %1017 = vmatmul.mubr.bf16.gmra.mxu0 %v218
      %v1018 = vpop.f32.mrf.mxu0
      %v1019 = vadd.f32 %v317, %v1018
      %v1020 = vpop.f32.mrf.mxu0
      %v1021 = vadd.f32 %v321, %v1020
      %v1022 = vpop.f32.mrf.mxu0
      %v1023 = vadd.f32 %v317, %v1022
      %v1024 = vpop.f32.mrf.mxu0
      %v1025 = vadd.f32 %v321, %v1024
      %1026 = vmatprep.mubr.bf16.mxu0 %v692
      %1027 = vmatmul.mubr.bf16.gmra.mxu0 %v220
      %v1028 = vpop.f32.mrf.mxu0
      %v1029 = vadd.f32 %v317, %v1028
      %v1030 = vpop.f32.mrf.mxu0
      %v1031 = vadd.f32 %v321, %v1030
      %v1032 = vpop.f32.mrf.mxu0
      %v1033 = vadd.f32 %v317, %v1032
      %v1034 = vpop.f32.mrf.mxu0
      %v1035 = vadd.f32 %v321, %v1034
      %1036 = vmatprep.mubr.bf16.mxu0 %v695
      %1037 = vmatmul.mubr.bf16.gmra.mxu0 %v222
      %v1038 = vpop.f32.mrf.mxu0
      %v1039 = vadd.f32 %v317, %v1038
      %v1040 = vpop.f32.mrf.mxu0
      %v1041 = vadd.f32 %v321, %v1040
      %v1042 = vpop.f32.mrf.mxu0
      %v1043 = vadd.f32 %v317, %v1042
      %v1044 = vpop.f32.mrf.mxu0
      %v1045 = vadd.f32 %v321, %v1044
      %1046 = vmatprep.mubr.bf16.mxu0 %v698
      %1047 = vmatmul.mubr.bf16.gmra.mxu0 %v224
      %v1048 = vpop.f32.mrf.mxu0
      %v1049 = vadd.f32 %v317, %v1048
      %v1050 = vpop.f32.mrf.mxu0
      %v1051 = vadd.f32 %v321, %v1050
      %v1052 = vpop.f32.mrf.mxu0
      %v1053 = vadd.f32 %v317, %v1052
      %v1054 = vpop.f32.mrf.mxu0
      %v1055 = vadd.f32 %v321, %v1054
      %1056 = vmatprep.mubr.bf16.mxu0 %v701
      %1057 = vmatmul.mubr.bf16.gmra.mxu0 %v226
      %v1058 = vpop.f32.mrf.mxu0
      %v1059 = vadd.f32 %v317, %v1058
      %v1060 = vpop.f32.mrf.mxu0
      %v1061 = vadd.f32 %v321, %v1060
      %v1062 = vpop.f32.mrf.mxu0
      %v1063 = vadd.f32 %v317, %v1062
      %v1064 = vpop.f32.mrf.mxu0
      %v1065 = vadd.f32 %v321, %v1064
      %1066 = vdwg.mxu0
      %1067 = vmatprep.subr.bf16.mxu0 %v605
      %1068 = vmatpush1.bf16.msra.mxu0 %v604
      %1069 = vmatprep.subr.bf16.mxu0 %v597
      %1070 = vmatpush1.bf16.msra.mxu0 %v596
      %1071 = vmatprep.subr.bf16.mxu0 %v589
      %1072 = vmatpush1.bf16.msra.mxu0 %v588
      %1073 = vmatprep.subr.bf16.mxu0 %v581
      %1074 = vmatpush1.bf16.msra.mxu0 %v580
      %1075 = vmatprep.subr.bf16.mxu0 %v573
      %1076 = vmatpush1.bf16.msra.mxu0 %v572
      %1077 = vmatprep.subr.bf16.mxu0 %v565
      %1078 = vmatpush1.bf16.msra.mxu0 %v564
      %1079 = vmatprep.subr.bf16.mxu0 %v557
      %1080 = vmatpush1.bf16.msra.mxu0 %v556
      %1081 = vmatprep.subr.bf16.mxu0 %v549
      %1082 = vmatpush1.bf16.msra.mxu0 %v548
      %1083 = vmatprep.subr.bf16.mxu0 0
      %1084 = vmatpush2.bf16.msra.mxu0 0
      %1085 = vmatprep.subr.bf16.mxu0 0
      %1086 = vmatpush2.bf16.msra.mxu0 0
      %1087 = vmatprep.subr.bf16.mxu0 0
      %1088 = vmatpush2.bf16.msra.mxu0 0
      %1089 = vmatprep.subr.bf16.mxu0 0
      %1090 = vmatpush2.bf16.msra.mxu0 0
      %1091 = vmatprep.subr.bf16.mxu0 0
      %1092 = vmatpush2.bf16.msra.mxu0 0
      %1093 = vmatprep.subr.bf16.mxu0 0
      %1094 = vmatpush2.bf16.msra.mxu0 0
      %1095 = vmatprep.subr.bf16.mxu0 0
      %1096 = vmatpush2.bf16.msra.mxu0 0
      %1097 = vmatprep.subr.bf16.mxu0 %v726
      %1098 = vmatpush2.bf16.msra.mxu0 %v723
      %1099 = vmatprep.mubr.bf16.mxu0 %v680
      %1100 = vmatmul.mubr.bf16.gmra.mxu0 %v212
      %v1101 = vpop.f32.mrf.mxu0
      %v1102 = vadd.f32 %v325, %v1101
      %v1103 = vpop.f32.mrf.mxu0
      %v1104 = vadd.f32 %v329, %v1103
      %v1105 = vpop.f32.mrf.mxu0
      %v1106 = vadd.f32 %v325, %v1105
      %v1107 = vpop.f32.mrf.mxu0
      %v1108 = vadd.f32 %v329, %v1107
      %1109 = vmatprep.mubr.bf16.mxu0 %v683
      %1110 = vmatmul.mubr.bf16.gmra.mxu0 %v214
      %v1111 = vpop.f32.mrf.mxu0
      %v1112 = vadd.f32 %v325, %v1111
      %v1113 = vpop.f32.mrf.mxu0
      %v1114 = vadd.f32 %v329, %v1113
      %v1115 = vpop.f32.mrf.mxu0
      %v1116 = vadd.f32 %v325, %v1115
      %v1117 = vpop.f32.mrf.mxu0
      %v1118 = vadd.f32 %v329, %v1117
      %1119 = vmatprep.mubr.bf16.mxu0 %v686
      %1120 = vmatmul.mubr.bf16.gmra.mxu0 %v216
      %v1121 = vpop.f32.mrf.mxu0
      %v1122 = vadd.f32 %v325, %v1121
      %v1123 = vpop.f32.mrf.mxu0
      %v1124 = vadd.f32 %v329, %v1123
      %v1125 = vpop.f32.mrf.mxu0
      %v1126 = vadd.f32 %v325, %v1125
      %v1127 = vpop.f32.mrf.mxu0
      %v1128 = vadd.f32 %v329, %v1127
      %1129 = vmatprep.mubr.bf16.mxu0 %v689
      %1130 = vmatmul.mubr.bf16.gmra.mxu0 %v218
      %v1131 = vpop.f32.mrf.mxu0
      %v1132 = vadd.f32 %v325, %v1131
      %v1133 = vpop.f32.mrf.mxu0
      %v1134 = vadd.f32 %v329, %v1133
      %v1135 = vpop.f32.mrf.mxu0
      %v1136 = vadd.f32 %v325, %v1135
      %v1137 = vpop.f32.mrf.mxu0
      %v1138 = vadd.f32 %v329, %v1137
      %1139 = vmatprep.mubr.bf16.mxu0 %v692
      %1140 = vmatmul.mubr.bf16.gmra.mxu0 %v220
      %v1141 = vpop.f32.mrf.mxu0
      %v1142 = vadd.f32 %v325, %v1141
      %v1143 = vpop.f32.mrf.mxu0
      %v1144 = vadd.f32 %v329, %v1143
      %v1145 = vpop.f32.mrf.mxu0
      %v1146 = vadd.f32 %v325, %v1145
      %v1147 = vpop.f32.mrf.mxu0
      %v1148 = vadd.f32 %v329, %v1147
      %1149 = vmatprep.mubr.bf16.mxu0 %v695
      %1150 = vmatmul.mubr.bf16.gmra.mxu0 %v222
      %v1151 = vpop.f32.mrf.mxu0
      %v1152 = vadd.f32 %v325, %v1151
      %v1153 = vpop.f32.mrf.mxu0
      %v1154 = vadd.f32 %v329, %v1153
      %v1155 = vpop.f32.mrf.mxu0
      %v1156 = vadd.f32 %v325, %v1155
      %v1157 = vpop.f32.mrf.mxu0
      %v1158 = vadd.f32 %v329, %v1157
      %1159 = vmatprep.mubr.bf16.mxu0 %v698
      %1160 = vmatmul.mubr.bf16.gmra.mxu0 %v224
      %v1161 = vpop.f32.mrf.mxu0
      %v1162 = vadd.f32 %v325, %v1161
      %v1163 = vpop.f32.mrf.mxu0
      %v1164 = vadd.f32 %v329, %v1163
      %v1165 = vpop.f32.mrf.mxu0
      %v1166 = vadd.f32 %v325, %v1165
      %v1167 = vpop.f32.mrf.mxu0
      %v1168 = vadd.f32 %v329, %v1167
      %1169 = vmatprep.mubr.bf16.mxu0 %v701
      %1170 = vmatmul.mubr.bf16.gmra.mxu0 %v226
      %v1171 = vpop.f32.mrf.mxu0
      %v1172 = vadd.f32 %v325, %v1171
      %v1173 = vpop.f32.mrf.mxu0
      %v1174 = vadd.f32 %v329, %v1173
      %v1175 = vpop.f32.mrf.mxu0
      %v1176 = vadd.f32 %v325, %v1175
      %v1177 = vpop.f32.mrf.mxu0
      %v1178 = vadd.f32 %v329, %v1177
      %1179 = vdwg.mxu0
      %1180 = vst [vmem:[%s177] sm:$0xff] %v763
      %1181 = vst [vmem:[%s177 + $0x8] sm:$0xff] %v765
      %1182 = vst [vmem:[%s177 + $0x10] sm:$0xff] %v876
      %1183 = vst [vmem:[%s177 + $0x18] sm:$0xff] %v878
      %1184 = vst [vmem:[%s177 + $0x20] sm:$0xff] %v989
      %1185 = vst [vmem:[%s177 + $0x28] sm:$0xff] %v991
      %1186 = vst [vmem:[%s177 + $0x30] sm:$0xff] %v1102
      %1187 = vst [vmem:[%s177 + $0x38] sm:$0xff] %v1104
      %1188 = vst [vmem:[%s177 + $0x40] sm:$0xff] %v767
      %1189 = vst [vmem:[%s177 + $0x48] sm:$0xff] %v769
      %1190 = vst [vmem:[%s177 + $0x50] sm:$0xff] %v880
      %1191 = vst [vmem:[%s177 + $0x58] sm:$0xff] %v882
      %1192 = vst [vmem:[%s177 + $0x60] sm:$0xff] %v993
      %1193 = vst [vmem:[%s177 + $0x68] sm:$0xff] %v995
      %1194 = vst [vmem:[%s177 + $0x70] sm:$0xff] %v1106
      %1195 = vst [vmem:[%s177 + $0x78] sm:$0xff] %v1108
      %1196 = vst [vmem:[%s177 + $0x80] sm:$0xff] %v773
      %1197 = vst [vmem:[%s177 + $0x88] sm:$0xff] %v775
      %1198 = vst [vmem:[%s177 + $0x90] sm:$0xff] %v886
      %1199 = vst [vmem:[%s177 + $0x98] sm:$0xff] %v888
      %1200 = vst [vmem:[%s177 + $0xa0] sm:$0xff] %v999
      %1201 = vst [vmem:[%s177 + $0xa8] sm:$0xff] %v1001
      %1202 = vst [vmem:[%s177 + $0xb0] sm:$0xff] %v1112
      %1203 = vst [vmem:[%s177 + $0xb8] sm:$0xff] %v1114
      %1204 = vst [vmem:[%s177 + $0xc0] sm:$0xff] %v777
      %1205 = vst [vmem:[%s177 + $0xc8] sm:$0xff] %v779
      %1206 = vst [vmem:[%s177 + $0xd0] sm:$0xff] %v890
      %1207 = vst [vmem:[%s177 + $0xd8] sm:$0xff] %v892
      %1208 = vst [vmem:[%s177 + $0xe0] sm:$0xff] %v1003
      %1209 = vst [vmem:[%s177 + $0xe8] sm:$0xff] %v1005
      %1210 = vst [vmem:[%s177 + $0xf0] sm:$0xff] %v1116
      %1211 = vst [vmem:[%s177 + $0xf8] sm:$0xff] %v1118
      %1212 = vst [vmem:[%s177 + $0x100] sm:$0xff] %v783
      %1213 = vst [vmem:[%s177 + $0x108] sm:$0xff] %v785
      %1214 = vst [vmem:[%s177 + $0x110] sm:$0xff] %v896
      %1215 = vst [vmem:[%s177 + $0x118] sm:$0xff] %v898
      %1216 = vst [vmem:[%s177 + $0x120] sm:$0xff] %v1009
      %1217 = vst [vmem:[%s177 + $0x128] sm:$0xff] %v1011
      %1218 = vst [vmem:[%s177 + $0x130] sm:$0xff] %v1122
      %1219 = vst [vmem:[%s177 + $0x138] sm:$0xff] %v1124
      %1220 = vst [vmem:[%s177 + $0x140] sm:$0xff] %v787
      %1221 = vst [vmem:[%s177 + $0x148] sm:$0xff] %v789
      %1222 = vst [vmem:[%s177 + $0x150] sm:$0xff] %v900
      %1223 = vst [vmem:[%s177 + $0x158] sm:$0xff] %v902
      %1224 = vst [vmem:[%s177 + $0x160] sm:$0xff] %v1013
      %1225 = vst [vmem:[%s177 + $0x168] sm:$0xff] %v1015
      %1226 = vst [vmem:[%s177 + $0x170] sm:$0xff] %v1126
      %1227 = vst [vmem:[%s177 + $0x178] sm:$0xff] %v1128
      %1228 = vst [vmem:[%s177 + $0x180] sm:$0xff] %v793
      %1229 = vst [vmem:[%s177 + $0x188] sm:$0xff] %v795
      %1230 = vst [vmem:[%s177 + $0x190] sm:$0xff] %v906
      %1231 = vst [vmem:[%s177 + $0x198] sm:$0xff] %v908
      %1232 = vst [vmem:[%s177 + $0x1a0] sm:$0xff] %v1019
      %1233 = vst [vmem:[%s177 + $0x1a8] sm:$0xff] %v1021
      %1234 = vst [vmem:[%s177 + $0x1b0] sm:$0xff] %v1132
      %1235 = vst [vmem:[%s177 + $0x1b8] sm:$0xff] %v1134
      %1236 = vst [vmem:[%s177 + $0x1c0] sm:$0xff] %v797
      %1237 = vst [vmem:[%s177 + $0x1c8] sm:$0xff] %v799
      %1238 = vst [vmem:[%s177 + $0x1d0] sm:$0xff] %v910
      %1239 = vst [vmem:[%s177 + $0x1d8] sm:$0xff] %v912
      %1240 = vst [vmem:[%s177 + $0x1e0] sm:$0xff] %v1023
      %1241 = vst [vmem:[%s177 + $0x1e8] sm:$0xff] %v1025
      %1242 = vst [vmem:[%s177 + $0x1f0] sm:$0xff] %v1136
      %1243 = vst [vmem:[%s177 + $0x1f8] sm:$0xff] %v1138
      %1244 = vst [vmem:[%s177 + $0x200] sm:$0xff] %v803
      %1245 = vst [vmem:[%s177 + $0x208] sm:$0xff] %v805
      %1246 = vst [vmem:[%s177 + $0x210] sm:$0xff] %v916
      %1247 = vst [vmem:[%s177 + $0x218] sm:$0xff] %v918
      %1248 = vst [vmem:[%s177 + $0x220] sm:$0xff] %v1029
      %1249 = vst [vmem:[%s177 + $0x228] sm:$0xff] %v1031
      %1250 = vst [vmem:[%s177 + $0x230] sm:$0xff] %v1142
      %1251 = vst [vmem:[%s177 + $0x238] sm:$0xff] %v1144
      %1252 = vst [vmem:[%s177 + $0x240] sm:$0xff] %v807
      %1253 = vst [vmem:[%s177 + $0x248] sm:$0xff] %v809
      %1254 = vst [vmem:[%s177 + $0x250] sm:$0xff] %v920
      %1255 = vst [vmem:[%s177 + $0x258] sm:$0xff] %v922
      %1256 = vst [vmem:[%s177 + $0x260] sm:$0xff] %v1033
      %1257 = vst [vmem:[%s177 + $0x268] sm:$0xff] %v1035
      %1258 = vst [vmem:[%s177 + $0x270] sm:$0xff] %v1146
      %1259 = vst [vmem:[%s177 + $0x278] sm:$0xff] %v1148
      %1260 = vst [vmem:[%s177 + $0x280] sm:$0xff] %v813
      %1261 = vst [vmem:[%s177 + $0x288] sm:$0xff] %v815
      %1262 = vst [vmem:[%s177 + $0x290] sm:$0xff] %v926
      %1263 = vst [vmem:[%s177 + $0x298] sm:$0xff] %v928
      %1264 = vst [vmem:[%s177 + $0x2a0] sm:$0xff] %v1039
      %1265 = vst [vmem:[%s177 + $0x2a8] sm:$0xff] %v1041
      %1266 = vst [vmem:[%s177 + $0x2b0] sm:$0xff] %v1152
      %1267 = vst [vmem:[%s177 + $0x2b8] sm:$0xff] %v1154
      %1268 = vst [vmem:[%s177 + $0x2c0] sm:$0xff] %v817
      %1269 = vst [vmem:[%s177 + $0x2c8] sm:$0xff] %v819
      %1270 = vst [vmem:[%s177 + $0x2d0] sm:$0xff] %v930
      %1271 = vst [vmem:[%s177 + $0x2d8] sm:$0xff] %v932
      %1272 = vst [vmem:[%s177 + $0x2e0] sm:$0xff] %v1043
      %1273 = vst [vmem:[%s177 + $0x2e8] sm:$0xff] %v1045
      %1274 = vst [vmem:[%s177 + $0x2f0] sm:$0xff] %v1156
      %1275 = vst [vmem:[%s177 + $0x2f8] sm:$0xff] %v1158
      %1276 = vst [vmem:[%s177 + $0x300] sm:$0xff] %v823
      %1277 = vst [vmem:[%s177 + $0x308] sm:$0xff] %v825
      %1278 = vst [vmem:[%s177 + $0x310] sm:$0xff] %v936
      %1279 = vst [vmem:[%s177 + $0x318] sm:$0xff] %v938
      %1280 = vst [vmem:[%s177 + $0x320] sm:$0xff] %v1049
      %1281 = vst [vmem:[%s177 + $0x328] sm:$0xff] %v1051
      %1282 = vst [vmem:[%s177 + $0x330] sm:$0xff] %v1162
      %1283 = vst [vmem:[%s177 + $0x338] sm:$0xff] %v1164
      %1284 = vst [vmem:[%s177 + $0x340] sm:$0xff] %v827
      %1285 = vst [vmem:[%s177 + $0x348] sm:$0xff] %v829
      %1286 = vst [vmem:[%s177 + $0x350] sm:$0xff] %v940
      %1287 = vst [vmem:[%s177 + $0x358] sm:$0xff] %v942
      %1288 = vst [vmem:[%s177 + $0x360] sm:$0xff] %v1053
      %1289 = vst [vmem:[%s177 + $0x368] sm:$0xff] %v1055
      %1290 = vst [vmem:[%s177 + $0x370] sm:$0xff] %v1166
      %1291 = vst [vmem:[%s177 + $0x378] sm:$0xff] %v1168
      %1292 = vst [vmem:[%s177 + $0x380] sm:$0xff] %v833
      %1293 = vst [vmem:[%s177 + $0x388] sm:$0xff] %v835
      %1294 = vst [vmem:[%s177 + $0x390] sm:$0xff] %v946
      %1295 = vst [vmem:[%s177 + $0x398] sm:$0xff] %v948
      %1296 = vst [vmem:[%s177 + $0x3a0] sm:$0xff] %v1059
      %1297 = vst [vmem:[%s177 + $0x3a8] sm:$0xff] %v1061
      %1298 = vst [vmem:[%s177 + $0x3b0] sm:$0xff] %v1172
      %1299 = vst [vmem:[%s177 + $0x3b8] sm:$0xff] %v1174
      %1300 = vst [vmem:[%s177 + $0x3c0] sm:$0xff] %v837
      %1301 = vst [vmem:[%s177 + $0x3c8] sm:$0xff] %v839
      %1302 = vst [vmem:[%s177 + $0x3d0] sm:$0xff] %v950
      %1303 = vst [vmem:[%s177 + $0x3d8] sm:$0xff] %v952
      %1304 = vst [vmem:[%s177 + $0x3e0] sm:$0xff] %v1063
      %1305 = vst [vmem:[%s177 + $0x3e8] sm:$0xff] %v1065
      %1306 = vst [vmem:[%s177 + $0x3f0] sm:$0xff] %v1176
      %1307 = vst [vmem:[%s177 + $0x3f8] sm:$0xff] %v1178
      %s1308 = smul.u32 16, %s14
      %p1309 = scmp.lt.s32.totalorder %s1308, 31
      %s1310 = scalar_select %p1309, %s1308, 31
      %s1311 = smul.addr %s1310, 8
      %s1312 = smul.addr %s1311, 8
      %s1313 = scalar_lea.vmem %s3, %s1312
      // Predicated region
      $region33: #{_lambda_.7} parent=31 // pred_check
        %p1314 = pneg %p100
      $region34: #{_lambda_.7} parent=31 // pred_check_branch
        %1316 = sbr.rel (%p1314) target = $region36
      $region35: #{_lambda_.7} parent=31 // pred_region
        %s1317 = smul.u32 16, %s14
      $region36: #{_lambda_.7} parent=31 // pred_fallthru
        _
    $region32: #{_lambda_.7} parent=5 // pred_fallthru
      _
    %p1318 = scmp.le.s32.totalorder 2, %s9
    // Predicated region
    $region37: #{_lambda_.7} parent=5 // pred_check
      %p1319 = pneg %p1318
    $region38: #{_lambda_.7} parent=5 // pred_check_branch
      %1321 = sbr.rel (%p1319) target = $region40
    $region39: #{_lambda_.7} parent=5 // pred_region
      %s1322 = ssub.s32 %s9, 2
      // Predicated region
      $region41: #{_lambda_.7} parent=39 // pred_check
        %p1323 = pneg %p106
      $region42: #{_lambda_.7} parent=39 // pred_check_branch
        %1325 = sbr.rel (%p1323) target = $region44
      $region43: #{_lambda_.7} parent=39 // pred_region
        %s1326 = smul.u32 16, %s15
        %p1327 = scmp.lt.s32.totalorder %s1326, 31
        %s1328 = scalar_select %p1327, %s1326, 31
        %s1329 = smul.addr %s1328, 8
        %s1330 = smul.addr %s1329, 8
        %s1331 = scalar_lea.vmem %s3, %s1330
      $region44: #{_lambda_.7} parent=39 // pred_fallthru
        _
    $region40: #{_lambda_.7} parent=5 // pred_fallthru
      _
  $region6: #{_lambda_.7} parent=0 // loop_footer
    %s13 = sadd.s32 1, %s9
  $region7: #{_lambda_.7} parent=0 // loop_footer_branch
    %8 = sbr.rel target = $region3
  $region8: #{_lambda_.7} parent=0 // loop_exit
    _

// kernel: closed_call.3
$region0: #{closed_call.3}
  #allocation0 [shape = 'u32[]', space=smem, size = 0x4, offset = 0x4, fixed_abs, tag = 'smem constant byte address 0x4 - core index']
  #allocation1 [shape = 'u32[144,128]{1,0:T(1,128)}', space=vmem, size = 0x12000, scoped, tag = 'internal scratch']
  %s0 = inlined_call_operand.vmem [shape: f32[32,1024], index: 0, kind: input, shape index: {}]
  %s1 = inlined_call_operand.vmem [shape: f32[32,256], index: 1, kind: input, shape index: {}]
  %s2 = inlined_call_operand.vmem [shape: f32[32,256], index: 2, kind: input, shape index: {}]
  %s3 = inlined_call_operand.vmem [shape: bf16[256,1024], index: 3, kind: input, shape index: {}]
  %s4 = inlined_call_operand.vmem [shape: f32[32,256], index: 4, kind: output, shape index: {0}]
  %s5 = inlined_call_operand.vmem [shape: f32[32,256], index: 5, kind: output, shape index: {1}]
  %6 = xla_tuple %s4, %s5
  %s7 = sld [smem:[#allocation0]]
  $region34: #{closed_call.3} parent=0
    _
  %s9 = ssub.s32 1, %s7
  %s10 = scalar_select 0, %s9, %s7
  // Predicated region
  $region2: #{closed_call.3} parent=0 // pred_check
    _
  $region3: #{closed_call.3} parent=0 // pred_check_branch
    %12 = sbr.rel (0) target = $region5
  $region4: #{closed_call.3} parent=0 // pred_region
    _
  $region5: #{closed_call.3} parent=0 // pred_fallthru
    _
  // Predicated region
  $region6: #{closed_call.3} parent=0 // pred_check
    _
  $region7: #{closed_call.3} parent=0 // pred_check_branch
    %14 = sbr.rel (0) target = $region9
  $region8: #{closed_call.3} parent=0 // pred_region
    _
  $region9: #{closed_call.3} parent=0 // pred_fallthru
    _
  // Predicated region
  $region10: #{closed_call.3} parent=0 // pred_check
    _
  $region11: #{closed_call.3} parent=0 // pred_check_branch
    %16 = sbr.rel (0) target = $region13
  $region12: #{closed_call.3} parent=0 // pred_region
    _
  $region13: #{closed_call.3} parent=0 // pred_fallthru
    _
  // Predicated region
  $region14: #{closed_call.3} parent=0 // pred_check
    _
  $region15: #{closed_call.3} parent=0 // pred_check_branch
    %18 = sbr.rel (0) target = $region17
  $region16: #{closed_call.3} parent=0 // pred_region
    _
  $region17: #{closed_call.3} parent=0 // pred_fallthru
    _
  %v19 = vld [vmem:[%s0] sm:$0xff]
  %v20 = vld [vmem:[%s0 + $0x8] sm:$0xff]
  %v21 = vld [vmem:[%s0 + $0x10] sm:$0xff]
  %v22 = vld [vmem:[%s0 + $0x18] sm:$0xff]
  %v23 = vld [vmem:[%s0 + $0x20] sm:$0xff]
  %v24 = vld [vmem:[%s0 + $0x28] sm:$0xff]
  %v25 = vld [vmem:[%s0 + $0x30] sm:$0xff]
  %v26 = vld [vmem:[%s0 + $0x38] sm:$0xff]
  %v27 = vld [vmem:[%s0 + $0x40] sm:$0xff]
  %v28 = vld [vmem:[%s0 + $0x48] sm:$0xff]
  %v29 = vld [vmem:[%s0 + $0x50] sm:$0xff]
  %v30 = vld [vmem:[%s0 + $0x58] sm:$0xff]
  %v31 = vld [vmem:[%s0 + $0x60] sm:$0xff]
  %v32 = vld [vmem:[%s0 + $0x68] sm:$0xff]
  %v33 = vld [vmem:[%s0 + $0x70] sm:$0xff]
  %v34 = vld [vmem:[%s0 + $0x78] sm:$0xff]
  %v35 = vld [vmem:[%s0 + $0x80] sm:$0xff]
  %v36 = vld [vmem:[%s0 + $0x88] sm:$0xff]
  %v37 = vld [vmem:[%s0 + $0x90] sm:$0xff]
  %v38 = vld [vmem:[%s0 + $0x98] sm:$0xff]
  %v39 = vld [vmem:[%s0 + $0xa0] sm:$0xff]
  %v40 = vld [vmem:[%s0 + $0xa8] sm:$0xff]
  %v41 = vld [vmem:[%s0 + $0xb0] sm:$0xff]
  %v42 = vld [vmem:[%s0 + $0xb8] sm:$0xff]
  %v43 = vld [vmem:[%s0 + $0xc0] sm:$0xff]
  %v44 = vld [vmem:[%s0 + $0xc8] sm:$0xff]
  %v45 = vld [vmem:[%s0 + $0xd0] sm:$0xff]
  %v46 = vld [vmem:[%s0 + $0xd8] sm:$0xff]
  %v47 = vld [vmem:[%s0 + $0xe0] sm:$0xff]
  %v48 = vld [vmem:[%s0 + $0xe8] sm:$0xff]
  %v49 = vld [vmem:[%s0 + $0xf0] sm:$0xff]
  %v50 = vld [vmem:[%s0 + $0xf8] sm:$0xff]
  %v51 = vld [vmem:[%s1] sm:$0xff]
  %v52 = vld [vmem:[%s1 + $0x8] sm:$0xff]
  %v53 = vld [vmem:[%s1 + $0x10] sm:$0xff]
  %v54 = vld [vmem:[%s1 + $0x18] sm:$0xff]
  %v55 = vld [vmem:[%s1 + $0x20] sm:$0xff]
  %v56 = vld [vmem:[%s1 + $0x28] sm:$0xff]
  %v57 = vld [vmem:[%s1 + $0x30] sm:$0xff]
  %v58 = vld [vmem:[%s1 + $0x38] sm:$0xff]
  %v59 = vpack.c.bf16 %v53, %v51
  %v60 = vpack.c.bf16 %v54, %v52
  %v61 = vpack.c.bf16 %v57, %v55
  %v62 = vpack.c.bf16 %v58, %v56
  %v63 = vld [vmem:[%s3] sm:$0xff]
  %v64 = vld [vmem:[%s3 + $0x8] sm:$0xff]
  %v65 = vld [vmem:[%s3 + $0x10] sm:$0xff]
  %v66 = vld [vmem:[%s3 + $0x18] sm:$0xff]
  %v67 = vld [vmem:[%s3 + $0x20] sm:$0xff]
  %v68 = vld [vmem:[%s3 + $0x28] sm:$0xff]
  %v69 = vld [vmem:[%s3 + $0x30] sm:$0xff]
  %v70 = vld [vmem:[%s3 + $0x38] sm:$0xff]
  %v71 = vld [vmem:[%s3 + $0x40] sm:$0xff]
  %v72 = vld [vmem:[%s3 + $0x48] sm:$0xff]
  %v73 = vld [vmem:[%s3 + $0x50] sm:$0xff]
  %v74 = vld [vmem:[%s3 + $0x58] sm:$0xff]
  %v75 = vld [vmem:[%s3 + $0x60] sm:$0xff]
  %v76 = vld [vmem:[%s3 + $0x68] sm:$0xff]
  %v77 = vld [vmem:[%s3 + $0x70] sm:$0xff]
  %v78 = vld [vmem:[%s3 + $0x78] sm:$0xff]
  %v79 = vld [vmem:[%s3 + $0x80] sm:$0xff]
  %v80 = vld [vmem:[%s3 + $0x88] sm:$0xff]
  %v81 = vld [vmem:[%s3 + $0x90] sm:$0xff]
  %v82 = vld [vmem:[%s3 + $0x98] sm:$0xff]
  %v83 = vld [vmem:[%s3 + $0xa0] sm:$0xff]
  %v84 = vld [vmem:[%s3 + $0xa8] sm:$0xff]
  %v85 = vld [vmem:[%s3 + $0xb0] sm:$0xff]
  %v86 = vld [vmem:[%s3 + $0xb8] sm:$0xff]
  %v87 = vld [vmem:[%s3 + $0xc0] sm:$0xff]
  %v88 = vld [vmem:[%s3 + $0xc8] sm:$0xff]
  %v89 = vld [vmem:[%s3 + $0xd0] sm:$0xff]
  %v90 = vld [vmem:[%s3 + $0xd8] sm:$0xff]
  %v91 = vld [vmem:[%s3 + $0xe0] sm:$0xff]
  %v92 = vld [vmem:[%s3 + $0xe8] sm:$0xff]
  %v93 = vld [vmem:[%s3 + $0xf0] sm:$0xff]
  %v94 = vld [vmem:[%s3 + $0xf8] sm:$0xff]
  %v95 = vld [vmem:[%s3 + $0x100] sm:$0xff]
  %v96 = vld [vmem:[%s3 + $0x108] sm:$0xff]
  %v97 = vld [vmem:[%s3 + $0x110] sm:$0xff]
  %v98 = vld [vmem:[%s3 + $0x118] sm:$0xff]
  %v99 = vld [vmem:[%s3 + $0x120] sm:$0xff]
  %v100 = vld [vmem:[%s3 + $0x128] sm:$0xff]
  %v101 = vld [vmem:[%s3 + $0x130] sm:$0xff]
  %v102 = vld [vmem:[%s3 + $0x138] sm:$0xff]
  %v103 = vld [vmem:[%s3 + $0x140] sm:$0xff]
  %v104 = vld [vmem:[%s3 + $0x148] sm:$0xff]
  %v105 = vld [vmem:[%s3 + $0x150] sm:$0xff]
  %v106 = vld [vmem:[%s3 + $0x158] sm:$0xff]
  %v107 = vld [vmem:[%s3 + $0x160] sm:$0xff]
  %v108 = vld [vmem:[%s3 + $0x168] sm:$0xff]
  %v109 = vld [vmem:[%s3 + $0x170] sm:$0xff]
  %v110 = vld [vmem:[%s3 + $0x178] sm:$0xff]
  %v111 = vld [vmem:[%s3 + $0x180] sm:$0xff]
  %v112 = vld [vmem:[%s3 + $0x188] sm:$0xff]
  %v113 = vld [vmem:[%s3 + $0x190] sm:$0xff]
  %v114 = vld [vmem:[%s3 + $0x198] sm:$0xff]
  %v115 = vld [vmem:[%s3 + $0x1a0] sm:$0xff]
  %v116 = vld [vmem:[%s3 + $0x1a8] sm:$0xff]
  %v117 = vld [vmem:[%s3 + $0x1b0] sm:$0xff]
  %v118 = vld [vmem:[%s3 + $0x1b8] sm:$0xff]
  %v119 = vld [vmem:[%s3 + $0x1c0] sm:$0xff]
  %v120 = vld [vmem:[%s3 + $0x1c8] sm:$0xff]
  %v121 = vld [vmem:[%s3 + $0x1d0] sm:$0xff]
  %v122 = vld [vmem:[%s3 + $0x1d8] sm:$0xff]
  %v123 = vld [vmem:[%s3 + $0x1e0] sm:$0xff]
  %v124 = vld [vmem:[%s3 + $0x1e8] sm:$0xff]
  %v125 = vld [vmem:[%s3 + $0x1f0] sm:$0xff]
  %v126 = vld [vmem:[%s3 + $0x1f8] sm:$0xff]
  %v127 = vld [vmem:[%s3 + $0x200] sm:$0xff]
  %v128 = vld [vmem:[%s3 + $0x208] sm:$0xff]
  %v129 = vld [vmem:[%s3 + $0x210] sm:$0xff]
  %v130 = vld [vmem:[%s3 + $0x218] sm:$0xff]
  %v131 = vld [vmem:[%s3 + $0x220] sm:$0xff]
  %v132 = vld [vmem:[%s3 + $0x228] sm:$0xff]
  %v133 = vld [vmem:[%s3 + $0x230] sm:$0xff]
  %v134 = vld [vmem:[%s3 + $0x238] sm:$0xff]
  %v135 = vld [vmem:[%s3 + $0x240] sm:$0xff]
  %v136 = vld [vmem:[%s3 + $0x248] sm:$0xff]
  %v137 = vld [vmem:[%s3 + $0x250] sm:$0xff]
  %v138 = vld [vmem:[%s3 + $0x258] sm:$0xff]
  %v139 = vld [vmem:[%s3 + $0x260] sm:$0xff]
  %v140 = vld [vmem:[%s3 + $0x268] sm:$0xff]
  %v141 = vld [vmem:[%s3 + $0x270] sm:$0xff]
  %v142 = vld [vmem:[%s3 + $0x278] sm:$0xff]
  %v143 = vld [vmem:[%s3 + $0x280] sm:$0xff]
  %v144 = vld [vmem:[%s3 + $0x288] sm:$0xff]
  %v145 = vld [vmem:[%s3 + $0x290] sm:$0xff]
  %v146 = vld [vmem:[%s3 + $0x298] sm:$0xff]
  %v147 = vld [vmem:[%s3 + $0x2a0] sm:$0xff]
  %v148 = vld [vmem:[%s3 + $0x2a8] sm:$0xff]
  %v149 = vld [vmem:[%s3 + $0x2b0] sm:$0xff]
  %v150 = vld [vmem:[%s3 + $0x2b8] sm:$0xff]
  %v151 = vld [vmem:[%s3 + $0x2c0] sm:$0xff]
  %v152 = vld [vmem:[%s3 + $0x2c8] sm:$0xff]
  %v153 = vld [vmem:[%s3 + $0x2d0] sm:$0xff]
  %v154 = vld [vmem:[%s3 + $0x2d8] sm:$0xff]
  %v155 = vld [vmem:[%s3 + $0x2e0] sm:$0xff]
  %v156 = vld [vmem:[%s3 + $0x2e8] sm:$0xff]
  %v157 = vld [vmem:[%s3 + $0x2f0] sm:$0xff]
  %v158 = vld [vmem:[%s3 + $0x2f8] sm:$0xff]
  %v159 = vld [vmem:[%s3 + $0x300] sm:$0xff]
  %v160 = vld [vmem:[%s3 + $0x308] sm:$0xff]
  %v161 = vld [vmem:[%s3 + $0x310] sm:$0xff]
  %v162 = vld [vmem:[%s3 + $0x318] sm:$0xff]
  %v163 = vld [vmem:[%s3 + $0x320] sm:$0xff]
  %v164 = vld [vmem:[%s3 + $0x328] sm:$0xff]
  %v165 = vld [vmem:[%s3 + $0x330] sm:$0xff]
  %v166 = vld [vmem:[%s3 + $0x338] sm:$0xff]
  %v167 = vld [vmem:[%s3 + $0x340] sm:$0xff]
  %v168 = vld [vmem:[%s3 + $0x348] sm:$0xff]
  %v169 = vld [vmem:[%s3 + $0x350] sm:$0xff]
  %v170 = vld [vmem:[%s3 + $0x358] sm:$0xff]
  %v171 = vld [vmem:[%s3 + $0x360] sm:$0xff]
  %v172 = vld [vmem:[%s3 + $0x368] sm:$0xff]
  %v173 = vld [vmem:[%s3 + $0x370] sm:$0xff]
  %v174 = vld [vmem:[%s3 + $0x378] sm:$0xff]
  %v175 = vld [vmem:[%s3 + $0x380] sm:$0xff]
  %v176 = vld [vmem:[%s3 + $0x388] sm:$0xff]
  %v177 = vld [vmem:[%s3 + $0x390] sm:$0xff]
  %v178 = vld [vmem:[%s3 + $0x398] sm:$0xff]
  %v179 = vld [vmem:[%s3 + $0x3a0] sm:$0xff]
  %v180 = vld [vmem:[%s3 + $0x3a8] sm:$0xff]
  %v181 = vld [vmem:[%s3 + $0x3b0] sm:$0xff]
  %v182 = vld [vmem:[%s3 + $0x3b8] sm:$0xff]
  %v183 = vld [vmem:[%s3 + $0x3c0] sm:$0xff]
  %v184 = vld [vmem:[%s3 + $0x3c8] sm:$0xff]
  %v185 = vld [vmem:[%s3 + $0x3d0] sm:$0xff]
  %v186 = vld [vmem:[%s3 + $0x3d8] sm:$0xff]
  %v187 = vld [vmem:[%s3 + $0x3e0] sm:$0xff]
  %v188 = vld [vmem:[%s3 + $0x3e8] sm:$0xff]
  %v189 = vld [vmem:[%s3 + $0x3f0] sm:$0xff]
  %v190 = vld [vmem:[%s3 + $0x3f8] sm:$0xff]
  %v319 = vunpack.c.l.b16 %v63
  %v320 = vunpack.c.h.b16 %v63
  %v321 = vunpack.c.l.b16 %v64
  %v322 = vunpack.c.h.b16 %v64
  %v323 = vunpack.c.l.b16 %v65
  %v324 = vunpack.c.h.b16 %v65
  %v325 = vunpack.c.l.b16 %v66
  %v326 = vunpack.c.h.b16 %v66
  %v327 = vunpack.c.l.b16 %v67
  %v328 = vunpack.c.h.b16 %v67
  %v329 = vunpack.c.l.b16 %v68
  %v330 = vunpack.c.h.b16 %v68
  %v331 = vunpack.c.l.b16 %v69
  %v332 = vunpack.c.h.b16 %v69
  %v333 = vunpack.c.l.b16 %v70
  %v334 = vunpack.c.h.b16 %v70
  %v335 = vunpack.c.l.b16 %v71
  %v336 = vunpack.c.h.b16 %v71
  %v337 = vunpack.c.l.b16 %v72
  %v338 = vunpack.c.h.b16 %v72
  %v339 = vunpack.c.l.b16 %v73
  %v340 = vunpack.c.h.b16 %v73
  %v341 = vunpack.c.l.b16 %v74
  %v342 = vunpack.c.h.b16 %v74
  %v343 = vunpack.c.l.b16 %v75
  %v344 = vunpack.c.h.b16 %v75
  %v345 = vunpack.c.l.b16 %v76
  %v346 = vunpack.c.h.b16 %v76
  %v347 = vunpack.c.l.b16 %v77
  %v348 = vunpack.c.h.b16 %v77
  %v349 = vunpack.c.l.b16 %v78
  %v350 = vunpack.c.h.b16 %v78
  %v351 = vunpack.c.l.b16 %v79
  %v352 = vunpack.c.h.b16 %v79
  %v353 = vunpack.c.l.b16 %v80
  %v354 = vunpack.c.h.b16 %v80
  %v355 = vunpack.c.l.b16 %v81
  %v356 = vunpack.c.h.b16 %v81
  %v357 = vunpack.c.l.b16 %v82
  %v358 = vunpack.c.h.b16 %v82
  %v359 = vunpack.c.l.b16 %v83
  %v360 = vunpack.c.h.b16 %v83
  %v361 = vunpack.c.l.b16 %v84
  %v362 = vunpack.c.h.b16 %v84
  %v363 = vunpack.c.l.b16 %v85
  %v364 = vunpack.c.h.b16 %v85
  %v365 = vunpack.c.l.b16 %v86
  %v366 = vunpack.c.h.b16 %v86
  %v367 = vunpack.c.l.b16 %v87
  %v368 = vunpack.c.h.b16 %v87
  %v369 = vunpack.c.l.b16 %v88
  %v370 = vunpack.c.h.b16 %v88
  %v371 = vunpack.c.l.b16 %v89
  %v372 = vunpack.c.h.b16 %v89
  %v373 = vunpack.c.l.b16 %v90
  %v374 = vunpack.c.h.b16 %v90
  %v375 = vunpack.c.l.b16 %v91
  %v376 = vunpack.c.h.b16 %v91
  %v377 = vunpack.c.l.b16 %v92
  %v378 = vunpack.c.h.b16 %v92
  %v379 = vunpack.c.l.b16 %v93
  %v380 = vunpack.c.h.b16 %v93
  %v381 = vunpack.c.l.b16 %v94
  %v382 = vunpack.c.h.b16 %v94
  %v383 = vunpack.c.l.b16 %v95
  %v384 = vunpack.c.h.b16 %v95
  %v385 = vunpack.c.l.b16 %v96
  %v386 = vunpack.c.h.b16 %v96
  %v387 = vunpack.c.l.b16 %v97
  %v388 = vunpack.c.h.b16 %v97
  %v389 = vunpack.c.l.b16 %v98
  %v390 = vunpack.c.h.b16 %v98
  %v391 = vunpack.c.l.b16 %v99
  %v392 = vunpack.c.h.b16 %v99
  %v393 = vunpack.c.l.b16 %v100
  %v394 = vunpack.c.h.b16 %v100
  %v395 = vunpack.c.l.b16 %v101
  %v396 = vunpack.c.h.b16 %v101
  %v397 = vunpack.c.l.b16 %v102
  %v398 = vunpack.c.h.b16 %v102
  %v399 = vunpack.c.l.b16 %v103
  %v400 = vunpack.c.h.b16 %v103
  %v401 = vunpack.c.l.b16 %v104
  %v402 = vunpack.c.h.b16 %v104
  %v403 = vunpack.c.l.b16 %v105
  %v404 = vunpack.c.h.b16 %v105
  %v405 = vunpack.c.l.b16 %v106
  %v406 = vunpack.c.h.b16 %v106
  %v407 = vunpack.c.l.b16 %v107
  %v408 = vunpack.c.h.b16 %v107
  %v409 = vunpack.c.l.b16 %v108
  %v410 = vunpack.c.h.b16 %v108
  %v411 = vunpack.c.l.b16 %v109
  %v412 = vunpack.c.h.b16 %v109
  %v413 = vunpack.c.l.b16 %v110
  %v414 = vunpack.c.h.b16 %v110
  %v415 = vunpack.c.l.b16 %v111
  %v416 = vunpack.c.h.b16 %v111
  %v417 = vunpack.c.l.b16 %v112
  %v418 = vunpack.c.h.b16 %v112
  %v419 = vunpack.c.l.b16 %v113
  %v420 = vunpack.c.h.b16 %v113
  %v421 = vunpack.c.l.b16 %v114
  %v422 = vunpack.c.h.b16 %v114
  %v423 = vunpack.c.l.b16 %v115
  %v424 = vunpack.c.h.b16 %v115
  %v425 = vunpack.c.l.b16 %v116
  %v426 = vunpack.c.h.b16 %v116
  %v427 = vunpack.c.l.b16 %v117
  %v428 = vunpack.c.h.b16 %v117
  %v429 = vunpack.c.l.b16 %v118
  %v430 = vunpack.c.h.b16 %v118
  %v431 = vunpack.c.l.b16 %v119
  %v432 = vunpack.c.h.b16 %v119
  %v433 = vunpack.c.l.b16 %v120
  %v434 = vunpack.c.h.b16 %v120
  %v435 = vunpack.c.l.b16 %v121
  %v436 = vunpack.c.h.b16 %v121
  %v437 = vunpack.c.l.b16 %v122
  %v438 = vunpack.c.h.b16 %v122
  %v439 = vunpack.c.l.b16 %v123
  %v440 = vunpack.c.h.b16 %v123
  %v441 = vunpack.c.l.b16 %v124
  %v442 = vunpack.c.h.b16 %v124
  %v443 = vunpack.c.l.b16 %v125
  %v444 = vunpack.c.h.b16 %v125
  %v445 = vunpack.c.l.b16 %v126
  %v446 = vunpack.c.h.b16 %v126
  %v447 = vunpack.c.l.b16 %v127
  %v448 = vunpack.c.h.b16 %v127
  %v449 = vunpack.c.l.b16 %v128
  %v450 = vunpack.c.h.b16 %v128
  %v451 = vunpack.c.l.b16 %v129
  %v452 = vunpack.c.h.b16 %v129
  %v453 = vunpack.c.l.b16 %v130
  %v454 = vunpack.c.h.b16 %v130
  %v455 = vunpack.c.l.b16 %v131
  %v456 = vunpack.c.h.b16 %v131
  %v457 = vunpack.c.l.b16 %v132
  %v458 = vunpack.c.h.b16 %v132
  %v459 = vunpack.c.l.b16 %v133
  %v460 = vunpack.c.h.b16 %v133
  %v461 = vunpack.c.l.b16 %v134
  %v462 = vunpack.c.h.b16 %v134
  %v463 = vunpack.c.l.b16 %v135
  %v464 = vunpack.c.h.b16 %v135
  %v465 = vunpack.c.l.b16 %v136
  %v466 = vunpack.c.h.b16 %v136
  %v467 = vunpack.c.l.b16 %v137
  %v468 = vunpack.c.h.b16 %v137
  %v469 = vunpack.c.l.b16 %v138
  %v470 = vunpack.c.h.b16 %v138
  %v471 = vunpack.c.l.b16 %v139
  %v472 = vunpack.c.h.b16 %v139
  %v473 = vunpack.c.l.b16 %v140
  %v474 = vunpack.c.h.b16 %v140
  %v475 = vunpack.c.l.b16 %v141
  %v476 = vunpack.c.h.b16 %v141
  %v477 = vunpack.c.l.b16 %v142
  %v478 = vunpack.c.h.b16 %v142
  %v479 = vunpack.c.l.b16 %v143
  %v480 = vunpack.c.h.b16 %v143
  %v481 = vunpack.c.l.b16 %v144
  %v482 = vunpack.c.h.b16 %v144
  %v483 = vunpack.c.l.b16 %v145
  %v484 = vunpack.c.h.b16 %v145
  %v485 = vunpack.c.l.b16 %v146
  %v486 = vunpack.c.h.b16 %v146
  %v487 = vunpack.c.l.b16 %v147
  %v488 = vunpack.c.h.b16 %v147
  %v489 = vunpack.c.l.b16 %v148
  %v490 = vunpack.c.h.b16 %v148
  %v491 = vunpack.c.l.b16 %v149
  %v492 = vunpack.c.h.b16 %v149
  %v493 = vunpack.c.l.b16 %v150
  %v494 = vunpack.c.h.b16 %v150
  %v495 = vunpack.c.l.b16 %v151
  %v496 = vunpack.c.h.b16 %v151
  %v497 = vunpack.c.l.b16 %v152
  %v498 = vunpack.c.h.b16 %v152
  %v499 = vunpack.c.l.b16 %v153
  %v500 = vunpack.c.h.b16 %v153
  %v501 = vunpack.c.l.b16 %v154
  %v502 = vunpack.c.h.b16 %v154
  %v503 = vunpack.c.l.b16 %v155
  %v504 = vunpack.c.h.b16 %v155
  %v505 = vunpack.c.l.b16 %v156
  %v506 = vunpack.c.h.b16 %v156
  %v507 = vunpack.c.l.b16 %v157
  %v508 = vunpack.c.h.b16 %v157
  %v509 = vunpack.c.l.b16 %v158
  %v510 = vunpack.c.h.b16 %v158
  %v511 = vunpack.c.l.b16 %v159
  %v512 = vunpack.c.h.b16 %v159
  %v513 = vunpack.c.l.b16 %v160
  %v514 = vunpack.c.h.b16 %v160
  %v515 = vunpack.c.l.b16 %v161
  %v516 = vunpack.c.h.b16 %v161
  %v517 = vunpack.c.l.b16 %v162
  %v518 = vunpack.c.h.b16 %v162
  %v519 = vunpack.c.l.b16 %v163
  %v520 = vunpack.c.h.b16 %v163
  %v521 = vunpack.c.l.b16 %v164
  %v522 = vunpack.c.h.b16 %v164
  %v523 = vunpack.c.l.b16 %v165
  %v524 = vunpack.c.h.b16 %v165
  %v525 = vunpack.c.l.b16 %v166
  %v526 = vunpack.c.h.b16 %v166
  %v527 = vunpack.c.l.b16 %v167
  %v528 = vunpack.c.h.b16 %v167
  %v529 = vunpack.c.l.b16 %v168
  %v530 = vunpack.c.h.b16 %v168
  %v531 = vunpack.c.l.b16 %v169
  %v532 = vunpack.c.h.b16 %v169
  %v533 = vunpack.c.l.b16 %v170
  %v534 = vunpack.c.h.b16 %v170
  %v535 = vunpack.c.l.b16 %v171
  %v536 = vunpack.c.h.b16 %v171
  %v537 = vunpack.c.l.b16 %v172
  %v538 = vunpack.c.h.b16 %v172
  %v539 = vunpack.c.l.b16 %v173
  %v540 = vunpack.c.h.b16 %v173
  %v541 = vunpack.c.l.b16 %v174
  %v542 = vunpack.c.h.b16 %v174
  %v543 = vunpack.c.l.b16 %v175
  %v544 = vunpack.c.h.b16 %v175
  %v545 = vunpack.c.l.b16 %v176
  %v546 = vunpack.c.h.b16 %v176
  %v547 = vunpack.c.l.b16 %v177
  %v548 = vunpack.c.h.b16 %v177
  %v549 = vunpack.c.l.b16 %v178
  %v550 = vunpack.c.h.b16 %v178
  %v551 = vunpack.c.l.b16 %v179
  %v552 = vunpack.c.h.b16 %v179
  %v553 = vunpack.c.l.b16 %v180
  %v554 = vunpack.c.h.b16 %v180
  %v555 = vunpack.c.l.b16 %v181
  %v556 = vunpack.c.h.b16 %v181
  %v557 = vunpack.c.l.b16 %v182
  %v558 = vunpack.c.h.b16 %v182
  %v559 = vunpack.c.l.b16 %v183
  %v560 = vunpack.c.h.b16 %v183
  %v561 = vunpack.c.l.b16 %v184
  %v562 = vunpack.c.h.b16 %v184
  %v563 = vunpack.c.l.b16 %v185
  %v564 = vunpack.c.h.b16 %v185
  %v565 = vunpack.c.l.b16 %v186
  %v566 = vunpack.c.h.b16 %v186
  %v567 = vunpack.c.l.b16 %v187
  %v568 = vunpack.c.h.b16 %v187
  %v569 = vunpack.c.l.b16 %v188
  %v570 = vunpack.c.h.b16 %v188
  %v571 = vunpack.c.l.b16 %v189
  %v572 = vunpack.c.h.b16 %v189
  %v573 = vunpack.c.l.b16 %v190
  %v574 = vunpack.c.h.b16 %v190
  %v575 = vpack.c.b16 %v327, %v319
  %v576 = vpack.c.b16 %v328, %v320
  %v577 = vpack.c.b16 %v329, %v321
  %v578 = vpack.c.b16 %v330, %v322
  %v579 = vpack.c.b16 %v331, %v323
  %v580 = vpack.c.b16 %v332, %v324
  %v581 = vpack.c.b16 %v333, %v325
  %v582 = vpack.c.b16 %v334, %v326
  %v583 = vpack.c.b16 %v343, %v335
  %v584 = vpack.c.b16 %v344, %v336
  %v585 = vpack.c.b16 %v345, %v337
  %v586 = vpack.c.b16 %v346, %v338
  %v587 = vpack.c.b16 %v347, %v339
  %v588 = vpack.c.b16 %v348, %v340
  %v589 = vpack.c.b16 %v349, %v341
  %v590 = vpack.c.b16 %v350, %v342
  %v591 = vpack.c.b16 %v359, %v351
  %v592 = vpack.c.b16 %v360, %v352
  %v593 = vpack.c.b16 %v361, %v353
  %v594 = vpack.c.b16 %v362, %v354
  %v595 = vpack.c.b16 %v363, %v355
  %v596 = vpack.c.b16 %v364, %v356
  %v597 = vpack.c.b16 %v365, %v357
  %v598 = vpack.c.b16 %v366, %v358
  %v599 = vpack.c.b16 %v375, %v367
  %v600 = vpack.c.b16 %v376, %v368
  %v601 = vpack.c.b16 %v377, %v369
  %v602 = vpack.c.b16 %v378, %v370
  %v603 = vpack.c.b16 %v379, %v371
  %v604 = vpack.c.b16 %v380, %v372
  %v605 = vpack.c.b16 %v381, %v373
  %v606 = vpack.c.b16 %v382, %v374
  %v607 = vpack.c.b16 %v391, %v383
  %v608 = vpack.c.b16 %v392, %v384
  %v609 = vpack.c.b16 %v393, %v385
  %v610 = vpack.c.b16 %v394, %v386
  %v611 = vpack.c.b16 %v395, %v387
  %v612 = vpack.c.b16 %v396, %v388
  %v613 = vpack.c.b16 %v397, %v389
  %v614 = vpack.c.b16 %v398, %v390
  %v615 = vpack.c.b16 %v407, %v399
  %v616 = vpack.c.b16 %v408, %v400
  %v617 = vpack.c.b16 %v409, %v401
  %v618 = vpack.c.b16 %v410, %v402
  %v619 = vpack.c.b16 %v411, %v403
  %v620 = vpack.c.b16 %v412, %v404
  %v621 = vpack.c.b16 %v413, %v405
  %v622 = vpack.c.b16 %v414, %v406
  %v623 = vpack.c.b16 %v423, %v415
  %v624 = vpack.c.b16 %v424, %v416
  %v625 = vpack.c.b16 %v425, %v417
  %v626 = vpack.c.b16 %v426, %v418
  %v627 = vpack.c.b16 %v427, %v419
  %v628 = vpack.c.b16 %v428, %v420
  %v629 = vpack.c.b16 %v429, %v421
  %v630 = vpack.c.b16 %v430, %v422
  %v631 = vpack.c.b16 %v439, %v431
  %v632 = vpack.c.b16 %v440, %v432
  %v633 = vpack.c.b16 %v441, %v433
  %v634 = vpack.c.b16 %v442, %v434
  %v635 = vpack.c.b16 %v443, %v435
  %v636 = vpack.c.b16 %v444, %v436
  %v637 = vpack.c.b16 %v445, %v437
  %v638 = vpack.c.b16 %v446, %v438
  %v639 = vpack.c.b16 %v455, %v447
  %v640 = vpack.c.b16 %v456, %v448
  %v641 = vpack.c.b16 %v457, %v449
  %v642 = vpack.c.b16 %v458, %v450
  %v643 = vpack.c.b16 %v459, %v451
  %v644 = vpack.c.b16 %v460, %v452
  %v645 = vpack.c.b16 %v461, %v453
  %v646 = vpack.c.b16 %v462, %v454
  %v647 = vpack.c.b16 %v471, %v463
  %v648 = vpack.c.b16 %v472, %v464
  %v649 = vpack.c.b16 %v473, %v465
  %v650 = vpack.c.b16 %v474, %v466
  %v651 = vpack.c.b16 %v475, %v467
  %v652 = vpack.c.b16 %v476, %v468
  %v653 = vpack.c.b16 %v477, %v469
  %v654 = vpack.c.b16 %v478, %v470
  %v655 = vpack.c.b16 %v487, %v479
  %v656 = vpack.c.b16 %v488, %v480
  %v657 = vpack.c.b16 %v489, %v481
  %v658 = vpack.c.b16 %v490, %v482
  %v659 = vpack.c.b16 %v491, %v483
  %v660 = vpack.c.b16 %v492, %v484
  %v661 = vpack.c.b16 %v493, %v485
  %v662 = vpack.c.b16 %v494, %v486
  %v663 = vpack.c.b16 %v503, %v495
  %v664 = vpack.c.b16 %v504, %v496
  %v665 = vpack.c.b16 %v505, %v497
  %v666 = vpack.c.b16 %v506, %v498
  %v667 = vpack.c.b16 %v507, %v499
  %v668 = vpack.c.b16 %v508, %v500
  %v669 = vpack.c.b16 %v509, %v501
  %v670 = vpack.c.b16 %v510, %v502
  %v671 = vpack.c.b16 %v519, %v511
  %v672 = vpack.c.b16 %v520, %v512
  %v673 = vpack.c.b16 %v521, %v513
  %v674 = vpack.c.b16 %v522, %v514
  %v675 = vpack.c.b16 %v523, %v515
  %v676 = vpack.c.b16 %v524, %v516
  %v677 = vpack.c.b16 %v525, %v517
  %v678 = vpack.c.b16 %v526, %v518
  %v679 = vpack.c.b16 %v535, %v527
  %v680 = vpack.c.b16 %v536, %v528
  %v681 = vpack.c.b16 %v537, %v529
  %v682 = vpack.c.b16 %v538, %v530
  %v683 = vpack.c.b16 %v539, %v531
  %v684 = vpack.c.b16 %v540, %v532
  %v685 = vpack.c.b16 %v541, %v533
  %v686 = vpack.c.b16 %v542, %v534
  %v687 = vpack.c.b16 %v551, %v543
  %v688 = vpack.c.b16 %v552, %v544
  %v689 = vpack.c.b16 %v553, %v545
  %v690 = vpack.c.b16 %v554, %v546
  %v691 = vpack.c.b16 %v555, %v547
  %v692 = vpack.c.b16 %v556, %v548
  %v693 = vpack.c.b16 %v557, %v549
  %v694 = vpack.c.b16 %v558, %v550
  %v695 = vpack.c.b16 %v567, %v559
  %v696 = vpack.c.b16 %v568, %v560
  %v697 = vpack.c.b16 %v569, %v561
  %v698 = vpack.c.b16 %v570, %v562
  %v699 = vpack.c.b16 %v571, %v563
  %v700 = vpack.c.b16 %v572, %v564
  %v701 = vpack.c.b16 %v573, %v565
  %v702 = vpack.c.b16 %v574, %v566
  %831 = vmatprep.subr.bf16.mxu0 %v632
  %832 = vmatpush1.bf16.msra.mxu0 %v631
  %833 = vmatprep.subr.bf16.mxu0 %v624
  %834 = vmatpush1.bf16.msra.mxu0 %v623
  %835 = vmatprep.subr.bf16.mxu0 %v616
  %836 = vmatpush1.bf16.msra.mxu0 %v615
  %837 = vmatprep.subr.bf16.mxu0 %v608
  %838 = vmatpush1.bf16.msra.mxu0 %v607
  %839 = vmatprep.subr.bf16.mxu0 %v600
  %840 = vmatpush1.bf16.msra.mxu0 %v599
  %841 = vmatprep.subr.bf16.mxu0 %v592
  %842 = vmatpush1.bf16.msra.mxu0 %v591
  %843 = vmatprep.subr.bf16.mxu0 %v584
  %844 = vmatpush1.bf16.msra.mxu0 %v583
  %845 = vmatprep.subr.bf16.mxu0 %v576
  %846 = vmatpush1.bf16.msra.mxu0 %v575
  %847 = vmatprep.subr.bf16.mxu0 %v696
  %848 = vmatpush2.bf16.msra.mxu0 %v695
  %849 = vmatprep.subr.bf16.mxu0 %v688
  %850 = vmatpush2.bf16.msra.mxu0 %v687
  %851 = vmatprep.subr.bf16.mxu0 %v680
  %852 = vmatpush2.bf16.msra.mxu0 %v679
  %853 = vmatprep.subr.bf16.mxu0 %v672
  %854 = vmatpush2.bf16.msra.mxu0 %v671
  %855 = vmatprep.subr.bf16.mxu0 %v664
  %856 = vmatpush2.bf16.msra.mxu0 %v663
  %857 = vmatprep.subr.bf16.mxu0 %v656
  %858 = vmatpush2.bf16.msra.mxu0 %v655
  %859 = vmatprep.subr.bf16.mxu0 %v648
  %860 = vmatpush2.bf16.msra.mxu0 %v647
  %861 = vmatprep.subr.bf16.mxu0 %v640
  %862 = vmatpush2.bf16.msra.mxu0 %v639
  %863 = vmatprep.mubr.bf16.mxu0 %v60
  %864 = vmatmul.mubr.bf16.gmra.mxu0 %v59
  %v865 = vpop.f32.mrf.mxu0
  %v866 = vadd.f32 0.0, %v865
  %v867 = vpop.f32.mrf.mxu0
  %v868 = vadd.f32 0.0, %v867
  %v869 = vpop.f32.mrf.mxu0
  %v870 = vadd.f32 0.0, %v869
  %v871 = vpop.f32.mrf.mxu0
  %v872 = vadd.f32 0.0, %v871
  %873 = vmatprep.mubr.bf16.mxu0 %v62
  %874 = vmatmul.mubr.bf16.gmra.mxu0 %v61
  %v875 = vpop.f32.mrf.mxu0
  %v876 = vadd.f32 0.0, %v875
  %v877 = vpop.f32.mrf.mxu0
  %v878 = vadd.f32 0.0, %v877
  %v879 = vpop.f32.mrf.mxu0
  %v880 = vadd.f32 0.0, %v879
  %v881 = vpop.f32.mrf.mxu0
  %v882 = vadd.f32 0.0, %v881
  %883 = vdwg.mxu0
  %884 = vmatprep.subr.bf16.mxu0 %v634
  %885 = vmatpush1.bf16.msra.mxu0 %v633
  %886 = vmatprep.subr.bf16.mxu0 %v626
  %887 = vmatpush1.bf16.msra.mxu0 %v625
  %888 = vmatprep.subr.bf16.mxu0 %v618
  %889 = vmatpush1.bf16.msra.mxu0 %v617
  %890 = vmatprep.subr.bf16.mxu0 %v610
  %891 = vmatpush1.bf16.msra.mxu0 %v609
  %892 = vmatprep.subr.bf16.mxu0 %v602
  %893 = vmatpush1.bf16.msra.mxu0 %v601
  %894 = vmatprep.subr.bf16.mxu0 %v594
  %895 = vmatpush1.bf16.msra.mxu0 %v593
  %896 = vmatprep.subr.bf16.mxu0 %v586
  %897 = vmatpush1.bf16.msra.mxu0 %v585
  %898 = vmatprep.subr.bf16.mxu0 %v578
  %899 = vmatpush1.bf16.msra.mxu0 %v577
  %900 = vmatprep.subr.bf16.mxu0 %v698
  %901 = vmatpush2.bf16.msra.mxu0 %v697
  %902 = vmatprep.subr.bf16.mxu0 %v690
  %903 = vmatpush2.bf16.msra.mxu0 %v689
  %904 = vmatprep.subr.bf16.mxu0 %v682
  %905 = vmatpush2.bf16.msra.mxu0 %v681
  %906 = vmatprep.subr.bf16.mxu0 %v674
  %907 = vmatpush2.bf16.msra.mxu0 %v673
  %908 = vmatprep.subr.bf16.mxu0 %v666
  %909 = vmatpush2.bf16.msra.mxu0 %v665
  %910 = vmatprep.subr.bf16.mxu0 %v658
  %911 = vmatpush2.bf16.msra.mxu0 %v657
  %912 = vmatprep.subr.bf16.mxu0 %v650
  %913 = vmatpush2.bf16.msra.mxu0 %v649
  %914 = vmatprep.subr.bf16.mxu0 %v642
  %915 = vmatpush2.bf16.msra.mxu0 %v641
  %916 = vmatprep.mubr.bf16.mxu0 %v60
  %917 = vmatmul.mubr.bf16.gmra.mxu0 %v59
  %v918 = vpop.f32.mrf.mxu0
  %v919 = vadd.f32 0.0, %v918
  %v920 = vpop.f32.mrf.mxu0
  %v921 = vadd.f32 0.0, %v920
  %v922 = vpop.f32.mrf.mxu0
  %v923 = vadd.f32 0.0, %v922
  %v924 = vpop.f32.mrf.mxu0
  %v925 = vadd.f32 0.0, %v924
  %926 = vmatprep.mubr.bf16.mxu0 %v62
  %927 = vmatmul.mubr.bf16.gmra.mxu0 %v61
  %v928 = vpop.f32.mrf.mxu0
  %v929 = vadd.f32 0.0, %v928
  %v930 = vpop.f32.mrf.mxu0
  %v931 = vadd.f32 0.0, %v930
  %v932 = vpop.f32.mrf.mxu0
  %v933 = vadd.f32 0.0, %v932
  %v934 = vpop.f32.mrf.mxu0
  %v935 = vadd.f32 0.0, %v934
  %936 = vdwg.mxu0
  %937 = vmatprep.subr.bf16.mxu0 %v636
  %938 = vmatpush1.bf16.msra.mxu0 %v635
  %939 = vmatprep.subr.bf16.mxu0 %v628
  %940 = vmatpush1.bf16.msra.mxu0 %v627
  %941 = vmatprep.subr.bf16.mxu0 %v620
  %942 = vmatpush1.bf16.msra.mxu0 %v619
  %943 = vmatprep.subr.bf16.mxu0 %v612
  %944 = vmatpush1.bf16.msra.mxu0 %v611
  %945 = vmatprep.subr.bf16.mxu0 %v604
  %946 = vmatpush1.bf16.msra.mxu0 %v603
  %947 = vmatprep.subr.bf16.mxu0 %v596
  %948 = vmatpush1.bf16.msra.mxu0 %v595
  %949 = vmatprep.subr.bf16.mxu0 %v588
  %950 = vmatpush1.bf16.msra.mxu0 %v587
  %951 = vmatprep.subr.bf16.mxu0 %v580
  %952 = vmatpush1.bf16.msra.mxu0 %v579
  %953 = vmatprep.subr.bf16.mxu0 %v700
  %954 = vmatpush2.bf16.msra.mxu0 %v699
  %955 = vmatprep.subr.bf16.mxu0 %v692
  %956 = vmatpush2.bf16.msra.mxu0 %v691
  %957 = vmatprep.subr.bf16.mxu0 %v684
  %958 = vmatpush2.bf16.msra.mxu0 %v683
  %959 = vmatprep.subr.bf16.mxu0 %v676
  %960 = vmatpush2.bf16.msra.mxu0 %v675
  %961 = vmatprep.subr.bf16.mxu0 %v668
  %962 = vmatpush2.bf16.msra.mxu0 %v667
  %963 = vmatprep.subr.bf16.mxu0 %v660
  %964 = vmatpush2.bf16.msra.mxu0 %v659
  %965 = vmatprep.subr.bf16.mxu0 %v652
  %966 = vmatpush2.bf16.msra.mxu0 %v651
  %967 = vmatprep.subr.bf16.mxu0 %v644
  %968 = vmatpush2.bf16.msra.mxu0 %v643
  %969 = vmatprep.mubr.bf16.mxu0 %v60
  %970 = vmatmul.mubr.bf16.gmra.mxu0 %v59
  %v971 = vpop.f32.mrf.mxu0
  %v972 = vadd.f32 0.0, %v971
  %v973 = vpop.f32.mrf.mxu0
  %v974 = vadd.f32 0.0, %v973
  %v975 = vpop.f32.mrf.mxu0
  %v976 = vadd.f32 0.0, %v975
  %v977 = vpop.f32.mrf.mxu0
  %v978 = vadd.f32 0.0, %v977
  %979 = vmatprep.mubr.bf16.mxu0 %v62
  %980 = vmatmul.mubr.bf16.gmra.mxu0 %v61
  %v981 = vpop.f32.mrf.mxu0
  %v982 = vadd.f32 0.0, %v981
  %v983 = vpop.f32.mrf.mxu0
  %v984 = vadd.f32 0.0, %v983
  %v985 = vpop.f32.mrf.mxu0
  %v986 = vadd.f32 0.0, %v985
  %v987 = vpop.f32.mrf.mxu0
  %v988 = vadd.f32 0.0, %v987
  %989 = vdwg.mxu0
  %990 = vmatprep.subr.bf16.mxu0 %v638
  %991 = vmatpush1.bf16.msra.mxu0 %v637
  %992 = vmatprep.subr.bf16.mxu0 %v630
  %993 = vmatpush1.bf16.msra.mxu0 %v629
  %994 = vmatprep.subr.bf16.mxu0 %v622
  %995 = vmatpush1.bf16.msra.mxu0 %v621
  %996 = vmatprep.subr.bf16.mxu0 %v614
  %997 = vmatpush1.bf16.msra.mxu0 %v613
  %998 = vmatprep.subr.bf16.mxu0 %v606
  %999 = vmatpush1.bf16.msra.mxu0 %v605
  %1000 = vmatprep.subr.bf16.mxu0 %v598
  %1001 = vmatpush1.bf16.msra.mxu0 %v597
  %1002 = vmatprep.subr.bf16.mxu0 %v590
  %1003 = vmatpush1.bf16.msra.mxu0 %v589
  %1004 = vmatprep.subr.bf16.mxu0 %v582
  %1005 = vmatpush1.bf16.msra.mxu0 %v581
  %1006 = vmatprep.subr.bf16.mxu0 %v702
  %1007 = vmatpush2.bf16.msra.mxu0 %v701
  %1008 = vmatprep.subr.bf16.mxu0 %v694
  %1009 = vmatpush2.bf16.msra.mxu0 %v693
  %1010 = vmatprep.subr.bf16.mxu0 %v686
  %1011 = vmatpush2.bf16.msra.mxu0 %v685
  %1012 = vmatprep.subr.bf16.mxu0 %v678
  %1013 = vmatpush2.bf16.msra.mxu0 %v677
  %1014 = vmatprep.subr.bf16.mxu0 %v670
  %1015 = vmatpush2.bf16.msra.mxu0 %v669
  %1016 = vmatprep.subr.bf16.mxu0 %v662
  %1017 = vmatpush2.bf16.msra.mxu0 %v661
  %1018 = vmatprep.subr.bf16.mxu0 %v654
  %1019 = vmatpush2.bf16.msra.mxu0 %v653
  %1020 = vmatprep.subr.bf16.mxu0 %v646
  %1021 = vmatpush2.bf16.msra.mxu0 %v645
  %1022 = vmatprep.mubr.bf16.mxu0 %v60
  %1023 = vmatmul.mubr.bf16.gmra.mxu0 %v59
  %v1024 = vpop.f32.mrf.mxu0
  %v1025 = vadd.f32 0.0, %v1024
  %v1026 = vpop.f32.mrf.mxu0
  %v1027 = vadd.f32 0.0, %v1026
  %v1028 = vpop.f32.mrf.mxu0
  %v1029 = vadd.f32 0.0, %v1028
  %v1030 = vpop.f32.mrf.mxu0
  %v1031 = vadd.f32 0.0, %v1030
  %1032 = vmatprep.mubr.bf16.mxu0 %v62
  %1033 = vmatmul.mubr.bf16.gmra.mxu0 %v61
  %v1034 = vpop.f32.mrf.mxu0
  %v1035 = vadd.f32 0.0, %v1034
  %v1036 = vpop.f32.mrf.mxu0
  %v1037 = vadd.f32 0.0, %v1036
  %v1038 = vpop.f32.mrf.mxu0
  %v1039 = vadd.f32 0.0, %v1038
  %v1040 = vpop.f32.mrf.mxu0
  %v1041 = vadd.f32 0.0, %v1040
  %1042 = vdwg.mxu0
  %v1043 = vadd.f32 %v19, %v866
  %v1044 = vadd.f32 %v20, %v868
  %v1045 = vadd.f32 %v21, %v919
  %v1046 = vadd.f32 %v22, %v921
  %v1047 = vadd.f32 %v23, %v972
  %v1048 = vadd.f32 %v24, %v974
  %v1049 = vadd.f32 %v25, %v1025
  %v1050 = vadd.f32 %v26, %v1027
  %v1051 = vadd.f32 %v27, %v870
  %v1052 = vadd.f32 %v28, %v872
  %v1053 = vadd.f32 %v29, %v923
  %v1054 = vadd.f32 %v30, %v925
  %v1055 = vadd.f32 %v31, %v976
  %v1056 = vadd.f32 %v32, %v978
  %v1057 = vadd.f32 %v33, %v1029
  %v1058 = vadd.f32 %v34, %v1031
  %v1059 = vadd.f32 %v35, %v876
  %v1060 = vadd.f32 %v36, %v878
  %v1061 = vadd.f32 %v37, %v929
  %v1062 = vadd.f32 %v38, %v931
  %v1063 = vadd.f32 %v39, %v982
  %v1064 = vadd.f32 %v40, %v984
  %v1065 = vadd.f32 %v41, %v1035
  %v1066 = vadd.f32 %v42, %v1037
  %v1067 = vadd.f32 %v43, %v880
  %v1068 = vadd.f32 %v44, %v882
  %v1069 = vadd.f32 %v45, %v933
  %v1070 = vadd.f32 %v46, %v935
  %v1071 = vadd.f32 %v47, %v986
  %v1072 = vadd.f32 %v48, %v988
  %v1073 = vadd.f32 %v49, %v1039
  %v1074 = vadd.f32 %v50, %v1041
  %v1075 = vsub.f32 0.0, %v1043
  %v1076 = vsub.f32 0.0, %v1044
  %v1077 = vsub.f32 0.0, %v1051
  %v1078 = vsub.f32 0.0, %v1052
  %v1079 = vsub.f32 0.0, %v1059
  %v1080 = vsub.f32 0.0, %v1060
  %v1081 = vsub.f32 0.0, %v1067
  %v1082 = vsub.f32 0.0, %v1068
  %v1083 = vmul.f32 %v1075, 1.442695
  %v1084 = vpow.pop %v1083
  %v1085 = vmul.f32 %v1076, 1.442695
  %v1086 = vpow.pop %v1085
  %v1087 = vmul.f32 %v1077, 1.442695
  %v1088 = vpow.pop %v1087
  %v1089 = vmul.f32 %v1078, 1.442695
  %v1090 = vpow.pop %v1089
  %v1091 = vmul.f32 %v1079, 1.442695
  %v1092 = vpow.pop %v1091
  %v1093 = vmul.f32 %v1080, 1.442695
  %v1094 = vpow.pop %v1093
  %v1095 = vmul.f32 %v1081, 1.442695
  %v1096 = vpow.pop %v1095
  %v1097 = vmul.f32 %v1082, 1.442695
  %v1098 = vpow.pop %v1097
  %v1099 = vadd.f32 %v1084, 1.0
  %v1100 = vadd.f32 %v1086, 1.0
  %v1101 = vadd.f32 %v1088, 1.0
  %v1102 = vadd.f32 %v1090, 1.0
  %v1103 = vadd.f32 %v1092, 1.0
  %v1104 = vadd.f32 %v1094, 1.0
  %v1105 = vadd.f32 %v1096, 1.0
  %v1106 = vadd.f32 %v1098, 1.0
  %v1107 = vrcp.pop %v1099
  %v1108 = vmul.f32 1.0, %v1107
  %v1109 = vrcp.pop %v1100
  %v1110 = vmul.f32 1.0, %v1109
  %v1111 = vrcp.pop %v1101
  %v1112 = vmul.f32 1.0, %v1111
  %v1113 = vrcp.pop %v1102
  %v1114 = vmul.f32 1.0, %v1113
  %v1115 = vrcp.pop %v1103
  %v1116 = vmul.f32 1.0, %v1115
  %v1117 = vrcp.pop %v1104
  %v1118 = vmul.f32 1.0, %v1117
  %v1119 = vrcp.pop %v1105
  %v1120 = vmul.f32 1.0, %v1119
  %v1121 = vrcp.pop %v1106
  %v1122 = vmul.f32 1.0, %v1121
  %v1123 = vsub.f32 0.0, %v1045
  %v1124 = vsub.f32 0.0, %v1046
  %v1125 = vsub.f32 0.0, %v1053
  %v1126 = vsub.f32 0.0, %v1054
  %v1127 = vsub.f32 0.0, %v1061
  %v1128 = vsub.f32 0.0, %v1062
  %v1129 = vsub.f32 0.0, %v1069
  %v1130 = vsub.f32 0.0, %v1070
  %v1131 = vmul.f32 %v1123, 1.442695
  %v1132 = vpow.pop %v1131
  %v1133 = vmul.f32 %v1124, 1.442695
  %v1134 = vpow.pop %v1133
  %v1135 = vmul.f32 %v1125, 1.442695
  %v1136 = vpow.pop %v1135
  %v1137 = vmul.f32 %v1126, 1.442695
  %v1138 = vpow.pop %v1137
  %v1139 = vmul.f32 %v1127, 1.442695
  %v1140 = vpow.pop %v1139
  %v1141 = vmul.f32 %v1128, 1.442695
  %v1142 = vpow.pop %v1141
  %v1143 = vmul.f32 %v1129, 1.442695
  %v1144 = vpow.pop %v1143
  %v1145 = vmul.f32 %v1130, 1.442695
  %v1146 = vpow.pop %v1145
  %v1147 = vadd.f32 %v1132, 1.0
  %v1148 = vadd.f32 %v1134, 1.0
  %v1149 = vadd.f32 %v1136, 1.0
  %v1150 = vadd.f32 %v1138, 1.0
  %v1151 = vadd.f32 %v1140, 1.0
  %v1152 = vadd.f32 %v1142, 1.0
  %v1153 = vadd.f32 %v1144, 1.0
  %v1154 = vadd.f32 %v1146, 1.0
  %v1155 = vrcp.pop %v1147
  %v1156 = vmul.f32 1.0, %v1155
  %v1157 = vrcp.pop %v1148
  %v1158 = vmul.f32 1.0, %v1157
  %v1159 = vrcp.pop %v1149
  %v1160 = vmul.f32 1.0, %v1159
  %v1161 = vrcp.pop %v1150
  %v1162 = vmul.f32 1.0, %v1161
  %v1163 = vrcp.pop %v1151
  %v1164 = vmul.f32 1.0, %v1163
  %v1165 = vrcp.pop %v1152
  %v1166 = vmul.f32 1.0, %v1165
  %v1167 = vrcp.pop %v1153
  %v1168 = vmul.f32 1.0, %v1167
  %v1169 = vrcp.pop %v1154
  %v1170 = vmul.f32 1.0, %v1169
  %v1171 = vtanh.pop %v1047
  %v1172 = vtanh.pop %v1048
  %v1173 = vtanh.pop %v1055
  %v1174 = vtanh.pop %v1056
  %v1175 = vtanh.pop %v1063
  %v1176 = vtanh.pop %v1064
  %v1177 = vtanh.pop %v1071
  %v1178 = vtanh.pop %v1072
  %v1179 = vsub.f32 0.0, %v1049
  %v1180 = vsub.f32 0.0, %v1050
  %v1181 = vsub.f32 0.0, %v1057
  %v1182 = vsub.f32 0.0, %v1058
  %v1183 = vsub.f32 0.0, %v1065
  %v1184 = vsub.f32 0.0, %v1066
  %v1185 = vsub.f32 0.0, %v1073
  %v1186 = vsub.f32 0.0, %v1074
  %v1187 = vmul.f32 %v1179, 1.442695
  %v1188 = vpow.pop %v1187
  %v1189 = vmul.f32 %v1180, 1.442695
  %v1190 = vpow.pop %v1189
  %v1191 = vmul.f32 %v1181, 1.442695
  %v1192 = vpow.pop %v1191
  %v1193 = vmul.f32 %v1182, 1.442695
  %v1194 = vpow.pop %v1193
  %v1195 = vmul.f32 %v1183, 1.442695
  %v1196 = vpow.pop %v1195
  %v1197 = vmul.f32 %v1184, 1.442695
  %v1198 = vpow.pop %v1197
  %v1199 = vmul.f32 %v1185, 1.442695
  %v1200 = vpow.pop %v1199
  %v1201 = vmul.f32 %v1186, 1.442695
  %v1202 = vpow.pop %v1201
  %v1203 = vadd.f32 %v1188, 1.0
  %v1204 = vadd.f32 %v1190, 1.0
  %v1205 = vadd.f32 %v1192, 1.0
  %v1206 = vadd.f32 %v1194, 1.0
  %v1207 = vadd.f32 %v1196, 1.0
  %v1208 = vadd.f32 %v1198, 1.0
  %v1209 = vadd.f32 %v1200, 1.0
  %v1210 = vadd.f32 %v1202, 1.0
  %v1211 = vrcp.pop %v1203
  %v1212 = vmul.f32 1.0, %v1211
  %v1213 = vrcp.pop %v1204
  %v1214 = vmul.f32 1.0, %v1213
  %v1215 = vrcp.pop %v1205
  %v1216 = vmul.f32 1.0, %v1215
  %v1217 = vrcp.pop %v1206
  %v1218 = vmul.f32 1.0, %v1217
  %v1219 = vrcp.pop %v1207
  %v1220 = vmul.f32 1.0, %v1219
  %v1221 = vrcp.pop %v1208
  %v1222 = vmul.f32 1.0, %v1221
  %v1223 = vrcp.pop %v1209
  %v1224 = vmul.f32 1.0, %v1223
  %v1225 = vrcp.pop %v1210
  %v1226 = vmul.f32 1.0, %v1225
  %v1227 = vld [vmem:[%s2] sm:$0xff]
  %v1228 = vld [vmem:[%s2 + $0x8] sm:$0xff]
  %v1229 = vld [vmem:[%s2 + $0x10] sm:$0xff]
  %v1230 = vld [vmem:[%s2 + $0x18] sm:$0xff]
  %v1231 = vld [vmem:[%s2 + $0x20] sm:$0xff]
  %v1232 = vld [vmem:[%s2 + $0x28] sm:$0xff]
  %v1233 = vld [vmem:[%s2 + $0x30] sm:$0xff]
  %v1234 = vld [vmem:[%s2 + $0x38] sm:$0xff]
  %v1235 = vmul.f32 %v1156, %v1227
  %v1236 = vmul.f32 %v1158, %v1228
  %v1237 = vmul.f32 %v1160, %v1229
  %v1238 = vmul.f32 %v1162, %v1230
  %v1239 = vmul.f32 %v1164, %v1231
  %v1240 = vmul.f32 %v1166, %v1232
  %v1241 = vmul.f32 %v1168, %v1233
  %v1242 = vmul.f32 %v1170, %v1234
  %v1243 = vmul.f32 %v1108, %v1171
  %v1244 = vmul.f32 %v1110, %v1172
  %v1245 = vmul.f32 %v1112, %v1173
  %v1246 = vmul.f32 %v1114, %v1174
  %v1247 = vmul.f32 %v1116, %v1175
  %v1248 = vmul.f32 %v1118, %v1176
  %v1249 = vmul.f32 %v1120, %v1177
  %v1250 = vmul.f32 %v1122, %v1178
  %v1251 = vadd.f32 %v1235, %v1243
  %v1252 = vadd.f32 %v1236, %v1244
  %v1253 = vadd.f32 %v1237, %v1245
  %v1254 = vadd.f32 %v1238, %v1246
  %v1255 = vadd.f32 %v1239, %v1247
  %v1256 = vadd.f32 %v1240, %v1248
  %v1257 = vadd.f32 %v1241, %v1249
  %v1258 = vadd.f32 %v1242, %v1250
  %1259 = vst [vmem:[%s5] sm:$0xff] %v1251
  %1260 = vst [vmem:[%s5 + $0x8] sm:$0xff] %v1252
  %1261 = vst [vmem:[%s5 + $0x10] sm:$0xff] %v1253
  %1262 = vst [vmem:[%s5 + $0x18] sm:$0xff] %v1254
  %1263 = vst [vmem:[%s5 + $0x20] sm:$0xff] %v1255
  %1264 = vst [vmem:[%s5 + $0x28] sm:$0xff] %v1256
  %1265 = vst [vmem:[%s5 + $0x30] sm:$0xff] %v1257
  %1266 = vst [vmem:[%s5 + $0x38] sm:$0xff] %v1258
  %v1267 = vtanh.pop %v1251
  %v1268 = vtanh.pop %v1252
  %v1269 = vtanh.pop %v1253
  %v1270 = vtanh.pop %v1254
  %v1271 = vtanh.pop %v1255
  %v1272 = vtanh.pop %v1256
  %v1273 = vtanh.pop %v1257
  %v1274 = vtanh.pop %v1258
  %v1275 = vmul.f32 %v1212, %v1267
  %v1276 = vmul.f32 %v1214, %v1268
  %v1277 = vmul.f32 %v1216, %v1269
  %v1278 = vmul.f32 %v1218, %v1270
  %v1279 = vmul.f32 %v1220, %v1271
  %v1280 = vmul.f32 %v1222, %v1272
  %v1281 = vmul.f32 %v1224, %v1273
  %v1282 = vmul.f32 %v1226, %v1274
  %1283 = vst [vmem:[%s4] sm:$0xff] %v1275
  %1284 = vst [vmem:[%s4 + $0x8] sm:$0xff] %v1276
  %1285 = vst [vmem:[%s4 + $0x10] sm:$0xff] %v1277
  %1286 = vst [vmem:[%s4 + $0x18] sm:$0xff] %v1278
  %1287 = vst [vmem:[%s4 + $0x20] sm:$0xff] %v1279
  %1288 = vst [vmem:[%s4 + $0x28] sm:$0xff] %v1280
  %1289 = vst [vmem:[%s4 + $0x30] sm:$0xff] %v1281
  %1290 = vst [vmem:[%s4 + $0x38] sm:$0xff] %v1282
  // Predicated region
  $region18: #{closed_call.3} parent=0 // pred_check
    _
  $region19: #{closed_call.3} parent=0 // pred_check_branch
    %1292 = sbr.rel (0) target = $region21
  $region20: #{closed_call.3} parent=0 // pred_region
    _
  $region21: #{closed_call.3} parent=0 // pred_fallthru
    _
  // Predicated region
  $region22: #{closed_call.3} parent=0 // pred_check
    _
  $region23: #{closed_call.3} parent=0 // pred_check_branch
    %1294 = sbr.rel (0) target = $region25
  $region24: #{closed_call.3} parent=0 // pred_region
    _
  $region25: #{closed_call.3} parent=0 // pred_fallthru
    _
  // Predicated region
  $region26: #{closed_call.3} parent=0 // pred_check
    _
  $region27: #{closed_call.3} parent=0 // pred_check_branch
    %1296 = sbr.rel (0) target = $region29
  $region28: #{closed_call.3} parent=0 // pred_region
    _
  $region29: #{closed_call.3} parent=0 // pred_fallthru
    _
  // Predicated region
  $region30: #{closed_call.3} parent=0 // pred_check
    _
  $region31: #{closed_call.3} parent=0 // pred_check_branch
    %1298 = sbr.rel (0) target = $region33
  $region32: #{closed_call.3} parent=0 // pred_region
    _
  $region33: #{closed_call.3} parent=0 // pred_fallthru
    _

// kernel: _lambda_.8
$region0: #{_lambda_.8}
  #allocation0 [shape = 'u32[]', space=smem, size = 0x4, offset = 0x4, fixed_abs, tag = 'smem constant byte address 0x4 - core index']
  #allocation1 [shape = 'u32[144,128]{1,0:T(1,128)}', space=vmem, size = 0x12000, scoped, tag = 'internal scratch']
  %s0 = inlined_call_operand.vmem [shape: f32[8,64,516], index: 0, kind: input, shape index: {}]
  %s1 = inlined_call_operand.vmem [shape: bf16[516,512], index: 1, kind: input, shape index: {}]
  %s2 = inlined_call_operand.vmem [shape: f32[1,512], index: 2, kind: input, shape index: {}]
  %s3 = inlined_call_operand.vmem [shape: bf16[516,256], index: 3, kind: input, shape index: {}]
  %s4 = inlined_call_operand.vmem [shape: f32[1,256], index: 4, kind: input, shape index: {}]
  %s5 = inlined_call_operand.vmem [shape: bf16[256,512], index: 5, kind: input, shape index: {}]
  %s6 = inlined_call_operand.vmem [shape: f32[1,512], index: 6, kind: input, shape index: {}]
  %s7 = inlined_call_operand.vmem [shape: f32[64,512], index: 7, kind: output, shape index: {}]
  %s8 = sld [smem:[#allocation0]]
  $region69: #{_lambda_.8} parent=0
    _
  %s10 = ssub.s32 1, %s8
  %s11 = scalar_select 0, %s10, %s8
  loop: start=0, step=1, limit=10
  $region2: #{_lambda_.8} parent=0 // loop_pre_header
    _
  $region3: #{_lambda_.8} parent=0 // loop_header
    %s13 = sphi 0, %s17
    %p14 = scmp.ge.s32.totalorder %s13, 10
    %s20 = sphi 0, %s32
    %s21 = sphi 0, %s28
    %s22 = sphi 0, %s20
    %s23 = sphi 0, %s21
    %s24 = sphi 0, %s22
    %s25 = sphi 0, %s23
    %s37 = sphi 0, %s39
    %s40 = sphi 0, %s37
    %s41 = sphi 0, %s40
    %s57 = sphi 0, %s41
    %s61 = sphi 0, %s61
    %s63 = sphi 0, %s61
    %s64 = sphi 0, %s63
    %s78 = sphi 0, %s64
    %s82 = sphi 0, %s82
    %s84 = sphi 0, %s82
    %s85 = sphi 0, %s84
    %s99 = sphi 0, %s85
    %s103 = sphi 0, %s103
    %s105 = sphi 0, %s103
    %s106 = sphi 0, %s105
    %s120 = sphi 0, %s106
    %s124 = sphi 0, %s124
    %s126 = sphi 0, %s124
    %s127 = sphi 0, %s126
    %s141 = sphi 0, %s127
    %s145 = sphi 0, %s145
    %s147 = sphi 0, %s145
    %s148 = sphi 0, %s147
    %s162 = sphi 0, %s148
    %s166 = sphi 0, %s166
    %s168 = sphi 0, %s166
    %s169 = sphi 0, %s168
    %s183 = sphi 0, %s169
    %s189 = sphi 0, %s191
    %s192 = sphi 0, %s189
    %s193 = sphi 0, %s192
    %s209 = sphi 0, %s193
  $region4: #{_lambda_.8} parent=0 // loop_header_branch
    %16 = sbr.rel (%p14) target = $region8
  $region5: #{_lambda_.8} parent=0 // loop_body
    %s18 = ssub.s32 %s13, 1
    %s19 = ssub.s32 %s13, 2
    %s26 = sadd.s32 1, %s21
    %p27 = scmp.ge.s32.totalorder %s26, 8
    %s28 = scalar_select %p27, 0, %s26
    %s29 = sadd.s32 1, %s20
    %s30 = scalar_select %p27, %s29, %s20
    %p31 = scmp.ge.s32.totalorder %s30, 1
    %s32 = scalar_select %p31, 0, %s30
    %s33 = ssub.s32 %s21, %s28
    %s34 = ssub.s32 %s20, %s32
    %s35 = sor.u32 %s33, %s34
    %p36 = scmp.eq.s32.totalorder %s35, 0
    %s38 = sadd.s32 %s37, 1
    %s39 = scalar_select %p36, %s37, %s38
    %p42 = pneg %p36
    %p43 = scmp.eq.s32.totalorder %s13, 7
    %p44 = por %p42, %p43
    %p45 = scmp.ne.s32.totalorder %s37, %s40
    %p46 = scmp.eq.s32.totalorder %s13, 0
    %p47 = por %p45, %p46
    %p48 = scmp.ne.s32.totalorder %s37, %s40
    %p49 = scmp.eq.s32.totalorder %s18, 7
    %p50 = por %p48, %p49
    %p51 = scmp.ne.s32.totalorder %s40, %s41
    %p52 = scmp.eq.s32.totalorder %s18, 0
    %p53 = por %p51, %p52
    %p54 = scmp.ne.s32.totalorder %s40, %s41
    %p55 = scmp.eq.s32.totalorder %s19, 7
    %p56 = por %p54, %p55
    %p58 = scmp.ne.s32.totalorder %s41, %s57
    %p59 = scmp.eq.s32.totalorder %s19, 0
    %p60 = por %p58, %p59
    %s62 = sadd.s32 %s61, 1
    %p65 = scmp.eq.s32.totalorder %s13, 7
    %p66 = scmp.ne.s32.totalorder %s61, %s63
    %p67 = scmp.eq.s32.totalorder %s13, 0
    %p68 = por %p66, %p67
    %p69 = scmp.ne.s32.totalorder %s61, %s63
    %p70 = scmp.eq.s32.totalorder %s18, 7
    %p71 = por %p69, %p70
    %p72 = scmp.ne.s32.totalorder %s63, %s64
    %p73 = scmp.eq.s32.totalorder %s18, 0
    %p74 = por %p72, %p73
    %p75 = scmp.ne.s32.totalorder %s63, %s64
    %p76 = scmp.eq.s32.totalorder %s19, 7
    %p77 = por %p75, %p76
    %p79 = scmp.ne.s32.totalorder %s64, %s78
    %p80 = scmp.eq.s32.totalorder %s19, 0
    %p81 = por %p79, %p80
    %s83 = sadd.s32 %s82, 1
    %p86 = scmp.eq.s32.totalorder %s13, 7
    %p87 = scmp.ne.s32.totalorder %s82, %s84
    %p88 = scmp.eq.s32.totalorder %s13, 0
    %p89 = por %p87, %p88
    %p90 = scmp.ne.s32.totalorder %s82, %s84
    %p91 = scmp.eq.s32.totalorder %s18, 7
    %p92 = por %p90, %p91
    %p93 = scmp.ne.s32.totalorder %s84, %s85
    %p94 = scmp.eq.s32.totalorder %s18, 0
    %p95 = por %p93, %p94
    %p96 = scmp.ne.s32.totalorder %s84, %s85
    %p97 = scmp.eq.s32.totalorder %s19, 7
    %p98 = por %p96, %p97
    %p100 = scmp.ne.s32.totalorder %s85, %s99
    %p101 = scmp.eq.s32.totalorder %s19, 0
    %p102 = por %p100, %p101
    %s104 = sadd.s32 %s103, 1
    %p107 = scmp.eq.s32.totalorder %s13, 7
    %p108 = scmp.ne.s32.totalorder %s103, %s105
    %p109 = scmp.eq.s32.totalorder %s13, 0
    %p110 = por %p108, %p109
    %p111 = scmp.ne.s32.totalorder %s103, %s105
    %p112 = scmp.eq.s32.totalorder %s18, 7
    %p113 = por %p111, %p112
    %p114 = scmp.ne.s32.totalorder %s105, %s106
    %p115 = scmp.eq.s32.totalorder %s18, 0
    %p116 = por %p114, %p115
    %p117 = scmp.ne.s32.totalorder %s105, %s106
    %p118 = scmp.eq.s32.totalorder %s19, 7
    %p119 = por %p117, %p118
    %p121 = scmp.ne.s32.totalorder %s106, %s120
    %p122 = scmp.eq.s32.totalorder %s19, 0
    %p123 = por %p121, %p122
    %s125 = sadd.s32 %s124, 1
    %p128 = scmp.eq.s32.totalorder %s13, 7
    %p129 = scmp.ne.s32.totalorder %s124, %s126
    %p130 = scmp.eq.s32.totalorder %s13, 0
    %p131 = por %p129, %p130
    %p132 = scmp.ne.s32.totalorder %s124, %s126
    %p133 = scmp.eq.s32.totalorder %s18, 7
    %p134 = por %p132, %p133
    %p135 = scmp.ne.s32.totalorder %s126, %s127
    %p136 = scmp.eq.s32.totalorder %s18, 0
    %p137 = por %p135, %p136
    %p138 = scmp.ne.s32.totalorder %s126, %s127
    %p139 = scmp.eq.s32.totalorder %s19, 7
    %p140 = por %p138, %p139
    %p142 = scmp.ne.s32.totalorder %s127, %s141
    %p143 = scmp.eq.s32.totalorder %s19, 0
    %p144 = por %p142, %p143
    %s146 = sadd.s32 %s145, 1
    %p149 = scmp.eq.s32.totalorder %s13, 7
    %p150 = scmp.ne.s32.totalorder %s145, %s147
    %p151 = scmp.eq.s32.totalorder %s13, 0
    %p152 = por %p150, %p151
    %p153 = scmp.ne.s32.totalorder %s145, %s147
    %p154 = scmp.eq.s32.totalorder %s18, 7
    %p155 = por %p153, %p154
    %p156 = scmp.ne.s32.totalorder %s147, %s148
    %p157 = scmp.eq.s32.totalorder %s18, 0
    %p158 = por %p156, %p157
    %p159 = scmp.ne.s32.totalorder %s147, %s148
    %p160 = scmp.eq.s32.totalorder %s19, 7
    %p161 = por %p159, %p160
    %p163 = scmp.ne.s32.totalorder %s148, %s162
    %p164 = scmp.eq.s32.totalorder %s19, 0
    %p165 = por %p163, %p164
    %s167 = sadd.s32 %s166, 1
    %p170 = scmp.eq.s32.totalorder %s13, 7
    %p171 = scmp.ne.s32.totalorder %s166, %s168
    %p172 = scmp.eq.s32.totalorder %s13, 0
    %p173 = por %p171, %p172
    %p174 = scmp.ne.s32.totalorder %s166, %s168
    %p175 = scmp.eq.s32.totalorder %s18, 7
    %p176 = por %p174, %p175
    %p177 = scmp.ne.s32.totalorder %s168, %s169
    %p178 = scmp.eq.s32.totalorder %s18, 0
    %p179 = por %p177, %p178
    %p180 = scmp.ne.s32.totalorder %s168, %s169
    %p181 = scmp.eq.s32.totalorder %s19, 7
    %p182 = por %p180, %p181
    %p184 = scmp.ne.s32.totalorder %s169, %s183
    %p185 = scmp.eq.s32.totalorder %s19, 0
    %p186 = por %p184, %p185
    %s187 = ssub.s32 %s20, %s32
    %p188 = scmp.eq.s32.totalorder %s187, 0
    %s190 = sadd.s32 %s189, 1
    %s191 = scalar_select %p188, %s189, %s190
    %p194 = pneg %p188
    %p195 = scmp.eq.s32.totalorder %s13, 7
    %p196 = por %p194, %p195
    %p197 = scmp.ne.s32.totalorder %s189, %s192
    %p198 = scmp.eq.s32.totalorder %s13, 0
    %p199 = por %p197, %p198
    %p200 = scmp.ne.s32.totalorder %s189, %s192
    %p201 = scmp.eq.s32.totalorder %s18, 7
    %p202 = por %p200, %p201
    %p203 = scmp.ne.s32.totalorder %s192, %s193
    %p204 = scmp.eq.s32.totalorder %s18, 0
    %p205 = por %p203, %p204
    %p206 = scmp.ne.s32.totalorder %s192, %s193
    %p207 = scmp.eq.s32.totalorder %s19, 7
    %p208 = por %p206, %p207
    %p210 = scmp.ne.s32.totalorder %s193, %s209
    %p211 = scmp.eq.s32.totalorder %s19, 0
    %p212 = por %p210, %p211
    %p213 = scmp.le.s32.totalorder 1, %s13
    %p214 = scmp.lt.s32.totalorder %s13, 9
    %p215 = pnand %p213, %p214
    %p216 = pneg %p215
    // Predicated region
    $region9: #{_lambda_.8} parent=5 // pred_check
      _
    $region10: #{_lambda_.8} parent=5 // pred_check_branch
      %218 = sbr.rel (%p215) target = $region12
    $region11: #{_lambda_.8} parent=5 // pred_region
      %s219 = ssub.s32 %s13, 1
      // Predicated region
      $region13: #{_lambda_.8} parent=11 // pred_check
        %p220 = pneg %p74
      $region14: #{_lambda_.8} parent=11 // pred_check_branch
        %222 = sbr.rel (%p220) target = $region16
      $region15: #{_lambda_.8} parent=11 // pred_region
        _
      $region16: #{_lambda_.8} parent=11 // pred_fallthru
        _
      // Predicated region
      $region17: #{_lambda_.8} parent=11 // pred_check
        %p223 = pneg %p95
      $region18: #{_lambda_.8} parent=11 // pred_check_branch
        %225 = sbr.rel (%p223) target = $region20
      $region19: #{_lambda_.8} parent=11 // pred_region
        _
      $region20: #{_lambda_.8} parent=11 // pred_fallthru
        _
      // Predicated region
      $region21: #{_lambda_.8} parent=11 // pred_check
        %p226 = pneg %p116
      $region22: #{_lambda_.8} parent=11 // pred_check_branch
        %228 = sbr.rel (%p226) target = $region24
      $region23: #{_lambda_.8} parent=11 // pred_region
        _
      $region24: #{_lambda_.8} parent=11 // pred_fallthru
        _
      // Predicated region
      $region25: #{_lambda_.8} parent=11 // pred_check
        %p229 = pneg %p137
      $region26: #{_lambda_.8} parent=11 // pred_check_branch
        %231 = sbr.rel (%p229) target = $region28
      $region27: #{_lambda_.8} parent=11 // pred_region
        _
      $region28: #{_lambda_.8} parent=11 // pred_fallthru
        _
      // Predicated region
      $region29: #{_lambda_.8} parent=11 // pred_check
        %p232 = pneg %p158
      $region30: #{_lambda_.8} parent=11 // pred_check_branch
        %234 = sbr.rel (%p232) target = $region32
      $region31: #{_lambda_.8} parent=11 // pred_region
        _
      $region32: #{_lambda_.8} parent=11 // pred_fallthru
        _
      // Predicated region
      $region33: #{_lambda_.8} parent=11 // pred_check
        %p235 = pneg %p179
      $region34: #{_lambda_.8} parent=11 // pred_check_branch
        %237 = sbr.rel (%p235) target = $region36
      $region35: #{_lambda_.8} parent=11 // pred_region
        _
      $region36: #{_lambda_.8} parent=11 // pred_fallthru
        _
    $region12: #{_lambda_.8} parent=5 // pred_fallthru
      _
    %p238 = scmp.lt.s32.totalorder %s13, 8
    // Predicated region
    $region37: #{_lambda_.8} parent=5 // pred_check
      %p239 = pneg %p238
    $region38: #{_lambda_.8} parent=5 // pred_check_branch
      %241 = sbr.rel (%p239) target = $region40
    $region39: #{_lambda_.8} parent=5 // pred_region
      // Predicated region
      $region41: #{_lambda_.8} parent=39 // pred_check
        %p242 = pneg %p47
      $region42: #{_lambda_.8} parent=39 // pred_check_branch
        %244 = sbr.rel (%p242) target = $region44
      $region43: #{_lambda_.8} parent=39 // pred_region
        %s245 = smul.u32 8, %s20
        %p246 = scmp.lt.s32.totalorder %s21, 7
        %s247 = scalar_select %p246, %s21, 7
        %p248 = scmp.lt.s32.totalorder %s245, 7
        %s249 = scalar_select %p248, %s245, 7
        %s250 = smul.addr %s249, 5
        %s251 = smul.addr %s247, 40
        %s252 = sadd.s32 %s250, %s251
        %s253 = smul.addr %s252, 8
        %s254 = scalar_lea.vmem %s0, %s253
        %s255 = smul.u32 8, %s20
      $region44: #{_lambda_.8} parent=39 // pred_fallthru
        _
    $region40: #{_lambda_.8} parent=5 // pred_fallthru
      _
    %p256 = scmp.le.s32.totalorder 1, %s13
    %p257 = scmp.lt.s32.totalorder %s13, 9
    %p258 = pnand %p256, %p257
    %p259 = pneg %p258
    // Predicated region
    $region45: #{_lambda_.8} parent=5 // pred_check
      _
    $region46: #{_lambda_.8} parent=5 // pred_check_branch
      %261 = sbr.rel (%p258) target = $region48
    $region47: #{_lambda_.8} parent=5 // pred_region
      %s262 = ssub.s32 %s13, 1
      %s263 = smul.u32 8, %s22
      %p264 = scmp.lt.s32.totalorder %s23, 7
      %s265 = scalar_select %p264, %s23, 7
      %p266 = scmp.lt.s32.totalorder %s263, 7
      %s267 = scalar_select %p266, %s263, 7
      %s268 = smul.addr %s267, 5
      %s269 = smul.addr %s265, 40
      %s270 = sadd.s32 %s268, %s269
      %s271 = smul.addr %s270, 8
      %s272 = scalar_lea.vmem %s0, %s271
      %p273 = pneg %p53
      %p274 = pneg %p50
      %p275 = pneg %p74
      %p276 = pneg %p71
      %p277 = pneg %p95
      %p278 = pneg %p92
      %p279 = pneg %p116
      %p280 = pneg %p113
      %p281 = pneg %p137
      %p282 = pneg %p134
      %p283 = pneg %p158
      %p284 = pneg %p155
      %p285 = pneg %p179
      %p286 = pneg %p176
      %p287 = pneg %p205
      %p288 = pneg %p202
      %s289 = smul.u32 8, %s22
      %p290 = scmp.lt.s32.totalorder %s289, 7
      %s291 = scalar_select %p290, %s289, 7
      %s292 = smul.addr %s291, 4
      %s293 = smul.addr %s292, 8
      %s294 = scalar_lea.vmem %s7, %s293
      %s295 = smul.u32 8, %s22
      %p296 = scmp.lt.s32.totalorder %s23, 7
      %s297 = scalar_select %p296, %s23, 7
      %p298 = scmp.lt.s32.totalorder %s295, 7
      %s299 = scalar_select %p298, %s295, 7
      %s300 = smul.addr %s299, 5
      %s301 = smul.addr %s297, 40
      %s302 = sadd.s32 %s300, %s301
      %s303 = smul.addr %s302, 8
      %s304 = scalar_lea.vmem %s0, %s303
      %s305 = smul.u32 8, %s22
      %s306 = smul.u32 8, %s22
      %p307 = scmp.lt.s32.totalorder %s306, 7
      %s308 = scalar_select %p307, %s306, 7
      %s309 = smul.addr %s308, 4
      %s310 = smul.addr %s309, 8
      %s311 = scalar_lea.vmem %s7, %s310
      %s312 = smul.u32 8, %s22
      %v314 = vld [vmem:[%s304] sm:$0xff]
      %v315 = vld [vmem:[%s304 + $0x8] sm:$0xff]
      %v316 = vld [vmem:[%s304 + $0x10] sm:$0xff]
      %v317 = vld [vmem:[%s304 + $0x18] sm:$0xff]
      %v318 = vld [vmem:[%s304 + $0x20] sm:$0xff]
      %v319 = vld [vmem:[%s304 + $0x28] sm:$0xff]
      %v320 = vld [vmem:[%s304 + $0x30] sm:$0xff]
      %v321 = vld [vmem:[%s304 + $0x38] sm:$0xff]
      %v322 = vld [vmem:[%s304 + $0x40] sm:$0xff]
      %v323 = vld [vmem:[%s304 + $0x48] sm:$0xff]
      %v324 = vld [vmem:[%s304 + $0x50] sm:$0xff]
      %v325 = vld [vmem:[%s304 + $0x58] sm:$0xff]
      %v326 = vld [vmem:[%s304 + $0x60] sm:$0xff]
      %v327 = vld [vmem:[%s304 + $0x68] sm:$0xff]
      %v328 = vld [vmem:[%s304 + $0x70] sm:$0xff]
      %v329 = vld [vmem:[%s304 + $0x78] sm:$0xff]
      %v330 = vld [vmem:[%s304 + $0x80] sm:$0xff]
      %v331 = vld [vmem:[%s304 + $0x88] sm:$0xff]
      %v332 = vld [vmem:[%s304 + $0x90] sm:$0xff]
      %v333 = vld [vmem:[%s304 + $0x98] sm:$0xff]
      %v334 = vld [vmem:[%s304 + $0xa0] sm:$0xff]
      %v335 = vld [vmem:[%s304 + $0xa8] sm:$0xff]
      %v336 = vld [vmem:[%s304 + $0xb0] sm:$0xff]
      %v337 = vld [vmem:[%s304 + $0xb8] sm:$0xff]
      %v338 = vld [vmem:[%s304 + $0xc0] sm:$0xff]
      %v339 = vld [vmem:[%s304 + $0xc8] sm:$0xff]
      %v340 = vld [vmem:[%s304 + $0xd0] sm:$0xff]
      %v341 = vld [vmem:[%s304 + $0xd8] sm:$0xff]
      %v342 = vld [vmem:[%s304 + $0xe0] sm:$0xff]
      %v343 = vld [vmem:[%s304 + $0xe8] sm:$0xff]
      %v344 = vld [vmem:[%s304 + $0xf0] sm:$0xff]
      %v345 = vld [vmem:[%s304 + $0xf8] sm:$0xff]
      %v346 = vld [vmem:[%s304 + $0x100] sm:$0xff]
      %v347 = vld [vmem:[%s304 + $0x108] sm:$0xff]
      %v348 = vld [vmem:[%s304 + $0x110] sm:$0xff]
      %v349 = vld [vmem:[%s304 + $0x118] sm:$0xff]
      %v350 = vld [vmem:[%s304 + $0x120] sm:$0xff]
      %v351 = vld [vmem:[%s304 + $0x128] sm:$0xff]
      %v352 = vld [vmem:[%s304 + $0x130] sm:$0xff]
      %v353 = vld [vmem:[%s304 + $0x138] sm:$0xff]
      %v354 = vpack.c.bf16 %v319, %v314
      %v355 = vpack.c.bf16 %v320, %v315
      %v356 = vpack.c.bf16 %v321, %v316
      %v357 = vpack.c.bf16 %v322, %v317
      %v358 = vpack.c.bf16 %v323, %v318
      %v359 = vpack.c.bf16 %v329, %v324
      %v360 = vpack.c.bf16 %v330, %v325
      %v361 = vpack.c.bf16 %v331, %v326
      %v362 = vpack.c.bf16 %v332, %v327
      %v363 = vpack.c.bf16 %v333, %v328
      %v364 = vpack.c.bf16 %v339, %v334
      %v365 = vpack.c.bf16 %v340, %v335
      %v366 = vpack.c.bf16 %v341, %v336
      %v367 = vpack.c.bf16 %v342, %v337
      %v368 = vpack.c.bf16 %v343, %v338
      %v369 = vpack.c.bf16 %v349, %v344
      %v370 = vpack.c.bf16 %v350, %v345
      %v371 = vpack.c.bf16 %v351, %v346
      %v372 = vpack.c.bf16 %v352, %v347
      %v373 = vpack.c.bf16 %v353, %v348
      %v374 = vld [vmem:[%s1] sm:$0xff]
      %v375 = vld [vmem:[%s1 + $0x8] sm:$0xff]
      %v376 = vld [vmem:[%s1 + $0x10] sm:$0xff]
      %v377 = vld [vmem:[%s1 + $0x18] sm:$0xff]
      %v378 = vld [vmem:[%s1 + $0x20] sm:$0xff]
      %v379 = vld [vmem:[%s1 + $0x28] sm:$0xff]
      %v380 = vld [vmem:[%s1 + $0x30] sm:$0xff]
      %v381 = vld [vmem:[%s1 + $0x38] sm:$0xff]
      %v382 = vld [vmem:[%s1 + $0x40] sm:$0xff]
      %v383 = vld [vmem:[%s1 + $0x48] sm:$0xff]
      %v384 = vld [vmem:[%s1 + $0x50] sm:$0xff]
      %v385 = vld [vmem:[%s1 + $0x58] sm:$0xff]
      %v386 = vld [vmem:[%s1 + $0x60] sm:$0xff]
      %v387 = vld [vmem:[%s1 + $0x68] sm:$0xff]
      %v388 = vld [vmem:[%s1 + $0x70] sm:$0xff]
      %v389 = vld [vmem:[%s1 + $0x78] sm:$0xff]
      %v390 = vld [vmem:[%s1 + $0x80] sm:$0xff]
      %v391 = vld [vmem:[%s1 + $0x88] sm:$0xff]
      %v392 = vld [vmem:[%s1 + $0x90] sm:$0xff]
      %v393 = vld [vmem:[%s1 + $0x98] sm:$0xff]
      %v394 = vld [vmem:[%s1 + $0xa0] sm:$0xff]
      %v395 = vld [vmem:[%s1 + $0xa8] sm:$0xff]
      %v396 = vld [vmem:[%s1 + $0xb0] sm:$0xff]
      %v397 = vld [vmem:[%s1 + $0xb8] sm:$0xff]
      %v398 = vld [vmem:[%s1 + $0xc0] sm:$0xff]
      %v399 = vld [vmem:[%s1 + $0xc8] sm:$0xff]
      %v400 = vld [vmem:[%s1 + $0xd0] sm:$0xff]
      %v401 = vld [vmem:[%s1 + $0xd8] sm:$0xff]
      %v402 = vld [vmem:[%s1 + $0xe0] sm:$0xff]
      %v403 = vld [vmem:[%s1 + $0xe8] sm:$0xff]
      %v404 = vld [vmem:[%s1 + $0xf0] sm:$0xff]
      %v405 = vld [vmem:[%s1 + $0xf8] sm:$0xff]
      %v406 = vld [vmem:[%s1 + $0x100] sm:$0xff]
      %v407 = vld [vmem:[%s1 + $0x108] sm:$0xff]
      %v408 = vld [vmem:[%s1 + $0x110] sm:$0xff]
      %v409 = vld [vmem:[%s1 + $0x118] sm:$0xff]
      %v410 = vld [vmem:[%s1 + $0x120] sm:$0xff]
      %v411 = vld [vmem:[%s1 + $0x128] sm:$0xff]
      %v412 = vld [vmem:[%s1 + $0x130] sm:$0xff]
      %v413 = vld [vmem:[%s1 + $0x138] sm:$0xff]
      %v414 = vld [vmem:[%s1 + $0x140] sm:$0xff]
      %v415 = vld [vmem:[%s1 + $0x148] sm:$0xff]
      %v416 = vld [vmem:[%s1 + $0x150] sm:$0xff]
      %v417 = vld [vmem:[%s1 + $0x158] sm:$0xff]
      %v418 = vld [vmem:[%s1 + $0x160] sm:$0xff]
      %v419 = vld [vmem:[%s1 + $0x168] sm:$0xff]
      %v420 = vld [vmem:[%s1 + $0x170] sm:$0xff]
      %v421 = vld [vmem:[%s1 + $0x178] sm:$0xff]
      %v422 = vld [vmem:[%s1 + $0x180] sm:$0xff]
      %v423 = vld [vmem:[%s1 + $0x188] sm:$0xff]
      %v424 = vld [vmem:[%s1 + $0x190] sm:$0xff]
      %v425 = vld [vmem:[%s1 + $0x198] sm:$0xff]
      %v426 = vld [vmem:[%s1 + $0x1a0] sm:$0xff]
      %v427 = vld [vmem:[%s1 + $0x1a8] sm:$0xff]
      %v428 = vld [vmem:[%s1 + $0x1b0] sm:$0xff]
      %v429 = vld [vmem:[%s1 + $0x1b8] sm:$0xff]
      %v430 = vld [vmem:[%s1 + $0x1c0] sm:$0xff]
      %v431 = vld [vmem:[%s1 + $0x1c8] sm:$0xff]
      %v432 = vld [vmem:[%s1 + $0x1d0] sm:$0xff]
      %v433 = vld [vmem:[%s1 + $0x1d8] sm:$0xff]
      %v434 = vld [vmem:[%s1 + $0x1e0] sm:$0xff]
      %v435 = vld [vmem:[%s1 + $0x1e8] sm:$0xff]
      %v436 = vld [vmem:[%s1 + $0x1f0] sm:$0xff]
      %v437 = vld [vmem:[%s1 + $0x1f8] sm:$0xff]
      %v438 = vld [vmem:[%s1 + $0x200] sm:$0xff]
      %v439 = vld [vmem:[%s1 + $0x208] sm:$0xff]
      %v440 = vld [vmem:[%s1 + $0x210] sm:$0xff]
      %v441 = vld [vmem:[%s1 + $0x218] sm:$0xff]
      %v442 = vld [vmem:[%s1 + $0x220] sm:$0xff]
      %v443 = vld [vmem:[%s1 + $0x228] sm:$0xff]
      %v444 = vld [vmem:[%s1 + $0x230] sm:$0xff]
      %v445 = vld [vmem:[%s1 + $0x238] sm:$0xff]
      %v446 = vld [vmem:[%s1 + $0x240] sm:$0xff]
      %v447 = vld [vmem:[%s1 + $0x248] sm:$0xff]
      %v448 = vld [vmem:[%s1 + $0x250] sm:$0xff]
      %v449 = vld [vmem:[%s1 + $0x258] sm:$0xff]
      %v450 = vld [vmem:[%s1 + $0x260] sm:$0xff]
      %v451 = vld [vmem:[%s1 + $0x268] sm:$0xff]
      %v452 = vld [vmem:[%s1 + $0x270] sm:$0xff]
      %v453 = vld [vmem:[%s1 + $0x278] sm:$0xff]
      %v454 = vld [vmem:[%s1 + $0x280] sm:$0xff]
      %v455 = vld [vmem:[%s1 + $0x288] sm:$0xff]
      %v456 = vld [vmem:[%s1 + $0x290] sm:$0xff]
      %v457 = vld [vmem:[%s1 + $0x298] sm:$0xff]
      %v458 = vld [vmem:[%s1 + $0x2a0] sm:$0xff]
      %v459 = vld [vmem:[%s1 + $0x2a8] sm:$0xff]
      %v460 = vld [vmem:[%s1 + $0x2b0] sm:$0xff]
      %v461 = vld [vmem:[%s1 + $0x2b8] sm:$0xff]
      %v462 = vld [vmem:[%s1 + $0x2c0] sm:$0xff]
      %v463 = vld [vmem:[%s1 + $0x2c8] sm:$0xff]
      %v464 = vld [vmem:[%s1 + $0x2d0] sm:$0xff]
      %v465 = vld [vmem:[%s1 + $0x2d8] sm:$0xff]
      %v466 = vld [vmem:[%s1 + $0x2e0] sm:$0xff]
      %v467 = vld [vmem:[%s1 + $0x2e8] sm:$0xff]
      %v468 = vld [vmem:[%s1 + $0x2f0] sm:$0xff]
      %v469 = vld [vmem:[%s1 + $0x2f8] sm:$0xff]
      %v470 = vld [vmem:[%s1 + $0x300] sm:$0xff]
      %v471 = vld [vmem:[%s1 + $0x308] sm:$0xff]
      %v472 = vld [vmem:[%s1 + $0x310] sm:$0xff]
      %v473 = vld [vmem:[%s1 + $0x318] sm:$0xff]
      %v474 = vld [vmem:[%s1 + $0x320] sm:$0xff]
      %v475 = vld [vmem:[%s1 + $0x328] sm:$0xff]
      %v476 = vld [vmem:[%s1 + $0x330] sm:$0xff]
      %v477 = vld [vmem:[%s1 + $0x338] sm:$0xff]
      %v478 = vld [vmem:[%s1 + $0x340] sm:$0xff]
      %v479 = vld [vmem:[%s1 + $0x348] sm:$0xff]
      %v480 = vld [vmem:[%s1 + $0x350] sm:$0xff]
      %v481 = vld [vmem:[%s1 + $0x358] sm:$0xff]
      %v482 = vld [vmem:[%s1 + $0x360] sm:$0xff]
      %v483 = vld [vmem:[%s1 + $0x368] sm:$0xff]
      %v484 = vld [vmem:[%s1 + $0x370] sm:$0xff]
      %v485 = vld [vmem:[%s1 + $0x378] sm:$0xff]
      %v486 = vld [vmem:[%s1 + $0x380] sm:$0xff]
      %v487 = vld [vmem:[%s1 + $0x388] sm:$0xff]
      %v488 = vld [vmem:[%s1 + $0x390] sm:$0xff]
      %v489 = vld [vmem:[%s1 + $0x398] sm:$0xff]
      %v490 = vld [vmem:[%s1 + $0x3a0] sm:$0xff]
      %v491 = vld [vmem:[%s1 + $0x3a8] sm:$0xff]
      %v492 = vld [vmem:[%s1 + $0x3b0] sm:$0xff]
      %v493 = vld [vmem:[%s1 + $0x3b8] sm:$0xff]
      %v494 = vld [vmem:[%s1 + $0x3c0] sm:$0xff]
      %v495 = vld [vmem:[%s1 + $0x3c8] sm:$0xff]
      %v496 = vld [vmem:[%s1 + $0x3d0] sm:$0xff]
      %v497 = vld [vmem:[%s1 + $0x3d8] sm:$0xff]
      %v498 = vld [vmem:[%s1 + $0x3e0] sm:$0xff]
      %v499 = vld [vmem:[%s1 + $0x3e8] sm:$0xff]
      %v500 = vld [vmem:[%s1 + $0x3f0] sm:$0xff]
      %v501 = vld [vmem:[%s1 + $0x3f8] sm:$0xff]
      %v502 = vld [vmem:[%s1 + $0x400] sm:$0x33]
      %v503 = vld [vmem:[%s1 + $0x408] sm:$0x33]
      %v504 = vld [vmem:[%s2] sm:$0xf]
      %v506 = vlaneseq
      %v507 = vshrl.u32 %v506, 7
      %v508 = vsub.s32 0, %v507
      %v509 = vrot.slane %v504, %v508
      %v510 = vlaneseq
      %v511 = vshrl.u32 %v510, 7
      %v512 = vsub.s32 1, %v511
      %v513 = vrot.slane %v504, %v512
      %v514 = vlaneseq
      %v515 = vshrl.u32 %v514, 7
      %v516 = vsub.s32 2, %v515
      %v517 = vrot.slane %v504, %v516
      %v518 = vlaneseq
      %v519 = vshrl.u32 %v518, 7
      %v520 = vsub.s32 3, %v519
      %v521 = vrot.slane %v504, %v520
      %v656 = vunpack.c.l.b16 %v374
      %v657 = vunpack.c.h.b16 %v374
      %v658 = vunpack.c.l.b16 %v375
      %v659 = vunpack.c.h.b16 %v375
      %v660 = vunpack.c.l.b16 %v376
      %v661 = vunpack.c.h.b16 %v376
      %v662 = vunpack.c.l.b16 %v377
      %v663 = vunpack.c.h.b16 %v377
      %v664 = vunpack.c.l.b16 %v378
      %v665 = vunpack.c.h.b16 %v378
      %v666 = vunpack.c.l.b16 %v379
      %v667 = vunpack.c.h.b16 %v379
      %v668 = vunpack.c.l.b16 %v380
      %v669 = vunpack.c.h.b16 %v380
      %v670 = vunpack.c.l.b16 %v381
      %v671 = vunpack.c.h.b16 %v381
      %v672 = vunpack.c.l.b16 %v382
      %v673 = vunpack.c.h.b16 %v382
      %v674 = vunpack.c.l.b16 %v383
      %v675 = vunpack.c.h.b16 %v383
      %v676 = vunpack.c.l.b16 %v384
      %v677 = vunpack.c.h.b16 %v384
      %v678 = vunpack.c.l.b16 %v385
      %v679 = vunpack.c.h.b16 %v385
      %v680 = vunpack.c.l.b16 %v386
      %v681 = vunpack.c.h.b16 %v386
      %v682 = vunpack.c.l.b16 %v387
      %v683 = vunpack.c.h.b16 %v387
      %v684 = vunpack.c.l.b16 %v388
      %v685 = vunpack.c.h.b16 %v388
      %v686 = vunpack.c.l.b16 %v389
      %v687 = vunpack.c.h.b16 %v389
      %v688 = vunpack.c.l.b16 %v390
      %v689 = vunpack.c.h.b16 %v390
      %v690 = vunpack.c.l.b16 %v391
      %v691 = vunpack.c.h.b16 %v391
      %v692 = vunpack.c.l.b16 %v392
      %v693 = vunpack.c.h.b16 %v392
      %v694 = vunpack.c.l.b16 %v393
      %v695 = vunpack.c.h.b16 %v393
      %v696 = vunpack.c.l.b16 %v394
      %v697 = vunpack.c.h.b16 %v394
      %v698 = vunpack.c.l.b16 %v395
      %v699 = vunpack.c.h.b16 %v395
      %v700 = vunpack.c.l.b16 %v396
      %v701 = vunpack.c.h.b16 %v396
      %v702 = vunpack.c.l.b16 %v397
      %v703 = vunpack.c.h.b16 %v397
      %v704 = vunpack.c.l.b16 %v398
      %v705 = vunpack.c.h.b16 %v398
      %v706 = vunpack.c.l.b16 %v399
      %v707 = vunpack.c.h.b16 %v399
      %v708 = vunpack.c.l.b16 %v400
      %v709 = vunpack.c.h.b16 %v400
      %v710 = vunpack.c.l.b16 %v401
      %v711 = vunpack.c.h.b16 %v401
      %v712 = vunpack.c.l.b16 %v402
      %v713 = vunpack.c.h.b16 %v402
      %v714 = vunpack.c.l.b16 %v403
      %v715 = vunpack.c.h.b16 %v403
      %v716 = vunpack.c.l.b16 %v404
      %v717 = vunpack.c.h.b16 %v404
      %v718 = vunpack.c.l.b16 %v405
      %v719 = vunpack.c.h.b16 %v405
      %v720 = vunpack.c.l.b16 %v406
      %v721 = vunpack.c.h.b16 %v406
      %v722 = vunpack.c.l.b16 %v407
      %v723 = vunpack.c.h.b16 %v407
      %v724 = vunpack.c.l.b16 %v408
      %v725 = vunpack.c.h.b16 %v408
      %v726 = vunpack.c.l.b16 %v409
      %v727 = vunpack.c.h.b16 %v409
      %v728 = vunpack.c.l.b16 %v410
      %v729 = vunpack.c.h.b16 %v410
      %v730 = vunpack.c.l.b16 %v411
      %v731 = vunpack.c.h.b16 %v411
      %v732 = vunpack.c.l.b16 %v412
      %v733 = vunpack.c.h.b16 %v412
      %v734 = vunpack.c.l.b16 %v413
      %v735 = vunpack.c.h.b16 %v413
      %v736 = vunpack.c.l.b16 %v414
      %v737 = vunpack.c.h.b16 %v414
      %v738 = vunpack.c.l.b16 %v415
      %v739 = vunpack.c.h.b16 %v415
      %v740 = vunpack.c.l.b16 %v416
      %v741 = vunpack.c.h.b16 %v416
      %v742 = vunpack.c.l.b16 %v417
      %v743 = vunpack.c.h.b16 %v417
      %v744 = vunpack.c.l.b16 %v418
      %v745 = vunpack.c.h.b16 %v418
      %v746 = vunpack.c.l.b16 %v419
      %v747 = vunpack.c.h.b16 %v419
      %v748 = vunpack.c.l.b16 %v420
      %v749 = vunpack.c.h.b16 %v420
      %v750 = vunpack.c.l.b16 %v421
      %v751 = vunpack.c.h.b16 %v421
      %v752 = vunpack.c.l.b16 %v422
      %v753 = vunpack.c.h.b16 %v422
      %v754 = vunpack.c.l.b16 %v423
      %v755 = vunpack.c.h.b16 %v423
      %v756 = vunpack.c.l.b16 %v424
      %v757 = vunpack.c.h.b16 %v424
      %v758 = vunpack.c.l.b16 %v425
      %v759 = vunpack.c.h.b16 %v425
      %v760 = vunpack.c.l.b16 %v426
      %v761 = vunpack.c.h.b16 %v426
      %v762 = vunpack.c.l.b16 %v427
      %v763 = vunpack.c.h.b16 %v427
      %v764 = vunpack.c.l.b16 %v428
      %v765 = vunpack.c.h.b16 %v428
      %v766 = vunpack.c.l.b16 %v429
      %v767 = vunpack.c.h.b16 %v429
      %v768 = vunpack.c.l.b16 %v430
      %v769 = vunpack.c.h.b16 %v430
      %v770 = vunpack.c.l.b16 %v431
      %v771 = vunpack.c.h.b16 %v431
      %v772 = vunpack.c.l.b16 %v432
      %v773 = vunpack.c.h.b16 %v432
      %v774 = vunpack.c.l.b16 %v433
      %v775 = vunpack.c.h.b16 %v433
      %v776 = vunpack.c.l.b16 %v434
      %v777 = vunpack.c.h.b16 %v434
      %v778 = vunpack.c.l.b16 %v435
      %v779 = vunpack.c.h.b16 %v435
      %v780 = vunpack.c.l.b16 %v436
      %v781 = vunpack.c.h.b16 %v436
      %v782 = vunpack.c.l.b16 %v437
      %v783 = vunpack.c.h.b16 %v437
      %v784 = vunpack.c.l.b16 %v438
      %v785 = vunpack.c.h.b16 %v438
      %v786 = vunpack.c.l.b16 %v439
      %v787 = vunpack.c.h.b16 %v439
      %v788 = vunpack.c.l.b16 %v440
      %v789 = vunpack.c.h.b16 %v440
      %v790 = vunpack.c.l.b16 %v441
      %v791 = vunpack.c.h.b16 %v441
      %v792 = vunpack.c.l.b16 %v442
      %v793 = vunpack.c.h.b16 %v442
      %v794 = vunpack.c.l.b16 %v443
      %v795 = vunpack.c.h.b16 %v443
      %v796 = vunpack.c.l.b16 %v444
      %v797 = vunpack.c.h.b16 %v444
      %v798 = vunpack.c.l.b16 %v445
      %v799 = vunpack.c.h.b16 %v445
      %v800 = vunpack.c.l.b16 %v446
      %v801 = vunpack.c.h.b16 %v446
      %v802 = vunpack.c.l.b16 %v447
      %v803 = vunpack.c.h.b16 %v447
      %v804 = vunpack.c.l.b16 %v448
      %v805 = vunpack.c.h.b16 %v448
      %v806 = vunpack.c.l.b16 %v449
      %v807 = vunpack.c.h.b16 %v449
      %v808 = vunpack.c.l.b16 %v450
      %v809 = vunpack.c.h.b16 %v450
      %v810 = vunpack.c.l.b16 %v451
      %v811 = vunpack.c.h.b16 %v451
      %v812 = vunpack.c.l.b16 %v452
      %v813 = vunpack.c.h.b16 %v452
      %v814 = vunpack.c.l.b16 %v453
      %v815 = vunpack.c.h.b16 %v453
      %v816 = vunpack.c.l.b16 %v454
      %v817 = vunpack.c.h.b16 %v454
      %v818 = vunpack.c.l.b16 %v455
      %v819 = vunpack.c.h.b16 %v455
      %v820 = vunpack.c.l.b16 %v456
      %v821 = vunpack.c.h.b16 %v456
      %v822 = vunpack.c.l.b16 %v457
      %v823 = vunpack.c.h.b16 %v457
      %v824 = vunpack.c.l.b16 %v458
      %v825 = vunpack.c.h.b16 %v458
      %v826 = vunpack.c.l.b16 %v459
      %v827 = vunpack.c.h.b16 %v459
      %v828 = vunpack.c.l.b16 %v460
      %v829 = vunpack.c.h.b16 %v460
      %v830 = vunpack.c.l.b16 %v461
      %v831 = vunpack.c.h.b16 %v461
      %v832 = vunpack.c.l.b16 %v462
      %v833 = vunpack.c.h.b16 %v462
      %v834 = vunpack.c.l.b16 %v463
      %v835 = vunpack.c.h.b16 %v463
      %v836 = vunpack.c.l.b16 %v464
      %v837 = vunpack.c.h.b16 %v464
      %v838 = vunpack.c.l.b16 %v465
      %v839 = vunpack.c.h.b16 %v465
      %v840 = vunpack.c.l.b16 %v466
      %v841 = vunpack.c.h.b16 %v466
      %v842 = vunpack.c.l.b16 %v467
      %v843 = vunpack.c.h.b16 %v467
      %v844 = vunpack.c.l.b16 %v468
      %v845 = vunpack.c.h.b16 %v468
      %v846 = vunpack.c.l.b16 %v469
      %v847 = vunpack.c.h.b16 %v469
      %v848 = vunpack.c.l.b16 %v470
      %v849 = vunpack.c.h.b16 %v470
      %v850 = vunpack.c.l.b16 %v471
      %v851 = vunpack.c.h.b16 %v471
      %v852 = vunpack.c.l.b16 %v472
      %v853 = vunpack.c.h.b16 %v472
      %v854 = vunpack.c.l.b16 %v473
      %v855 = vunpack.c.h.b16 %v473
      %v856 = vunpack.c.l.b16 %v474
      %v857 = vunpack.c.h.b16 %v474
      %v858 = vunpack.c.l.b16 %v475
      %v859 = vunpack.c.h.b16 %v475
      %v860 = vunpack.c.l.b16 %v476
      %v861 = vunpack.c.h.b16 %v476
      %v862 = vunpack.c.l.b16 %v477
      %v863 = vunpack.c.h.b16 %v477
      %v864 = vunpack.c.l.b16 %v478
      %v865 = vunpack.c.h.b16 %v478
      %v866 = vunpack.c.l.b16 %v479
      %v867 = vunpack.c.h.b16 %v479
      %v868 = vunpack.c.l.b16 %v480
      %v869 = vunpack.c.h.b16 %v480
      %v870 = vunpack.c.l.b16 %v481
      %v871 = vunpack.c.h.b16 %v481
      %v872 = vunpack.c.l.b16 %v482
      %v873 = vunpack.c.h.b16 %v482
      %v874 = vunpack.c.l.b16 %v483
      %v875 = vunpack.c.h.b16 %v483
      %v876 = vunpack.c.l.b16 %v484
      %v877 = vunpack.c.h.b16 %v484
      %v878 = vunpack.c.l.b16 %v485
      %v879 = vunpack.c.h.b16 %v485
      %v880 = vunpack.c.l.b16 %v486
      %v881 = vunpack.c.h.b16 %v486
      %v882 = vunpack.c.l.b16 %v487
      %v883 = vunpack.c.h.b16 %v487
      %v884 = vunpack.c.l.b16 %v488
      %v885 = vunpack.c.h.b16 %v488
      %v886 = vunpack.c.l.b16 %v489
      %v887 = vunpack.c.h.b16 %v489
      %v888 = vunpack.c.l.b16 %v490
      %v889 = vunpack.c.h.b16 %v490
      %v890 = vunpack.c.l.b16 %v491
      %v891 = vunpack.c.h.b16 %v491
      %v892 = vunpack.c.l.b16 %v492
      %v893 = vunpack.c.h.b16 %v492
      %v894 = vunpack.c.l.b16 %v493
      %v895 = vunpack.c.h.b16 %v493
      %v896 = vunpack.c.l.b16 %v494
      %v897 = vunpack.c.h.b16 %v494
      %v898 = vunpack.c.l.b16 %v495
      %v899 = vunpack.c.h.b16 %v495
      %v900 = vunpack.c.l.b16 %v496
      %v901 = vunpack.c.h.b16 %v496
      %v902 = vunpack.c.l.b16 %v497
      %v903 = vunpack.c.h.b16 %v497
      %v904 = vunpack.c.l.b16 %v498
      %v905 = vunpack.c.h.b16 %v498
      %v906 = vunpack.c.l.b16 %v499
      %v907 = vunpack.c.h.b16 %v499
      %v908 = vunpack.c.l.b16 %v500
      %v909 = vunpack.c.h.b16 %v500
      %v910 = vunpack.c.l.b16 %v501
      %v911 = vunpack.c.h.b16 %v501
      %v912 = vunpack.c.l.b16 %v502
      %v913 = vunpack.c.h.b16 %v502
      %v914 = vunpack.c.l.b16 %v503
      %v915 = vunpack.c.h.b16 %v503
      %v916 = vpack.c.b16 %v660, %v656
      %v917 = vpack.c.b16 %v661, %v657
      %v918 = vpack.c.b16 %v662, %v658
      %v919 = vpack.c.b16 %v663, %v659
      %v920 = vpack.c.b16 %v668, %v664
      %v921 = vpack.c.b16 %v669, %v665
      %v922 = vpack.c.b16 %v670, %v666
      %v923 = vpack.c.b16 %v671, %v667
      %v924 = vpack.c.b16 %v676, %v672
      %v925 = vpack.c.b16 %v677, %v673
      %v926 = vpack.c.b16 %v678, %v674
      %v927 = vpack.c.b16 %v679, %v675
      %v928 = vpack.c.b16 %v684, %v680
      %v929 = vpack.c.b16 %v685, %v681
      %v930 = vpack.c.b16 %v686, %v682
      %v931 = vpack.c.b16 %v687, %v683
      %v932 = vpack.c.b16 %v692, %v688
      %v933 = vpack.c.b16 %v693, %v689
      %v934 = vpack.c.b16 %v694, %v690
      %v935 = vpack.c.b16 %v695, %v691
      %v936 = vpack.c.b16 %v700, %v696
      %v937 = vpack.c.b16 %v701, %v697
      %v938 = vpack.c.b16 %v702, %v698
      %v939 = vpack.c.b16 %v703, %v699
      %v940 = vpack.c.b16 %v708, %v704
      %v941 = vpack.c.b16 %v709, %v705
      %v942 = vpack.c.b16 %v710, %v706
      %v943 = vpack.c.b16 %v711, %v707
      %v944 = vpack.c.b16 %v716, %v712
      %v945 = vpack.c.b16 %v717, %v713
      %v946 = vpack.c.b16 %v718, %v714
      %v947 = vpack.c.b16 %v719, %v715
      %v948 = vpack.c.b16 %v724, %v720
      %v949 = vpack.c.b16 %v725, %v721
      %v950 = vpack.c.b16 %v726, %v722
      %v951 = vpack.c.b16 %v727, %v723
      %v952 = vpack.c.b16 %v732, %v728
      %v953 = vpack.c.b16 %v733, %v729
      %v954 = vpack.c.b16 %v734, %v730
      %v955 = vpack.c.b16 %v735, %v731
      %v956 = vpack.c.b16 %v740, %v736
      %v957 = vpack.c.b16 %v741, %v737
      %v958 = vpack.c.b16 %v742, %v738
      %v959 = vpack.c.b16 %v743, %v739
      %v960 = vpack.c.b16 %v748, %v744
      %v961 = vpack.c.b16 %v749, %v745
      %v962 = vpack.c.b16 %v750, %v746
      %v963 = vpack.c.b16 %v751, %v747
      %v964 = vpack.c.b16 %v756, %v752
      %v965 = vpack.c.b16 %v757, %v753
      %v966 = vpack.c.b16 %v758, %v754
      %v967 = vpack.c.b16 %v759, %v755
      %v968 = vpack.c.b16 %v764, %v760
      %v969 = vpack.c.b16 %v765, %v761
      %v970 = vpack.c.b16 %v766, %v762
      %v971 = vpack.c.b16 %v767, %v763
      %v972 = vpack.c.b16 %v772, %v768
      %v973 = vpack.c.b16 %v773, %v769
      %v974 = vpack.c.b16 %v774, %v770
      %v975 = vpack.c.b16 %v775, %v771
      %v976 = vpack.c.b16 %v780, %v776
      %v977 = vpack.c.b16 %v781, %v777
      %v978 = vpack.c.b16 %v782, %v778
      %v979 = vpack.c.b16 %v783, %v779
      %v980 = vpack.c.b16 %v788, %v784
      %v981 = vpack.c.b16 %v789, %v785
      %v982 = vpack.c.b16 %v790, %v786
      %v983 = vpack.c.b16 %v791, %v787
      %v984 = vpack.c.b16 %v796, %v792
      %v985 = vpack.c.b16 %v797, %v793
      %v986 = vpack.c.b16 %v798, %v794
      %v987 = vpack.c.b16 %v799, %v795
      %v988 = vpack.c.b16 %v804, %v800
      %v989 = vpack.c.b16 %v805, %v801
      %v990 = vpack.c.b16 %v806, %v802
      %v991 = vpack.c.b16 %v807, %v803
      %v992 = vpack.c.b16 %v812, %v808
      %v993 = vpack.c.b16 %v813, %v809
      %v994 = vpack.c.b16 %v814, %v810
      %v995 = vpack.c.b16 %v815, %v811
      %v996 = vpack.c.b16 %v820, %v816
      %v997 = vpack.c.b16 %v821, %v817
      %v998 = vpack.c.b16 %v822, %v818
      %v999 = vpack.c.b16 %v823, %v819
      %v1000 = vpack.c.b16 %v828, %v824
      %v1001 = vpack.c.b16 %v829, %v825
      %v1002 = vpack.c.b16 %v830, %v826
      %v1003 = vpack.c.b16 %v831, %v827
      %v1004 = vpack.c.b16 %v836, %v832
      %v1005 = vpack.c.b16 %v837, %v833
      %v1006 = vpack.c.b16 %v838, %v834
      %v1007 = vpack.c.b16 %v839, %v835
      %v1008 = vpack.c.b16 %v844, %v840
      %v1009 = vpack.c.b16 %v845, %v841
      %v1010 = vpack.c.b16 %v846, %v842
      %v1011 = vpack.c.b16 %v847, %v843
      %v1012 = vpack.c.b16 %v852, %v848
      %v1013 = vpack.c.b16 %v853, %v849
      %v1014 = vpack.c.b16 %v854, %v850
      %v1015 = vpack.c.b16 %v855, %v851
      %v1016 = vpack.c.b16 %v860, %v856
      %v1017 = vpack.c.b16 %v861, %v857
      %v1018 = vpack.c.b16 %v862, %v858
      %v1019 = vpack.c.b16 %v863, %v859
      %v1020 = vpack.c.b16 %v868, %v864
      %v1021 = vpack.c.b16 %v869, %v865
      %v1022 = vpack.c.b16 %v870, %v866
      %v1023 = vpack.c.b16 %v871, %v867
      %v1024 = vpack.c.b16 %v876, %v872
      %v1025 = vpack.c.b16 %v877, %v873
      %v1026 = vpack.c.b16 %v878, %v874
      %v1027 = vpack.c.b16 %v879, %v875
      %v1028 = vpack.c.b16 %v884, %v880
      %v1029 = vpack.c.b16 %v885, %v881
      %v1030 = vpack.c.b16 %v886, %v882
      %v1031 = vpack.c.b16 %v887, %v883
      %v1032 = vpack.c.b16 %v892, %v888
      %v1033 = vpack.c.b16 %v893, %v889
      %v1034 = vpack.c.b16 %v894, %v890
      %v1035 = vpack.c.b16 %v895, %v891
      %v1036 = vpack.c.b16 %v900, %v896
      %v1037 = vpack.c.b16 %v901, %v897
      %v1038 = vpack.c.b16 %v902, %v898
      %v1039 = vpack.c.b16 %v903, %v899
      %v1040 = vpack.c.b16 %v908, %v904
      %v1041 = vpack.c.b16 %v909, %v905
      %v1042 = vpack.c.b16 %v910, %v906
      %v1043 = vpack.c.b16 %v911, %v907
      %v1044 = vpack.c.b16 %v912, %v912
      %v1045 = vpack.c.b16 %v913, %v913
      %v1046 = vpack.c.b16 %v914, %v914
      %v1047 = vpack.c.b16 %v915, %v915
      %vm1176 = vcmask 31744
      %v1178 = vsel %vm1176, %v358, 0
      %v1181 = vsel %vm1176, %v363, 0
      %v1184 = vsel %vm1176, %v368, 0
      %v1187 = vsel %vm1176, %v373, 0
      %vm1189 = vcmask 1041408
      %v1191 = vsel %vm1189, %v1044, 0
      %v1194 = vsel %vm1189, %v1045, 0
      %v1197 = vsel %vm1189, %v1046, 0
      %v1200 = vsel %vm1189, %v1047, 0
      %1202 = vmatprep.subr.bf16.mxu0 %v945
      %1203 = vmatpush1.bf16.msra.mxu0 %v944
      %1204 = vmatprep.subr.bf16.mxu0 %v941
      %1205 = vmatpush1.bf16.msra.mxu0 %v940
      %1206 = vmatprep.subr.bf16.mxu0 %v937
      %1207 = vmatpush1.bf16.msra.mxu0 %v936
      %1208 = vmatprep.subr.bf16.mxu0 %v933
      %1209 = vmatpush1.bf16.msra.mxu0 %v932
      %1210 = vmatprep.subr.bf16.mxu0 %v929
      %1211 = vmatpush1.bf16.msra.mxu0 %v928
      %1212 = vmatprep.subr.bf16.mxu0 %v925
      %1213 = vmatpush1.bf16.msra.mxu0 %v924
      %1214 = vmatprep.subr.bf16.mxu0 %v921
      %1215 = vmatpush1.bf16.msra.mxu0 %v920
      %1216 = vmatprep.subr.bf16.mxu0 %v917
      %1217 = vmatpush1.bf16.msra.mxu0 %v916
      %1218 = vmatprep.subr.bf16.mxu0 %v977
      %1219 = vmatpush2.bf16.msra.mxu0 %v976
      %1220 = vmatprep.subr.bf16.mxu0 %v973
      %1221 = vmatpush2.bf16.msra.mxu0 %v972
      %1222 = vmatprep.subr.bf16.mxu0 %v969
      %1223 = vmatpush2.bf16.msra.mxu0 %v968
      %1224 = vmatprep.subr.bf16.mxu0 %v965
      %1225 = vmatpush2.bf16.msra.mxu0 %v964
      %1226 = vmatprep.subr.bf16.mxu0 %v961
      %1227 = vmatpush2.bf16.msra.mxu0 %v960
      %1228 = vmatprep.subr.bf16.mxu0 %v957
      %1229 = vmatpush2.bf16.msra.mxu0 %v956
      %1230 = vmatprep.subr.bf16.mxu0 %v953
      %1231 = vmatpush2.bf16.msra.mxu0 %v952
      %1232 = vmatprep.subr.bf16.mxu0 %v949
      %1233 = vmatpush2.bf16.msra.mxu0 %v948
      %1234 = vmatprep.mubr.bf16.mxu0 %v355
      %1235 = vmatmul.mubr.bf16.gmra.mxu0 %v354
      %v1236 = vpop.f32.mrf.mxu0
      %v1237 = vadd.f32 %v509, %v1236
      %v1238 = vpop.f32.mrf.mxu0
      %v1239 = vadd.f32 %v513, %v1238
      %v1240 = vpop.f32.mrf.mxu0
      %v1241 = vadd.f32 %v509, %v1240
      %v1242 = vpop.f32.mrf.mxu0
      %v1243 = vadd.f32 %v513, %v1242
      %1244 = vmatprep.mubr.bf16.mxu0 %v360
      %1245 = vmatmul.mubr.bf16.gmra.mxu0 %v359
      %v1246 = vpop.f32.mrf.mxu0
      %v1247 = vadd.f32 %v509, %v1246
      %v1248 = vpop.f32.mrf.mxu0
      %v1249 = vadd.f32 %v513, %v1248
      %v1250 = vpop.f32.mrf.mxu0
      %v1251 = vadd.f32 %v509, %v1250
      %v1252 = vpop.f32.mrf.mxu0
      %v1253 = vadd.f32 %v513, %v1252
      %1254 = vmatprep.mubr.bf16.mxu0 %v365
      %1255 = vmatmul.mubr.bf16.gmra.mxu0 %v364
      %v1256 = vpop.f32.mrf.mxu0
      %v1257 = vadd.f32 %v509, %v1256
      %v1258 = vpop.f32.mrf.mxu0
      %v1259 = vadd.f32 %v513, %v1258
      %v1260 = vpop.f32.mrf.mxu0
      %v1261 = vadd.f32 %v509, %v1260
      %v1262 = vpop.f32.mrf.mxu0
      %v1263 = vadd.f32 %v513, %v1262
      %1264 = vmatprep.mubr.bf16.mxu0 %v370
      %1265 = vmatmul.mubr.bf16.gmra.mxu0 %v369
      %v1266 = vpop.f32.mrf.mxu0
      %v1267 = vadd.f32 %v509, %v1266
      %v1268 = vpop.f32.mrf.mxu0
      %v1269 = vadd.f32 %v513, %v1268
      %v1270 = vpop.f32.mrf.mxu0
      %v1271 = vadd.f32 %v509, %v1270
      %v1272 = vpop.f32.mrf.mxu0
      %v1273 = vadd.f32 %v513, %v1272
      %1274 = vdwg.mxu0
      %1275 = vmatprep.subr.bf16.mxu0 %v1009
      %1276 = vmatpush1.bf16.msra.mxu0 %v1008
      %1277 = vmatprep.subr.bf16.mxu0 %v1005
      %1278 = vmatpush1.bf16.msra.mxu0 %v1004
      %1279 = vmatprep.subr.bf16.mxu0 %v1001
      %1280 = vmatpush1.bf16.msra.mxu0 %v1000
      %1281 = vmatprep.subr.bf16.mxu0 %v997
      %1282 = vmatpush1.bf16.msra.mxu0 %v996
      %1283 = vmatprep.subr.bf16.mxu0 %v993
      %1284 = vmatpush1.bf16.msra.mxu0 %v992
      %1285 = vmatprep.subr.bf16.mxu0 %v989
      %1286 = vmatpush1.bf16.msra.mxu0 %v988
      %1287 = vmatprep.subr.bf16.mxu0 %v985
      %1288 = vmatpush1.bf16.msra.mxu0 %v984
      %1289 = vmatprep.subr.bf16.mxu0 %v981
      %1290 = vmatpush1.bf16.msra.mxu0 %v980
      %1291 = vmatprep.subr.bf16.mxu0 %v1041
      %1292 = vmatpush2.bf16.msra.mxu0 %v1040
      %1293 = vmatprep.subr.bf16.mxu0 %v1037
      %1294 = vmatpush2.bf16.msra.mxu0 %v1036
      %1295 = vmatprep.subr.bf16.mxu0 %v1033
      %1296 = vmatpush2.bf16.msra.mxu0 %v1032
      %1297 = vmatprep.subr.bf16.mxu0 %v1029
      %1298 = vmatpush2.bf16.msra.mxu0 %v1028
      %1299 = vmatprep.subr.bf16.mxu0 %v1025
      %1300 = vmatpush2.bf16.msra.mxu0 %v1024
      %1301 = vmatprep.subr.bf16.mxu0 %v1021
      %1302 = vmatpush2.bf16.msra.mxu0 %v1020
      %1303 = vmatprep.subr.bf16.mxu0 %v1017
      %1304 = vmatpush2.bf16.msra.mxu0 %v1016
      %1305 = vmatprep.subr.bf16.mxu0 %v1013
      %1306 = vmatpush2.bf16.msra.mxu0 %v1012
      %1307 = vmatprep.mubr.bf16.mxu0 %v357
      %1308 = vmatmul.mubr.bf16.gmra.mxu0 %v356
      %v1309 = vpop.f32.mrf.mxu0
      %v1310 = vadd.f32 %v1237, %v1309
      %v1311 = vpop.f32.mrf.mxu0
      %v1312 = vadd.f32 %v1239, %v1311
      %v1313 = vpop.f32.mrf.mxu0
      %v1314 = vadd.f32 %v1241, %v1313
      %v1315 = vpop.f32.mrf.mxu0
      %v1316 = vadd.f32 %v1243, %v1315
      %1317 = vmatprep.mubr.bf16.mxu0 %v362
      %1318 = vmatmul.mubr.bf16.gmra.mxu0 %v361
      %v1319 = vpop.f32.mrf.mxu0
      %v1320 = vadd.f32 %v1247, %v1319
      %v1321 = vpop.f32.mrf.mxu0
      %v1322 = vadd.f32 %v1249, %v1321
      %v1323 = vpop.f32.mrf.mxu0
      %v1324 = vadd.f32 %v1251, %v1323
      %v1325 = vpop.f32.mrf.mxu0
      %v1326 = vadd.f32 %v1253, %v1325
      %1327 = vmatprep.mubr.bf16.mxu0 %v367
      %1328 = vmatmul.mubr.bf16.gmra.mxu0 %v366
      %v1329 = vpop.f32.mrf.mxu0
      %v1330 = vadd.f32 %v1257, %v1329
      %v1331 = vpop.f32.mrf.mxu0
      %v1332 = vadd.f32 %v1259, %v1331
      %v1333 = vpop.f32.mrf.mxu0
      %v1334 = vadd.f32 %v1261, %v1333
      %v1335 = vpop.f32.mrf.mxu0
      %v1336 = vadd.f32 %v1263, %v1335
      %1337 = vmatprep.mubr.bf16.mxu0 %v372
      %1338 = vmatmul.mubr.bf16.gmra.mxu0 %v371
      %v1339 = vpop.f32.mrf.mxu0
      %v1340 = vadd.f32 %v1267, %v1339
      %v1341 = vpop.f32.mrf.mxu0
      %v1342 = vadd.f32 %v1269, %v1341
      %v1343 = vpop.f32.mrf.mxu0
      %v1344 = vadd.f32 %v1271, %v1343
      %v1345 = vpop.f32.mrf.mxu0
      %v1346 = vadd.f32 %v1273, %v1345
      %1347 = vdwg.mxu0
      %1348 = vmatprep.subr.bf16.mxu0 0
      %1349 = vmatpush1.bf16.msra.mxu0 0
      %1350 = vmatprep.subr.bf16.mxu0 0
      %1351 = vmatpush1.bf16.msra.mxu0 0
      %1352 = vmatprep.subr.bf16.mxu0 0
      %1353 = vmatpush1.bf16.msra.mxu0 0
      %1354 = vmatprep.subr.bf16.mxu0 0
      %1355 = vmatpush1.bf16.msra.mxu0 0
      %1356 = vmatprep.subr.bf16.mxu0 0
      %1357 = vmatpush1.bf16.msra.mxu0 0
      %1358 = vmatprep.subr.bf16.mxu0 0
      %1359 = vmatpush1.bf16.msra.mxu0 0
      %1360 = vmatprep.subr.bf16.mxu0 0
      %1361 = vmatpush1.bf16.msra.mxu0 0
      %1362 = vmatprep.subr.bf16.mxu0 %v1194
      %1363 = vmatpush1.bf16.msra.mxu0 %v1191
      %1364 = vmatprep.subr.bf16.mxu0 0
      %1365 = vmatpush2.bf16.msra.mxu0 0
      %1366 = vmatprep.subr.bf16.mxu0 0
      %1367 = vmatpush2.bf16.msra.mxu0 0
      %1368 = vmatprep.subr.bf16.mxu0 0
      %1369 = vmatpush2.bf16.msra.mxu0 0
      %1370 = vmatprep.subr.bf16.mxu0 0
      %1371 = vmatpush2.bf16.msra.mxu0 0
      %1372 = vmatprep.subr.bf16.mxu0 0
      %1373 = vmatpush2.bf16.msra.mxu0 0
      %1374 = vmatprep.subr.bf16.mxu0 0
      %1375 = vmatpush2.bf16.msra.mxu0 0
      %1376 = vmatprep.subr.bf16.mxu0 0
      %1377 = vmatpush2.bf16.msra.mxu0 0
      %1378 = vmatprep.subr.bf16.mxu0 0
      %1379 = vmatpush2.bf16.msra.mxu0 0
      %1380 = vmatprep.mubr.bf16.mxu0 0
      %1381 = vmatmul.mubr.bf16.gmra.mxu0 %v1178
      %v1382 = vpop.f32.mrf.mxu0
      %v1383 = vadd.f32 %v1310, %v1382
      %v1384 = vpop.f32.mrf.mxu0
      %v1385 = vadd.f32 %v1312, %v1384
      %v1386 = vpop.f32.mrf.mxu0
      %v1387 = vadd.f32 %v1314, %v1386
      %v1388 = vpop.f32.mrf.mxu0
      %v1389 = vadd.f32 %v1316, %v1388
      %1390 = vmatprep.mubr.bf16.mxu0 0
      %1391 = vmatmul.mubr.bf16.gmra.mxu0 %v1181
      %v1392 = vpop.f32.mrf.mxu0
      %v1393 = vadd.f32 %v1320, %v1392
      %v1394 = vpop.f32.mrf.mxu0
      %v1395 = vadd.f32 %v1322, %v1394
      %v1396 = vpop.f32.mrf.mxu0
      %v1397 = vadd.f32 %v1324, %v1396
      %v1398 = vpop.f32.mrf.mxu0
      %v1399 = vadd.f32 %v1326, %v1398
      %1400 = vmatprep.mubr.bf16.mxu0 0
      %1401 = vmatmul.mubr.bf16.gmra.mxu0 %v1184
      %v1402 = vpop.f32.mrf.mxu0
      %v1403 = vadd.f32 %v1330, %v1402
      %v1404 = vpop.f32.mrf.mxu0
      %v1405 = vadd.f32 %v1332, %v1404
      %v1406 = vpop.f32.mrf.mxu0
      %v1407 = vadd.f32 %v1334, %v1406
      %v1408 = vpop.f32.mrf.mxu0
      %v1409 = vadd.f32 %v1336, %v1408
      %1410 = vmatprep.mubr.bf16.mxu0 0
      %1411 = vmatmul.mubr.bf16.gmra.mxu0 %v1187
      %v1412 = vpop.f32.mrf.mxu0
      %v1413 = vadd.f32 %v1340, %v1412
      %v1414 = vpop.f32.mrf.mxu0
      %v1415 = vadd.f32 %v1342, %v1414
      %v1416 = vpop.f32.mrf.mxu0
      %v1417 = vadd.f32 %v1344, %v1416
      %v1418 = vpop.f32.mrf.mxu0
      %v1419 = vadd.f32 %v1346, %v1418
      %1420 = vdwg.mxu0
      %1421 = vmatprep.subr.bf16.mxu0 %v947
      %1422 = vmatpush1.bf16.msra.mxu0 %v946
      %1423 = vmatprep.subr.bf16.mxu0 %v943
      %1424 = vmatpush1.bf16.msra.mxu0 %v942
      %1425 = vmatprep.subr.bf16.mxu0 %v939
      %1426 = vmatpush1.bf16.msra.mxu0 %v938
      %1427 = vmatprep.subr.bf16.mxu0 %v935
      %1428 = vmatpush1.bf16.msra.mxu0 %v934
      %1429 = vmatprep.subr.bf16.mxu0 %v931
      %1430 = vmatpush1.bf16.msra.mxu0 %v930
      %1431 = vmatprep.subr.bf16.mxu0 %v927
      %1432 = vmatpush1.bf16.msra.mxu0 %v926
      %1433 = vmatprep.subr.bf16.mxu0 %v923
      %1434 = vmatpush1.bf16.msra.mxu0 %v922
      %1435 = vmatprep.subr.bf16.mxu0 %v919
      %1436 = vmatpush1.bf16.msra.mxu0 %v918
      %1437 = vmatprep.subr.bf16.mxu0 %v979
      %1438 = vmatpush2.bf16.msra.mxu0 %v978
      %1439 = vmatprep.subr.bf16.mxu0 %v975
      %1440 = vmatpush2.bf16.msra.mxu0 %v974
      %1441 = vmatprep.subr.bf16.mxu0 %v971
      %1442 = vmatpush2.bf16.msra.mxu0 %v970
      %1443 = vmatprep.subr.bf16.mxu0 %v967
      %1444 = vmatpush2.bf16.msra.mxu0 %v966
      %1445 = vmatprep.subr.bf16.mxu0 %v963
      %1446 = vmatpush2.bf16.msra.mxu0 %v962
      %1447 = vmatprep.subr.bf16.mxu0 %v959
      %1448 = vmatpush2.bf16.msra.mxu0 %v958
      %1449 = vmatprep.subr.bf16.mxu0 %v955
      %1450 = vmatpush2.bf16.msra.mxu0 %v954
      %1451 = vmatprep.subr.bf16.mxu0 %v951
      %1452 = vmatpush2.bf16.msra.mxu0 %v950
      %1453 = vmatprep.mubr.bf16.mxu0 %v355
      %1454 = vmatmul.mubr.bf16.gmra.mxu0 %v354
      %v1455 = vpop.f32.mrf.mxu0
      %v1456 = vadd.f32 %v517, %v1455
      %v1457 = vpop.f32.mrf.mxu0
      %v1458 = vadd.f32 %v521, %v1457
      %v1459 = vpop.f32.mrf.mxu0
      %v1460 = vadd.f32 %v517, %v1459
      %v1461 = vpop.f32.mrf.mxu0
      %v1462 = vadd.f32 %v521, %v1461
      %1463 = vmatprep.mubr.bf16.mxu0 %v360
      %1464 = vmatmul.mubr.bf16.gmra.mxu0 %v359
      %v1465 = vpop.f32.mrf.mxu0
      %v1466 = vadd.f32 %v517, %v1465
      %v1467 = vpop.f32.mrf.mxu0
      %v1468 = vadd.f32 %v521, %v1467
      %v1469 = vpop.f32.mrf.mxu0
      %v1470 = vadd.f32 %v517, %v1469
      %v1471 = vpop.f32.mrf.mxu0
      %v1472 = vadd.f32 %v521, %v1471
      %1473 = vmatprep.mubr.bf16.mxu0 %v365
      %1474 = vmatmul.mubr.bf16.gmra.mxu0 %v364
      %v1475 = vpop.f32.mrf.mxu0
      %v1476 = vadd.f32 %v517, %v1475
      %v1477 = vpop.f32.mrf.mxu0
      %v1478 = vadd.f32 %v521, %v1477
      %v1479 = vpop.f32.mrf.mxu0
      %v1480 = vadd.f32 %v517, %v1479
      %v1481 = vpop.f32.mrf.mxu0
      %v1482 = vadd.f32 %v521, %v1481
      %1483 = vmatprep.mubr.bf16.mxu0 %v370
      %1484 = vmatmul.mubr.bf16.gmra.mxu0 %v369
      %v1485 = vpop.f32.mrf.mxu0
      %v1486 = vadd.f32 %v517, %v1485
      %v1487 = vpop.f32.mrf.mxu0
      %v1488 = vadd.f32 %v521, %v1487
      %v1489 = vpop.f32.mrf.mxu0
      %v1490 = vadd.f32 %v517, %v1489
      %v1491 = vpop.f32.mrf.mxu0
      %v1492 = vadd.f32 %v521, %v1491
      %1493 = vdwg.mxu0
      %1494 = vmatprep.subr.bf16.mxu0 %v1011
      %1495 = vmatpush1.bf16.msra.mxu0 %v1010
      %1496 = vmatprep.subr.bf16.mxu0 %v1007
      %1497 = vmatpush1.bf16.msra.mxu0 %v1006
      %1498 = vmatprep.subr.bf16.mxu0 %v1003
      %1499 = vmatpush1.bf16.msra.mxu0 %v1002
      %1500 = vmatprep.subr.bf16.mxu0 %v999
      %1501 = vmatpush1.bf16.msra.mxu0 %v998
      %1502 = vmatprep.subr.bf16.mxu0 %v995
      %1503 = vmatpush1.bf16.msra.mxu0 %v994
      %1504 = vmatprep.subr.bf16.mxu0 %v991
      %1505 = vmatpush1.bf16.msra.mxu0 %v990
      %1506 = vmatprep.subr.bf16.mxu0 %v987
      %1507 = vmatpush1.bf16.msra.mxu0 %v986
      %1508 = vmatprep.subr.bf16.mxu0 %v983
      %1509 = vmatpush1.bf16.msra.mxu0 %v982
      %1510 = vmatprep.subr.bf16.mxu0 %v1043
      %1511 = vmatpush2.bf16.msra.mxu0 %v1042
      %1512 = vmatprep.subr.bf16.mxu0 %v1039
      %1513 = vmatpush2.bf16.msra.mxu0 %v1038
      %1514 = vmatprep.subr.bf16.mxu0 %v1035
      %1515 = vmatpush2.bf16.msra.mxu0 %v1034
      %1516 = vmatprep.subr.bf16.mxu0 %v1031
      %1517 = vmatpush2.bf16.msra.mxu0 %v1030
      %1518 = vmatprep.subr.bf16.mxu0 %v1027
      %1519 = vmatpush2.bf16.msra.mxu0 %v1026
      %1520 = vmatprep.subr.bf16.mxu0 %v1023
      %1521 = vmatpush2.bf16.msra.mxu0 %v1022
      %1522 = vmatprep.subr.bf16.mxu0 %v1019
      %1523 = vmatpush2.bf16.msra.mxu0 %v1018
      %1524 = vmatprep.subr.bf16.mxu0 %v1015
      %1525 = vmatpush2.bf16.msra.mxu0 %v1014
      %1526 = vmatprep.mubr.bf16.mxu0 %v357
      %1527 = vmatmul.mubr.bf16.gmra.mxu0 %v356
      %v1528 = vpop.f32.mrf.mxu0
      %v1529 = vadd.f32 %v1456, %v1528
      %v1530 = vpop.f32.mrf.mxu0
      %v1531 = vadd.f32 %v1458, %v1530
      %v1532 = vpop.f32.mrf.mxu0
      %v1533 = vadd.f32 %v1460, %v1532
      %v1534 = vpop.f32.mrf.mxu0
      %v1535 = vadd.f32 %v1462, %v1534
      %1536 = vmatprep.mubr.bf16.mxu0 %v362
      %1537 = vmatmul.mubr.bf16.gmra.mxu0 %v361
      %v1538 = vpop.f32.mrf.mxu0
      %v1539 = vadd.f32 %v1466, %v1538
      %v1540 = vpop.f32.mrf.mxu0
      %v1541 = vadd.f32 %v1468, %v1540
      %v1542 = vpop.f32.mrf.mxu0
      %v1543 = vadd.f32 %v1470, %v1542
      %v1544 = vpop.f32.mrf.mxu0
      %v1545 = vadd.f32 %v1472, %v1544
      %1546 = vmatprep.mubr.bf16.mxu0 %v367
      %1547 = vmatmul.mubr.bf16.gmra.mxu0 %v366
      %v1548 = vpop.f32.mrf.mxu0
      %v1549 = vadd.f32 %v1476, %v1548
      %v1550 = vpop.f32.mrf.mxu0
      %v1551 = vadd.f32 %v1478, %v1550
      %v1552 = vpop.f32.mrf.mxu0
      %v1553 = vadd.f32 %v1480, %v1552
      %v1554 = vpop.f32.mrf.mxu0
      %v1555 = vadd.f32 %v1482, %v1554
      %1556 = vmatprep.mubr.bf16.mxu0 %v372
      %1557 = vmatmul.mubr.bf16.gmra.mxu0 %v371
      %v1558 = vpop.f32.mrf.mxu0
      %v1559 = vadd.f32 %v1486, %v1558
      %v1560 = vpop.f32.mrf.mxu0
      %v1561 = vadd.f32 %v1488, %v1560
      %v1562 = vpop.f32.mrf.mxu0
      %v1563 = vadd.f32 %v1490, %v1562
      %v1564 = vpop.f32.mrf.mxu0
      %v1565 = vadd.f32 %v1492, %v1564
      %1566 = vdwg.mxu0
      %1567 = vmatprep.subr.bf16.mxu0 0
      %1568 = vmatpush1.bf16.msra.mxu0 0
      %1569 = vmatprep.subr.bf16.mxu0 0
      %1570 = vmatpush1.bf16.msra.mxu0 0
      %1571 = vmatprep.subr.bf16.mxu0 0
      %1572 = vmatpush1.bf16.msra.mxu0 0
      %1573 = vmatprep.subr.bf16.mxu0 0
      %1574 = vmatpush1.bf16.msra.mxu0 0
      %1575 = vmatprep.subr.bf16.mxu0 0
      %1576 = vmatpush1.bf16.msra.mxu0 0
      %1577 = vmatprep.subr.bf16.mxu0 0
      %1578 = vmatpush1.bf16.msra.mxu0 0
      %1579 = vmatprep.subr.bf16.mxu0 0
      %1580 = vmatpush1.bf16.msra.mxu0 0
      %1581 = vmatprep.subr.bf16.mxu0 %v1200
      %1582 = vmatpush1.bf16.msra.mxu0 %v1197
      %1583 = vmatprep.subr.bf16.mxu0 0
      %1584 = vmatpush2.bf16.msra.mxu0 0
      %1585 = vmatprep.subr.bf16.mxu0 0
      %1586 = vmatpush2.bf16.msra.mxu0 0
      %1587 = vmatprep.subr.bf16.mxu0 0
      %1588 = vmatpush2.bf16.msra.mxu0 0
      %1589 = vmatprep.subr.bf16.mxu0 0
      %1590 = vmatpush2.bf16.msra.mxu0 0
      %1591 = vmatprep.subr.bf16.mxu0 0
      %1592 = vmatpush2.bf16.msra.mxu0 0
      %1593 = vmatprep.subr.bf16.mxu0 0
      %1594 = vmatpush2.bf16.msra.mxu0 0
      %1595 = vmatprep.subr.bf16.mxu0 0
      %1596 = vmatpush2.bf16.msra.mxu0 0
      %1597 = vmatprep.subr.bf16.mxu0 0
      %1598 = vmatpush2.bf16.msra.mxu0 0
      %1599 = vmatprep.mubr.bf16.mxu0 0
      %1600 = vmatmul.mubr.bf16.gmra.mxu0 %v1178
      %v1601 = vpop.f32.mrf.mxu0
      %v1602 = vadd.f32 %v1529, %v1601
      %v1603 = vpop.f32.mrf.mxu0
      %v1604 = vadd.f32 %v1531, %v1603
      %v1605 = vpop.f32.mrf.mxu0
      %v1606 = vadd.f32 %v1533, %v1605
      %v1607 = vpop.f32.mrf.mxu0
      %v1608 = vadd.f32 %v1535, %v1607
      %1609 = vmatprep.mubr.bf16.mxu0 0
      %1610 = vmatmul.mubr.bf16.gmra.mxu0 %v1181
      %v1611 = vpop.f32.mrf.mxu0
      %v1612 = vadd.f32 %v1539, %v1611
      %v1613 = vpop.f32.mrf.mxu0
      %v1614 = vadd.f32 %v1541, %v1613
      %v1615 = vpop.f32.mrf.mxu0
      %v1616 = vadd.f32 %v1543, %v1615
      %v1617 = vpop.f32.mrf.mxu0
      %v1618 = vadd.f32 %v1545, %v1617
      %1619 = vmatprep.mubr.bf16.mxu0 0
      %1620 = vmatmul.mubr.bf16.gmra.mxu0 %v1184
      %v1621 = vpop.f32.mrf.mxu0
      %v1622 = vadd.f32 %v1549, %v1621
      %v1623 = vpop.f32.mrf.mxu0
      %v1624 = vadd.f32 %v1551, %v1623
      %v1625 = vpop.f32.mrf.mxu0
      %v1626 = vadd.f32 %v1553, %v1625
      %v1627 = vpop.f32.mrf.mxu0
      %v1628 = vadd.f32 %v1555, %v1627
      %1629 = vmatprep.mubr.bf16.mxu0 0
      %1630 = vmatmul.mubr.bf16.gmra.mxu0 %v1187
      %v1631 = vpop.f32.mrf.mxu0
      %v1632 = vadd.f32 %v1559, %v1631
      %v1633 = vpop.f32.mrf.mxu0
      %v1634 = vadd.f32 %v1561, %v1633
      %v1635 = vpop.f32.mrf.mxu0
      %v1636 = vadd.f32 %v1563, %v1635
      %v1637 = vpop.f32.mrf.mxu0
      %v1638 = vadd.f32 %v1565, %v1637
      %1639 = vdwg.mxu0
      %v1640 = vmax.f32 %v1383, 0.0
      %v1641 = vmax.f32 %v1385, 0.0
      %v1642 = vmax.f32 %v1602, 0.0
      %v1643 = vmax.f32 %v1604, 0.0
      %v1644 = vmax.f32 %v1387, 0.0
      %v1645 = vmax.f32 %v1389, 0.0
      %v1646 = vmax.f32 %v1606, 0.0
      %v1647 = vmax.f32 %v1608, 0.0
      %v1648 = vmax.f32 %v1393, 0.0
      %v1649 = vmax.f32 %v1395, 0.0
      %v1650 = vmax.f32 %v1612, 0.0
      %v1651 = vmax.f32 %v1614, 0.0
      %v1652 = vmax.f32 %v1397, 0.0
      %v1653 = vmax.f32 %v1399, 0.0
      %v1654 = vmax.f32 %v1616, 0.0
      %v1655 = vmax.f32 %v1618, 0.0
      %v1656 = vmax.f32 %v1403, 0.0
      %v1657 = vmax.f32 %v1405, 0.0
      %v1658 = vmax.f32 %v1622, 0.0
      %v1659 = vmax.f32 %v1624, 0.0
      %v1660 = vmax.f32 %v1407, 0.0
      %v1661 = vmax.f32 %v1409, 0.0
      %v1662 = vmax.f32 %v1626, 0.0
      %v1663 = vmax.f32 %v1628, 0.0
      %v1664 = vmax.f32 %v1413, 0.0
      %v1665 = vmax.f32 %v1415, 0.0
      %v1666 = vmax.f32 %v1632, 0.0
      %v1667 = vmax.f32 %v1634, 0.0
      %v1668 = vmax.f32 %v1417, 0.0
      %v1669 = vmax.f32 %v1419, 0.0
      %v1670 = vmax.f32 %v1636, 0.0
      %v1671 = vmax.f32 %v1638, 0.0
      %v1672 = vld [vmem:[%s3] sm:$0xff]
      %v1673 = vld [vmem:[%s3 + $0x8] sm:$0xff]
      %v1674 = vld [vmem:[%s3 + $0x10] sm:$0xff]
      %v1675 = vld [vmem:[%s3 + $0x18] sm:$0xff]
      %v1676 = vld [vmem:[%s3 + $0x20] sm:$0xff]
      %v1677 = vld [vmem:[%s3 + $0x28] sm:$0xff]
      %v1678 = vld [vmem:[%s3 + $0x30] sm:$0xff]
      %v1679 = vld [vmem:[%s3 + $0x38] sm:$0xff]
      %v1680 = vld [vmem:[%s3 + $0x40] sm:$0xff]
      %v1681 = vld [vmem:[%s3 + $0x48] sm:$0xff]
      %v1682 = vld [vmem:[%s3 + $0x50] sm:$0xff]
      %v1683 = vld [vmem:[%s3 + $0x58] sm:$0xff]
      %v1684 = vld [vmem:[%s3 + $0x60] sm:$0xff]
      %v1685 = vld [vmem:[%s3 + $0x68] sm:$0xff]
      %v1686 = vld [vmem:[%s3 + $0x70] sm:$0xff]
      %v1687 = vld [vmem:[%s3 + $0x78] sm:$0xff]
      %v1688 = vld [vmem:[%s3 + $0x80] sm:$0xff]
      %v1689 = vld [vmem:[%s3 + $0x88] sm:$0xff]
      %v1690 = vld [vmem:[%s3 + $0x90] sm:$0xff]
      %v1691 = vld [vmem:[%s3 + $0x98] sm:$0xff]
      %v1692 = vld [vmem:[%s3 + $0xa0] sm:$0xff]
      %v1693 = vld [vmem:[%s3 + $0xa8] sm:$0xff]
      %v1694 = vld [vmem:[%s3 + $0xb0] sm:$0xff]
      %v1695 = vld [vmem:[%s3 + $0xb8] sm:$0xff]
      %v1696 = vld [vmem:[%s3 + $0xc0] sm:$0xff]
      %v1697 = vld [vmem:[%s3 + $0xc8] sm:$0xff]
      %v1698 = vld [vmem:[%s3 + $0xd0] sm:$0xff]
      %v1699 = vld [vmem:[%s3 + $0xd8] sm:$0xff]
      %v1700 = vld [vmem:[%s3 + $0xe0] sm:$0xff]
      %v1701 = vld [vmem:[%s3 + $0xe8] sm:$0xff]
      %v1702 = vld [vmem:[%s3 + $0xf0] sm:$0xff]
      %v1703 = vld [vmem:[%s3 + $0xf8] sm:$0xff]
      %v1704 = vld [vmem:[%s3 + $0x100] sm:$0xff]
      %v1705 = vld [vmem:[%s3 + $0x108] sm:$0xff]
      %v1706 = vld [vmem:[%s3 + $0x110] sm:$0xff]
      %v1707 = vld [vmem:[%s3 + $0x118] sm:$0xff]
      %v1708 = vld [vmem:[%s3 + $0x120] sm:$0xff]
      %v1709 = vld [vmem:[%s3 + $0x128] sm:$0xff]
      %v1710 = vld [vmem:[%s3 + $0x130] sm:$0xff]
      %v1711 = vld [vmem:[%s3 + $0x138] sm:$0xff]
      %v1712 = vld [vmem:[%s3 + $0x140] sm:$0xff]
      %v1713 = vld [vmem:[%s3 + $0x148] sm:$0xff]
      %v1714 = vld [vmem:[%s3 + $0x150] sm:$0xff]
      %v1715 = vld [vmem:[%s3 + $0x158] sm:$0xff]
      %v1716 = vld [vmem:[%s3 + $0x160] sm:$0xff]
      %v1717 = vld [vmem:[%s3 + $0x168] sm:$0xff]
      %v1718 = vld [vmem:[%s3 + $0x170] sm:$0xff]
      %v1719 = vld [vmem:[%s3 + $0x178] sm:$0xff]
      %v1720 = vld [vmem:[%s3 + $0x180] sm:$0xff]
      %v1721 = vld [vmem:[%s3 + $0x188] sm:$0xff]
      %v1722 = vld [vmem:[%s3 + $0x190] sm:$0xff]
      %v1723 = vld [vmem:[%s3 + $0x198] sm:$0xff]
      %v1724 = vld [vmem:[%s3 + $0x1a0] sm:$0xff]
      %v1725 = vld [vmem:[%s3 + $0x1a8] sm:$0xff]
      %v1726 = vld [vmem:[%s3 + $0x1b0] sm:$0xff]
      %v1727 = vld [vmem:[%s3 + $0x1b8] sm:$0xff]
      %v1728 = vld [vmem:[%s3 + $0x1c0] sm:$0xff]
      %v1729 = vld [vmem:[%s3 + $0x1c8] sm:$0xff]
      %v1730 = vld [vmem:[%s3 + $0x1d0] sm:$0xff]
      %v1731 = vld [vmem:[%s3 + $0x1d8] sm:$0xff]
      %v1732 = vld [vmem:[%s3 + $0x1e0] sm:$0xff]
      %v1733 = vld [vmem:[%s3 + $0x1e8] sm:$0xff]
      %v1734 = vld [vmem:[%s3 + $0x1f0] sm:$0xff]
      %v1735 = vld [vmem:[%s3 + $0x1f8] sm:$0xff]
      %v1736 = vld [vmem:[%s3 + $0x200] sm:$0x33]
      %v1737 = vld [vmem:[%s4] sm:$0x3]
      %v1739 = vlaneseq
      %v1740 = vshrl.u32 %v1739, 7
      %v1741 = vsub.s32 0, %v1740
      %v1742 = vrot.slane %v1737, %v1741
      %v1743 = vlaneseq
      %v1744 = vshrl.u32 %v1743, 7
      %v1745 = vsub.s32 1, %v1744
      %v1746 = vrot.slane %v1737, %v1745
      %v1814 = vunpack.c.l.b16 %v1672
      %v1815 = vunpack.c.h.b16 %v1672
      %v1816 = vunpack.c.l.b16 %v1673
      %v1817 = vunpack.c.h.b16 %v1673
      %v1818 = vunpack.c.l.b16 %v1674
      %v1819 = vunpack.c.h.b16 %v1674
      %v1820 = vunpack.c.l.b16 %v1675
      %v1821 = vunpack.c.h.b16 %v1675
      %v1822 = vunpack.c.l.b16 %v1676
      %v1823 = vunpack.c.h.b16 %v1676
      %v1824 = vunpack.c.l.b16 %v1677
      %v1825 = vunpack.c.h.b16 %v1677
      %v1826 = vunpack.c.l.b16 %v1678
      %v1827 = vunpack.c.h.b16 %v1678
      %v1828 = vunpack.c.l.b16 %v1679
      %v1829 = vunpack.c.h.b16 %v1679
      %v1830 = vunpack.c.l.b16 %v1680
      %v1831 = vunpack.c.h.b16 %v1680
      %v1832 = vunpack.c.l.b16 %v1681
      %v1833 = vunpack.c.h.b16 %v1681
      %v1834 = vunpack.c.l.b16 %v1682
      %v1835 = vunpack.c.h.b16 %v1682
      %v1836 = vunpack.c.l.b16 %v1683
      %v1837 = vunpack.c.h.b16 %v1683
      %v1838 = vunpack.c.l.b16 %v1684
      %v1839 = vunpack.c.h.b16 %v1684
      %v1840 = vunpack.c.l.b16 %v1685
      %v1841 = vunpack.c.h.b16 %v1685
      %v1842 = vunpack.c.l.b16 %v1686
      %v1843 = vunpack.c.h.b16 %v1686
      %v1844 = vunpack.c.l.b16 %v1687
      %v1845 = vunpack.c.h.b16 %v1687
      %v1846 = vunpack.c.l.b16 %v1688
      %v1847 = vunpack.c.h.b16 %v1688
      %v1848 = vunpack.c.l.b16 %v1689
      %v1849 = vunpack.c.h.b16 %v1689
      %v1850 = vunpack.c.l.b16 %v1690
      %v1851 = vunpack.c.h.b16 %v1690
      %v1852 = vunpack.c.l.b16 %v1691
      %v1853 = vunpack.c.h.b16 %v1691
      %v1854 = vunpack.c.l.b16 %v1692
      %v1855 = vunpack.c.h.b16 %v1692
      %v1856 = vunpack.c.l.b16 %v1693
      %v1857 = vunpack.c.h.b16 %v1693
      %v1858 = vunpack.c.l.b16 %v1694
      %v1859 = vunpack.c.h.b16 %v1694
      %v1860 = vunpack.c.l.b16 %v1695
      %v1861 = vunpack.c.h.b16 %v1695
      %v1862 = vunpack.c.l.b16 %v1696
      %v1863 = vunpack.c.h.b16 %v1696
      %v1864 = vunpack.c.l.b16 %v1697
      %v1865 = vunpack.c.h.b16 %v1697
      %v1866 = vunpack.c.l.b16 %v1698
      %v1867 = vunpack.c.h.b16 %v1698
      %v1868 = vunpack.c.l.b16 %v1699
      %v1869 = vunpack.c.h.b16 %v1699
      %v1870 = vunpack.c.l.b16 %v1700
      %v1871 = vunpack.c.h.b16 %v1700
      %v1872 = vunpack.c.l.b16 %v1701
      %v1873 = vunpack.c.h.b16 %v1701
      %v1874 = vunpack.c.l.b16 %v1702
      %v1875 = vunpack.c.h.b16 %v1702
      %v1876 = vunpack.c.l.b16 %v1703
      %v1877 = vunpack.c.h.b16 %v1703
      %v1878 = vunpack.c.l.b16 %v1704
      %v1879 = vunpack.c.h.b16 %v1704
      %v1880 = vunpack.c.l.b16 %v1705
      %v1881 = vunpack.c.h.b16 %v1705
      %v1882 = vunpack.c.l.b16 %v1706
      %v1883 = vunpack.c.h.b16 %v1706
      %v1884 = vunpack.c.l.b16 %v1707
      %v1885 = vunpack.c.h.b16 %v1707
      %v1886 = vunpack.c.l.b16 %v1708
      %v1887 = vunpack.c.h.b16 %v1708
      %v1888 = vunpack.c.l.b16 %v1709
      %v1889 = vunpack.c.h.b16 %v1709
      %v1890 = vunpack.c.l.b16 %v1710
      %v1891 = vunpack.c.h.b16 %v1710
      %v1892 = vunpack.c.l.b16 %v1711
      %v1893 = vunpack.c.h.b16 %v1711
      %v1894 = vunpack.c.l.b16 %v1712
      %v1895 = vunpack.c.h.b16 %v1712
      %v1896 = vunpack.c.l.b16 %v1713
      %v1897 = vunpack.c.h.b16 %v1713
      %v1898 = vunpack.c.l.b16 %v1714
      %v1899 = vunpack.c.h.b16 %v1714
      %v1900 = vunpack.c.l.b16 %v1715
      %v1901 = vunpack.c.h.b16 %v1715
      %v1902 = vunpack.c.l.b16 %v1716
      %v1903 = vunpack.c.h.b16 %v1716
      %v1904 = vunpack.c.l.b16 %v1717
      %v1905 = vunpack.c.h.b16 %v1717
      %v1906 = vunpack.c.l.b16 %v1718
      %v1907 = vunpack.c.h.b16 %v1718
      %v1908 = vunpack.c.l.b16 %v1719
      %v1909 = vunpack.c.h.b16 %v1719
      %v1910 = vunpack.c.l.b16 %v1720
      %v1911 = vunpack.c.h.b16 %v1720
      %v1912 = vunpack.c.l.b16 %v1721
      %v1913 = vunpack.c.h.b16 %v1721
      %v1914 = vunpack.c.l.b16 %v1722
      %v1915 = vunpack.c.h.b16 %v1722
      %v1916 = vunpack.c.l.b16 %v1723
      %v1917 = vunpack.c.h.b16 %v1723
      %v1918 = vunpack.c.l.b16 %v1724
      %v1919 = vunpack.c.h.b16 %v1724
      %v1920 = vunpack.c.l.b16 %v1725
      %v1921 = vunpack.c.h.b16 %v1725
      %v1922 = vunpack.c.l.b16 %v1726
      %v1923 = vunpack.c.h.b16 %v1726
      %v1924 = vunpack.c.l.b16 %v1727
      %v1925 = vunpack.c.h.b16 %v1727
      %v1926 = vunpack.c.l.b16 %v1728
      %v1927 = vunpack.c.h.b16 %v1728
      %v1928 = vunpack.c.l.b16 %v1729
      %v1929 = vunpack.c.h.b16 %v1729
      %v1930 = vunpack.c.l.b16 %v1730
      %v1931 = vunpack.c.h.b16 %v1730
      %v1932 = vunpack.c.l.b16 %v1731
      %v1933 = vunpack.c.h.b16 %v1731
      %v1934 = vunpack.c.l.b16 %v1732
      %v1935 = vunpack.c.h.b16 %v1732
      %v1936 = vunpack.c.l.b16 %v1733
      %v1937 = vunpack.c.h.b16 %v1733
      %v1938 = vunpack.c.l.b16 %v1734
      %v1939 = vunpack.c.h.b16 %v1734
      %v1940 = vunpack.c.l.b16 %v1735
      %v1941 = vunpack.c.h.b16 %v1735
      %v1942 = vunpack.c.l.b16 %v1736
      %v1943 = vunpack.c.h.b16 %v1736
      %v1944 = vpack.c.b16 %v1816, %v1814
      %v1945 = vpack.c.b16 %v1817, %v1815
      %v1946 = vpack.c.b16 %v1820, %v1818
      %v1947 = vpack.c.b16 %v1821, %v1819
      %v1948 = vpack.c.b16 %v1824, %v1822
      %v1949 = vpack.c.b16 %v1825, %v1823
      %v1950 = vpack.c.b16 %v1828, %v1826
      %v1951 = vpack.c.b16 %v1829, %v1827
      %v1952 = vpack.c.b16 %v1832, %v1830
      %v1953 = vpack.c.b16 %v1833, %v1831
      %v1954 = vpack.c.b16 %v1836, %v1834
      %v1955 = vpack.c.b16 %v1837, %v1835
      %v1956 = vpack.c.b16 %v1840, %v1838
      %v1957 = vpack.c.b16 %v1841, %v1839
      %v1958 = vpack.c.b16 %v1844, %v1842
      %v1959 = vpack.c.b16 %v1845, %v1843
      %v1960 = vpack.c.b16 %v1848, %v1846
      %v1961 = vpack.c.b16 %v1849, %v1847
      %v1962 = vpack.c.b16 %v1852, %v1850
      %v1963 = vpack.c.b16 %v1853, %v1851
      %v1964 = vpack.c.b16 %v1856, %v1854
      %v1965 = vpack.c.b16 %v1857, %v1855
      %v1966 = vpack.c.b16 %v1860, %v1858
      %v1967 = vpack.c.b16 %v1861, %v1859
      %v1968 = vpack.c.b16 %v1864, %v1862
      %v1969 = vpack.c.b16 %v1865, %v1863
      %v1970 = vpack.c.b16 %v1868, %v1866
      %v1971 = vpack.c.b16 %v1869, %v1867
      %v1972 = vpack.c.b16 %v1872, %v1870
      %v1973 = vpack.c.b16 %v1873, %v1871
      %v1974 = vpack.c.b16 %v1876, %v1874
      %v1975 = vpack.c.b16 %v1877, %v1875
      %v1976 = vpack.c.b16 %v1880, %v1878
      %v1977 = vpack.c.b16 %v1881, %v1879
      %v1978 = vpack.c.b16 %v1884, %v1882
      %v1979 = vpack.c.b16 %v1885, %v1883
      %v1980 = vpack.c.b16 %v1888, %v1886
      %v1981 = vpack.c.b16 %v1889, %v1887
      %v1982 = vpack.c.b16 %v1892, %v1890
      %v1983 = vpack.c.b16 %v1893, %v1891
      %v1984 = vpack.c.b16 %v1896, %v1894
      %v1985 = vpack.c.b16 %v1897, %v1895
      %v1986 = vpack.c.b16 %v1900, %v1898
      %v1987 = vpack.c.b16 %v1901, %v1899
      %v1988 = vpack.c.b16 %v1904, %v1902
      %v1989 = vpack.c.b16 %v1905, %v1903
      %v1990 = vpack.c.b16 %v1908, %v1906
      %v1991 = vpack.c.b16 %v1909, %v1907
      %v1992 = vpack.c.b16 %v1912, %v1910
      %v1993 = vpack.c.b16 %v1913, %v1911
      %v1994 = vpack.c.b16 %v1916, %v1914
      %v1995 = vpack.c.b16 %v1917, %v1915
      %v1996 = vpack.c.b16 %v1920, %v1918
      %v1997 = vpack.c.b16 %v1921, %v1919
      %v1998 = vpack.c.b16 %v1924, %v1922
      %v1999 = vpack.c.b16 %v1925, %v1923
      %v2000 = vpack.c.b16 %v1928, %v1926
      %v2001 = vpack.c.b16 %v1929, %v1927
      %v2002 = vpack.c.b16 %v1932, %v1930
      %v2003 = vpack.c.b16 %v1933, %v1931
      %v2004 = vpack.c.b16 %v1936, %v1934
      %v2005 = vpack.c.b16 %v1937, %v1935
      %v2006 = vpack.c.b16 %v1940, %v1938
      %v2007 = vpack.c.b16 %v1941, %v1939
      %v2008 = vpack.c.b16 %v1942, %v1942
      %v2009 = vpack.c.b16 %v1943, %v1943
      %v2075 = vsel %vm1189, %v2008, 0
      %v2078 = vsel %vm1189, %v2009, 0
      %2080 = vmatprep.subr.bf16.mxu0 %v1959
      %2081 = vmatpush1.bf16.msra.mxu0 %v1958
      %2082 = vmatprep.subr.bf16.mxu0 %v1957
      %2083 = vmatpush1.bf16.msra.mxu0 %v1956
      %2084 = vmatprep.subr.bf16.mxu0 %v1955
      %2085 = vmatpush1.bf16.msra.mxu0 %v1954
      %2086 = vmatprep.subr.bf16.mxu0 %v1953
      %2087 = vmatpush1.bf16.msra.mxu0 %v1952
      %2088 = vmatprep.subr.bf16.mxu0 %v1951
      %2089 = vmatpush1.bf16.msra.mxu0 %v1950
      %2090 = vmatprep.subr.bf16.mxu0 %v1949
      %2091 = vmatpush1.bf16.msra.mxu0 %v1948
      %2092 = vmatprep.subr.bf16.mxu0 %v1947
      %2093 = vmatpush1.bf16.msra.mxu0 %v1946
      %2094 = vmatprep.subr.bf16.mxu0 %v1945
      %2095 = vmatpush1.bf16.msra.mxu0 %v1944
      %2096 = vmatprep.subr.bf16.mxu0 %v1975
      %2097 = vmatpush2.bf16.msra.mxu0 %v1974
      %2098 = vmatprep.subr.bf16.mxu0 %v1973
      %2099 = vmatpush2.bf16.msra.mxu0 %v1972
      %2100 = vmatprep.subr.bf16.mxu0 %v1971
      %2101 = vmatpush2.bf16.msra.mxu0 %v1970
      %2102 = vmatprep.subr.bf16.mxu0 %v1969
      %2103 = vmatpush2.bf16.msra.mxu0 %v1968
      %2104 = vmatprep.subr.bf16.mxu0 %v1967
      %2105 = vmatpush2.bf16.msra.mxu0 %v1966
      %2106 = vmatprep.subr.bf16.mxu0 %v1965
      %2107 = vmatpush2.bf16.msra.mxu0 %v1964
      %2108 = vmatprep.subr.bf16.mxu0 %v1963
      %2109 = vmatpush2.bf16.msra.mxu0 %v1962
      %2110 = vmatprep.subr.bf16.mxu0 %v1961
      %2111 = vmatpush2.bf16.msra.mxu0 %v1960
      %2112 = vmatprep.mubr.bf16.mxu0 %v355
      %2113 = vmatmul.mubr.bf16.gmra.mxu0 %v354
      %v2114 = vpop.f32.mrf.mxu0
      %v2115 = vadd.f32 %v1742, %v2114
      %v2116 = vpop.f32.mrf.mxu0
      %v2117 = vadd.f32 %v1746, %v2116
      %v2118 = vpop.f32.mrf.mxu0
      %v2119 = vadd.f32 %v1742, %v2118
      %v2120 = vpop.f32.mrf.mxu0
      %v2121 = vadd.f32 %v1746, %v2120
      %2122 = vmatprep.mubr.bf16.mxu0 %v360
      %2123 = vmatmul.mubr.bf16.gmra.mxu0 %v359
      %v2124 = vpop.f32.mrf.mxu0
      %v2125 = vadd.f32 %v1742, %v2124
      %v2126 = vpop.f32.mrf.mxu0
      %v2127 = vadd.f32 %v1746, %v2126
      %v2128 = vpop.f32.mrf.mxu0
      %v2129 = vadd.f32 %v1742, %v2128
      %v2130 = vpop.f32.mrf.mxu0
      %v2131 = vadd.f32 %v1746, %v2130
      %2132 = vmatprep.mubr.bf16.mxu0 %v365
      %2133 = vmatmul.mubr.bf16.gmra.mxu0 %v364
      %v2134 = vpop.f32.mrf.mxu0
      %v2135 = vadd.f32 %v1742, %v2134
      %v2136 = vpop.f32.mrf.mxu0
      %v2137 = vadd.f32 %v1746, %v2136
      %v2138 = vpop.f32.mrf.mxu0
      %v2139 = vadd.f32 %v1742, %v2138
      %v2140 = vpop.f32.mrf.mxu0
      %v2141 = vadd.f32 %v1746, %v2140
      %2142 = vmatprep.mubr.bf16.mxu0 %v370
      %2143 = vmatmul.mubr.bf16.gmra.mxu0 %v369
      %v2144 = vpop.f32.mrf.mxu0
      %v2145 = vadd.f32 %v1742, %v2144
      %v2146 = vpop.f32.mrf.mxu0
      %v2147 = vadd.f32 %v1746, %v2146
      %v2148 = vpop.f32.mrf.mxu0
      %v2149 = vadd.f32 %v1742, %v2148
      %v2150 = vpop.f32.mrf.mxu0
      %v2151 = vadd.f32 %v1746, %v2150
      %2152 = vdwg.mxu0
      %2153 = vmatprep.subr.bf16.mxu0 %v1991
      %2154 = vmatpush1.bf16.msra.mxu0 %v1990
      %2155 = vmatprep.subr.bf16.mxu0 %v1989
      %2156 = vmatpush1.bf16.msra.mxu0 %v1988
      %2157 = vmatprep.subr.bf16.mxu0 %v1987
      %2158 = vmatpush1.bf16.msra.mxu0 %v1986
      %2159 = vmatprep.subr.bf16.mxu0 %v1985
      %2160 = vmatpush1.bf16.msra.mxu0 %v1984
      %2161 = vmatprep.subr.bf16.mxu0 %v1983
      %2162 = vmatpush1.bf16.msra.mxu0 %v1982
      %2163 = vmatprep.subr.bf16.mxu0 %v1981
      %2164 = vmatpush1.bf16.msra.mxu0 %v1980
      %2165 = vmatprep.subr.bf16.mxu0 %v1979
      %2166 = vmatpush1.bf16.msra.mxu0 %v1978
      %2167 = vmatprep.subr.bf16.mxu0 %v1977
      %2168 = vmatpush1.bf16.msra.mxu0 %v1976
      %2169 = vmatprep.subr.bf16.mxu0 %v2007
      %2170 = vmatpush2.bf16.msra.mxu0 %v2006
      %2171 = vmatprep.subr.bf16.mxu0 %v2005
      %2172 = vmatpush2.bf16.msra.mxu0 %v2004
      %2173 = vmatprep.subr.bf16.mxu0 %v2003
      %2174 = vmatpush2.bf16.msra.mxu0 %v2002
      %2175 = vmatprep.subr.bf16.mxu0 %v2001
      %2176 = vmatpush2.bf16.msra.mxu0 %v2000
      %2177 = vmatprep.subr.bf16.mxu0 %v1999
      %2178 = vmatpush2.bf16.msra.mxu0 %v1998
      %2179 = vmatprep.subr.bf16.mxu0 %v1997
      %2180 = vmatpush2.bf16.msra.mxu0 %v1996
      %2181 = vmatprep.subr.bf16.mxu0 %v1995
      %2182 = vmatpush2.bf16.msra.mxu0 %v1994
      %2183 = vmatprep.subr.bf16.mxu0 %v1993
      %2184 = vmatpush2.bf16.msra.mxu0 %v1992
      %2185 = vmatprep.mubr.bf16.mxu0 %v357
      %2186 = vmatmul.mubr.bf16.gmra.mxu0 %v356
      %v2187 = vpop.f32.mrf.mxu0
      %v2188 = vadd.f32 %v2115, %v2187
      %v2189 = vpop.f32.mrf.mxu0
      %v2190 = vadd.f32 %v2117, %v2189
      %v2191 = vpop.f32.mrf.mxu0
      %v2192 = vadd.f32 %v2119, %v2191
      %v2193 = vpop.f32.mrf.mxu0
      %v2194 = vadd.f32 %v2121, %v2193
      %2195 = vmatprep.mubr.bf16.mxu0 %v362
      %2196 = vmatmul.mubr.bf16.gmra.mxu0 %v361
      %v2197 = vpop.f32.mrf.mxu0
      %v2198 = vadd.f32 %v2125, %v2197
      %v2199 = vpop.f32.mrf.mxu0
      %v2200 = vadd.f32 %v2127, %v2199
      %v2201 = vpop.f32.mrf.mxu0
      %v2202 = vadd.f32 %v2129, %v2201
      %v2203 = vpop.f32.mrf.mxu0
      %v2204 = vadd.f32 %v2131, %v2203
      %2205 = vmatprep.mubr.bf16.mxu0 %v367
      %2206 = vmatmul.mubr.bf16.gmra.mxu0 %v366
      %v2207 = vpop.f32.mrf.mxu0
      %v2208 = vadd.f32 %v2135, %v2207
      %v2209 = vpop.f32.mrf.mxu0
      %v2210 = vadd.f32 %v2137, %v2209
      %v2211 = vpop.f32.mrf.mxu0
      %v2212 = vadd.f32 %v2139, %v2211
      %v2213 = vpop.f32.mrf.mxu0
      %v2214 = vadd.f32 %v2141, %v2213
      %2215 = vmatprep.mubr.bf16.mxu0 %v372
      %2216 = vmatmul.mubr.bf16.gmra.mxu0 %v371
      %v2217 = vpop.f32.mrf.mxu0
      %v2218 = vadd.f32 %v2145, %v2217
      %v2219 = vpop.f32.mrf.mxu0
      %v2220 = vadd.f32 %v2147, %v2219
      %v2221 = vpop.f32.mrf.mxu0
      %v2222 = vadd.f32 %v2149, %v2221
      %v2223 = vpop.f32.mrf.mxu0
      %v2224 = vadd.f32 %v2151, %v2223
      %2225 = vdwg.mxu0
      %2226 = vmatprep.subr.bf16.mxu0 0
      %2227 = vmatpush1.bf16.msra.mxu0 0
      %2228 = vmatprep.subr.bf16.mxu0 0
      %2229 = vmatpush1.bf16.msra.mxu0 0
      %2230 = vmatprep.subr.bf16.mxu0 0
      %2231 = vmatpush1.bf16.msra.mxu0 0
      %2232 = vmatprep.subr.bf16.mxu0 0
      %2233 = vmatpush1.bf16.msra.mxu0 0
      %2234 = vmatprep.subr.bf16.mxu0 0
      %2235 = vmatpush1.bf16.msra.mxu0 0
      %2236 = vmatprep.subr.bf16.mxu0 0
      %2237 = vmatpush1.bf16.msra.mxu0 0
      %2238 = vmatprep.subr.bf16.mxu0 0
      %2239 = vmatpush1.bf16.msra.mxu0 0
      %2240 = vmatprep.subr.bf16.mxu0 %v2078
      %2241 = vmatpush1.bf16.msra.mxu0 %v2075
      %2242 = vmatprep.subr.bf16.mxu0 0
      %2243 = vmatpush2.bf16.msra.mxu0 0
      %2244 = vmatprep.subr.bf16.mxu0 0
      %2245 = vmatpush2.bf16.msra.mxu0 0
      %2246 = vmatprep.subr.bf16.mxu0 0
      %2247 = vmatpush2.bf16.msra.mxu0 0
      %2248 = vmatprep.subr.bf16.mxu0 0
      %2249 = vmatpush2.bf16.msra.mxu0 0
      %2250 = vmatprep.subr.bf16.mxu0 0
      %2251 = vmatpush2.bf16.msra.mxu0 0
      %2252 = vmatprep.subr.bf16.mxu0 0
      %2253 = vmatpush2.bf16.msra.mxu0 0
      %2254 = vmatprep.subr.bf16.mxu0 0
      %2255 = vmatpush2.bf16.msra.mxu0 0
      %2256 = vmatprep.subr.bf16.mxu0 0
      %2257 = vmatpush2.bf16.msra.mxu0 0
      %2258 = vmatprep.mubr.bf16.mxu0 0
      %2259 = vmatmul.mubr.bf16.gmra.mxu0 %v1178
      %v2260 = vpop.f32.mrf.mxu0
      %v2261 = vadd.f32 %v2188, %v2260
      %v2262 = vpop.f32.mrf.mxu0
      %v2263 = vadd.f32 %v2190, %v2262
      %v2264 = vpop.f32.mrf.mxu0
      %v2265 = vadd.f32 %v2192, %v2264
      %v2266 = vpop.f32.mrf.mxu0
      %v2267 = vadd.f32 %v2194, %v2266
      %2268 = vmatprep.mubr.bf16.mxu0 0
      %2269 = vmatmul.mubr.bf16.gmra.mxu0 %v1181
      %v2270 = vpop.f32.mrf.mxu0
      %v2271 = vadd.f32 %v2198, %v2270
      %v2272 = vpop.f32.mrf.mxu0
      %v2273 = vadd.f32 %v2200, %v2272
      %v2274 = vpop.f32.mrf.mxu0
      %v2275 = vadd.f32 %v2202, %v2274
      %v2276 = vpop.f32.mrf.mxu0
      %v2277 = vadd.f32 %v2204, %v2276
      %2278 = vmatprep.mubr.bf16.mxu0 0
      %2279 = vmatmul.mubr.bf16.gmra.mxu0 %v1184
      %v2280 = vpop.f32.mrf.mxu0
      %v2281 = vadd.f32 %v2208, %v2280
      %v2282 = vpop.f32.mrf.mxu0
      %v2283 = vadd.f32 %v2210, %v2282
      %v2284 = vpop.f32.mrf.mxu0
      %v2285 = vadd.f32 %v2212, %v2284
      %v2286 = vpop.f32.mrf.mxu0
      %v2287 = vadd.f32 %v2214, %v2286
      %2288 = vmatprep.mubr.bf16.mxu0 0
      %2289 = vmatmul.mubr.bf16.gmra.mxu0 %v1187
      %v2290 = vpop.f32.mrf.mxu0
      %v2291 = vadd.f32 %v2218, %v2290
      %v2292 = vpop.f32.mrf.mxu0
      %v2293 = vadd.f32 %v2220, %v2292
      %v2294 = vpop.f32.mrf.mxu0
      %v2295 = vadd.f32 %v2222, %v2294
      %v2296 = vpop.f32.mrf.mxu0
      %v2297 = vadd.f32 %v2224, %v2296
      %2298 = vdwg.mxu0
      %v2299 = vmax.f32 %v2261, 0.0
      %v2300 = vmax.f32 %v2263, 0.0
      %v2301 = vmax.f32 %v2265, 0.0
      %v2302 = vmax.f32 %v2267, 0.0
      %v2303 = vmax.f32 %v2271, 0.0
      %v2304 = vmax.f32 %v2273, 0.0
      %v2305 = vmax.f32 %v2275, 0.0
      %v2306 = vmax.f32 %v2277, 0.0
      %v2307 = vmax.f32 %v2281, 0.0
      %v2308 = vmax.f32 %v2283, 0.0
      %v2309 = vmax.f32 %v2285, 0.0
      %v2310 = vmax.f32 %v2287, 0.0
      %v2311 = vmax.f32 %v2291, 0.0
      %v2312 = vmax.f32 %v2293, 0.0
      %v2313 = vmax.f32 %v2295, 0.0
      %v2314 = vmax.f32 %v2297, 0.0
      %v2315 = vpack.c.bf16 %v2301, %v2299
      %v2316 = vpack.c.bf16 %v2302, %v2300
      %v2317 = vpack.c.bf16 %v2305, %v2303
      %v2318 = vpack.c.bf16 %v2306, %v2304
      %v2319 = vpack.c.bf16 %v2309, %v2307
      %v2320 = vpack.c.bf16 %v2310, %v2308
      %v2321 = vpack.c.bf16 %v2313, %v2311
      %v2322 = vpack.c.bf16 %v2314, %v2312
      %v2323 = vld [vmem:[%s5] sm:$0xff]
      %v2324 = vld [vmem:[%s5 + $0x8] sm:$0xff]
      %v2325 = vld [vmem:[%s5 + $0x10] sm:$0xff]
      %v2326 = vld [vmem:[%s5 + $0x18] sm:$0xff]
      %v2327 = vld [vmem:[%s5 + $0x20] sm:$0xff]
      %v2328 = vld [vmem:[%s5 + $0x28] sm:$0xff]
      %v2329 = vld [vmem:[%s5 + $0x30] sm:$0xff]
      %v2330 = vld [vmem:[%s5 + $0x38] sm:$0xff]
      %v2331 = vld [vmem:[%s5 + $0x40] sm:$0xff]
      %v2332 = vld [vmem:[%s5 + $0x48] sm:$0xff]
      %v2333 = vld [vmem:[%s5 + $0x50] sm:$0xff]
      %v2334 = vld [vmem:[%s5 + $0x58] sm:$0xff]
      %v2335 = vld [vmem:[%s5 + $0x60] sm:$0xff]
      %v2336 = vld [vmem:[%s5 + $0x68] sm:$0xff]
      %v2337 = vld [vmem:[%s5 + $0x70] sm:$0xff]
      %v2338 = vld [vmem:[%s5 + $0x78] sm:$0xff]
      %v2339 = vld [vmem:[%s5 + $0x80] sm:$0xff]
      %v2340 = vld [vmem:[%s5 + $0x88] sm:$0xff]
      %v2341 = vld [vmem:[%s5 + $0x90] sm:$0xff]
      %v2342 = vld [vmem:[%s5 + $0x98] sm:$0xff]
      %v2343 = vld [vmem:[%s5 + $0xa0] sm:$0xff]
      %v2344 = vld [vmem:[%s5 + $0xa8] sm:$0xff]
      %v2345 = vld [vmem:[%s5 + $0xb0] sm:$0xff]
      %v2346 = vld [vmem:[%s5 + $0xb8] sm:$0xff]
      %v2347 = vld [vmem:[%s5 + $0xc0] sm:$0xff]
      %v2348 = vld [vmem:[%s5 + $0xc8] sm:$0xff]
      %v2349 = vld [vmem:[%s5 + $0xd0] sm:$0xff]
      %v2350 = vld [vmem:[%s5 + $0xd8] sm:$0xff]
      %v2351 = vld [vmem:[%s5 + $0xe0] sm:$0xff]
      %v2352 = vld [vmem:[%s5 + $0xe8] sm:$0xff]
      %v2353 = vld [vmem:[%s5 + $0xf0] sm:$0xff]
      %v2354 = vld [vmem:[%s5 + $0xf8] sm:$0xff]
      %v2355 = vld [vmem:[%s5 + $0x100] sm:$0xff]
      %v2356 = vld [vmem:[%s5 + $0x108] sm:$0xff]
      %v2357 = vld [vmem:[%s5 + $0x110] sm:$0xff]
      %v2358 = vld [vmem:[%s5 + $0x118] sm:$0xff]
      %v2359 = vld [vmem:[%s5 + $0x120] sm:$0xff]
      %v2360 = vld [vmem:[%s5 + $0x128] sm:$0xff]
      %v2361 = vld [vmem:[%s5 + $0x130] sm:$0xff]
      %v2362 = vld [vmem:[%s5 + $0x138] sm:$0xff]
      %v2363 = vld [vmem:[%s5 + $0x140] sm:$0xff]
      %v2364 = vld [vmem:[%s5 + $0x148] sm:$0xff]
      %v2365 = vld [vmem:[%s5 + $0x150] sm:$0xff]
      %v2366 = vld [vmem:[%s5 + $0x158] sm:$0xff]
      %v2367 = vld [vmem:[%s5 + $0x160] sm:$0xff]
      %v2368 = vld [vmem:[%s5 + $0x168] sm:$0xff]
      %v2369 = vld [vmem:[%s5 + $0x170] sm:$0xff]
      %v2370 = vld [vmem:[%s5 + $0x178] sm:$0xff]
      %v2371 = vld [vmem:[%s5 + $0x180] sm:$0xff]
      %v2372 = vld [vmem:[%s5 + $0x188] sm:$0xff]
      %v2373 = vld [vmem:[%s5 + $0x190] sm:$0xff]
      %v2374 = vld [vmem:[%s5 + $0x198] sm:$0xff]
      %v2375 = vld [vmem:[%s5 + $0x1a0] sm:$0xff]
      %v2376 = vld [vmem:[%s5 + $0x1a8] sm:$0xff]
      %v2377 = vld [vmem:[%s5 + $0x1b0] sm:$0xff]
      %v2378 = vld [vmem:[%s5 + $0x1b8] sm:$0xff]
      %v2379 = vld [vmem:[%s5 + $0x1c0] sm:$0xff]
      %v2380 = vld [vmem:[%s5 + $0x1c8] sm:$0xff]
      %v2381 = vld [vmem:[%s5 + $0x1d0] sm:$0xff]
      %v2382 = vld [vmem:[%s5 + $0x1d8] sm:$0xff]
      %v2383 = vld [vmem:[%s5 + $0x1e0] sm:$0xff]
      %v2384 = vld [vmem:[%s5 + $0x1e8] sm:$0xff]
      %v2385 = vld [vmem:[%s5 + $0x1f0] sm:$0xff]
      %v2386 = vld [vmem:[%s5 + $0x1f8] sm:$0xff]
      %v2387 = vld [vmem:[%s6] sm:$0xf]
      %v2389 = vlaneseq
      %v2390 = vshrl.u32 %v2389, 7
      %v2391 = vsub.s32 0, %v2390
      %v2392 = vrot.slane %v2387, %v2391
      %v2393 = vlaneseq
      %v2394 = vshrl.u32 %v2393, 7
      %v2395 = vsub.s32 1, %v2394
      %v2396 = vrot.slane %v2387, %v2395
      %v2397 = vlaneseq
      %v2398 = vshrl.u32 %v2397, 7
      %v2399 = vsub.s32 2, %v2398
      %v2400 = vrot.slane %v2387, %v2399
      %v2401 = vlaneseq
      %v2402 = vshrl.u32 %v2401, 7
      %v2403 = vsub.s32 3, %v2402
      %v2404 = vrot.slane %v2387, %v2403
      %v2473 = vunpack.c.l.b16 %v2323
      %v2474 = vunpack.c.h.b16 %v2323
      %v2475 = vunpack.c.l.b16 %v2324
      %v2476 = vunpack.c.h.b16 %v2324
      %v2477 = vunpack.c.l.b16 %v2325
      %v2478 = vunpack.c.h.b16 %v2325
      %v2479 = vunpack.c.l.b16 %v2326
      %v2480 = vunpack.c.h.b16 %v2326
      %v2481 = vunpack.c.l.b16 %v2327
      %v2482 = vunpack.c.h.b16 %v2327
      %v2483 = vunpack.c.l.b16 %v2328
      %v2484 = vunpack.c.h.b16 %v2328
      %v2485 = vunpack.c.l.b16 %v2329
      %v2486 = vunpack.c.h.b16 %v2329
      %v2487 = vunpack.c.l.b16 %v2330
      %v2488 = vunpack.c.h.b16 %v2330
      %v2489 = vunpack.c.l.b16 %v2331
      %v2490 = vunpack.c.h.b16 %v2331
      %v2491 = vunpack.c.l.b16 %v2332
      %v2492 = vunpack.c.h.b16 %v2332
      %v2493 = vunpack.c.l.b16 %v2333
      %v2494 = vunpack.c.h.b16 %v2333
      %v2495 = vunpack.c.l.b16 %v2334
      %v2496 = vunpack.c.h.b16 %v2334
      %v2497 = vunpack.c.l.b16 %v2335
      %v2498 = vunpack.c.h.b16 %v2335
      %v2499 = vunpack.c.l.b16 %v2336
      %v2500 = vunpack.c.h.b16 %v2336
      %v2501 = vunpack.c.l.b16 %v2337
      %v2502 = vunpack.c.h.b16 %v2337
      %v2503 = vunpack.c.l.b16 %v2338
      %v2504 = vunpack.c.h.b16 %v2338
      %v2505 = vunpack.c.l.b16 %v2339
      %v2506 = vunpack.c.h.b16 %v2339
      %v2507 = vunpack.c.l.b16 %v2340
      %v2508 = vunpack.c.h.b16 %v2340
      %v2509 = vunpack.c.l.b16 %v2341
      %v2510 = vunpack.c.h.b16 %v2341
      %v2511 = vunpack.c.l.b16 %v2342
      %v2512 = vunpack.c.h.b16 %v2342
      %v2513 = vunpack.c.l.b16 %v2343
      %v2514 = vunpack.c.h.b16 %v2343
      %v2515 = vunpack.c.l.b16 %v2344
      %v2516 = vunpack.c.h.b16 %v2344
      %v2517 = vunpack.c.l.b16 %v2345
      %v2518 = vunpack.c.h.b16 %v2345
      %v2519 = vunpack.c.l.b16 %v2346
      %v2520 = vunpack.c.h.b16 %v2346
      %v2521 = vunpack.c.l.b16 %v2347
      %v2522 = vunpack.c.h.b16 %v2347
      %v2523 = vunpack.c.l.b16 %v2348
      %v2524 = vunpack.c.h.b16 %v2348
      %v2525 = vunpack.c.l.b16 %v2349
      %v2526 = vunpack.c.h.b16 %v2349
      %v2527 = vunpack.c.l.b16 %v2350
      %v2528 = vunpack.c.h.b16 %v2350
      %v2529 = vunpack.c.l.b16 %v2351
      %v2530 = vunpack.c.h.b16 %v2351
      %v2531 = vunpack.c.l.b16 %v2352
      %v2532 = vunpack.c.h.b16 %v2352
      %v2533 = vunpack.c.l.b16 %v2353
      %v2534 = vunpack.c.h.b16 %v2353
      %v2535 = vunpack.c.l.b16 %v2354
      %v2536 = vunpack.c.h.b16 %v2354
      %v2537 = vunpack.c.l.b16 %v2355
      %v2538 = vunpack.c.h.b16 %v2355
      %v2539 = vunpack.c.l.b16 %v2356
      %v2540 = vunpack.c.h.b16 %v2356
      %v2541 = vunpack.c.l.b16 %v2357
      %v2542 = vunpack.c.h.b16 %v2357
      %v2543 = vunpack.c.l.b16 %v2358
      %v2544 = vunpack.c.h.b16 %v2358
      %v2545 = vunpack.c.l.b16 %v2359
      %v2546 = vunpack.c.h.b16 %v2359
      %v2547 = vunpack.c.l.b16 %v2360
      %v2548 = vunpack.c.h.b16 %v2360
      %v2549 = vunpack.c.l.b16 %v2361
      %v2550 = vunpack.c.h.b16 %v2361
      %v2551 = vunpack.c.l.b16 %v2362
      %v2552 = vunpack.c.h.b16 %v2362
      %v2553 = vunpack.c.l.b16 %v2363
      %v2554 = vunpack.c.h.b16 %v2363
      %v2555 = vunpack.c.l.b16 %v2364
      %v2556 = vunpack.c.h.b16 %v2364
      %v2557 = vunpack.c.l.b16 %v2365
      %v2558 = vunpack.c.h.b16 %v2365
      %v2559 = vunpack.c.l.b16 %v2366
      %v2560 = vunpack.c.h.b16 %v2366
      %v2561 = vunpack.c.l.b16 %v2367
      %v2562 = vunpack.c.h.b16 %v2367
      %v2563 = vunpack.c.l.b16 %v2368
      %v2564 = vunpack.c.h.b16 %v2368
      %v2565 = vunpack.c.l.b16 %v2369
      %v2566 = vunpack.c.h.b16 %v2369
      %v2567 = vunpack.c.l.b16 %v2370
      %v2568 = vunpack.c.h.b16 %v2370
      %v2569 = vunpack.c.l.b16 %v2371
      %v2570 = vunpack.c.h.b16 %v2371
      %v2571 = vunpack.c.l.b16 %v2372
      %v2572 = vunpack.c.h.b16 %v2372
      %v2573 = vunpack.c.l.b16 %v2373
      %v2574 = vunpack.c.h.b16 %v2373
      %v2575 = vunpack.c.l.b16 %v2374
      %v2576 = vunpack.c.h.b16 %v2374
      %v2577 = vunpack.c.l.b16 %v2375
      %v2578 = vunpack.c.h.b16 %v2375
      %v2579 = vunpack.c.l.b16 %v2376
      %v2580 = vunpack.c.h.b16 %v2376
      %v2581 = vunpack.c.l.b16 %v2377
      %v2582 = vunpack.c.h.b16 %v2377
      %v2583 = vunpack.c.l.b16 %v2378
      %v2584 = vunpack.c.h.b16 %v2378
      %v2585 = vunpack.c.l.b16 %v2379
      %v2586 = vunpack.c.h.b16 %v2379
      %v2587 = vunpack.c.l.b16 %v2380
      %v2588 = vunpack.c.h.b16 %v2380
      %v2589 = vunpack.c.l.b16 %v2381
      %v2590 = vunpack.c.h.b16 %v2381
      %v2591 = vunpack.c.l.b16 %v2382
      %v2592 = vunpack.c.h.b16 %v2382
      %v2593 = vunpack.c.l.b16 %v2383
      %v2594 = vunpack.c.h.b16 %v2383
      %v2595 = vunpack.c.l.b16 %v2384
      %v2596 = vunpack.c.h.b16 %v2384
      %v2597 = vunpack.c.l.b16 %v2385
      %v2598 = vunpack.c.h.b16 %v2385
      %v2599 = vunpack.c.l.b16 %v2386
      %v2600 = vunpack.c.h.b16 %v2386
      %v2601 = vpack.c.b16 %v2477, %v2473
      %v2602 = vpack.c.b16 %v2478, %v2474
      %v2603 = vpack.c.b16 %v2479, %v2475
      %v2604 = vpack.c.b16 %v2480, %v2476
      %v2605 = vpack.c.b16 %v2485, %v2481
      %v2606 = vpack.c.b16 %v2486, %v2482
      %v2607 = vpack.c.b16 %v2487, %v2483
      %v2608 = vpack.c.b16 %v2488, %v2484
      %v2609 = vpack.c.b16 %v2493, %v2489
      %v2610 = vpack.c.b16 %v2494, %v2490
      %v2611 = vpack.c.b16 %v2495, %v2491
      %v2612 = vpack.c.b16 %v2496, %v2492
      %v2613 = vpack.c.b16 %v2501, %v2497
      %v2614 = vpack.c.b16 %v2502, %v2498
      %v2615 = vpack.c.b16 %v2503, %v2499
      %v2616 = vpack.c.b16 %v2504, %v2500
      %v2617 = vpack.c.b16 %v2509, %v2505
      %v2618 = vpack.c.b16 %v2510, %v2506
      %v2619 = vpack.c.b16 %v2511, %v2507
      %v2620 = vpack.c.b16 %v2512, %v2508
      %v2621 = vpack.c.b16 %v2517, %v2513
      %v2622 = vpack.c.b16 %v2518, %v2514
      %v2623 = vpack.c.b16 %v2519, %v2515
      %v2624 = vpack.c.b16 %v2520, %v2516
      %v2625 = vpack.c.b16 %v2525, %v2521
      %v2626 = vpack.c.b16 %v2526, %v2522
      %v2627 = vpack.c.b16 %v2527, %v2523
      %v2628 = vpack.c.b16 %v2528, %v2524
      %v2629 = vpack.c.b16 %v2533, %v2529
      %v2630 = vpack.c.b16 %v2534, %v2530
      %v2631 = vpack.c.b16 %v2535, %v2531
      %v2632 = vpack.c.b16 %v2536, %v2532
      %v2633 = vpack.c.b16 %v2541, %v2537
      %v2634 = vpack.c.b16 %v2542, %v2538
      %v2635 = vpack.c.b16 %v2543, %v2539
      %v2636 = vpack.c.b16 %v2544, %v2540
      %v2637 = vpack.c.b16 %v2549, %v2545
      %v2638 = vpack.c.b16 %v2550, %v2546
      %v2639 = vpack.c.b16 %v2551, %v2547
      %v2640 = vpack.c.b16 %v2552, %v2548
      %v2641 = vpack.c.b16 %v2557, %v2553
      %v2642 = vpack.c.b16 %v2558, %v2554
      %v2643 = vpack.c.b16 %v2559, %v2555
      %v2644 = vpack.c.b16 %v2560, %v2556
      %v2645 = vpack.c.b16 %v2565, %v2561
      %v2646 = vpack.c.b16 %v2566, %v2562
      %v2647 = vpack.c.b16 %v2567, %v2563
      %v2648 = vpack.c.b16 %v2568, %v2564
      %v2649 = vpack.c.b16 %v2573, %v2569
      %v2650 = vpack.c.b16 %v2574, %v2570
      %v2651 = vpack.c.b16 %v2575, %v2571
      %v2652 = vpack.c.b16 %v2576, %v2572
      %v2653 = vpack.c.b16 %v2581, %v2577
      %v2654 = vpack.c.b16 %v2582, %v2578
      %v2655 = vpack.c.b16 %v2583, %v2579
      %v2656 = vpack.c.b16 %v2584, %v2580
      %v2657 = vpack.c.b16 %v2589, %v2585
      %v2658 = vpack.c.b16 %v2590, %v2586
      %v2659 = vpack.c.b16 %v2591, %v2587
      %v2660 = vpack.c.b16 %v2592, %v2588
      %v2661 = vpack.c.b16 %v2597, %v2593
      %v2662 = vpack.c.b16 %v2598, %v2594
      %v2663 = vpack.c.b16 %v2599, %v2595
      %v2664 = vpack.c.b16 %v2600, %v2596
      %2729 = vmatprep.subr.bf16.mxu0 %v2630
      %2730 = vmatpush1.bf16.msra.mxu0 %v2629
      %2731 = vmatprep.subr.bf16.mxu0 %v2626
      %2732 = vmatpush1.bf16.msra.mxu0 %v2625
      %2733 = vmatprep.subr.bf16.mxu0 %v2622
      %2734 = vmatpush1.bf16.msra.mxu0 %v2621
      %2735 = vmatprep.subr.bf16.mxu0 %v2618
      %2736 = vmatpush1.bf16.msra.mxu0 %v2617
      %2737 = vmatprep.subr.bf16.mxu0 %v2614
      %2738 = vmatpush1.bf16.msra.mxu0 %v2613
      %2739 = vmatprep.subr.bf16.mxu0 %v2610
      %2740 = vmatpush1.bf16.msra.mxu0 %v2609
      %2741 = vmatprep.subr.bf16.mxu0 %v2606
      %2742 = vmatpush1.bf16.msra.mxu0 %v2605
      %2743 = vmatprep.subr.bf16.mxu0 %v2602
      %2744 = vmatpush1.bf16.msra.mxu0 %v2601
      %2745 = vmatprep.subr.bf16.mxu0 %v2662
      %2746 = vmatpush2.bf16.msra.mxu0 %v2661
      %2747 = vmatprep.subr.bf16.mxu0 %v2658
      %2748 = vmatpush2.bf16.msra.mxu0 %v2657
      %2749 = vmatprep.subr.bf16.mxu0 %v2654
      %2750 = vmatpush2.bf16.msra.mxu0 %v2653
      %2751 = vmatprep.subr.bf16.mxu0 %v2650
      %2752 = vmatpush2.bf16.msra.mxu0 %v2649
      %2753 = vmatprep.subr.bf16.mxu0 %v2646
      %2754 = vmatpush2.bf16.msra.mxu0 %v2645
      %2755 = vmatprep.subr.bf16.mxu0 %v2642
      %2756 = vmatpush2.bf16.msra.mxu0 %v2641
      %2757 = vmatprep.subr.bf16.mxu0 %v2638
      %2758 = vmatpush2.bf16.msra.mxu0 %v2637
      %2759 = vmatprep.subr.bf16.mxu0 %v2634
      %2760 = vmatpush2.bf16.msra.mxu0 %v2633
      %2761 = vmatprep.mubr.bf16.mxu0 %v2316
      %2762 = vmatmul.mubr.bf16.gmra.mxu0 %v2315
      %v2763 = vpop.f32.mrf.mxu0
      %v2764 = vadd.f32 %v2392, %v2763
      %v2765 = vpop.f32.mrf.mxu0
      %v2766 = vadd.f32 %v2396, %v2765
      %v2767 = vpop.f32.mrf.mxu0
      %v2768 = vadd.f32 %v2392, %v2767
      %v2769 = vpop.f32.mrf.mxu0
      %v2770 = vadd.f32 %v2396, %v2769
      %2771 = vmatprep.mubr.bf16.mxu0 %v2318
      %2772 = vmatmul.mubr.bf16.gmra.mxu0 %v2317
      %v2773 = vpop.f32.mrf.mxu0
      %v2774 = vadd.f32 %v2392, %v2773
      %v2775 = vpop.f32.mrf.mxu0
      %v2776 = vadd.f32 %v2396, %v2775
      %v2777 = vpop.f32.mrf.mxu0
      %v2778 = vadd.f32 %v2392, %v2777
      %v2779 = vpop.f32.mrf.mxu0
      %v2780 = vadd.f32 %v2396, %v2779
      %2781 = vmatprep.mubr.bf16.mxu0 %v2320
      %2782 = vmatmul.mubr.bf16.gmra.mxu0 %v2319
      %v2783 = vpop.f32.mrf.mxu0
      %v2784 = vadd.f32 %v2392, %v2783
      %v2785 = vpop.f32.mrf.mxu0
      %v2786 = vadd.f32 %v2396, %v2785
      %v2787 = vpop.f32.mrf.mxu0
      %v2788 = vadd.f32 %v2392, %v2787
      %v2789 = vpop.f32.mrf.mxu0
      %v2790 = vadd.f32 %v2396, %v2789
      %2791 = vmatprep.mubr.bf16.mxu0 %v2322
      %2792 = vmatmul.mubr.bf16.gmra.mxu0 %v2321
      %v2793 = vpop.f32.mrf.mxu0
      %v2794 = vadd.f32 %v2392, %v2793
      %v2795 = vpop.f32.mrf.mxu0
      %v2796 = vadd.f32 %v2396, %v2795
      %v2797 = vpop.f32.mrf.mxu0
      %v2798 = vadd.f32 %v2392, %v2797
      %v2799 = vpop.f32.mrf.mxu0
      %v2800 = vadd.f32 %v2396, %v2799
      %2801 = vdwg.mxu0
      %2802 = vmatprep.subr.bf16.mxu0 %v2632
      %2803 = vmatpush1.bf16.msra.mxu0 %v2631
      %2804 = vmatprep.subr.bf16.mxu0 %v2628
      %2805 = vmatpush1.bf16.msra.mxu0 %v2627
      %2806 = vmatprep.subr.bf16.mxu0 %v2624
      %2807 = vmatpush1.bf16.msra.mxu0 %v2623
      %2808 = vmatprep.subr.bf16.mxu0 %v2620
      %2809 = vmatpush1.bf16.msra.mxu0 %v2619
      %2810 = vmatprep.subr.bf16.mxu0 %v2616
      %2811 = vmatpush1.bf16.msra.mxu0 %v2615
      %2812 = vmatprep.subr.bf16.mxu0 %v2612
      %2813 = vmatpush1.bf16.msra.mxu0 %v2611
      %2814 = vmatprep.subr.bf16.mxu0 %v2608
      %2815 = vmatpush1.bf16.msra.mxu0 %v2607
      %2816 = vmatprep.subr.bf16.mxu0 %v2604
      %2817 = vmatpush1.bf16.msra.mxu0 %v2603
      %2818 = vmatprep.subr.bf16.mxu0 %v2664
      %2819 = vmatpush2.bf16.msra.mxu0 %v2663
      %2820 = vmatprep.subr.bf16.mxu0 %v2660
      %2821 = vmatpush2.bf16.msra.mxu0 %v2659
      %2822 = vmatprep.subr.bf16.mxu0 %v2656
      %2823 = vmatpush2.bf16.msra.mxu0 %v2655
      %2824 = vmatprep.subr.bf16.mxu0 %v2652
      %2825 = vmatpush2.bf16.msra.mxu0 %v2651
      %2826 = vmatprep.subr.bf16.mxu0 %v2648
      %2827 = vmatpush2.bf16.msra.mxu0 %v2647
      %2828 = vmatprep.subr.bf16.mxu0 %v2644
      %2829 = vmatpush2.bf16.msra.mxu0 %v2643
      %2830 = vmatprep.subr.bf16.mxu0 %v2640
      %2831 = vmatpush2.bf16.msra.mxu0 %v2639
      %2832 = vmatprep.subr.bf16.mxu0 %v2636
      %2833 = vmatpush2.bf16.msra.mxu0 %v2635
      %2834 = vmatprep.mubr.bf16.mxu0 %v2316
      %2835 = vmatmul.mubr.bf16.gmra.mxu0 %v2315
      %v2836 = vpop.f32.mrf.mxu0
      %v2837 = vadd.f32 %v2400, %v2836
      %v2838 = vpop.f32.mrf.mxu0
      %v2839 = vadd.f32 %v2404, %v2838
      %v2840 = vpop.f32.mrf.mxu0
      %v2841 = vadd.f32 %v2400, %v2840
      %v2842 = vpop.f32.mrf.mxu0
      %v2843 = vadd.f32 %v2404, %v2842
      %2844 = vmatprep.mubr.bf16.mxu0 %v2318
      %2845 = vmatmul.mubr.bf16.gmra.mxu0 %v2317
      %v2846 = vpop.f32.mrf.mxu0
      %v2847 = vadd.f32 %v2400, %v2846
      %v2848 = vpop.f32.mrf.mxu0
      %v2849 = vadd.f32 %v2404, %v2848
      %v2850 = vpop.f32.mrf.mxu0
      %v2851 = vadd.f32 %v2400, %v2850
      %v2852 = vpop.f32.mrf.mxu0
      %v2853 = vadd.f32 %v2404, %v2852
      %2854 = vmatprep.mubr.bf16.mxu0 %v2320
      %2855 = vmatmul.mubr.bf16.gmra.mxu0 %v2319
      %v2856 = vpop.f32.mrf.mxu0
      %v2857 = vadd.f32 %v2400, %v2856
      %v2858 = vpop.f32.mrf.mxu0
      %v2859 = vadd.f32 %v2404, %v2858
      %v2860 = vpop.f32.mrf.mxu0
      %v2861 = vadd.f32 %v2400, %v2860
      %v2862 = vpop.f32.mrf.mxu0
      %v2863 = vadd.f32 %v2404, %v2862
      %2864 = vmatprep.mubr.bf16.mxu0 %v2322
      %2865 = vmatmul.mubr.bf16.gmra.mxu0 %v2321
      %v2866 = vpop.f32.mrf.mxu0
      %v2867 = vadd.f32 %v2400, %v2866
      %v2868 = vpop.f32.mrf.mxu0
      %v2869 = vadd.f32 %v2404, %v2868
      %v2870 = vpop.f32.mrf.mxu0
      %v2871 = vadd.f32 %v2400, %v2870
      %v2872 = vpop.f32.mrf.mxu0
      %v2873 = vadd.f32 %v2404, %v2872
      %2874 = vdwg.mxu0
      %v2875 = vmax.f32 %v2764, 0.0
      %v2876 = vmax.f32 %v2766, 0.0
      %v2877 = vmax.f32 %v2837, 0.0
      %v2878 = vmax.f32 %v2839, 0.0
      %v2879 = vmax.f32 %v2768, 0.0
      %v2880 = vmax.f32 %v2770, 0.0
      %v2881 = vmax.f32 %v2841, 0.0
      %v2882 = vmax.f32 %v2843, 0.0
      %v2883 = vmax.f32 %v2774, 0.0
      %v2884 = vmax.f32 %v2776, 0.0
      %v2885 = vmax.f32 %v2847, 0.0
      %v2886 = vmax.f32 %v2849, 0.0
      %v2887 = vmax.f32 %v2778, 0.0
      %v2888 = vmax.f32 %v2780, 0.0
      %v2889 = vmax.f32 %v2851, 0.0
      %v2890 = vmax.f32 %v2853, 0.0
      %v2891 = vmax.f32 %v2784, 0.0
      %v2892 = vmax.f32 %v2786, 0.0
      %v2893 = vmax.f32 %v2857, 0.0
      %v2894 = vmax.f32 %v2859, 0.0
      %v2895 = vmax.f32 %v2788, 0.0
      %v2896 = vmax.f32 %v2790, 0.0
      %v2897 = vmax.f32 %v2861, 0.0
      %v2898 = vmax.f32 %v2863, 0.0
      %v2899 = vmax.f32 %v2794, 0.0
      %v2900 = vmax.f32 %v2796, 0.0
      %v2901 = vmax.f32 %v2867, 0.0
      %v2902 = vmax.f32 %v2869, 0.0
      %v2903 = vmax.f32 %v2798, 0.0
      %v2904 = vmax.f32 %v2800, 0.0
      %v2905 = vmax.f32 %v2871, 0.0
      %v2906 = vmax.f32 %v2873, 0.0
      %v2907 = vmul.f32 %v1640, %v2875
      %v2908 = vmul.f32 %v1641, %v2876
      %v2909 = vmul.f32 %v1642, %v2877
      %v2910 = vmul.f32 %v1643, %v2878
      %v2911 = vmul.f32 %v1644, %v2879
      %v2912 = vmul.f32 %v1645, %v2880
      %v2913 = vmul.f32 %v1646, %v2881
      %v2914 = vmul.f32 %v1647, %v2882
      %v2915 = vmul.f32 %v1648, %v2883
      %v2916 = vmul.f32 %v1649, %v2884
      %v2917 = vmul.f32 %v1650, %v2885
      %v2918 = vmul.f32 %v1651, %v2886
      %v2919 = vmul.f32 %v1652, %v2887
      %v2920 = vmul.f32 %v1653, %v2888
      %v2921 = vmul.f32 %v1654, %v2889
      %v2922 = vmul.f32 %v1655, %v2890
      %v2923 = vmul.f32 %v1656, %v2891
      %v2924 = vmul.f32 %v1657, %v2892
      %v2925 = vmul.f32 %v1658, %v2893
      %v2926 = vmul.f32 %v1659, %v2894
      %v2927 = vmul.f32 %v1660, %v2895
      %v2928 = vmul.f32 %v1661, %v2896
      %v2929 = vmul.f32 %v1662, %v2897
      %v2930 = vmul.f32 %v1663, %v2898
      %v2931 = vmul.f32 %v1664, %v2899
      %v2932 = vmul.f32 %v1665, %v2900
      %v2933 = vmul.f32 %v1666, %v2901
      %v2934 = vmul.f32 %v1667, %v2902
      %v2935 = vmul.f32 %v1668, %v2903
      %v2936 = vmul.f32 %v1669, %v2904
      %v2937 = vmul.f32 %v1670, %v2905
      %v2938 = vmul.f32 %v1671, %v2906
      %p2939 = scmp.eq.s32.totalorder %s23, 0
      // Predicated region
      $region49: #{_lambda_.8} parent=47 // pred_check
        %p2940 = pneg %p2939
      $region50: #{_lambda_.8} parent=47 // pred_check_branch
        %2942 = sbr.rel (%p2940) target = $region52
      $region51: #{_lambda_.8} parent=47 // pred_region
        %2943 = vst [vmem:[%s311] sm:$0xff] %v2907
        %2944 = vst [vmem:[%s311 + $0x8] sm:$0xff] %v2908
        %2945 = vst [vmem:[%s311 + $0x10] sm:$0xff] %v2909
        %2946 = vst [vmem:[%s311 + $0x18] sm:$0xff] %v2910
        %2947 = vst [vmem:[%s311 + $0x20] sm:$0xff] %v2911
        %2948 = vst [vmem:[%s311 + $0x28] sm:$0xff] %v2912
        %2949 = vst [vmem:[%s311 + $0x30] sm:$0xff] %v2913
        %2950 = vst [vmem:[%s311 + $0x38] sm:$0xff] %v2914
        %2951 = vst [vmem:[%s311 + $0x40] sm:$0xff] %v2915
        %2952 = vst [vmem:[%s311 + $0x48] sm:$0xff] %v2916
        %2953 = vst [vmem:[%s311 + $0x50] sm:$0xff] %v2917
        %2954 = vst [vmem:[%s311 + $0x58] sm:$0xff] %v2918
        %2955 = vst [vmem:[%s311 + $0x60] sm:$0xff] %v2919
        %2956 = vst [vmem:[%s311 + $0x68] sm:$0xff] %v2920
        %2957 = vst [vmem:[%s311 + $0x70] sm:$0xff] %v2921
        %2958 = vst [vmem:[%s311 + $0x78] sm:$0xff] %v2922
        %2959 = vst [vmem:[%s311 + $0x80] sm:$0xff] %v2923
        %2960 = vst [vmem:[%s311 + $0x88] sm:$0xff] %v2924
        %2961 = vst [vmem:[%s311 + $0x90] sm:$0xff] %v2925
        %2962 = vst [vmem:[%s311 + $0x98] sm:$0xff] %v2926
        %2963 = vst [vmem:[%s311 + $0xa0] sm:$0xff] %v2927
        %2964 = vst [vmem:[%s311 + $0xa8] sm:$0xff] %v2928
        %2965 = vst [vmem:[%s311 + $0xb0] sm:$0xff] %v2929
        %2966 = vst [vmem:[%s311 + $0xb8] sm:$0xff] %v2930
        %2967 = vst [vmem:[%s311 + $0xc0] sm:$0xff] %v2931
        %2968 = vst [vmem:[%s311 + $0xc8] sm:$0xff] %v2932
        %2969 = vst [vmem:[%s311 + $0xd0] sm:$0xff] %v2933
        %2970 = vst [vmem:[%s311 + $0xd8] sm:$0xff] %v2934
        %2971 = vst [vmem:[%s311 + $0xe0] sm:$0xff] %v2935
        %2972 = vst [vmem:[%s311 + $0xe8] sm:$0xff] %v2936
        %2973 = vst [vmem:[%s311 + $0xf0] sm:$0xff] %v2937
        %2974 = vst [vmem:[%s311 + $0xf8] sm:$0xff] %v2938
      $region52: #{_lambda_.8} parent=47 // pred_fallthru
        _
      %p2975 = scmp.gt.s32.totalorder %s23, 0
      // Predicated region
      $region53: #{_lambda_.8} parent=47 // pred_check
        %p2976 = pneg %p2975
      $region54: #{_lambda_.8} parent=47 // pred_check_branch
        %2978 = sbr.rel (%p2976) target = $region56
      $region55: #{_lambda_.8} parent=47 // pred_region
        %v2979 = vld [vmem:[%s311] sm:$0xff]
        %v2980 = vld [vmem:[%s311 + $0x8] sm:$0xff]
        %v2981 = vld [vmem:[%s311 + $0x10] sm:$0xff]
        %v2982 = vld [vmem:[%s311 + $0x18] sm:$0xff]
        %v2983 = vld [vmem:[%s311 + $0x20] sm:$0xff]
        %v2984 = vld [vmem:[%s311 + $0x28] sm:$0xff]
        %v2985 = vld [vmem:[%s311 + $0x30] sm:$0xff]
        %v2986 = vld [vmem:[%s311 + $0x38] sm:$0xff]
        %v2987 = vld [vmem:[%s311 + $0x40] sm:$0xff]
        %v2988 = vld [vmem:[%s311 + $0x48] sm:$0xff]
        %v2989 = vld [vmem:[%s311 + $0x50] sm:$0xff]
        %v2990 = vld [vmem:[%s311 + $0x58] sm:$0xff]
        %v2991 = vld [vmem:[%s311 + $0x60] sm:$0xff]
        %v2992 = vld [vmem:[%s311 + $0x68] sm:$0xff]
        %v2993 = vld [vmem:[%s311 + $0x70] sm:$0xff]
        %v2994 = vld [vmem:[%s311 + $0x78] sm:$0xff]
        %v2995 = vld [vmem:[%s311 + $0x80] sm:$0xff]
        %v2996 = vld [vmem:[%s311 + $0x88] sm:$0xff]
        %v2997 = vld [vmem:[%s311 + $0x90] sm:$0xff]
        %v2998 = vld [vmem:[%s311 + $0x98] sm:$0xff]
        %v2999 = vld [vmem:[%s311 + $0xa0] sm:$0xff]
        %v3000 = vld [vmem:[%s311 + $0xa8] sm:$0xff]
        %v3001 = vld [vmem:[%s311 + $0xb0] sm:$0xff]
        %v3002 = vld [vmem:[%s311 + $0xb8] sm:$0xff]
        %v3003 = vld [vmem:[%s311 + $0xc0] sm:$0xff]
        %v3004 = vld [vmem:[%s311 + $0xc8] sm:$0xff]
        %v3005 = vld [vmem:[%s311 + $0xd0] sm:$0xff]
        %v3006 = vld [vmem:[%s311 + $0xd8] sm:$0xff]
        %v3007 = vld [vmem:[%s311 + $0xe0] sm:$0xff]
        %v3008 = vld [vmem:[%s311 + $0xe8] sm:$0xff]
        %v3009 = vld [vmem:[%s311 + $0xf0] sm:$0xff]
        %v3010 = vld [vmem:[%s311 + $0xf8] sm:$0xff]
        %v3011 = vmax.f32 %v2979, %v2907
        %v3012 = vmax.f32 %v2980, %v2908
        %v3013 = vmax.f32 %v2981, %v2909
        %v3014 = vmax.f32 %v2982, %v2910
        %v3015 = vmax.f32 %v2983, %v2911
        %v3016 = vmax.f32 %v2984, %v2912
        %v3017 = vmax.f32 %v2985, %v2913
        %v3018 = vmax.f32 %v2986, %v2914
        %v3019 = vmax.f32 %v2987, %v2915
        %v3020 = vmax.f32 %v2988, %v2916
        %v3021 = vmax.f32 %v2989, %v2917
        %v3022 = vmax.f32 %v2990, %v2918
        %v3023 = vmax.f32 %v2991, %v2919
        %v3024 = vmax.f32 %v2992, %v2920
        %v3025 = vmax.f32 %v2993, %v2921
        %v3026 = vmax.f32 %v2994, %v2922
        %v3027 = vmax.f32 %v2995, %v2923
        %v3028 = vmax.f32 %v2996, %v2924
        %v3029 = vmax.f32 %v2997, %v2925
        %v3030 = vmax.f32 %v2998, %v2926
        %v3031 = vmax.f32 %v2999, %v2927
        %v3032 = vmax.f32 %v3000, %v2928
        %v3033 = vmax.f32 %v3001, %v2929
        %v3034 = vmax.f32 %v3002, %v2930
        %v3035 = vmax.f32 %v3003, %v2931
        %v3036 = vmax.f32 %v3004, %v2932
        %v3037 = vmax.f32 %v3005, %v2933
        %v3038 = vmax.f32 %v3006, %v2934
        %v3039 = vmax.f32 %v3007, %v2935
        %v3040 = vmax.f32 %v3008, %v2936
        %v3041 = vmax.f32 %v3009, %v2937
        %v3042 = vmax.f32 %v3010, %v2938
        %3043 = vst [vmem:[%s311] sm:$0xff] %v3011
        %3044 = vst [vmem:[%s311 + $0x8] sm:$0xff] %v3012
        %3045 = vst [vmem:[%s311 + $0x10] sm:$0xff] %v3013
        %3046 = vst [vmem:[%s311 + $0x18] sm:$0xff] %v3014
        %3047 = vst [vmem:[%s311 + $0x20] sm:$0xff] %v3015
        %3048 = vst [vmem:[%s311 + $0x28] sm:$0xff] %v3016
        %3049 = vst [vmem:[%s311 + $0x30] sm:$0xff] %v3017
        %3050 = vst [vmem:[%s311 + $0x38] sm:$0xff] %v3018
        %3051 = vst [vmem:[%s311 + $0x40] sm:$0xff] %v3019
        %3052 = vst [vmem:[%s311 + $0x48] sm:$0xff] %v3020
        %3053 = vst [vmem:[%s311 + $0x50] sm:$0xff] %v3021
        %3054 = vst [vmem:[%s311 + $0x58] sm:$0xff] %v3022
        %3055 = vst [vmem:[%s311 + $0x60] sm:$0xff] %v3023
        %3056 = vst [vmem:[%s311 + $0x68] sm:$0xff] %v3024
        %3057 = vst [vmem:[%s311 + $0x70] sm:$0xff] %v3025
        %3058 = vst [vmem:[%s311 + $0x78] sm:$0xff] %v3026
        %3059 = vst [vmem:[%s311 + $0x80] sm:$0xff] %v3027
        %3060 = vst [vmem:[%s311 + $0x88] sm:$0xff] %v3028
        %3061 = vst [vmem:[%s311 + $0x90] sm:$0xff] %v3029
        %3062 = vst [vmem:[%s311 + $0x98] sm:$0xff] %v3030
        %3063 = vst [vmem:[%s311 + $0xa0] sm:$0xff] %v3031
        %3064 = vst [vmem:[%s311 + $0xa8] sm:$0xff] %v3032
        %3065 = vst [vmem:[%s311 + $0xb0] sm:$0xff] %v3033
        %3066 = vst [vmem:[%s311 + $0xb8] sm:$0xff] %v3034
        %3067 = vst [vmem:[%s311 + $0xc0] sm:$0xff] %v3035
        %3068 = vst [vmem:[%s311 + $0xc8] sm:$0xff] %v3036
        %3069 = vst [vmem:[%s311 + $0xd0] sm:$0xff] %v3037
        %3070 = vst [vmem:[%s311 + $0xd8] sm:$0xff] %v3038
        %3071 = vst [vmem:[%s311 + $0xe0] sm:$0xff] %v3039
        %3072 = vst [vmem:[%s311 + $0xe8] sm:$0xff] %v3040
        %3073 = vst [vmem:[%s311 + $0xf0] sm:$0xff] %v3041
        %3074 = vst [vmem:[%s311 + $0xf8] sm:$0xff] %v3042
      $region56: #{_lambda_.8} parent=47 // pred_fallthru
        _
      %s3075 = smul.u32 8, %s22
      %p3076 = scmp.lt.s32.totalorder %s3075, 7
      %s3077 = scalar_select %p3076, %s3075, 7
      %s3078 = smul.addr %s3077, 4
      %s3079 = smul.addr %s3078, 8
      %s3080 = scalar_lea.vmem %s7, %s3079
      // Predicated region
      $region57: #{_lambda_.8} parent=47 // pred_check
        %p3081 = pneg %p202
      $region58: #{_lambda_.8} parent=47 // pred_check_branch
        %3083 = sbr.rel (%p3081) target = $region60
      $region59: #{_lambda_.8} parent=47 // pred_region
        %s3084 = smul.u32 8, %s22
      $region60: #{_lambda_.8} parent=47 // pred_fallthru
        _
      // Predicated region
      $region61: #{_lambda_.8} parent=47 // pred_check
        %p3085 = pneg %p202
      $region62: #{_lambda_.8} parent=47 // pred_check_branch
        %3087 = sbr.rel (%p3085) target = $region64
      $region63: #{_lambda_.8} parent=47 // pred_region
        %s3088 = smul.u32 8, %s22
        %p3089 = scmp.lt.s32.totalorder %s3088, 7
        %s3090 = scalar_select %p3089, %s3088, 7
        %s3091 = smul.addr %s3090, 4
        %s3092 = smul.addr %s3091, 8
        %s3093 = scalar_lea.vmem %s7, %s3092
      $region64: #{_lambda_.8} parent=47 // pred_fallthru
        _
    $region48: #{_lambda_.8} parent=5 // pred_fallthru
      _
    %p3094 = scmp.le.s32.totalorder 2, %s13
    // Predicated region
    $region65: #{_lambda_.8} parent=5 // pred_check
      %p3095 = pneg %p3094
    $region66: #{_lambda_.8} parent=5 // pred_check_branch
      %3097 = sbr.rel (%p3095) target = $region68
    $region67: #{_lambda_.8} parent=5 // pred_region
      %s3098 = ssub.s32 %s13, 2
    $region68: #{_lambda_.8} parent=5 // pred_fallthru
      _
  $region6: #{_lambda_.8} parent=0 // loop_footer
    %s17 = sadd.s32 1, %s13
  $region7: #{_lambda_.8} parent=0 // loop_footer_branch
    %12 = sbr.rel target = $region3
  $region8: #{_lambda_.8} parent=0 // loop_exit
    _

// kernel: _lambda_.9
$region0: #{_lambda_.9}
  #allocation0 [shape = 'u32[]', space=smem, size = 0x4, offset = 0x4, fixed_abs, tag = 'smem constant byte address 0x4 - core index']
  #allocation1 [shape = 'u32[144,128]{1,0:T(1,128)}', space=vmem, size = 0x12000, scoped, tag = 'internal scratch']
  %s0 = inlined_call_operand.vmem [shape: f32[64,512], index: 0, kind: input, shape index: {}]
  %s1 = inlined_call_operand.vmem [shape: bf16[512,1024], index: 1, kind: input, shape index: {}]
  %s2 = inlined_call_operand.vmem [shape: f32[1,1024], index: 2, kind: input, shape index: {}]
  %s3 = inlined_call_operand.vmem [shape: f32[64,1024], index: 3, kind: output, shape index: {}]
  %s4 = sld [smem:[#allocation0]]
  $region22: #{_lambda_.9} parent=0
    _
  %s6 = ssub.s32 1, %s4
  %s7 = scalar_select 0, %s6, %s4
  // Predicated region
  $region2: #{_lambda_.9} parent=0 // pred_check
    _
  $region3: #{_lambda_.9} parent=0 // pred_check_branch
    %9 = sbr.rel (0) target = $region5
  $region4: #{_lambda_.9} parent=0 // pred_region
    _
  $region5: #{_lambda_.9} parent=0 // pred_fallthru
    _
  // Predicated region
  $region6: #{_lambda_.9} parent=0 // pred_check
    _
  $region7: #{_lambda_.9} parent=0 // pred_check_branch
    %11 = sbr.rel (0) target = $region9
  $region8: #{_lambda_.9} parent=0 // pred_region
    _
  $region9: #{_lambda_.9} parent=0 // pred_fallthru
    _
  // Predicated region
  $region10: #{_lambda_.9} parent=0 // pred_check
    _
  $region11: #{_lambda_.9} parent=0 // pred_check_branch
    %13 = sbr.rel (0) target = $region13
  $region12: #{_lambda_.9} parent=0 // pred_region
    _
  $region13: #{_lambda_.9} parent=0 // pred_fallthru
    _
  %v14 = vld [vmem:[%s0] sm:$0xff]
  %v15 = vld [vmem:[%s0 + $0x8] sm:$0xff]
  %v16 = vld [vmem:[%s0 + $0x10] sm:$0xff]
  %v17 = vld [vmem:[%s0 + $0x18] sm:$0xff]
  %v18 = vld [vmem:[%s0 + $0x20] sm:$0xff]
  %v19 = vld [vmem:[%s0 + $0x28] sm:$0xff]
  %v20 = vld [vmem:[%s0 + $0x30] sm:$0xff]
  %v21 = vld [vmem:[%s0 + $0x38] sm:$0xff]
  %v22 = vld [vmem:[%s0 + $0x40] sm:$0xff]
  %v23 = vld [vmem:[%s0 + $0x48] sm:$0xff]
  %v24 = vld [vmem:[%s0 + $0x50] sm:$0xff]
  %v25 = vld [vmem:[%s0 + $0x58] sm:$0xff]
  %v26 = vld [vmem:[%s0 + $0x60] sm:$0xff]
  %v27 = vld [vmem:[%s0 + $0x68] sm:$0xff]
  %v28 = vld [vmem:[%s0 + $0x70] sm:$0xff]
  %v29 = vld [vmem:[%s0 + $0x78] sm:$0xff]
  %v30 = vld [vmem:[%s0 + $0x80] sm:$0xff]
  %v31 = vld [vmem:[%s0 + $0x88] sm:$0xff]
  %v32 = vld [vmem:[%s0 + $0x90] sm:$0xff]
  %v33 = vld [vmem:[%s0 + $0x98] sm:$0xff]
  %v34 = vld [vmem:[%s0 + $0xa0] sm:$0xff]
  %v35 = vld [vmem:[%s0 + $0xa8] sm:$0xff]
  %v36 = vld [vmem:[%s0 + $0xb0] sm:$0xff]
  %v37 = vld [vmem:[%s0 + $0xb8] sm:$0xff]
  %v38 = vld [vmem:[%s0 + $0xc0] sm:$0xff]
  %v39 = vld [vmem:[%s0 + $0xc8] sm:$0xff]
  %v40 = vld [vmem:[%s0 + $0xd0] sm:$0xff]
  %v41 = vld [vmem:[%s0 + $0xd8] sm:$0xff]
  %v42 = vld [vmem:[%s0 + $0xe0] sm:$0xff]
  %v43 = vld [vmem:[%s0 + $0xe8] sm:$0xff]
  %v44 = vld [vmem:[%s0 + $0xf0] sm:$0xff]
  %v45 = vld [vmem:[%s0 + $0xf8] sm:$0xff]
  %v46 = vpack.c.bf16 %v18, %v14
  %v47 = vpack.c.bf16 %v19, %v15
  %v48 = vpack.c.bf16 %v20, %v16
  %v49 = vpack.c.bf16 %v21, %v17
  %v50 = vpack.c.bf16 %v26, %v22
  %v51 = vpack.c.bf16 %v27, %v23
  %v52 = vpack.c.bf16 %v28, %v24
  %v53 = vpack.c.bf16 %v29, %v25
  %v54 = vpack.c.bf16 %v34, %v30
  %v55 = vpack.c.bf16 %v35, %v31
  %v56 = vpack.c.bf16 %v36, %v32
  %v57 = vpack.c.bf16 %v37, %v33
  %v58 = vpack.c.bf16 %v42, %v38
  %v59 = vpack.c.bf16 %v43, %v39
  %v60 = vpack.c.bf16 %v44, %v40
  %v61 = vpack.c.bf16 %v45, %v41
  %v62 = vld [vmem:[%s1] sm:$0xff]
  %v63 = vld [vmem:[%s1 + $0x8] sm:$0xff]
  %v64 = vld [vmem:[%s1 + $0x10] sm:$0xff]
  %v65 = vld [vmem:[%s1 + $0x18] sm:$0xff]
  %v66 = vld [vmem:[%s1 + $0x20] sm:$0xff]
  %v67 = vld [vmem:[%s1 + $0x28] sm:$0xff]
  %v68 = vld [vmem:[%s1 + $0x30] sm:$0xff]
  %v69 = vld [vmem:[%s1 + $0x38] sm:$0xff]
  %v70 = vld [vmem:[%s1 + $0x40] sm:$0xff]
  %v71 = vld [vmem:[%s1 + $0x48] sm:$0xff]
  %v72 = vld [vmem:[%s1 + $0x50] sm:$0xff]
  %v73 = vld [vmem:[%s1 + $0x58] sm:$0xff]
  %v74 = vld [vmem:[%s1 + $0x60] sm:$0xff]
  %v75 = vld [vmem:[%s1 + $0x68] sm:$0xff]
  %v76 = vld [vmem:[%s1 + $0x70] sm:$0xff]
  %v77 = vld [vmem:[%s1 + $0x78] sm:$0xff]
  %v78 = vld [vmem:[%s1 + $0x80] sm:$0xff]
  %v79 = vld [vmem:[%s1 + $0x88] sm:$0xff]
  %v80 = vld [vmem:[%s1 + $0x90] sm:$0xff]
  %v81 = vld [vmem:[%s1 + $0x98] sm:$0xff]
  %v82 = vld [vmem:[%s1 + $0xa0] sm:$0xff]
  %v83 = vld [vmem:[%s1 + $0xa8] sm:$0xff]
  %v84 = vld [vmem:[%s1 + $0xb0] sm:$0xff]
  %v85 = vld [vmem:[%s1 + $0xb8] sm:$0xff]
  %v86 = vld [vmem:[%s1 + $0xc0] sm:$0xff]
  %v87 = vld [vmem:[%s1 + $0xc8] sm:$0xff]
  %v88 = vld [vmem:[%s1 + $0xd0] sm:$0xff]
  %v89 = vld [vmem:[%s1 + $0xd8] sm:$0xff]
  %v90 = vld [vmem:[%s1 + $0xe0] sm:$0xff]
  %v91 = vld [vmem:[%s1 + $0xe8] sm:$0xff]
  %v92 = vld [vmem:[%s1 + $0xf0] sm:$0xff]
  %v93 = vld [vmem:[%s1 + $0xf8] sm:$0xff]
  %v94 = vld [vmem:[%s1 + $0x100] sm:$0xff]
  %v95 = vld [vmem:[%s1 + $0x108] sm:$0xff]
  %v96 = vld [vmem:[%s1 + $0x110] sm:$0xff]
  %v97 = vld [vmem:[%s1 + $0x118] sm:$0xff]
  %v98 = vld [vmem:[%s1 + $0x120] sm:$0xff]
  %v99 = vld [vmem:[%s1 + $0x128] sm:$0xff]
  %v100 = vld [vmem:[%s1 + $0x130] sm:$0xff]
  %v101 = vld [vmem:[%s1 + $0x138] sm:$0xff]
  %v102 = vld [vmem:[%s1 + $0x140] sm:$0xff]
  %v103 = vld [vmem:[%s1 + $0x148] sm:$0xff]
  %v104 = vld [vmem:[%s1 + $0x150] sm:$0xff]
  %v105 = vld [vmem:[%s1 + $0x158] sm:$0xff]
  %v106 = vld [vmem:[%s1 + $0x160] sm:$0xff]
  %v107 = vld [vmem:[%s1 + $0x168] sm:$0xff]
  %v108 = vld [vmem:[%s1 + $0x170] sm:$0xff]
  %v109 = vld [vmem:[%s1 + $0x178] sm:$0xff]
  %v110 = vld [vmem:[%s1 + $0x180] sm:$0xff]
  %v111 = vld [vmem:[%s1 + $0x188] sm:$0xff]
  %v112 = vld [vmem:[%s1 + $0x190] sm:$0xff]
  %v113 = vld [vmem:[%s1 + $0x198] sm:$0xff]
  %v114 = vld [vmem:[%s1 + $0x1a0] sm:$0xff]
  %v115 = vld [vmem:[%s1 + $0x1a8] sm:$0xff]
  %v116 = vld [vmem:[%s1 + $0x1b0] sm:$0xff]
  %v117 = vld [vmem:[%s1 + $0x1b8] sm:$0xff]
  %v118 = vld [vmem:[%s1 + $0x1c0] sm:$0xff]
  %v119 = vld [vmem:[%s1 + $0x1c8] sm:$0xff]
  %v120 = vld [vmem:[%s1 + $0x1d0] sm:$0xff]
  %v121 = vld [vmem:[%s1 + $0x1d8] sm:$0xff]
  %v122 = vld [vmem:[%s1 + $0x1e0] sm:$0xff]
  %v123 = vld [vmem:[%s1 + $0x1e8] sm:$0xff]
  %v124 = vld [vmem:[%s1 + $0x1f0] sm:$0xff]
  %v125 = vld [vmem:[%s1 + $0x1f8] sm:$0xff]
  %v126 = vld [vmem:[%s1 + $0x200] sm:$0xff]
  %v127 = vld [vmem:[%s1 + $0x208] sm:$0xff]
  %v128 = vld [vmem:[%s1 + $0x210] sm:$0xff]
  %v129 = vld [vmem:[%s1 + $0x218] sm:$0xff]
  %v130 = vld [vmem:[%s1 + $0x220] sm:$0xff]
  %v131 = vld [vmem:[%s1 + $0x228] sm:$0xff]
  %v132 = vld [vmem:[%s1 + $0x230] sm:$0xff]
  %v133 = vld [vmem:[%s1 + $0x238] sm:$0xff]
  %v134 = vld [vmem:[%s1 + $0x240] sm:$0xff]
  %v135 = vld [vmem:[%s1 + $0x248] sm:$0xff]
  %v136 = vld [vmem:[%s1 + $0x250] sm:$0xff]
  %v137 = vld [vmem:[%s1 + $0x258] sm:$0xff]
  %v138 = vld [vmem:[%s1 + $0x260] sm:$0xff]
  %v139 = vld [vmem:[%s1 + $0x268] sm:$0xff]
  %v140 = vld [vmem:[%s1 + $0x270] sm:$0xff]
  %v141 = vld [vmem:[%s1 + $0x278] sm:$0xff]
  %v142 = vld [vmem:[%s1 + $0x280] sm:$0xff]
  %v143 = vld [vmem:[%s1 + $0x288] sm:$0xff]
  %v144 = vld [vmem:[%s1 + $0x290] sm:$0xff]
  %v145 = vld [vmem:[%s1 + $0x298] sm:$0xff]
  %v146 = vld [vmem:[%s1 + $0x2a0] sm:$0xff]
  %v147 = vld [vmem:[%s1 + $0x2a8] sm:$0xff]
  %v148 = vld [vmem:[%s1 + $0x2b0] sm:$0xff]
  %v149 = vld [vmem:[%s1 + $0x2b8] sm:$0xff]
  %v150 = vld [vmem:[%s1 + $0x2c0] sm:$0xff]
  %v151 = vld [vmem:[%s1 + $0x2c8] sm:$0xff]
  %v152 = vld [vmem:[%s1 + $0x2d0] sm:$0xff]
  %v153 = vld [vmem:[%s1 + $0x2d8] sm:$0xff]
  %v154 = vld [vmem:[%s1 + $0x2e0] sm:$0xff]
  %v155 = vld [vmem:[%s1 + $0x2e8] sm:$0xff]
  %v156 = vld [vmem:[%s1 + $0x2f0] sm:$0xff]
  %v157 = vld [vmem:[%s1 + $0x2f8] sm:$0xff]
  %v158 = vld [vmem:[%s1 + $0x300] sm:$0xff]
  %v159 = vld [vmem:[%s1 + $0x308] sm:$0xff]
  %v160 = vld [vmem:[%s1 + $0x310] sm:$0xff]
  %v161 = vld [vmem:[%s1 + $0x318] sm:$0xff]
  %v162 = vld [vmem:[%s1 + $0x320] sm:$0xff]
  %v163 = vld [vmem:[%s1 + $0x328] sm:$0xff]
  %v164 = vld [vmem:[%s1 + $0x330] sm:$0xff]
  %v165 = vld [vmem:[%s1 + $0x338] sm:$0xff]
  %v166 = vld [vmem:[%s1 + $0x340] sm:$0xff]
  %v167 = vld [vmem:[%s1 + $0x348] sm:$0xff]
  %v168 = vld [vmem:[%s1 + $0x350] sm:$0xff]
  %v169 = vld [vmem:[%s1 + $0x358] sm:$0xff]
  %v170 = vld [vmem:[%s1 + $0x360] sm:$0xff]
  %v171 = vld [vmem:[%s1 + $0x368] sm:$0xff]
  %v172 = vld [vmem:[%s1 + $0x370] sm:$0xff]
  %v173 = vld [vmem:[%s1 + $0x378] sm:$0xff]
  %v174 = vld [vmem:[%s1 + $0x380] sm:$0xff]
  %v175 = vld [vmem:[%s1 + $0x388] sm:$0xff]
  %v176 = vld [vmem:[%s1 + $0x390] sm:$0xff]
  %v177 = vld [vmem:[%s1 + $0x398] sm:$0xff]
  %v178 = vld [vmem:[%s1 + $0x3a0] sm:$0xff]
  %v179 = vld [vmem:[%s1 + $0x3a8] sm:$0xff]
  %v180 = vld [vmem:[%s1 + $0x3b0] sm:$0xff]
  %v181 = vld [vmem:[%s1 + $0x3b8] sm:$0xff]
  %v182 = vld [vmem:[%s1 + $0x3c0] sm:$0xff]
  %v183 = vld [vmem:[%s1 + $0x3c8] sm:$0xff]
  %v184 = vld [vmem:[%s1 + $0x3d0] sm:$0xff]
  %v185 = vld [vmem:[%s1 + $0x3d8] sm:$0xff]
  %v186 = vld [vmem:[%s1 + $0x3e0] sm:$0xff]
  %v187 = vld [vmem:[%s1 + $0x3e8] sm:$0xff]
  %v188 = vld [vmem:[%s1 + $0x3f0] sm:$0xff]
  %v189 = vld [vmem:[%s1 + $0x3f8] sm:$0xff]
  %v190 = vld [vmem:[%s1 + $0x400] sm:$0xff]
  %v191 = vld [vmem:[%s1 + $0x408] sm:$0xff]
  %v192 = vld [vmem:[%s1 + $0x410] sm:$0xff]
  %v193 = vld [vmem:[%s1 + $0x418] sm:$0xff]
  %v194 = vld [vmem:[%s1 + $0x420] sm:$0xff]
  %v195 = vld [vmem:[%s1 + $0x428] sm:$0xff]
  %v196 = vld [vmem:[%s1 + $0x430] sm:$0xff]
  %v197 = vld [vmem:[%s1 + $0x438] sm:$0xff]
  %v198 = vld [vmem:[%s1 + $0x440] sm:$0xff]
  %v199 = vld [vmem:[%s1 + $0x448] sm:$0xff]
  %v200 = vld [vmem:[%s1 + $0x450] sm:$0xff]
  %v201 = vld [vmem:[%s1 + $0x458] sm:$0xff]
  %v202 = vld [vmem:[%s1 + $0x460] sm:$0xff]
  %v203 = vld [vmem:[%s1 + $0x468] sm:$0xff]
  %v204 = vld [vmem:[%s1 + $0x470] sm:$0xff]
  %v205 = vld [vmem:[%s1 + $0x478] sm:$0xff]
  %v206 = vld [vmem:[%s1 + $0x480] sm:$0xff]
  %v207 = vld [vmem:[%s1 + $0x488] sm:$0xff]
  %v208 = vld [vmem:[%s1 + $0x490] sm:$0xff]
  %v209 = vld [vmem:[%s1 + $0x498] sm:$0xff]
  %v210 = vld [vmem:[%s1 + $0x4a0] sm:$0xff]
  %v211 = vld [vmem:[%s1 + $0x4a8] sm:$0xff]
  %v212 = vld [vmem:[%s1 + $0x4b0] sm:$0xff]
  %v213 = vld [vmem:[%s1 + $0x4b8] sm:$0xff]
  %v214 = vld [vmem:[%s1 + $0x4c0] sm:$0xff]
  %v215 = vld [vmem:[%s1 + $0x4c8] sm:$0xff]
  %v216 = vld [vmem:[%s1 + $0x4d0] sm:$0xff]
  %v217 = vld [vmem:[%s1 + $0x4d8] sm:$0xff]
  %v218 = vld [vmem:[%s1 + $0x4e0] sm:$0xff]
  %v219 = vld [vmem:[%s1 + $0x4e8] sm:$0xff]
  %v220 = vld [vmem:[%s1 + $0x4f0] sm:$0xff]
  %v221 = vld [vmem:[%s1 + $0x4f8] sm:$0xff]
  %v222 = vld [vmem:[%s1 + $0x500] sm:$0xff]
  %v223 = vld [vmem:[%s1 + $0x508] sm:$0xff]
  %v224 = vld [vmem:[%s1 + $0x510] sm:$0xff]
  %v225 = vld [vmem:[%s1 + $0x518] sm:$0xff]
  %v226 = vld [vmem:[%s1 + $0x520] sm:$0xff]
  %v227 = vld [vmem:[%s1 + $0x528] sm:$0xff]
  %v228 = vld [vmem:[%s1 + $0x530] sm:$0xff]
  %v229 = vld [vmem:[%s1 + $0x538] sm:$0xff]
  %v230 = vld [vmem:[%s1 + $0x540] sm:$0xff]
  %v231 = vld [vmem:[%s1 + $0x548] sm:$0xff]
  %v232 = vld [vmem:[%s1 + $0x550] sm:$0xff]
  %v233 = vld [vmem:[%s1 + $0x558] sm:$0xff]
  %v234 = vld [vmem:[%s1 + $0x560] sm:$0xff]
  %v235 = vld [vmem:[%s1 + $0x568] sm:$0xff]
  %v236 = vld [vmem:[%s1 + $0x570] sm:$0xff]
  %v237 = vld [vmem:[%s1 + $0x578] sm:$0xff]
  %v238 = vld [vmem:[%s1 + $0x580] sm:$0xff]
  %v239 = vld [vmem:[%s1 + $0x588] sm:$0xff]
  %v240 = vld [vmem:[%s1 + $0x590] sm:$0xff]
  %v241 = vld [vmem:[%s1 + $0x598] sm:$0xff]
  %v242 = vld [vmem:[%s1 + $0x5a0] sm:$0xff]
  %v243 = vld [vmem:[%s1 + $0x5a8] sm:$0xff]
  %v244 = vld [vmem:[%s1 + $0x5b0] sm:$0xff]
  %v245 = vld [vmem:[%s1 + $0x5b8] sm:$0xff]
  %v246 = vld [vmem:[%s1 + $0x5c0] sm:$0xff]
  %v247 = vld [vmem:[%s1 + $0x5c8] sm:$0xff]
  %v248 = vld [vmem:[%s1 + $0x5d0] sm:$0xff]
  %v249 = vld [vmem:[%s1 + $0x5d8] sm:$0xff]
  %v250 = vld [vmem:[%s1 + $0x5e0] sm:$0xff]
  %v251 = vld [vmem:[%s1 + $0x5e8] sm:$0xff]
  %v252 = vld [vmem:[%s1 + $0x5f0] sm:$0xff]
  %v253 = vld [vmem:[%s1 + $0x5f8] sm:$0xff]
  %v254 = vld [vmem:[%s1 + $0x600] sm:$0xff]
  %v255 = vld [vmem:[%s1 + $0x608] sm:$0xff]
  %v256 = vld [vmem:[%s1 + $0x610] sm:$0xff]
  %v257 = vld [vmem:[%s1 + $0x618] sm:$0xff]
  %v258 = vld [vmem:[%s1 + $0x620] sm:$0xff]
  %v259 = vld [vmem:[%s1 + $0x628] sm:$0xff]
  %v260 = vld [vmem:[%s1 + $0x630] sm:$0xff]
  %v261 = vld [vmem:[%s1 + $0x638] sm:$0xff]
  %v262 = vld [vmem:[%s1 + $0x640] sm:$0xff]
  %v263 = vld [vmem:[%s1 + $0x648] sm:$0xff]
  %v264 = vld [vmem:[%s1 + $0x650] sm:$0xff]
  %v265 = vld [vmem:[%s1 + $0x658] sm:$0xff]
  %v266 = vld [vmem:[%s1 + $0x660] sm:$0xff]
  %v267 = vld [vmem:[%s1 + $0x668] sm:$0xff]
  %v268 = vld [vmem:[%s1 + $0x670] sm:$0xff]
  %v269 = vld [vmem:[%s1 + $0x678] sm:$0xff]
  %v270 = vld [vmem:[%s1 + $0x680] sm:$0xff]
  %v271 = vld [vmem:[%s1 + $0x688] sm:$0xff]
  %v272 = vld [vmem:[%s1 + $0x690] sm:$0xff]
  %v273 = vld [vmem:[%s1 + $0x698] sm:$0xff]
  %v274 = vld [vmem:[%s1 + $0x6a0] sm:$0xff]
  %v275 = vld [vmem:[%s1 + $0x6a8] sm:$0xff]
  %v276 = vld [vmem:[%s1 + $0x6b0] sm:$0xff]
  %v277 = vld [vmem:[%s1 + $0x6b8] sm:$0xff]
  %v278 = vld [vmem:[%s1 + $0x6c0] sm:$0xff]
  %v279 = vld [vmem:[%s1 + $0x6c8] sm:$0xff]
  %v280 = vld [vmem:[%s1 + $0x6d0] sm:$0xff]
  %v281 = vld [vmem:[%s1 + $0x6d8] sm:$0xff]
  %v282 = vld [vmem:[%s1 + $0x6e0] sm:$0xff]
  %v283 = vld [vmem:[%s1 + $0x6e8] sm:$0xff]
  %v284 = vld [vmem:[%s1 + $0x6f0] sm:$0xff]
  %v285 = vld [vmem:[%s1 + $0x6f8] sm:$0xff]
  %v286 = vld [vmem:[%s1 + $0x700] sm:$0xff]
  %v287 = vld [vmem:[%s1 + $0x708] sm:$0xff]
  %v288 = vld [vmem:[%s1 + $0x710] sm:$0xff]
  %v289 = vld [vmem:[%s1 + $0x718] sm:$0xff]
  %v290 = vld [vmem:[%s1 + $0x720] sm:$0xff]
  %v291 = vld [vmem:[%s1 + $0x728] sm:$0xff]
  %v292 = vld [vmem:[%s1 + $0x730] sm:$0xff]
  %v293 = vld [vmem:[%s1 + $0x738] sm:$0xff]
  %v294 = vld [vmem:[%s1 + $0x740] sm:$0xff]
  %v295 = vld [vmem:[%s1 + $0x748] sm:$0xff]
  %v296 = vld [vmem:[%s1 + $0x750] sm:$0xff]
  %v297 = vld [vmem:[%s1 + $0x758] sm:$0xff]
  %v298 = vld [vmem:[%s1 + $0x760] sm:$0xff]
  %v299 = vld [vmem:[%s1 + $0x768] sm:$0xff]
  %v300 = vld [vmem:[%s1 + $0x770] sm:$0xff]
  %v301 = vld [vmem:[%s1 + $0x778] sm:$0xff]
  %v302 = vld [vmem:[%s1 + $0x780] sm:$0xff]
  %v303 = vld [vmem:[%s1 + $0x788] sm:$0xff]
  %v304 = vld [vmem:[%s1 + $0x790] sm:$0xff]
  %v305 = vld [vmem:[%s1 + $0x798] sm:$0xff]
  %v306 = vld [vmem:[%s1 + $0x7a0] sm:$0xff]
  %v307 = vld [vmem:[%s1 + $0x7a8] sm:$0xff]
  %v308 = vld [vmem:[%s1 + $0x7b0] sm:$0xff]
  %v309 = vld [vmem:[%s1 + $0x7b8] sm:$0xff]
  %v310 = vld [vmem:[%s1 + $0x7c0] sm:$0xff]
  %v311 = vld [vmem:[%s1 + $0x7c8] sm:$0xff]
  %v312 = vld [vmem:[%s1 + $0x7d0] sm:$0xff]
  %v313 = vld [vmem:[%s1 + $0x7d8] sm:$0xff]
  %v314 = vld [vmem:[%s1 + $0x7e0] sm:$0xff]
  %v315 = vld [vmem:[%s1 + $0x7e8] sm:$0xff]
  %v316 = vld [vmem:[%s1 + $0x7f0] sm:$0xff]
  %v317 = vld [vmem:[%s1 + $0x7f8] sm:$0xff]
  %v318 = vld [vmem:[%s2] sm:$0xff]
  %v320 = vlaneseq
  %v321 = vshrl.u32 %v320, 7
  %v322 = vsub.s32 0, %v321
  %v323 = vrot.slane %v318, %v322
  %v324 = vlaneseq
  %v325 = vshrl.u32 %v324, 7
  %v326 = vsub.s32 1, %v325
  %v327 = vrot.slane %v318, %v326
  %v328 = vlaneseq
  %v329 = vshrl.u32 %v328, 7
  %v330 = vsub.s32 2, %v329
  %v331 = vrot.slane %v318, %v330
  %v332 = vlaneseq
  %v333 = vshrl.u32 %v332, 7
  %v334 = vsub.s32 3, %v333
  %v335 = vrot.slane %v318, %v334
  %v336 = vlaneseq
  %v337 = vshrl.u32 %v336, 7
  %v338 = vsub.s32 4, %v337
  %v339 = vrot.slane %v318, %v338
  %v340 = vlaneseq
  %v341 = vshrl.u32 %v340, 7
  %v342 = vsub.s32 5, %v341
  %v343 = vrot.slane %v318, %v342
  %v344 = vlaneseq
  %v345 = vshrl.u32 %v344, 7
  %v346 = vsub.s32 6, %v345
  %v347 = vrot.slane %v318, %v346
  %v348 = vlaneseq
  %v349 = vshrl.u32 %v348, 7
  %v350 = vsub.s32 7, %v349
  %v351 = vrot.slane %v318, %v350
  %v616 = vunpack.c.l.b16 %v62
  %v617 = vunpack.c.h.b16 %v62
  %v618 = vunpack.c.l.b16 %v63
  %v619 = vunpack.c.h.b16 %v63
  %v620 = vunpack.c.l.b16 %v64
  %v621 = vunpack.c.h.b16 %v64
  %v622 = vunpack.c.l.b16 %v65
  %v623 = vunpack.c.h.b16 %v65
  %v624 = vunpack.c.l.b16 %v66
  %v625 = vunpack.c.h.b16 %v66
  %v626 = vunpack.c.l.b16 %v67
  %v627 = vunpack.c.h.b16 %v67
  %v628 = vunpack.c.l.b16 %v68
  %v629 = vunpack.c.h.b16 %v68
  %v630 = vunpack.c.l.b16 %v69
  %v631 = vunpack.c.h.b16 %v69
  %v632 = vunpack.c.l.b16 %v70
  %v633 = vunpack.c.h.b16 %v70
  %v634 = vunpack.c.l.b16 %v71
  %v635 = vunpack.c.h.b16 %v71
  %v636 = vunpack.c.l.b16 %v72
  %v637 = vunpack.c.h.b16 %v72
  %v638 = vunpack.c.l.b16 %v73
  %v639 = vunpack.c.h.b16 %v73
  %v640 = vunpack.c.l.b16 %v74
  %v641 = vunpack.c.h.b16 %v74
  %v642 = vunpack.c.l.b16 %v75
  %v643 = vunpack.c.h.b16 %v75
  %v644 = vunpack.c.l.b16 %v76
  %v645 = vunpack.c.h.b16 %v76
  %v646 = vunpack.c.l.b16 %v77
  %v647 = vunpack.c.h.b16 %v77
  %v648 = vunpack.c.l.b16 %v78
  %v649 = vunpack.c.h.b16 %v78
  %v650 = vunpack.c.l.b16 %v79
  %v651 = vunpack.c.h.b16 %v79
  %v652 = vunpack.c.l.b16 %v80
  %v653 = vunpack.c.h.b16 %v80
  %v654 = vunpack.c.l.b16 %v81
  %v655 = vunpack.c.h.b16 %v81
  %v656 = vunpack.c.l.b16 %v82
  %v657 = vunpack.c.h.b16 %v82
  %v658 = vunpack.c.l.b16 %v83
  %v659 = vunpack.c.h.b16 %v83
  %v660 = vunpack.c.l.b16 %v84
  %v661 = vunpack.c.h.b16 %v84
  %v662 = vunpack.c.l.b16 %v85
  %v663 = vunpack.c.h.b16 %v85
  %v664 = vunpack.c.l.b16 %v86
  %v665 = vunpack.c.h.b16 %v86
  %v666 = vunpack.c.l.b16 %v87
  %v667 = vunpack.c.h.b16 %v87
  %v668 = vunpack.c.l.b16 %v88
  %v669 = vunpack.c.h.b16 %v88
  %v670 = vunpack.c.l.b16 %v89
  %v671 = vunpack.c.h.b16 %v89
  %v672 = vunpack.c.l.b16 %v90
  %v673 = vunpack.c.h.b16 %v90
  %v674 = vunpack.c.l.b16 %v91
  %v675 = vunpack.c.h.b16 %v91
  %v676 = vunpack.c.l.b16 %v92
  %v677 = vunpack.c.h.b16 %v92
  %v678 = vunpack.c.l.b16 %v93
  %v679 = vunpack.c.h.b16 %v93
  %v680 = vunpack.c.l.b16 %v94
  %v681 = vunpack.c.h.b16 %v94
  %v682 = vunpack.c.l.b16 %v95
  %v683 = vunpack.c.h.b16 %v95
  %v684 = vunpack.c.l.b16 %v96
  %v685 = vunpack.c.h.b16 %v96
  %v686 = vunpack.c.l.b16 %v97
  %v687 = vunpack.c.h.b16 %v97
  %v688 = vunpack.c.l.b16 %v98
  %v689 = vunpack.c.h.b16 %v98
  %v690 = vunpack.c.l.b16 %v99
  %v691 = vunpack.c.h.b16 %v99
  %v692 = vunpack.c.l.b16 %v100
  %v693 = vunpack.c.h.b16 %v100
  %v694 = vunpack.c.l.b16 %v101
  %v695 = vunpack.c.h.b16 %v101
  %v696 = vunpack.c.l.b16 %v102
  %v697 = vunpack.c.h.b16 %v102
  %v698 = vunpack.c.l.b16 %v103
  %v699 = vunpack.c.h.b16 %v103
  %v700 = vunpack.c.l.b16 %v104
  %v701 = vunpack.c.h.b16 %v104
  %v702 = vunpack.c.l.b16 %v105
  %v703 = vunpack.c.h.b16 %v105
  %v704 = vunpack.c.l.b16 %v106
  %v705 = vunpack.c.h.b16 %v106
  %v706 = vunpack.c.l.b16 %v107
  %v707 = vunpack.c.h.b16 %v107
  %v708 = vunpack.c.l.b16 %v108
  %v709 = vunpack.c.h.b16 %v108
  %v710 = vunpack.c.l.b16 %v109
  %v711 = vunpack.c.h.b16 %v109
  %v712 = vunpack.c.l.b16 %v110
  %v713 = vunpack.c.h.b16 %v110
  %v714 = vunpack.c.l.b16 %v111
  %v715 = vunpack.c.h.b16 %v111
  %v716 = vunpack.c.l.b16 %v112
  %v717 = vunpack.c.h.b16 %v112
  %v718 = vunpack.c.l.b16 %v113
  %v719 = vunpack.c.h.b16 %v113
  %v720 = vunpack.c.l.b16 %v114
  %v721 = vunpack.c.h.b16 %v114
  %v722 = vunpack.c.l.b16 %v115
  %v723 = vunpack.c.h.b16 %v115
  %v724 = vunpack.c.l.b16 %v116
  %v725 = vunpack.c.h.b16 %v116
  %v726 = vunpack.c.l.b16 %v117
  %v727 = vunpack.c.h.b16 %v117
  %v728 = vunpack.c.l.b16 %v118
  %v729 = vunpack.c.h.b16 %v118
  %v730 = vunpack.c.l.b16 %v119
  %v731 = vunpack.c.h.b16 %v119
  %v732 = vunpack.c.l.b16 %v120
  %v733 = vunpack.c.h.b16 %v120
  %v734 = vunpack.c.l.b16 %v121
  %v735 = vunpack.c.h.b16 %v121
  %v736 = vunpack.c.l.b16 %v122
  %v737 = vunpack.c.h.b16 %v122
  %v738 = vunpack.c.l.b16 %v123
  %v739 = vunpack.c.h.b16 %v123
  %v740 = vunpack.c.l.b16 %v124
  %v741 = vunpack.c.h.b16 %v124
  %v742 = vunpack.c.l.b16 %v125
  %v743 = vunpack.c.h.b16 %v125
  %v744 = vunpack.c.l.b16 %v126
  %v745 = vunpack.c.h.b16 %v126
  %v746 = vunpack.c.l.b16 %v127
  %v747 = vunpack.c.h.b16 %v127
  %v748 = vunpack.c.l.b16 %v128
  %v749 = vunpack.c.h.b16 %v128
  %v750 = vunpack.c.l.b16 %v129
  %v751 = vunpack.c.h.b16 %v129
  %v752 = vunpack.c.l.b16 %v130
  %v753 = vunpack.c.h.b16 %v130
  %v754 = vunpack.c.l.b16 %v131
  %v755 = vunpack.c.h.b16 %v131
  %v756 = vunpack.c.l.b16 %v132
  %v757 = vunpack.c.h.b16 %v132
  %v758 = vunpack.c.l.b16 %v133
  %v759 = vunpack.c.h.b16 %v133
  %v760 = vunpack.c.l.b16 %v134
  %v761 = vunpack.c.h.b16 %v134
  %v762 = vunpack.c.l.b16 %v135
  %v763 = vunpack.c.h.b16 %v135
  %v764 = vunpack.c.l.b16 %v136
  %v765 = vunpack.c.h.b16 %v136
  %v766 = vunpack.c.l.b16 %v137
  %v767 = vunpack.c.h.b16 %v137
  %v768 = vunpack.c.l.b16 %v138
  %v769 = vunpack.c.h.b16 %v138
  %v770 = vunpack.c.l.b16 %v139
  %v771 = vunpack.c.h.b16 %v139
  %v772 = vunpack.c.l.b16 %v140
  %v773 = vunpack.c.h.b16 %v140
  %v774 = vunpack.c.l.b16 %v141
  %v775 = vunpack.c.h.b16 %v141
  %v776 = vunpack.c.l.b16 %v142
  %v777 = vunpack.c.h.b16 %v142
  %v778 = vunpack.c.l.b16 %v143
  %v779 = vunpack.c.h.b16 %v143
  %v780 = vunpack.c.l.b16 %v144
  %v781 = vunpack.c.h.b16 %v144
  %v782 = vunpack.c.l.b16 %v145
  %v783 = vunpack.c.h.b16 %v145
  %v784 = vunpack.c.l.b16 %v146
  %v785 = vunpack.c.h.b16 %v146
  %v786 = vunpack.c.l.b16 %v147
  %v787 = vunpack.c.h.b16 %v147
  %v788 = vunpack.c.l.b16 %v148
  %v789 = vunpack.c.h.b16 %v148
  %v790 = vunpack.c.l.b16 %v149
  %v791 = vunpack.c.h.b16 %v149
  %v792 = vunpack.c.l.b16 %v150
  %v793 = vunpack.c.h.b16 %v150
  %v794 = vunpack.c.l.b16 %v151
  %v795 = vunpack.c.h.b16 %v151
  %v796 = vunpack.c.l.b16 %v152
  %v797 = vunpack.c.h.b16 %v152
  %v798 = vunpack.c.l.b16 %v153
  %v799 = vunpack.c.h.b16 %v153
  %v800 = vunpack.c.l.b16 %v154
  %v801 = vunpack.c.h.b16 %v154
  %v802 = vunpack.c.l.b16 %v155
  %v803 = vunpack.c.h.b16 %v155
  %v804 = vunpack.c.l.b16 %v156
  %v805 = vunpack.c.h.b16 %v156
  %v806 = vunpack.c.l.b16 %v157
  %v807 = vunpack.c.h.b16 %v157
  %v808 = vunpack.c.l.b16 %v158
  %v809 = vunpack.c.h.b16 %v158
  %v810 = vunpack.c.l.b16 %v159
  %v811 = vunpack.c.h.b16 %v159
  %v812 = vunpack.c.l.b16 %v160
  %v813 = vunpack.c.h.b16 %v160
  %v814 = vunpack.c.l.b16 %v161
  %v815 = vunpack.c.h.b16 %v161
  %v816 = vunpack.c.l.b16 %v162
  %v817 = vunpack.c.h.b16 %v162
  %v818 = vunpack.c.l.b16 %v163
  %v819 = vunpack.c.h.b16 %v163
  %v820 = vunpack.c.l.b16 %v164
  %v821 = vunpack.c.h.b16 %v164
  %v822 = vunpack.c.l.b16 %v165
  %v823 = vunpack.c.h.b16 %v165
  %v824 = vunpack.c.l.b16 %v166
  %v825 = vunpack.c.h.b16 %v166
  %v826 = vunpack.c.l.b16 %v167
  %v827 = vunpack.c.h.b16 %v167
  %v828 = vunpack.c.l.b16 %v168
  %v829 = vunpack.c.h.b16 %v168
  %v830 = vunpack.c.l.b16 %v169
  %v831 = vunpack.c.h.b16 %v169
  %v832 = vunpack.c.l.b16 %v170
  %v833 = vunpack.c.h.b16 %v170
  %v834 = vunpack.c.l.b16 %v171
  %v835 = vunpack.c.h.b16 %v171
  %v836 = vunpack.c.l.b16 %v172
  %v837 = vunpack.c.h.b16 %v172
  %v838 = vunpack.c.l.b16 %v173
  %v839 = vunpack.c.h.b16 %v173
  %v840 = vunpack.c.l.b16 %v174
  %v841 = vunpack.c.h.b16 %v174
  %v842 = vunpack.c.l.b16 %v175
  %v843 = vunpack.c.h.b16 %v175
  %v844 = vunpack.c.l.b16 %v176
  %v845 = vunpack.c.h.b16 %v176
  %v846 = vunpack.c.l.b16 %v177
  %v847 = vunpack.c.h.b16 %v177
  %v848 = vunpack.c.l.b16 %v178
  %v849 = vunpack.c.h.b16 %v178
  %v850 = vunpack.c.l.b16 %v179
  %v851 = vunpack.c.h.b16 %v179
  %v852 = vunpack.c.l.b16 %v180
  %v853 = vunpack.c.h.b16 %v180
  %v854 = vunpack.c.l.b16 %v181
  %v855 = vunpack.c.h.b16 %v181
  %v856 = vunpack.c.l.b16 %v182
  %v857 = vunpack.c.h.b16 %v182
  %v858 = vunpack.c.l.b16 %v183
  %v859 = vunpack.c.h.b16 %v183
  %v860 = vunpack.c.l.b16 %v184
  %v861 = vunpack.c.h.b16 %v184
  %v862 = vunpack.c.l.b16 %v185
  %v863 = vunpack.c.h.b16 %v185
  %v864 = vunpack.c.l.b16 %v186
  %v865 = vunpack.c.h.b16 %v186
  %v866 = vunpack.c.l.b16 %v187
  %v867 = vunpack.c.h.b16 %v187
  %v868 = vunpack.c.l.b16 %v188
  %v869 = vunpack.c.h.b16 %v188
  %v870 = vunpack.c.l.b16 %v189
  %v871 = vunpack.c.h.b16 %v189
  %v872 = vunpack.c.l.b16 %v190
  %v873 = vunpack.c.h.b16 %v190
  %v874 = vunpack.c.l.b16 %v191
  %v875 = vunpack.c.h.b16 %v191
  %v876 = vunpack.c.l.b16 %v192
  %v877 = vunpack.c.h.b16 %v192
  %v878 = vunpack.c.l.b16 %v193
  %v879 = vunpack.c.h.b16 %v193
  %v880 = vunpack.c.l.b16 %v194
  %v881 = vunpack.c.h.b16 %v194
  %v882 = vunpack.c.l.b16 %v195
  %v883 = vunpack.c.h.b16 %v195
  %v884 = vunpack.c.l.b16 %v196
  %v885 = vunpack.c.h.b16 %v196
  %v886 = vunpack.c.l.b16 %v197
  %v887 = vunpack.c.h.b16 %v197
  %v888 = vunpack.c.l.b16 %v198
  %v889 = vunpack.c.h.b16 %v198
  %v890 = vunpack.c.l.b16 %v199
  %v891 = vunpack.c.h.b16 %v199
  %v892 = vunpack.c.l.b16 %v200
  %v893 = vunpack.c.h.b16 %v200
  %v894 = vunpack.c.l.b16 %v201
  %v895 = vunpack.c.h.b16 %v201
  %v896 = vunpack.c.l.b16 %v202
  %v897 = vunpack.c.h.b16 %v202
  %v898 = vunpack.c.l.b16 %v203
  %v899 = vunpack.c.h.b16 %v203
  %v900 = vunpack.c.l.b16 %v204
  %v901 = vunpack.c.h.b16 %v204
  %v902 = vunpack.c.l.b16 %v205
  %v903 = vunpack.c.h.b16 %v205
  %v904 = vunpack.c.l.b16 %v206
  %v905 = vunpack.c.h.b16 %v206
  %v906 = vunpack.c.l.b16 %v207
  %v907 = vunpack.c.h.b16 %v207
  %v908 = vunpack.c.l.b16 %v208
  %v909 = vunpack.c.h.b16 %v208
  %v910 = vunpack.c.l.b16 %v209
  %v911 = vunpack.c.h.b16 %v209
  %v912 = vunpack.c.l.b16 %v210
  %v913 = vunpack.c.h.b16 %v210
  %v914 = vunpack.c.l.b16 %v211
  %v915 = vunpack.c.h.b16 %v211
  %v916 = vunpack.c.l.b16 %v212
  %v917 = vunpack.c.h.b16 %v212
  %v918 = vunpack.c.l.b16 %v213
  %v919 = vunpack.c.h.b16 %v213
  %v920 = vunpack.c.l.b16 %v214
  %v921 = vunpack.c.h.b16 %v214
  %v922 = vunpack.c.l.b16 %v215
  %v923 = vunpack.c.h.b16 %v215
  %v924 = vunpack.c.l.b16 %v216
  %v925 = vunpack.c.h.b16 %v216
  %v926 = vunpack.c.l.b16 %v217
  %v927 = vunpack.c.h.b16 %v217
  %v928 = vunpack.c.l.b16 %v218
  %v929 = vunpack.c.h.b16 %v218
  %v930 = vunpack.c.l.b16 %v219
  %v931 = vunpack.c.h.b16 %v219
  %v932 = vunpack.c.l.b16 %v220
  %v933 = vunpack.c.h.b16 %v220
  %v934 = vunpack.c.l.b16 %v221
  %v935 = vunpack.c.h.b16 %v221
  %v936 = vunpack.c.l.b16 %v222
  %v937 = vunpack.c.h.b16 %v222
  %v938 = vunpack.c.l.b16 %v223
  %v939 = vunpack.c.h.b16 %v223
  %v940 = vunpack.c.l.b16 %v224
  %v941 = vunpack.c.h.b16 %v224
  %v942 = vunpack.c.l.b16 %v225
  %v943 = vunpack.c.h.b16 %v225
  %v944 = vunpack.c.l.b16 %v226
  %v945 = vunpack.c.h.b16 %v226
  %v946 = vunpack.c.l.b16 %v227
  %v947 = vunpack.c.h.b16 %v227
  %v948 = vunpack.c.l.b16 %v228
  %v949 = vunpack.c.h.b16 %v228
  %v950 = vunpack.c.l.b16 %v229
  %v951 = vunpack.c.h.b16 %v229
  %v952 = vunpack.c.l.b16 %v230
  %v953 = vunpack.c.h.b16 %v230
  %v954 = vunpack.c.l.b16 %v231
  %v955 = vunpack.c.h.b16 %v231
  %v956 = vunpack.c.l.b16 %v232
  %v957 = vunpack.c.h.b16 %v232
  %v958 = vunpack.c.l.b16 %v233
  %v959 = vunpack.c.h.b16 %v233
  %v960 = vunpack.c.l.b16 %v234
  %v961 = vunpack.c.h.b16 %v234
  %v962 = vunpack.c.l.b16 %v235
  %v963 = vunpack.c.h.b16 %v235
  %v964 = vunpack.c.l.b16 %v236
  %v965 = vunpack.c.h.b16 %v236
  %v966 = vunpack.c.l.b16 %v237
  %v967 = vunpack.c.h.b16 %v237
  %v968 = vunpack.c.l.b16 %v238
  %v969 = vunpack.c.h.b16 %v238
  %v970 = vunpack.c.l.b16 %v239
  %v971 = vunpack.c.h.b16 %v239
  %v972 = vunpack.c.l.b16 %v240
  %v973 = vunpack.c.h.b16 %v240
  %v974 = vunpack.c.l.b16 %v241
  %v975 = vunpack.c.h.b16 %v241
  %v976 = vunpack.c.l.b16 %v242
  %v977 = vunpack.c.h.b16 %v242
  %v978 = vunpack.c.l.b16 %v243
  %v979 = vunpack.c.h.b16 %v243
  %v980 = vunpack.c.l.b16 %v244
  %v981 = vunpack.c.h.b16 %v244
  %v982 = vunpack.c.l.b16 %v245
  %v983 = vunpack.c.h.b16 %v245
  %v984 = vunpack.c.l.b16 %v246
  %v985 = vunpack.c.h.b16 %v246
  %v986 = vunpack.c.l.b16 %v247
  %v987 = vunpack.c.h.b16 %v247
  %v988 = vunpack.c.l.b16 %v248
  %v989 = vunpack.c.h.b16 %v248
  %v990 = vunpack.c.l.b16 %v249
  %v991 = vunpack.c.h.b16 %v249
  %v992 = vunpack.c.l.b16 %v250
  %v993 = vunpack.c.h.b16 %v250
  %v994 = vunpack.c.l.b16 %v251
  %v995 = vunpack.c.h.b16 %v251
  %v996 = vunpack.c.l.b16 %v252
  %v997 = vunpack.c.h.b16 %v252
  %v998 = vunpack.c.l.b16 %v253
  %v999 = vunpack.c.h.b16 %v253
  %v1000 = vunpack.c.l.b16 %v254
  %v1001 = vunpack.c.h.b16 %v254
  %v1002 = vunpack.c.l.b16 %v255
  %v1003 = vunpack.c.h.b16 %v255
  %v1004 = vunpack.c.l.b16 %v256
  %v1005 = vunpack.c.h.b16 %v256
  %v1006 = vunpack.c.l.b16 %v257
  %v1007 = vunpack.c.h.b16 %v257
  %v1008 = vunpack.c.l.b16 %v258
  %v1009 = vunpack.c.h.b16 %v258
  %v1010 = vunpack.c.l.b16 %v259
  %v1011 = vunpack.c.h.b16 %v259
  %v1012 = vunpack.c.l.b16 %v260
  %v1013 = vunpack.c.h.b16 %v260
  %v1014 = vunpack.c.l.b16 %v261
  %v1015 = vunpack.c.h.b16 %v261
  %v1016 = vunpack.c.l.b16 %v262
  %v1017 = vunpack.c.h.b16 %v262
  %v1018 = vunpack.c.l.b16 %v263
  %v1019 = vunpack.c.h.b16 %v263
  %v1020 = vunpack.c.l.b16 %v264
  %v1021 = vunpack.c.h.b16 %v264
  %v1022 = vunpack.c.l.b16 %v265
  %v1023 = vunpack.c.h.b16 %v265
  %v1024 = vunpack.c.l.b16 %v266
  %v1025 = vunpack.c.h.b16 %v266
  %v1026 = vunpack.c.l.b16 %v267
  %v1027 = vunpack.c.h.b16 %v267
  %v1028 = vunpack.c.l.b16 %v268
  %v1029 = vunpack.c.h.b16 %v268
  %v1030 = vunpack.c.l.b16 %v269
  %v1031 = vunpack.c.h.b16 %v269
  %v1032 = vunpack.c.l.b16 %v270
  %v1033 = vunpack.c.h.b16 %v270
  %v1034 = vunpack.c.l.b16 %v271
  %v1035 = vunpack.c.h.b16 %v271
  %v1036 = vunpack.c.l.b16 %v272
  %v1037 = vunpack.c.h.b16 %v272
  %v1038 = vunpack.c.l.b16 %v273
  %v1039 = vunpack.c.h.b16 %v273
  %v1040 = vunpack.c.l.b16 %v274
  %v1041 = vunpack.c.h.b16 %v274
  %v1042 = vunpack.c.l.b16 %v275
  %v1043 = vunpack.c.h.b16 %v275
  %v1044 = vunpack.c.l.b16 %v276
  %v1045 = vunpack.c.h.b16 %v276
  %v1046 = vunpack.c.l.b16 %v277
  %v1047 = vunpack.c.h.b16 %v277
  %v1048 = vunpack.c.l.b16 %v278
  %v1049 = vunpack.c.h.b16 %v278
  %v1050 = vunpack.c.l.b16 %v279
  %v1051 = vunpack.c.h.b16 %v279
  %v1052 = vunpack.c.l.b16 %v280
  %v1053 = vunpack.c.h.b16 %v280
  %v1054 = vunpack.c.l.b16 %v281
  %v1055 = vunpack.c.h.b16 %v281
  %v1056 = vunpack.c.l.b16 %v282
  %v1057 = vunpack.c.h.b16 %v282
  %v1058 = vunpack.c.l.b16 %v283
  %v1059 = vunpack.c.h.b16 %v283
  %v1060 = vunpack.c.l.b16 %v284
  %v1061 = vunpack.c.h.b16 %v284
  %v1062 = vunpack.c.l.b16 %v285
  %v1063 = vunpack.c.h.b16 %v285
  %v1064 = vunpack.c.l.b16 %v286
  %v1065 = vunpack.c.h.b16 %v286
  %v1066 = vunpack.c.l.b16 %v287
  %v1067 = vunpack.c.h.b16 %v287
  %v1068 = vunpack.c.l.b16 %v288
  %v1069 = vunpack.c.h.b16 %v288
  %v1070 = vunpack.c.l.b16 %v289
  %v1071 = vunpack.c.h.b16 %v289
  %v1072 = vunpack.c.l.b16 %v290
  %v1073 = vunpack.c.h.b16 %v290
  %v1074 = vunpack.c.l.b16 %v291
  %v1075 = vunpack.c.h.b16 %v291
  %v1076 = vunpack.c.l.b16 %v292
  %v1077 = vunpack.c.h.b16 %v292
  %v1078 = vunpack.c.l.b16 %v293
  %v1079 = vunpack.c.h.b16 %v293
  %v1080 = vunpack.c.l.b16 %v294
  %v1081 = vunpack.c.h.b16 %v294
  %v1082 = vunpack.c.l.b16 %v295
  %v1083 = vunpack.c.h.b16 %v295
  %v1084 = vunpack.c.l.b16 %v296
  %v1085 = vunpack.c.h.b16 %v296
  %v1086 = vunpack.c.l.b16 %v297
  %v1087 = vunpack.c.h.b16 %v297
  %v1088 = vunpack.c.l.b16 %v298
  %v1089 = vunpack.c.h.b16 %v298
  %v1090 = vunpack.c.l.b16 %v299
  %v1091 = vunpack.c.h.b16 %v299
  %v1092 = vunpack.c.l.b16 %v300
  %v1093 = vunpack.c.h.b16 %v300
  %v1094 = vunpack.c.l.b16 %v301
  %v1095 = vunpack.c.h.b16 %v301
  %v1096 = vunpack.c.l.b16 %v302
  %v1097 = vunpack.c.h.b16 %v302
  %v1098 = vunpack.c.l.b16 %v303
  %v1099 = vunpack.c.h.b16 %v303
  %v1100 = vunpack.c.l.b16 %v304
  %v1101 = vunpack.c.h.b16 %v304
  %v1102 = vunpack.c.l.b16 %v305
  %v1103 = vunpack.c.h.b16 %v305
  %v1104 = vunpack.c.l.b16 %v306
  %v1105 = vunpack.c.h.b16 %v306
  %v1106 = vunpack.c.l.b16 %v307
  %v1107 = vunpack.c.h.b16 %v307
  %v1108 = vunpack.c.l.b16 %v308
  %v1109 = vunpack.c.h.b16 %v308
  %v1110 = vunpack.c.l.b16 %v309
  %v1111 = vunpack.c.h.b16 %v309
  %v1112 = vunpack.c.l.b16 %v310
  %v1113 = vunpack.c.h.b16 %v310
  %v1114 = vunpack.c.l.b16 %v311
  %v1115 = vunpack.c.h.b16 %v311
  %v1116 = vunpack.c.l.b16 %v312
  %v1117 = vunpack.c.h.b16 %v312
  %v1118 = vunpack.c.l.b16 %v313
  %v1119 = vunpack.c.h.b16 %v313
  %v1120 = vunpack.c.l.b16 %v314
  %v1121 = vunpack.c.h.b16 %v314
  %v1122 = vunpack.c.l.b16 %v315
  %v1123 = vunpack.c.h.b16 %v315
  %v1124 = vunpack.c.l.b16 %v316
  %v1125 = vunpack.c.h.b16 %v316
  %v1126 = vunpack.c.l.b16 %v317
  %v1127 = vunpack.c.h.b16 %v317
  %v1128 = vpack.c.b16 %v624, %v616
  %v1129 = vpack.c.b16 %v625, %v617
  %v1130 = vpack.c.b16 %v626, %v618
  %v1131 = vpack.c.b16 %v627, %v619
  %v1132 = vpack.c.b16 %v628, %v620
  %v1133 = vpack.c.b16 %v629, %v621
  %v1134 = vpack.c.b16 %v630, %v622
  %v1135 = vpack.c.b16 %v631, %v623
  %v1136 = vpack.c.b16 %v640, %v632
  %v1137 = vpack.c.b16 %v641, %v633
  %v1138 = vpack.c.b16 %v642, %v634
  %v1139 = vpack.c.b16 %v643, %v635
  %v1140 = vpack.c.b16 %v644, %v636
  %v1141 = vpack.c.b16 %v645, %v637
  %v1142 = vpack.c.b16 %v646, %v638
  %v1143 = vpack.c.b16 %v647, %v639
  %v1144 = vpack.c.b16 %v656, %v648
  %v1145 = vpack.c.b16 %v657, %v649
  %v1146 = vpack.c.b16 %v658, %v650
  %v1147 = vpack.c.b16 %v659, %v651
  %v1148 = vpack.c.b16 %v660, %v652
  %v1149 = vpack.c.b16 %v661, %v653
  %v1150 = vpack.c.b16 %v662, %v654
  %v1151 = vpack.c.b16 %v663, %v655
  %v1152 = vpack.c.b16 %v672, %v664
  %v1153 = vpack.c.b16 %v673, %v665
  %v1154 = vpack.c.b16 %v674, %v666
  %v1155 = vpack.c.b16 %v675, %v667
  %v1156 = vpack.c.b16 %v676, %v668
  %v1157 = vpack.c.b16 %v677, %v669
  %v1158 = vpack.c.b16 %v678, %v670
  %v1159 = vpack.c.b16 %v679, %v671
  %v1160 = vpack.c.b16 %v688, %v680
  %v1161 = vpack.c.b16 %v689, %v681
  %v1162 = vpack.c.b16 %v690, %v682
  %v1163 = vpack.c.b16 %v691, %v683
  %v1164 = vpack.c.b16 %v692, %v684
  %v1165 = vpack.c.b16 %v693, %v685
  %v1166 = vpack.c.b16 %v694, %v686
  %v1167 = vpack.c.b16 %v695, %v687
  %v1168 = vpack.c.b16 %v704, %v696
  %v1169 = vpack.c.b16 %v705, %v697
  %v1170 = vpack.c.b16 %v706, %v698
  %v1171 = vpack.c.b16 %v707, %v699
  %v1172 = vpack.c.b16 %v708, %v700
  %v1173 = vpack.c.b16 %v709, %v701
  %v1174 = vpack.c.b16 %v710, %v702
  %v1175 = vpack.c.b16 %v711, %v703
  %v1176 = vpack.c.b16 %v720, %v712
  %v1177 = vpack.c.b16 %v721, %v713
  %v1178 = vpack.c.b16 %v722, %v714
  %v1179 = vpack.c.b16 %v723, %v715
  %v1180 = vpack.c.b16 %v724, %v716
  %v1181 = vpack.c.b16 %v725, %v717
  %v1182 = vpack.c.b16 %v726, %v718
  %v1183 = vpack.c.b16 %v727, %v719
  %v1184 = vpack.c.b16 %v736, %v728
  %v1185 = vpack.c.b16 %v737, %v729
  %v1186 = vpack.c.b16 %v738, %v730
  %v1187 = vpack.c.b16 %v739, %v731
  %v1188 = vpack.c.b16 %v740, %v732
  %v1189 = vpack.c.b16 %v741, %v733
  %v1190 = vpack.c.b16 %v742, %v734
  %v1191 = vpack.c.b16 %v743, %v735
  %v1192 = vpack.c.b16 %v752, %v744
  %v1193 = vpack.c.b16 %v753, %v745
  %v1194 = vpack.c.b16 %v754, %v746
  %v1195 = vpack.c.b16 %v755, %v747
  %v1196 = vpack.c.b16 %v756, %v748
  %v1197 = vpack.c.b16 %v757, %v749
  %v1198 = vpack.c.b16 %v758, %v750
  %v1199 = vpack.c.b16 %v759, %v751
  %v1200 = vpack.c.b16 %v768, %v760
  %v1201 = vpack.c.b16 %v769, %v761
  %v1202 = vpack.c.b16 %v770, %v762
  %v1203 = vpack.c.b16 %v771, %v763
  %v1204 = vpack.c.b16 %v772, %v764
  %v1205 = vpack.c.b16 %v773, %v765
  %v1206 = vpack.c.b16 %v774, %v766
  %v1207 = vpack.c.b16 %v775, %v767
  %v1208 = vpack.c.b16 %v784, %v776
  %v1209 = vpack.c.b16 %v785, %v777
  %v1210 = vpack.c.b16 %v786, %v778
  %v1211 = vpack.c.b16 %v787, %v779
  %v1212 = vpack.c.b16 %v788, %v780
  %v1213 = vpack.c.b16 %v789, %v781
  %v1214 = vpack.c.b16 %v790, %v782
  %v1215 = vpack.c.b16 %v791, %v783
  %v1216 = vpack.c.b16 %v800, %v792
  %v1217 = vpack.c.b16 %v801, %v793
  %v1218 = vpack.c.b16 %v802, %v794
  %v1219 = vpack.c.b16 %v803, %v795
  %v1220 = vpack.c.b16 %v804, %v796
  %v1221 = vpack.c.b16 %v805, %v797
  %v1222 = vpack.c.b16 %v806, %v798
  %v1223 = vpack.c.b16 %v807, %v799
  %v1224 = vpack.c.b16 %v816, %v808
  %v1225 = vpack.c.b16 %v817, %v809
  %v1226 = vpack.c.b16 %v818, %v810
  %v1227 = vpack.c.b16 %v819, %v811
  %v1228 = vpack.c.b16 %v820, %v812
  %v1229 = vpack.c.b16 %v821, %v813
  %v1230 = vpack.c.b16 %v822, %v814
  %v1231 = vpack.c.b16 %v823, %v815
  %v1232 = vpack.c.b16 %v832, %v824
  %v1233 = vpack.c.b16 %v833, %v825
  %v1234 = vpack.c.b16 %v834, %v826
  %v1235 = vpack.c.b16 %v835, %v827
  %v1236 = vpack.c.b16 %v836, %v828
  %v1237 = vpack.c.b16 %v837, %v829
  %v1238 = vpack.c.b16 %v838, %v830
  %v1239 = vpack.c.b16 %v839, %v831
  %v1240 = vpack.c.b16 %v848, %v840
  %v1241 = vpack.c.b16 %v849, %v841
  %v1242 = vpack.c.b16 %v850, %v842
  %v1243 = vpack.c.b16 %v851, %v843
  %v1244 = vpack.c.b16 %v852, %v844
  %v1245 = vpack.c.b16 %v853, %v845
  %v1246 = vpack.c.b16 %v854, %v846
  %v1247 = vpack.c.b16 %v855, %v847
  %v1248 = vpack.c.b16 %v864, %v856
  %v1249 = vpack.c.b16 %v865, %v857
  %v1250 = vpack.c.b16 %v866, %v858
  %v1251 = vpack.c.b16 %v867, %v859
  %v1252 = vpack.c.b16 %v868, %v860
  %v1253 = vpack.c.b16 %v869, %v861
  %v1254 = vpack.c.b16 %v870, %v862
  %v1255 = vpack.c.b16 %v871, %v863
  %v1256 = vpack.c.b16 %v880, %v872
  %v1257 = vpack.c.b16 %v881, %v873
  %v1258 = vpack.c.b16 %v882, %v874
  %v1259 = vpack.c.b16 %v883, %v875
  %v1260 = vpack.c.b16 %v884, %v876
  %v1261 = vpack.c.b16 %v885, %v877
  %v1262 = vpack.c.b16 %v886, %v878
  %v1263 = vpack.c.b16 %v887, %v879
  %v1264 = vpack.c.b16 %v896, %v888
  %v1265 = vpack.c.b16 %v897, %v889
  %v1266 = vpack.c.b16 %v898, %v890
  %v1267 = vpack.c.b16 %v899, %v891
  %v1268 = vpack.c.b16 %v900, %v892
  %v1269 = vpack.c.b16 %v901, %v893
  %v1270 = vpack.c.b16 %v902, %v894
  %v1271 = vpack.c.b16 %v903, %v895
  %v1272 = vpack.c.b16 %v912, %v904
  %v1273 = vpack.c.b16 %v913, %v905
  %v1274 = vpack.c.b16 %v914, %v906
  %v1275 = vpack.c.b16 %v915, %v907
  %v1276 = vpack.c.b16 %v916, %v908
  %v1277 = vpack.c.b16 %v917, %v909
  %v1278 = vpack.c.b16 %v918, %v910
  %v1279 = vpack.c.b16 %v919, %v911
  %v1280 = vpack.c.b16 %v928, %v920
  %v1281 = vpack.c.b16 %v929, %v921
  %v1282 = vpack.c.b16 %v930, %v922
  %v1283 = vpack.c.b16 %v931, %v923
  %v1284 = vpack.c.b16 %v932, %v924
  %v1285 = vpack.c.b16 %v933, %v925
  %v1286 = vpack.c.b16 %v934, %v926
  %v1287 = vpack.c.b16 %v935, %v927
  %v1288 = vpack.c.b16 %v944, %v936
  %v1289 = vpack.c.b16 %v945, %v937
  %v1290 = vpack.c.b16 %v946, %v938
  %v1291 = vpack.c.b16 %v947, %v939
  %v1292 = vpack.c.b16 %v948, %v940
  %v1293 = vpack.c.b16 %v949, %v941
  %v1294 = vpack.c.b16 %v950, %v942
  %v1295 = vpack.c.b16 %v951, %v943
  %v1296 = vpack.c.b16 %v960, %v952
  %v1297 = vpack.c.b16 %v961, %v953
  %v1298 = vpack.c.b16 %v962, %v954
  %v1299 = vpack.c.b16 %v963, %v955
  %v1300 = vpack.c.b16 %v964, %v956
  %v1301 = vpack.c.b16 %v965, %v957
  %v1302 = vpack.c.b16 %v966, %v958
  %v1303 = vpack.c.b16 %v967, %v959
  %v1304 = vpack.c.b16 %v976, %v968
  %v1305 = vpack.c.b16 %v977, %v969
  %v1306 = vpack.c.b16 %v978, %v970
  %v1307 = vpack.c.b16 %v979, %v971
  %v1308 = vpack.c.b16 %v980, %v972
  %v1309 = vpack.c.b16 %v981, %v973
  %v1310 = vpack.c.b16 %v982, %v974
  %v1311 = vpack.c.b16 %v983, %v975
  %v1312 = vpack.c.b16 %v992, %v984
  %v1313 = vpack.c.b16 %v993, %v985
  %v1314 = vpack.c.b16 %v994, %v986
  %v1315 = vpack.c.b16 %v995, %v987
  %v1316 = vpack.c.b16 %v996, %v988
  %v1317 = vpack.c.b16 %v997, %v989
  %v1318 = vpack.c.b16 %v998, %v990
  %v1319 = vpack.c.b16 %v999, %v991
  %v1320 = vpack.c.b16 %v1008, %v1000
  %v1321 = vpack.c.b16 %v1009, %v1001
  %v1322 = vpack.c.b16 %v1010, %v1002
  %v1323 = vpack.c.b16 %v1011, %v1003
  %v1324 = vpack.c.b16 %v1012, %v1004
  %v1325 = vpack.c.b16 %v1013, %v1005
  %v1326 = vpack.c.b16 %v1014, %v1006
  %v1327 = vpack.c.b16 %v1015, %v1007
  %v1328 = vpack.c.b16 %v1024, %v1016
  %v1329 = vpack.c.b16 %v1025, %v1017
  %v1330 = vpack.c.b16 %v1026, %v1018
  %v1331 = vpack.c.b16 %v1027, %v1019
  %v1332 = vpack.c.b16 %v1028, %v1020
  %v1333 = vpack.c.b16 %v1029, %v1021
  %v1334 = vpack.c.b16 %v1030, %v1022
  %v1335 = vpack.c.b16 %v1031, %v1023
  %v1336 = vpack.c.b16 %v1040, %v1032
  %v1337 = vpack.c.b16 %v1041, %v1033
  %v1338 = vpack.c.b16 %v1042, %v1034
  %v1339 = vpack.c.b16 %v1043, %v1035
  %v1340 = vpack.c.b16 %v1044, %v1036
  %v1341 = vpack.c.b16 %v1045, %v1037
  %v1342 = vpack.c.b16 %v1046, %v1038
  %v1343 = vpack.c.b16 %v1047, %v1039
  %v1344 = vpack.c.b16 %v1056, %v1048
  %v1345 = vpack.c.b16 %v1057, %v1049
  %v1346 = vpack.c.b16 %v1058, %v1050
  %v1347 = vpack.c.b16 %v1059, %v1051
  %v1348 = vpack.c.b16 %v1060, %v1052
  %v1349 = vpack.c.b16 %v1061, %v1053
  %v1350 = vpack.c.b16 %v1062, %v1054
  %v1351 = vpack.c.b16 %v1063, %v1055
  %v1352 = vpack.c.b16 %v1072, %v1064
  %v1353 = vpack.c.b16 %v1073, %v1065
  %v1354 = vpack.c.b16 %v1074, %v1066
  %v1355 = vpack.c.b16 %v1075, %v1067
  %v1356 = vpack.c.b16 %v1076, %v1068
  %v1357 = vpack.c.b16 %v1077, %v1069
  %v1358 = vpack.c.b16 %v1078, %v1070
  %v1359 = vpack.c.b16 %v1079, %v1071
  %v1360 = vpack.c.b16 %v1088, %v1080
  %v1361 = vpack.c.b16 %v1089, %v1081
  %v1362 = vpack.c.b16 %v1090, %v1082
  %v1363 = vpack.c.b16 %v1091, %v1083
  %v1364 = vpack.c.b16 %v1092, %v1084
  %v1365 = vpack.c.b16 %v1093, %v1085
  %v1366 = vpack.c.b16 %v1094, %v1086
  %v1367 = vpack.c.b16 %v1095, %v1087
  %v1368 = vpack.c.b16 %v1104, %v1096
  %v1369 = vpack.c.b16 %v1105, %v1097
  %v1370 = vpack.c.b16 %v1106, %v1098
  %v1371 = vpack.c.b16 %v1107, %v1099
  %v1372 = vpack.c.b16 %v1108, %v1100
  %v1373 = vpack.c.b16 %v1109, %v1101
  %v1374 = vpack.c.b16 %v1110, %v1102
  %v1375 = vpack.c.b16 %v1111, %v1103
  %v1376 = vpack.c.b16 %v1120, %v1112
  %v1377 = vpack.c.b16 %v1121, %v1113
  %v1378 = vpack.c.b16 %v1122, %v1114
  %v1379 = vpack.c.b16 %v1123, %v1115
  %v1380 = vpack.c.b16 %v1124, %v1116
  %v1381 = vpack.c.b16 %v1125, %v1117
  %v1382 = vpack.c.b16 %v1126, %v1118
  %v1383 = vpack.c.b16 %v1127, %v1119
  %1640 = vmatprep.subr.bf16.mxu0 %v1185
  %1641 = vmatpush1.bf16.msra.mxu0 %v1184
  %1642 = vmatprep.subr.bf16.mxu0 %v1177
  %1643 = vmatpush1.bf16.msra.mxu0 %v1176
  %1644 = vmatprep.subr.bf16.mxu0 %v1169
  %1645 = vmatpush1.bf16.msra.mxu0 %v1168
  %1646 = vmatprep.subr.bf16.mxu0 %v1161
  %1647 = vmatpush1.bf16.msra.mxu0 %v1160
  %1648 = vmatprep.subr.bf16.mxu0 %v1153
  %1649 = vmatpush1.bf16.msra.mxu0 %v1152
  %1650 = vmatprep.subr.bf16.mxu0 %v1145
  %1651 = vmatpush1.bf16.msra.mxu0 %v1144
  %1652 = vmatprep.subr.bf16.mxu0 %v1137
  %1653 = vmatpush1.bf16.msra.mxu0 %v1136
  %1654 = vmatprep.subr.bf16.mxu0 %v1129
  %1655 = vmatpush1.bf16.msra.mxu0 %v1128
  %1656 = vmatprep.subr.bf16.mxu0 %v1249
  %1657 = vmatpush2.bf16.msra.mxu0 %v1248
  %1658 = vmatprep.subr.bf16.mxu0 %v1241
  %1659 = vmatpush2.bf16.msra.mxu0 %v1240
  %1660 = vmatprep.subr.bf16.mxu0 %v1233
  %1661 = vmatpush2.bf16.msra.mxu0 %v1232
  %1662 = vmatprep.subr.bf16.mxu0 %v1225
  %1663 = vmatpush2.bf16.msra.mxu0 %v1224
  %1664 = vmatprep.subr.bf16.mxu0 %v1217
  %1665 = vmatpush2.bf16.msra.mxu0 %v1216
  %1666 = vmatprep.subr.bf16.mxu0 %v1209
  %1667 = vmatpush2.bf16.msra.mxu0 %v1208
  %1668 = vmatprep.subr.bf16.mxu0 %v1201
  %1669 = vmatpush2.bf16.msra.mxu0 %v1200
  %1670 = vmatprep.subr.bf16.mxu0 %v1193
  %1671 = vmatpush2.bf16.msra.mxu0 %v1192
  %1672 = vmatprep.mubr.bf16.mxu0 %v47
  %1673 = vmatmul.mubr.bf16.gmra.mxu0 %v46
  %v1674 = vpop.f32.mrf.mxu0
  %v1675 = vadd.f32 %v323, %v1674
  %v1676 = vpop.f32.mrf.mxu0
  %v1677 = vadd.f32 %v327, %v1676
  %v1678 = vpop.f32.mrf.mxu0
  %v1679 = vadd.f32 %v323, %v1678
  %v1680 = vpop.f32.mrf.mxu0
  %v1681 = vadd.f32 %v327, %v1680
  %1682 = vmatprep.mubr.bf16.mxu0 %v51
  %1683 = vmatmul.mubr.bf16.gmra.mxu0 %v50
  %v1684 = vpop.f32.mrf.mxu0
  %v1685 = vadd.f32 %v323, %v1684
  %v1686 = vpop.f32.mrf.mxu0
  %v1687 = vadd.f32 %v327, %v1686
  %v1688 = vpop.f32.mrf.mxu0
  %v1689 = vadd.f32 %v323, %v1688
  %v1690 = vpop.f32.mrf.mxu0
  %v1691 = vadd.f32 %v327, %v1690
  %1692 = vmatprep.mubr.bf16.mxu0 %v55
  %1693 = vmatmul.mubr.bf16.gmra.mxu0 %v54
  %v1694 = vpop.f32.mrf.mxu0
  %v1695 = vadd.f32 %v323, %v1694
  %v1696 = vpop.f32.mrf.mxu0
  %v1697 = vadd.f32 %v327, %v1696
  %v1698 = vpop.f32.mrf.mxu0
  %v1699 = vadd.f32 %v323, %v1698
  %v1700 = vpop.f32.mrf.mxu0
  %v1701 = vadd.f32 %v327, %v1700
  %1702 = vmatprep.mubr.bf16.mxu0 %v59
  %1703 = vmatmul.mubr.bf16.gmra.mxu0 %v58
  %v1704 = vpop.f32.mrf.mxu0
  %v1705 = vadd.f32 %v323, %v1704
  %v1706 = vpop.f32.mrf.mxu0
  %v1707 = vadd.f32 %v327, %v1706
  %v1708 = vpop.f32.mrf.mxu0
  %v1709 = vadd.f32 %v323, %v1708
  %v1710 = vpop.f32.mrf.mxu0
  %v1711 = vadd.f32 %v327, %v1710
  %1712 = vdwg.mxu0
  %1713 = vmatprep.subr.bf16.mxu0 %v1313
  %1714 = vmatpush1.bf16.msra.mxu0 %v1312
  %1715 = vmatprep.subr.bf16.mxu0 %v1305
  %1716 = vmatpush1.bf16.msra.mxu0 %v1304
  %1717 = vmatprep.subr.bf16.mxu0 %v1297
  %1718 = vmatpush1.bf16.msra.mxu0 %v1296
  %1719 = vmatprep.subr.bf16.mxu0 %v1289
  %1720 = vmatpush1.bf16.msra.mxu0 %v1288
  %1721 = vmatprep.subr.bf16.mxu0 %v1281
  %1722 = vmatpush1.bf16.msra.mxu0 %v1280
  %1723 = vmatprep.subr.bf16.mxu0 %v1273
  %1724 = vmatpush1.bf16.msra.mxu0 %v1272
  %1725 = vmatprep.subr.bf16.mxu0 %v1265
  %1726 = vmatpush1.bf16.msra.mxu0 %v1264
  %1727 = vmatprep.subr.bf16.mxu0 %v1257
  %1728 = vmatpush1.bf16.msra.mxu0 %v1256
  %1729 = vmatprep.subr.bf16.mxu0 %v1377
  %1730 = vmatpush2.bf16.msra.mxu0 %v1376
  %1731 = vmatprep.subr.bf16.mxu0 %v1369
  %1732 = vmatpush2.bf16.msra.mxu0 %v1368
  %1733 = vmatprep.subr.bf16.mxu0 %v1361
  %1734 = vmatpush2.bf16.msra.mxu0 %v1360
  %1735 = vmatprep.subr.bf16.mxu0 %v1353
  %1736 = vmatpush2.bf16.msra.mxu0 %v1352
  %1737 = vmatprep.subr.bf16.mxu0 %v1345
  %1738 = vmatpush2.bf16.msra.mxu0 %v1344
  %1739 = vmatprep.subr.bf16.mxu0 %v1337
  %1740 = vmatpush2.bf16.msra.mxu0 %v1336
  %1741 = vmatprep.subr.bf16.mxu0 %v1329
  %1742 = vmatpush2.bf16.msra.mxu0 %v1328
  %1743 = vmatprep.subr.bf16.mxu0 %v1321
  %1744 = vmatpush2.bf16.msra.mxu0 %v1320
  %1745 = vmatprep.mubr.bf16.mxu0 %v49
  %1746 = vmatmul.mubr.bf16.gmra.mxu0 %v48
  %v1747 = vpop.f32.mrf.mxu0
  %v1748 = vadd.f32 %v1675, %v1747
  %v1749 = vpop.f32.mrf.mxu0
  %v1750 = vadd.f32 %v1677, %v1749
  %v1751 = vpop.f32.mrf.mxu0
  %v1752 = vadd.f32 %v1679, %v1751
  %v1753 = vpop.f32.mrf.mxu0
  %v1754 = vadd.f32 %v1681, %v1753
  %1755 = vmatprep.mubr.bf16.mxu0 %v53
  %1756 = vmatmul.mubr.bf16.gmra.mxu0 %v52
  %v1757 = vpop.f32.mrf.mxu0
  %v1758 = vadd.f32 %v1685, %v1757
  %v1759 = vpop.f32.mrf.mxu0
  %v1760 = vadd.f32 %v1687, %v1759
  %v1761 = vpop.f32.mrf.mxu0
  %v1762 = vadd.f32 %v1689, %v1761
  %v1763 = vpop.f32.mrf.mxu0
  %v1764 = vadd.f32 %v1691, %v1763
  %1765 = vmatprep.mubr.bf16.mxu0 %v57
  %1766 = vmatmul.mubr.bf16.gmra.mxu0 %v56
  %v1767 = vpop.f32.mrf.mxu0
  %v1768 = vadd.f32 %v1695, %v1767
  %v1769 = vpop.f32.mrf.mxu0
  %v1770 = vadd.f32 %v1697, %v1769
  %v1771 = vpop.f32.mrf.mxu0
  %v1772 = vadd.f32 %v1699, %v1771
  %v1773 = vpop.f32.mrf.mxu0
  %v1774 = vadd.f32 %v1701, %v1773
  %1775 = vmatprep.mubr.bf16.mxu0 %v61
  %1776 = vmatmul.mubr.bf16.gmra.mxu0 %v60
  %v1777 = vpop.f32.mrf.mxu0
  %v1778 = vadd.f32 %v1705, %v1777
  %v1779 = vpop.f32.mrf.mxu0
  %v1780 = vadd.f32 %v1707, %v1779
  %v1781 = vpop.f32.mrf.mxu0
  %v1782 = vadd.f32 %v1709, %v1781
  %v1783 = vpop.f32.mrf.mxu0
  %v1784 = vadd.f32 %v1711, %v1783
  %1785 = vdwg.mxu0
  %1786 = vmatprep.subr.bf16.mxu0 %v1187
  %1787 = vmatpush1.bf16.msra.mxu0 %v1186
  %1788 = vmatprep.subr.bf16.mxu0 %v1179
  %1789 = vmatpush1.bf16.msra.mxu0 %v1178
  %1790 = vmatprep.subr.bf16.mxu0 %v1171
  %1791 = vmatpush1.bf16.msra.mxu0 %v1170
  %1792 = vmatprep.subr.bf16.mxu0 %v1163
  %1793 = vmatpush1.bf16.msra.mxu0 %v1162
  %1794 = vmatprep.subr.bf16.mxu0 %v1155
  %1795 = vmatpush1.bf16.msra.mxu0 %v1154
  %1796 = vmatprep.subr.bf16.mxu0 %v1147
  %1797 = vmatpush1.bf16.msra.mxu0 %v1146
  %1798 = vmatprep.subr.bf16.mxu0 %v1139
  %1799 = vmatpush1.bf16.msra.mxu0 %v1138
  %1800 = vmatprep.subr.bf16.mxu0 %v1131
  %1801 = vmatpush1.bf16.msra.mxu0 %v1130
  %1802 = vmatprep.subr.bf16.mxu0 %v1251
  %1803 = vmatpush2.bf16.msra.mxu0 %v1250
  %1804 = vmatprep.subr.bf16.mxu0 %v1243
  %1805 = vmatpush2.bf16.msra.mxu0 %v1242
  %1806 = vmatprep.subr.bf16.mxu0 %v1235
  %1807 = vmatpush2.bf16.msra.mxu0 %v1234
  %1808 = vmatprep.subr.bf16.mxu0 %v1227
  %1809 = vmatpush2.bf16.msra.mxu0 %v1226
  %1810 = vmatprep.subr.bf16.mxu0 %v1219
  %1811 = vmatpush2.bf16.msra.mxu0 %v1218
  %1812 = vmatprep.subr.bf16.mxu0 %v1211
  %1813 = vmatpush2.bf16.msra.mxu0 %v1210
  %1814 = vmatprep.subr.bf16.mxu0 %v1203
  %1815 = vmatpush2.bf16.msra.mxu0 %v1202
  %1816 = vmatprep.subr.bf16.mxu0 %v1195
  %1817 = vmatpush2.bf16.msra.mxu0 %v1194
  %1818 = vmatprep.mubr.bf16.mxu0 %v47
  %1819 = vmatmul.mubr.bf16.gmra.mxu0 %v46
  %v1820 = vpop.f32.mrf.mxu0
  %v1821 = vadd.f32 %v331, %v1820
  %v1822 = vpop.f32.mrf.mxu0
  %v1823 = vadd.f32 %v335, %v1822
  %v1824 = vpop.f32.mrf.mxu0
  %v1825 = vadd.f32 %v331, %v1824
  %v1826 = vpop.f32.mrf.mxu0
  %v1827 = vadd.f32 %v335, %v1826
  %1828 = vmatprep.mubr.bf16.mxu0 %v51
  %1829 = vmatmul.mubr.bf16.gmra.mxu0 %v50
  %v1830 = vpop.f32.mrf.mxu0
  %v1831 = vadd.f32 %v331, %v1830
  %v1832 = vpop.f32.mrf.mxu0
  %v1833 = vadd.f32 %v335, %v1832
  %v1834 = vpop.f32.mrf.mxu0
  %v1835 = vadd.f32 %v331, %v1834
  %v1836 = vpop.f32.mrf.mxu0
  %v1837 = vadd.f32 %v335, %v1836
  %1838 = vmatprep.mubr.bf16.mxu0 %v55
  %1839 = vmatmul.mubr.bf16.gmra.mxu0 %v54
  %v1840 = vpop.f32.mrf.mxu0
  %v1841 = vadd.f32 %v331, %v1840
  %v1842 = vpop.f32.mrf.mxu0
  %v1843 = vadd.f32 %v335, %v1842
  %v1844 = vpop.f32.mrf.mxu0
  %v1845 = vadd.f32 %v331, %v1844
  %v1846 = vpop.f32.mrf.mxu0
  %v1847 = vadd.f32 %v335, %v1846
  %1848 = vmatprep.mubr.bf16.mxu0 %v59
  %1849 = vmatmul.mubr.bf16.gmra.mxu0 %v58
  %v1850 = vpop.f32.mrf.mxu0
  %v1851 = vadd.f32 %v331, %v1850
  %v1852 = vpop.f32.mrf.mxu0
  %v1853 = vadd.f32 %v335, %v1852
  %v1854 = vpop.f32.mrf.mxu0
  %v1855 = vadd.f32 %v331, %v1854
  %v1856 = vpop.f32.mrf.mxu0
  %v1857 = vadd.f32 %v335, %v1856
  %1858 = vdwg.mxu0
  %1859 = vmatprep.subr.bf16.mxu0 %v1315
  %1860 = vmatpush1.bf16.msra.mxu0 %v1314
  %1861 = vmatprep.subr.bf16.mxu0 %v1307
  %1862 = vmatpush1.bf16.msra.mxu0 %v1306
  %1863 = vmatprep.subr.bf16.mxu0 %v1299
  %1864 = vmatpush1.bf16.msra.mxu0 %v1298
  %1865 = vmatprep.subr.bf16.mxu0 %v1291
  %1866 = vmatpush1.bf16.msra.mxu0 %v1290
  %1867 = vmatprep.subr.bf16.mxu0 %v1283
  %1868 = vmatpush1.bf16.msra.mxu0 %v1282
  %1869 = vmatprep.subr.bf16.mxu0 %v1275
  %1870 = vmatpush1.bf16.msra.mxu0 %v1274
  %1871 = vmatprep.subr.bf16.mxu0 %v1267
  %1872 = vmatpush1.bf16.msra.mxu0 %v1266
  %1873 = vmatprep.subr.bf16.mxu0 %v1259
  %1874 = vmatpush1.bf16.msra.mxu0 %v1258
  %1875 = vmatprep.subr.bf16.mxu0 %v1379
  %1876 = vmatpush2.bf16.msra.mxu0 %v1378
  %1877 = vmatprep.subr.bf16.mxu0 %v1371
  %1878 = vmatpush2.bf16.msra.mxu0 %v1370
  %1879 = vmatprep.subr.bf16.mxu0 %v1363
  %1880 = vmatpush2.bf16.msra.mxu0 %v1362
  %1881 = vmatprep.subr.bf16.mxu0 %v1355
  %1882 = vmatpush2.bf16.msra.mxu0 %v1354
  %1883 = vmatprep.subr.bf16.mxu0 %v1347
  %1884 = vmatpush2.bf16.msra.mxu0 %v1346
  %1885 = vmatprep.subr.bf16.mxu0 %v1339
  %1886 = vmatpush2.bf16.msra.mxu0 %v1338
  %1887 = vmatprep.subr.bf16.mxu0 %v1331
  %1888 = vmatpush2.bf16.msra.mxu0 %v1330
  %1889 = vmatprep.subr.bf16.mxu0 %v1323
  %1890 = vmatpush2.bf16.msra.mxu0 %v1322
  %1891 = vmatprep.mubr.bf16.mxu0 %v49
  %1892 = vmatmul.mubr.bf16.gmra.mxu0 %v48
  %v1893 = vpop.f32.mrf.mxu0
  %v1894 = vadd.f32 %v1821, %v1893
  %v1895 = vpop.f32.mrf.mxu0
  %v1896 = vadd.f32 %v1823, %v1895
  %v1897 = vpop.f32.mrf.mxu0
  %v1898 = vadd.f32 %v1825, %v1897
  %v1899 = vpop.f32.mrf.mxu0
  %v1900 = vadd.f32 %v1827, %v1899
  %1901 = vmatprep.mubr.bf16.mxu0 %v53
  %1902 = vmatmul.mubr.bf16.gmra.mxu0 %v52
  %v1903 = vpop.f32.mrf.mxu0
  %v1904 = vadd.f32 %v1831, %v1903
  %v1905 = vpop.f32.mrf.mxu0
  %v1906 = vadd.f32 %v1833, %v1905
  %v1907 = vpop.f32.mrf.mxu0
  %v1908 = vadd.f32 %v1835, %v1907
  %v1909 = vpop.f32.mrf.mxu0
  %v1910 = vadd.f32 %v1837, %v1909
  %1911 = vmatprep.mubr.bf16.mxu0 %v57
  %1912 = vmatmul.mubr.bf16.gmra.mxu0 %v56
  %v1913 = vpop.f32.mrf.mxu0
  %v1914 = vadd.f32 %v1841, %v1913
  %v1915 = vpop.f32.mrf.mxu0
  %v1916 = vadd.f32 %v1843, %v1915
  %v1917 = vpop.f32.mrf.mxu0
  %v1918 = vadd.f32 %v1845, %v1917
  %v1919 = vpop.f32.mrf.mxu0
  %v1920 = vadd.f32 %v1847, %v1919
  %1921 = vmatprep.mubr.bf16.mxu0 %v61
  %1922 = vmatmul.mubr.bf16.gmra.mxu0 %v60
  %v1923 = vpop.f32.mrf.mxu0
  %v1924 = vadd.f32 %v1851, %v1923
  %v1925 = vpop.f32.mrf.mxu0
  %v1926 = vadd.f32 %v1853, %v1925
  %v1927 = vpop.f32.mrf.mxu0
  %v1928 = vadd.f32 %v1855, %v1927
  %v1929 = vpop.f32.mrf.mxu0
  %v1930 = vadd.f32 %v1857, %v1929
  %1931 = vdwg.mxu0
  %1932 = vmatprep.subr.bf16.mxu0 %v1189
  %1933 = vmatpush1.bf16.msra.mxu0 %v1188
  %1934 = vmatprep.subr.bf16.mxu0 %v1181
  %1935 = vmatpush1.bf16.msra.mxu0 %v1180
  %1936 = vmatprep.subr.bf16.mxu0 %v1173
  %1937 = vmatpush1.bf16.msra.mxu0 %v1172
  %1938 = vmatprep.subr.bf16.mxu0 %v1165
  %1939 = vmatpush1.bf16.msra.mxu0 %v1164
  %1940 = vmatprep.subr.bf16.mxu0 %v1157
  %1941 = vmatpush1.bf16.msra.mxu0 %v1156
  %1942 = vmatprep.subr.bf16.mxu0 %v1149
  %1943 = vmatpush1.bf16.msra.mxu0 %v1148
  %1944 = vmatprep.subr.bf16.mxu0 %v1141
  %1945 = vmatpush1.bf16.msra.mxu0 %v1140
  %1946 = vmatprep.subr.bf16.mxu0 %v1133
  %1947 = vmatpush1.bf16.msra.mxu0 %v1132
  %1948 = vmatprep.subr.bf16.mxu0 %v1253
  %1949 = vmatpush2.bf16.msra.mxu0 %v1252
  %1950 = vmatprep.subr.bf16.mxu0 %v1245
  %1951 = vmatpush2.bf16.msra.mxu0 %v1244
  %1952 = vmatprep.subr.bf16.mxu0 %v1237
  %1953 = vmatpush2.bf16.msra.mxu0 %v1236
  %1954 = vmatprep.subr.bf16.mxu0 %v1229
  %1955 = vmatpush2.bf16.msra.mxu0 %v1228
  %1956 = vmatprep.subr.bf16.mxu0 %v1221
  %1957 = vmatpush2.bf16.msra.mxu0 %v1220
  %1958 = vmatprep.subr.bf16.mxu0 %v1213
  %1959 = vmatpush2.bf16.msra.mxu0 %v1212
  %1960 = vmatprep.subr.bf16.mxu0 %v1205
  %1961 = vmatpush2.bf16.msra.mxu0 %v1204
  %1962 = vmatprep.subr.bf16.mxu0 %v1197
  %1963 = vmatpush2.bf16.msra.mxu0 %v1196
  %1964 = vmatprep.mubr.bf16.mxu0 %v47
  %1965 = vmatmul.mubr.bf16.gmra.mxu0 %v46
  %v1966 = vpop.f32.mrf.mxu0
  %v1967 = vadd.f32 %v339, %v1966
  %v1968 = vpop.f32.mrf.mxu0
  %v1969 = vadd.f32 %v343, %v1968
  %v1970 = vpop.f32.mrf.mxu0
  %v1971 = vadd.f32 %v339, %v1970
  %v1972 = vpop.f32.mrf.mxu0
  %v1973 = vadd.f32 %v343, %v1972
  %1974 = vmatprep.mubr.bf16.mxu0 %v51
  %1975 = vmatmul.mubr.bf16.gmra.mxu0 %v50
  %v1976 = vpop.f32.mrf.mxu0
  %v1977 = vadd.f32 %v339, %v1976
  %v1978 = vpop.f32.mrf.mxu0
  %v1979 = vadd.f32 %v343, %v1978
  %v1980 = vpop.f32.mrf.mxu0
  %v1981 = vadd.f32 %v339, %v1980
  %v1982 = vpop.f32.mrf.mxu0
  %v1983 = vadd.f32 %v343, %v1982
  %1984 = vmatprep.mubr.bf16.mxu0 %v55
  %1985 = vmatmul.mubr.bf16.gmra.mxu0 %v54
  %v1986 = vpop.f32.mrf.mxu0
  %v1987 = vadd.f32 %v339, %v1986
  %v1988 = vpop.f32.mrf.mxu0
  %v1989 = vadd.f32 %v343, %v1988
  %v1990 = vpop.f32.mrf.mxu0
  %v1991 = vadd.f32 %v339, %v1990
  %v1992 = vpop.f32.mrf.mxu0
  %v1993 = vadd.f32 %v343, %v1992
  %1994 = vmatprep.mubr.bf16.mxu0 %v59
  %1995 = vmatmul.mubr.bf16.gmra.mxu0 %v58
  %v1996 = vpop.f32.mrf.mxu0
  %v1997 = vadd.f32 %v339, %v1996
  %v1998 = vpop.f32.mrf.mxu0
  %v1999 = vadd.f32 %v343, %v1998
  %v2000 = vpop.f32.mrf.mxu0
  %v2001 = vadd.f32 %v339, %v2000
  %v2002 = vpop.f32.mrf.mxu0
  %v2003 = vadd.f32 %v343, %v2002
  %2004 = vdwg.mxu0
  %2005 = vmatprep.subr.bf16.mxu0 %v1317
  %2006 = vmatpush1.bf16.msra.mxu0 %v1316
  %2007 = vmatprep.subr.bf16.mxu0 %v1309
  %2008 = vmatpush1.bf16.msra.mxu0 %v1308
  %2009 = vmatprep.subr.bf16.mxu0 %v1301
  %2010 = vmatpush1.bf16.msra.mxu0 %v1300
  %2011 = vmatprep.subr.bf16.mxu0 %v1293
  %2012 = vmatpush1.bf16.msra.mxu0 %v1292
  %2013 = vmatprep.subr.bf16.mxu0 %v1285
  %2014 = vmatpush1.bf16.msra.mxu0 %v1284
  %2015 = vmatprep.subr.bf16.mxu0 %v1277
  %2016 = vmatpush1.bf16.msra.mxu0 %v1276
  %2017 = vmatprep.subr.bf16.mxu0 %v1269
  %2018 = vmatpush1.bf16.msra.mxu0 %v1268
  %2019 = vmatprep.subr.bf16.mxu0 %v1261
  %2020 = vmatpush1.bf16.msra.mxu0 %v1260
  %2021 = vmatprep.subr.bf16.mxu0 %v1381
  %2022 = vmatpush2.bf16.msra.mxu0 %v1380
  %2023 = vmatprep.subr.bf16.mxu0 %v1373
  %2024 = vmatpush2.bf16.msra.mxu0 %v1372
  %2025 = vmatprep.subr.bf16.mxu0 %v1365
  %2026 = vmatpush2.bf16.msra.mxu0 %v1364
  %2027 = vmatprep.subr.bf16.mxu0 %v1357
  %2028 = vmatpush2.bf16.msra.mxu0 %v1356
  %2029 = vmatprep.subr.bf16.mxu0 %v1349
  %2030 = vmatpush2.bf16.msra.mxu0 %v1348
  %2031 = vmatprep.subr.bf16.mxu0 %v1341
  %2032 = vmatpush2.bf16.msra.mxu0 %v1340
  %2033 = vmatprep.subr.bf16.mxu0 %v1333
  %2034 = vmatpush2.bf16.msra.mxu0 %v1332
  %2035 = vmatprep.subr.bf16.mxu0 %v1325
  %2036 = vmatpush2.bf16.msra.mxu0 %v1324
  %2037 = vmatprep.mubr.bf16.mxu0 %v49
  %2038 = vmatmul.mubr.bf16.gmra.mxu0 %v48
  %v2039 = vpop.f32.mrf.mxu0
  %v2040 = vadd.f32 %v1967, %v2039
  %v2041 = vpop.f32.mrf.mxu0
  %v2042 = vadd.f32 %v1969, %v2041
  %v2043 = vpop.f32.mrf.mxu0
  %v2044 = vadd.f32 %v1971, %v2043
  %v2045 = vpop.f32.mrf.mxu0
  %v2046 = vadd.f32 %v1973, %v2045
  %2047 = vmatprep.mubr.bf16.mxu0 %v53
  %2048 = vmatmul.mubr.bf16.gmra.mxu0 %v52
  %v2049 = vpop.f32.mrf.mxu0
  %v2050 = vadd.f32 %v1977, %v2049
  %v2051 = vpop.f32.mrf.mxu0
  %v2052 = vadd.f32 %v1979, %v2051
  %v2053 = vpop.f32.mrf.mxu0
  %v2054 = vadd.f32 %v1981, %v2053
  %v2055 = vpop.f32.mrf.mxu0
  %v2056 = vadd.f32 %v1983, %v2055
  %2057 = vmatprep.mubr.bf16.mxu0 %v57
  %2058 = vmatmul.mubr.bf16.gmra.mxu0 %v56
  %v2059 = vpop.f32.mrf.mxu0
  %v2060 = vadd.f32 %v1987, %v2059
  %v2061 = vpop.f32.mrf.mxu0
  %v2062 = vadd.f32 %v1989, %v2061
  %v2063 = vpop.f32.mrf.mxu0
  %v2064 = vadd.f32 %v1991, %v2063
  %v2065 = vpop.f32.mrf.mxu0
  %v2066 = vadd.f32 %v1993, %v2065
  %2067 = vmatprep.mubr.bf16.mxu0 %v61
  %2068 = vmatmul.mubr.bf16.gmra.mxu0 %v60
  %v2069 = vpop.f32.mrf.mxu0
  %v2070 = vadd.f32 %v1997, %v2069
  %v2071 = vpop.f32.mrf.mxu0
  %v2072 = vadd.f32 %v1999, %v2071
  %v2073 = vpop.f32.mrf.mxu0
  %v2074 = vadd.f32 %v2001, %v2073
  %v2075 = vpop.f32.mrf.mxu0
  %v2076 = vadd.f32 %v2003, %v2075
  %2077 = vdwg.mxu0
  %2078 = vmatprep.subr.bf16.mxu0 %v1191
  %2079 = vmatpush1.bf16.msra.mxu0 %v1190
  %2080 = vmatprep.subr.bf16.mxu0 %v1183
  %2081 = vmatpush1.bf16.msra.mxu0 %v1182
  %2082 = vmatprep.subr.bf16.mxu0 %v1175
  %2083 = vmatpush1.bf16.msra.mxu0 %v1174
  %2084 = vmatprep.subr.bf16.mxu0 %v1167
  %2085 = vmatpush1.bf16.msra.mxu0 %v1166
  %2086 = vmatprep.subr.bf16.mxu0 %v1159
  %2087 = vmatpush1.bf16.msra.mxu0 %v1158
  %2088 = vmatprep.subr.bf16.mxu0 %v1151
  %2089 = vmatpush1.bf16.msra.mxu0 %v1150
  %2090 = vmatprep.subr.bf16.mxu0 %v1143
  %2091 = vmatpush1.bf16.msra.mxu0 %v1142
  %2092 = vmatprep.subr.bf16.mxu0 %v1135
  %2093 = vmatpush1.bf16.msra.mxu0 %v1134
  %2094 = vmatprep.subr.bf16.mxu0 %v1255
  %2095 = vmatpush2.bf16.msra.mxu0 %v1254
  %2096 = vmatprep.subr.bf16.mxu0 %v1247
  %2097 = vmatpush2.bf16.msra.mxu0 %v1246
  %2098 = vmatprep.subr.bf16.mxu0 %v1239
  %2099 = vmatpush2.bf16.msra.mxu0 %v1238
  %2100 = vmatprep.subr.bf16.mxu0 %v1231
  %2101 = vmatpush2.bf16.msra.mxu0 %v1230
  %2102 = vmatprep.subr.bf16.mxu0 %v1223
  %2103 = vmatpush2.bf16.msra.mxu0 %v1222
  %2104 = vmatprep.subr.bf16.mxu0 %v1215
  %2105 = vmatpush2.bf16.msra.mxu0 %v1214
  %2106 = vmatprep.subr.bf16.mxu0 %v1207
  %2107 = vmatpush2.bf16.msra.mxu0 %v1206
  %2108 = vmatprep.subr.bf16.mxu0 %v1199
  %2109 = vmatpush2.bf16.msra.mxu0 %v1198
  %2110 = vmatprep.mubr.bf16.mxu0 %v47
  %2111 = vmatmul.mubr.bf16.gmra.mxu0 %v46
  %v2112 = vpop.f32.mrf.mxu0
  %v2113 = vadd.f32 %v347, %v2112
  %v2114 = vpop.f32.mrf.mxu0
  %v2115 = vadd.f32 %v351, %v2114
  %v2116 = vpop.f32.mrf.mxu0
  %v2117 = vadd.f32 %v347, %v2116
  %v2118 = vpop.f32.mrf.mxu0
  %v2119 = vadd.f32 %v351, %v2118
  %2120 = vmatprep.mubr.bf16.mxu0 %v51
  %2121 = vmatmul.mubr.bf16.gmra.mxu0 %v50
  %v2122 = vpop.f32.mrf.mxu0
  %v2123 = vadd.f32 %v347, %v2122
  %v2124 = vpop.f32.mrf.mxu0
  %v2125 = vadd.f32 %v351, %v2124
  %v2126 = vpop.f32.mrf.mxu0
  %v2127 = vadd.f32 %v347, %v2126
  %v2128 = vpop.f32.mrf.mxu0
  %v2129 = vadd.f32 %v351, %v2128
  %2130 = vmatprep.mubr.bf16.mxu0 %v55
  %2131 = vmatmul.mubr.bf16.gmra.mxu0 %v54
  %v2132 = vpop.f32.mrf.mxu0
  %v2133 = vadd.f32 %v347, %v2132
  %v2134 = vpop.f32.mrf.mxu0
  %v2135 = vadd.f32 %v351, %v2134
  %v2136 = vpop.f32.mrf.mxu0
  %v2137 = vadd.f32 %v347, %v2136
  %v2138 = vpop.f32.mrf.mxu0
  %v2139 = vadd.f32 %v351, %v2138
  %2140 = vmatprep.mubr.bf16.mxu0 %v59
  %2141 = vmatmul.mubr.bf16.gmra.mxu0 %v58
  %v2142 = vpop.f32.mrf.mxu0
  %v2143 = vadd.f32 %v347, %v2142
  %v2144 = vpop.f32.mrf.mxu0
  %v2145 = vadd.f32 %v351, %v2144
  %v2146 = vpop.f32.mrf.mxu0
  %v2147 = vadd.f32 %v347, %v2146
  %v2148 = vpop.f32.mrf.mxu0
  %v2149 = vadd.f32 %v351, %v2148
  %2150 = vdwg.mxu0
  %2151 = vmatprep.subr.bf16.mxu0 %v1319
  %2152 = vmatpush1.bf16.msra.mxu0 %v1318
  %2153 = vmatprep.subr.bf16.mxu0 %v1311
  %2154 = vmatpush1.bf16.msra.mxu0 %v1310
  %2155 = vmatprep.subr.bf16.mxu0 %v1303
  %2156 = vmatpush1.bf16.msra.mxu0 %v1302
  %2157 = vmatprep.subr.bf16.mxu0 %v1295
  %2158 = vmatpush1.bf16.msra.mxu0 %v1294
  %2159 = vmatprep.subr.bf16.mxu0 %v1287
  %2160 = vmatpush1.bf16.msra.mxu0 %v1286
  %2161 = vmatprep.subr.bf16.mxu0 %v1279
  %2162 = vmatpush1.bf16.msra.mxu0 %v1278
  %2163 = vmatprep.subr.bf16.mxu0 %v1271
  %2164 = vmatpush1.bf16.msra.mxu0 %v1270
  %2165 = vmatprep.subr.bf16.mxu0 %v1263
  %2166 = vmatpush1.bf16.msra.mxu0 %v1262
  %2167 = vmatprep.subr.bf16.mxu0 %v1383
  %2168 = vmatpush2.bf16.msra.mxu0 %v1382
  %2169 = vmatprep.subr.bf16.mxu0 %v1375
  %2170 = vmatpush2.bf16.msra.mxu0 %v1374
  %2171 = vmatprep.subr.bf16.mxu0 %v1367
  %2172 = vmatpush2.bf16.msra.mxu0 %v1366
  %2173 = vmatprep.subr.bf16.mxu0 %v1359
  %2174 = vmatpush2.bf16.msra.mxu0 %v1358
  %2175 = vmatprep.subr.bf16.mxu0 %v1351
  %2176 = vmatpush2.bf16.msra.mxu0 %v1350
  %2177 = vmatprep.subr.bf16.mxu0 %v1343
  %2178 = vmatpush2.bf16.msra.mxu0 %v1342
  %2179 = vmatprep.subr.bf16.mxu0 %v1335
  %2180 = vmatpush2.bf16.msra.mxu0 %v1334
  %2181 = vmatprep.subr.bf16.mxu0 %v1327
  %2182 = vmatpush2.bf16.msra.mxu0 %v1326
  %2183 = vmatprep.mubr.bf16.mxu0 %v49
  %2184 = vmatmul.mubr.bf16.gmra.mxu0 %v48
  %v2185 = vpop.f32.mrf.mxu0
  %v2186 = vadd.f32 %v2113, %v2185
  %v2187 = vpop.f32.mrf.mxu0
  %v2188 = vadd.f32 %v2115, %v2187
  %v2189 = vpop.f32.mrf.mxu0
  %v2190 = vadd.f32 %v2117, %v2189
  %v2191 = vpop.f32.mrf.mxu0
  %v2192 = vadd.f32 %v2119, %v2191
  %2193 = vmatprep.mubr.bf16.mxu0 %v53
  %2194 = vmatmul.mubr.bf16.gmra.mxu0 %v52
  %v2195 = vpop.f32.mrf.mxu0
  %v2196 = vadd.f32 %v2123, %v2195
  %v2197 = vpop.f32.mrf.mxu0
  %v2198 = vadd.f32 %v2125, %v2197
  %v2199 = vpop.f32.mrf.mxu0
  %v2200 = vadd.f32 %v2127, %v2199
  %v2201 = vpop.f32.mrf.mxu0
  %v2202 = vadd.f32 %v2129, %v2201
  %2203 = vmatprep.mubr.bf16.mxu0 %v57
  %2204 = vmatmul.mubr.bf16.gmra.mxu0 %v56
  %v2205 = vpop.f32.mrf.mxu0
  %v2206 = vadd.f32 %v2133, %v2205
  %v2207 = vpop.f32.mrf.mxu0
  %v2208 = vadd.f32 %v2135, %v2207
  %v2209 = vpop.f32.mrf.mxu0
  %v2210 = vadd.f32 %v2137, %v2209
  %v2211 = vpop.f32.mrf.mxu0
  %v2212 = vadd.f32 %v2139, %v2211
  %2213 = vmatprep.mubr.bf16.mxu0 %v61
  %2214 = vmatmul.mubr.bf16.gmra.mxu0 %v60
  %v2215 = vpop.f32.mrf.mxu0
  %v2216 = vadd.f32 %v2143, %v2215
  %v2217 = vpop.f32.mrf.mxu0
  %v2218 = vadd.f32 %v2145, %v2217
  %v2219 = vpop.f32.mrf.mxu0
  %v2220 = vadd.f32 %v2147, %v2219
  %v2221 = vpop.f32.mrf.mxu0
  %v2222 = vadd.f32 %v2149, %v2221
  %2223 = vdwg.mxu0
  %v2224 = vmax.f32 %v1748, 0.0
  %v2225 = vmax.f32 %v1750, 0.0
  %v2226 = vmax.f32 %v1894, 0.0
  %v2227 = vmax.f32 %v1896, 0.0
  %v2228 = vmax.f32 %v2040, 0.0
  %v2229 = vmax.f32 %v2042, 0.0
  %v2230 = vmax.f32 %v2186, 0.0
  %v2231 = vmax.f32 %v2188, 0.0
  %v2232 = vmax.f32 %v1752, 0.0
  %v2233 = vmax.f32 %v1754, 0.0
  %v2234 = vmax.f32 %v1898, 0.0
  %v2235 = vmax.f32 %v1900, 0.0
  %v2236 = vmax.f32 %v2044, 0.0
  %v2237 = vmax.f32 %v2046, 0.0
  %v2238 = vmax.f32 %v2190, 0.0
  %v2239 = vmax.f32 %v2192, 0.0
  %v2240 = vmax.f32 %v1758, 0.0
  %v2241 = vmax.f32 %v1760, 0.0
  %v2242 = vmax.f32 %v1904, 0.0
  %v2243 = vmax.f32 %v1906, 0.0
  %v2244 = vmax.f32 %v2050, 0.0
  %v2245 = vmax.f32 %v2052, 0.0
  %v2246 = vmax.f32 %v2196, 0.0
  %v2247 = vmax.f32 %v2198, 0.0
  %v2248 = vmax.f32 %v1762, 0.0
  %v2249 = vmax.f32 %v1764, 0.0
  %v2250 = vmax.f32 %v1908, 0.0
  %v2251 = vmax.f32 %v1910, 0.0
  %v2252 = vmax.f32 %v2054, 0.0
  %v2253 = vmax.f32 %v2056, 0.0
  %v2254 = vmax.f32 %v2200, 0.0
  %v2255 = vmax.f32 %v2202, 0.0
  %v2256 = vmax.f32 %v1768, 0.0
  %v2257 = vmax.f32 %v1770, 0.0
  %v2258 = vmax.f32 %v1914, 0.0
  %v2259 = vmax.f32 %v1916, 0.0
  %v2260 = vmax.f32 %v2060, 0.0
  %v2261 = vmax.f32 %v2062, 0.0
  %v2262 = vmax.f32 %v2206, 0.0
  %v2263 = vmax.f32 %v2208, 0.0
  %v2264 = vmax.f32 %v1772, 0.0
  %v2265 = vmax.f32 %v1774, 0.0
  %v2266 = vmax.f32 %v1918, 0.0
  %v2267 = vmax.f32 %v1920, 0.0
  %v2268 = vmax.f32 %v2064, 0.0
  %v2269 = vmax.f32 %v2066, 0.0
  %v2270 = vmax.f32 %v2210, 0.0
  %v2271 = vmax.f32 %v2212, 0.0
  %v2272 = vmax.f32 %v1778, 0.0
  %v2273 = vmax.f32 %v1780, 0.0
  %v2274 = vmax.f32 %v1924, 0.0
  %v2275 = vmax.f32 %v1926, 0.0
  %v2276 = vmax.f32 %v2070, 0.0
  %v2277 = vmax.f32 %v2072, 0.0
  %v2278 = vmax.f32 %v2216, 0.0
  %v2279 = vmax.f32 %v2218, 0.0
  %v2280 = vmax.f32 %v1782, 0.0
  %v2281 = vmax.f32 %v1784, 0.0
  %v2282 = vmax.f32 %v1928, 0.0
  %v2283 = vmax.f32 %v1930, 0.0
  %v2284 = vmax.f32 %v2074, 0.0
  %v2285 = vmax.f32 %v2076, 0.0
  %v2286 = vmax.f32 %v2220, 0.0
  %v2287 = vmax.f32 %v2222, 0.0
  %2288 = vst [vmem:[%s3] sm:$0xff] %v2224
  %2289 = vst [vmem:[%s3 + $0x8] sm:$0xff] %v2225
  %2290 = vst [vmem:[%s3 + $0x10] sm:$0xff] %v2226
  %2291 = vst [vmem:[%s3 + $0x18] sm:$0xff] %v2227
  %2292 = vst [vmem:[%s3 + $0x20] sm:$0xff] %v2228
  %2293 = vst [vmem:[%s3 + $0x28] sm:$0xff] %v2229
  %2294 = vst [vmem:[%s3 + $0x30] sm:$0xff] %v2230
  %2295 = vst [vmem:[%s3 + $0x38] sm:$0xff] %v2231
  %2296 = vst [vmem:[%s3 + $0x40] sm:$0xff] %v2232
  %2297 = vst [vmem:[%s3 + $0x48] sm:$0xff] %v2233
  %2298 = vst [vmem:[%s3 + $0x50] sm:$0xff] %v2234
  %2299 = vst [vmem:[%s3 + $0x58] sm:$0xff] %v2235
  %2300 = vst [vmem:[%s3 + $0x60] sm:$0xff] %v2236
  %2301 = vst [vmem:[%s3 + $0x68] sm:$0xff] %v2237
  %2302 = vst [vmem:[%s3 + $0x70] sm:$0xff] %v2238
  %2303 = vst [vmem:[%s3 + $0x78] sm:$0xff] %v2239
  %2304 = vst [vmem:[%s3 + $0x80] sm:$0xff] %v2240
  %2305 = vst [vmem:[%s3 + $0x88] sm:$0xff] %v2241
  %2306 = vst [vmem:[%s3 + $0x90] sm:$0xff] %v2242
  %2307 = vst [vmem:[%s3 + $0x98] sm:$0xff] %v2243
  %2308 = vst [vmem:[%s3 + $0xa0] sm:$0xff] %v2244
  %2309 = vst [vmem:[%s3 + $0xa8] sm:$0xff] %v2245
  %2310 = vst [vmem:[%s3 + $0xb0] sm:$0xff] %v2246
  %2311 = vst [vmem:[%s3 + $0xb8] sm:$0xff] %v2247
  %2312 = vst [vmem:[%s3 + $0xc0] sm:$0xff] %v2248
  %2313 = vst [vmem:[%s3 + $0xc8] sm:$0xff] %v2249
  %2314 = vst [vmem:[%s3 + $0xd0] sm:$0xff] %v2250
  %2315 = vst [vmem:[%s3 + $0xd8] sm:$0xff] %v2251
  %2316 = vst [vmem:[%s3 + $0xe0] sm:$0xff] %v2252
  %2317 = vst [vmem:[%s3 + $0xe8] sm:$0xff] %v2253
  %2318 = vst [vmem:[%s3 + $0xf0] sm:$0xff] %v2254
  %2319 = vst [vmem:[%s3 + $0xf8] sm:$0xff] %v2255
  %2320 = vst [vmem:[%s3 + $0x100] sm:$0xff] %v2256
  %2321 = vst [vmem:[%s3 + $0x108] sm:$0xff] %v2257
  %2322 = vst [vmem:[%s3 + $0x110] sm:$0xff] %v2258
  %2323 = vst [vmem:[%s3 + $0x118] sm:$0xff] %v2259
  %2324 = vst [vmem:[%s3 + $0x120] sm:$0xff] %v2260
  %2325 = vst [vmem:[%s3 + $0x128] sm:$0xff] %v2261
  %2326 = vst [vmem:[%s3 + $0x130] sm:$0xff] %v2262
  %2327 = vst [vmem:[%s3 + $0x138] sm:$0xff] %v2263
  %2328 = vst [vmem:[%s3 + $0x140] sm:$0xff] %v2264
  %2329 = vst [vmem:[%s3 + $0x148] sm:$0xff] %v2265
  %2330 = vst [vmem:[%s3 + $0x150] sm:$0xff] %v2266
  %2331 = vst [vmem:[%s3 + $0x158] sm:$0xff] %v2267
  %2332 = vst [vmem:[%s3 + $0x160] sm:$0xff] %v2268
  %2333 = vst [vmem:[%s3 + $0x168] sm:$0xff] %v2269
  %2334 = vst [vmem:[%s3 + $0x170] sm:$0xff] %v2270
  %2335 = vst [vmem:[%s3 + $0x178] sm:$0xff] %v2271
  %2336 = vst [vmem:[%s3 + $0x180] sm:$0xff] %v2272
  %2337 = vst [vmem:[%s3 + $0x188] sm:$0xff] %v2273
  %2338 = vst [vmem:[%s3 + $0x190] sm:$0xff] %v2274
  %2339 = vst [vmem:[%s3 + $0x198] sm:$0xff] %v2275
  %2340 = vst [vmem:[%s3 + $0x1a0] sm:$0xff] %v2276
  %2341 = vst [vmem:[%s3 + $0x1a8] sm:$0xff] %v2277
  %2342 = vst [vmem:[%s3 + $0x1b0] sm:$0xff] %v2278
  %2343 = vst [vmem:[%s3 + $0x1b8] sm:$0xff] %v2279
  %2344 = vst [vmem:[%s3 + $0x1c0] sm:$0xff] %v2280
  %2345 = vst [vmem:[%s3 + $0x1c8] sm:$0xff] %v2281
  %2346 = vst [vmem:[%s3 + $0x1d0] sm:$0xff] %v2282
  %2347 = vst [vmem:[%s3 + $0x1d8] sm:$0xff] %v2283
  %2348 = vst [vmem:[%s3 + $0x1e0] sm:$0xff] %v2284
  %2349 = vst [vmem:[%s3 + $0x1e8] sm:$0xff] %v2285
  %2350 = vst [vmem:[%s3 + $0x1f0] sm:$0xff] %v2286
  %2351 = vst [vmem:[%s3 + $0x1f8] sm:$0xff] %v2287
  // Predicated region
  $region14: #{_lambda_.9} parent=0 // pred_check
    _
  $region15: #{_lambda_.9} parent=0 // pred_check_branch
    %2353 = sbr.rel (0) target = $region17
  $region16: #{_lambda_.9} parent=0 // pred_region
    _
  $region17: #{_lambda_.9} parent=0 // pred_fallthru
    _
  // Predicated region
  $region18: #{_lambda_.9} parent=0 // pred_check
    _
  $region19: #{_lambda_.9} parent=0 // pred_check_branch
    %2355 = sbr.rel (0) target = $region21
  $region20: #{_lambda_.9} parent=0 // pred_region
    _
  $region21: #{_lambda_.9} parent=0 // pred_fallthru
    _

</llo_original>
